<compile_context>
chip_gen: v7x
topology: tpu7x:2x2x1
jax: 0.10.0
libtpu: 0.0.40
codegen_flags: <defaults>
</compile_context>

<pallas_src>
import numpy as np
import jax
import jax.numpy as jnp
from jax.experimental import pallas as pl
from jax.experimental.pallas import tpu as pltpu

SIZES = (1, 2, 3, 6)
BN_EPS = 1e-5


# ----------------------------------------------------------------------------
# Helper matrices (match PyTorch AdaptiveAvgPool2d / F.interpolate semantics)
# ----------------------------------------------------------------------------
def _adaptive_pool_matrix(in_size, out_size):
    """P[i, h] such that pooled[i] = sum_h P[i, h] * x[h] (AdaptiveAvgPool1d)."""
    P = np.zeros((out_size, in_size), np.float32)
    for i in range(out_size):
        start = (i * in_size) // out_size
        end = -(-((i + 1) * in_size) // out_size)  # ceil div
        P[i, start:end] = 1.0 / (end - start)
    return P


def _bilinear_matrix(out_size, in_size):
    """A[o, i]: 1-D bilinear interpolation with align_corners=True (rows sum to 1)."""
    A = np.zeros((out_size, in_size), np.float32)
    if in_size == 1:
        A[:, 0] = 1.0
        return A
    for o in range(out_size):
        coord = o * (in_size - 1) / (out_size - 1)
        i0 = int(np.floor(coord))
        i1 = min(i0 + 1, in_size - 1)
        f = coord - i0
        A[o, i0] += 1.0 - f
        A[o, i1] += f
    return A


# ----------------------------------------------------------------------------
# Pallas kernels
# ----------------------------------------------------------------------------
def _stages_kernel(x_ref, pool_ref, w_ref, mask_ref, bias_ref, up_ref, o_ref):
    """All pyramid stages fused: stacked pool -> 1x1 conv (+BN scale) -> masked
    block combine -> stacked bilinear upsample (+BN bias).  One x read, one
    lane-contiguous slab store."""
    x = x_ref[0]                                                       # (HW, Cin) bf16
    pooled = jnp.dot(pool_ref[...], x,
                     preferred_element_type=jnp.float32)               # (S2, Cin)
    y = jnp.dot(pooled.astype(jnp.bfloat16), w_ref[...],
                preferred_element_type=jnp.float32)                    # (S2, 4*Cout)
    y = y * mask_ref[...]                     # keep only each stage's own channel block
    up = jnp.dot(up_ref[...], y.astype(jnp.bfloat16),
                 preferred_element_type=jnp.float32)                   # (HW, 4*Cout)
    # BN bias commutes with the (row-stochastic) bilinear upsample -> add here.
    o_ref[0] = (up + bias_ref[...]).astype(o_ref.dtype)


def _bottleneck_kernel(s_ref, x_ref, ws_ref, wx_ref, scale_ref, bias_ref, o_ref,
                       ps_ref, px_ref):
    """3x3 conv (padding=1, no bias) + BN over one image.

    The channel concat [stage slab, feats] is realized by splitting the weight:
    acc = sum_tap slab_tap @ ws[tap] + feats_tap @ wx[tap].  The zero padding is
    done in VMEM scratch, kept FLAT so every tap is a contiguous sublane slice
    (no per-tap reshape/relayout)."""
    H, W, Cout = o_ref.shape[1], o_ref.shape[2], o_ref.shape[3]
    Wp = W + 2
    HWp = H * Wp

    # Zero the padded scratches (borders + spill rows stay 0), copy interior rows.
    ps_ref[...] = jnp.zeros_like(ps_ref)
    px_ref[...] = jnp.zeros_like(px_ref)
    for y in range(H):
        dst = (y + 1) * Wp + 1
        ps_ref[dst:dst + W, :] = s_ref[0, y * W:(y + 1) * W, :]
        px_ref[dst:dst + W, :] = x_ref[0, y * W:(y + 1) * W, :]

    # 9 shifted-tap matmuls on contiguous flat slices.  Rows of `acc` are indexed
    # by o = y*Wp + x; the x in {W, W+1} rows are garbage and dropped below.
    acc = jnp.zeros((HWp, Cout), jnp.float32)
    for dy in range(3):
        for dx in range(3):
            off = dy * Wp + dx
            t = dy * 3 + dx
            acc = acc + jnp.dot(ps_ref[off:off + HWp, :], ws_ref[t],
                                preferred_element_type=jnp.float32)
            acc = acc + jnp.dot(px_ref[off:off + HWp, :], wx_ref[t],
                                preferred_element_type=jnp.float32)

    acc = acc * scale_ref[0] + bias_ref[0]                             # BN (eval)
    # Drop the 2 padded columns per row (single extraction pass).
    for y in range(H):
        o_ref[0, y] = acc[y * Wp:y * Wp + W, :].astype(o_ref.dtype)


# ----------------------------------------------------------------------------
# pallas_call wrappers
# ----------------------------------------------------------------------------
def _stages_call(x_flat, pool, w_cat, mask, bias_cat, up):
    N, HW, Cin = x_flat.shape
    S2 = pool.shape[0]
    n_stage_ch = w_cat.shape[1]
    return pl.pallas_call(
        _stages_kernel,
        out_shape=jax.ShapeDtypeStruct((N, HW, n_stage_ch), jnp.bfloat16),
        grid=(N,),
        in_specs=[
            pl.BlockSpec((1, HW, Cin), lambda n: (n, 0, 0)),
            pl.BlockSpec((S2, HW), lambda n: (0, 0)),
            pl.BlockSpec((Cin, n_stage_ch), lambda n: (0, 0)),
            pl.BlockSpec((S2, n_stage_ch), lambda n: (0, 0)),
            pl.BlockSpec((1, n_stage_ch), lambda n: (0, 0)),
            pl.BlockSpec((HW, S2), lambda n: (0, 0)),
        ],
        out_specs=pl.BlockSpec((1, HW, n_stage_ch), lambda n: (n, 0, 0)),
        compiler_params=pltpu.CompilerParams(dimension_semantics=("parallel",)),
    )(x_flat, pool, w_cat, mask, bias_cat, up)


def _bottleneck_call(slab, x_flat, wb_s, wb_x, scale_b, bias_b, H, W):
    N, HW, Cs = slab.shape
    Cx = x_flat.shape[-1]
    Cout = wb_s.shape[-1]
    Wp = W + 2
    pad_rows = (H + 3) * Wp  # padded flat image + spare zero rows for the last taps
    return pl.pallas_call(
        _bottleneck_kernel,
        out_shape=jax.ShapeDtypeStruct((N, H, W, Cout), jnp.float32),
        grid=(N,),
        in_specs=[
            pl.BlockSpec((1, HW, Cs), lambda n: (n, 0, 0)),
            pl.BlockSpec((1, HW, Cx), lambda n: (n, 0, 0)),
            pl.BlockSpec((9, Cs, Cout), lambda n: (0, 0, 0)),
            pl.BlockSpec((9, Cx, Cout), lambda n: (0, 0, 0)),
            pl.BlockSpec((1, Cout), lambda n: (0, 0)),
            pl.BlockSpec((1, Cout), lambda n: (0, 0)),
        ],
        out_specs=pl.BlockSpec((1, H, W, Cout), lambda n: (n, 0, 0, 0)),
        scratch_shapes=[pltpu.VMEM((pad_rows, Cs), jnp.bfloat16),
                        pltpu.VMEM((pad_rows, Cx), jnp.bfloat16)],
        compiler_params=pltpu.CompilerParams(dimension_semantics=("parallel",)),
    )(slab, x_flat, wb_s, wb_x, scale_b, bias_b)


# ----------------------------------------------------------------------------
# Parameter init (deterministic, synthetic) and full forward
# ----------------------------------------------------------------------------
def _fold_bn(key, c):
    kg, kb, km, kv = jax.random.split(key, 4)
    gamma = 1.0 + 0.1 * jax.random.normal(kg, (c,), jnp.float32)
    beta = 0.1 * jax.random.normal(kb, (c,), jnp.float32)
    mean = 0.1 * jax.random.normal(km, (c,), jnp.float32)
    var = jax.random.uniform(kv, (c,), jnp.float32, minval=0.5, maxval=1.5)
    scale = gamma / jnp.sqrt(var + BN_EPS)
    bias = beta - mean * scale
    return scale.reshape(1, c), bias.reshape(1, c)


def init_params(key, features, out_features, sizes, H, W):
    n_stages = len(sizes)
    n_stage_ch = n_stages * out_features

    stages_raw, mats_raw = [], []
    w_cols, bias_cols, pool_rows, up_cols, mask_rows = [], [], [], [], []
    for i, s in enumerate(sizes):
        k = jax.random.fold_in(key, i)
        kw, kbn = jax.random.split(k)
        w1 = 0.1 * jax.random.normal(kw, (features, out_features), jnp.float32)
        scale, bias = _fold_bn(kbn, out_features)
        stages_raw.append((w1, scale, bias))

        bpool = np.kron(_adaptive_pool_matrix(H, s), _adaptive_pool_matrix(W, s))
        bup = np.kron(_bilinear_matrix(H, s), _bilinear_matrix(W, s))
        mats_raw.append((jnp.asarray(bpool), jnp.asarray(bup)))

        w_cols.append(w1 * scale)        # fold BN scale into the 1x1 conv weight
        bias_cols.append(bias)           # BN bias added after the upsample (rows sum to 1)
        pool_rows.append(bpool)
        up_cols.append(bup)
        m = np.zeros((s * s, n_stage_ch), np.float32)
        m[:, i * out_features:(i + 1) * out_features] = 1.0
        mask_rows.append(m)

    c_total = features + n_stage_ch
    kw, kbn = jax.random.split(jax.random.fold_in(key, 1000))
    wb = 0.05 * jax.random.normal(kw, (9, c_total, out_features), jnp.float32)
    scale_b, bias_b = _fold_bn(kbn, out_features)

    return {
        # raw per-stage params (reference path)
        "stages_raw": stages_raw, "mats_raw": mats_raw,
        # fused params (kernel path)
        "pool": jnp.asarray(np.concatenate(pool_rows, 0)),     # (S2, HW)
        "up": jnp.asarray(np.concatenate(up_cols, 1)),         # (HW, S2)
        "w_cat": jnp.concatenate(w_cols, 1),                   # (Cin, 4*Cout), scale folded
        "bias_cat": jnp.concatenate(bias_cols, 1),             # (1, 4*Cout)
        "mask": jnp.asarray(np.concatenate(mask_rows, 0)),     # (S2, 4*Cout)
        "wb": wb, "scale_b": scale_b, "bias_b": bias_b,
    }


def psp_module_forward(x_nchw, params):
    """PSPModule forward.  x_nchw: (N, C, H, W) -> (N, out_features, H, W)."""
    N, C, H, W = x_nchw.shape
    x_flat = jnp.transpose(x_nchw, (0, 2, 3, 1)).reshape(N, H * W, C).astype(jnp.bfloat16)

    # One fused pallas_call for all four pyramid stages.
    slab = _stages_call(
        x_flat,
        params["pool"].astype(jnp.bfloat16),
        params["w_cat"].astype(jnp.bfloat16),
        params["mask"],
        params["bias_cat"],
        params["up"].astype(jnp.bfloat16),
    )                                                    # (N, HW, 4*Cout) bf16

    # Bottleneck: the concat [stage slab, feats] is realized by splitting wb.
    n_stage_ch = slab.shape[-1]
    wb = params["wb"].astype(jnp.bfloat16)
    out = _bottleneck_call(slab, x_flat, wb[:, :n_stage_ch, :], wb[:, n_stage_ch:, :],
                           params["scale_b"], params["bias_b"], H, W)   # (N, H, W, Cout)
    return jnp.transpose(out, (0, 3, 1, 2))


def psp_module_reference(x_nchw, params):
    """Pure-JAX reference mirroring the original per-stage PyTorch math."""
    N, C, H, W = x_nchw.shape
    x_flat = jnp.transpose(x_nchw, (0, 2, 3, 1)).reshape(N, H * W, C)
    priors = []
    for (bpool, bup), (w1, sc, bi) in zip(params["mats_raw"], params["stages_raw"]):
        p = jnp.einsum("sp,npc->nsc", bpool, x_flat, precision="highest")
        y = jnp.einsum("nsc,co->nso", p, w1, precision="highest") * sc + bi
        priors.append(jnp.einsum("ps,nso->npo", bup, y, precision="highest"))
    priors.append(x_flat)
    cat = jnp.concatenate(priors, -1).reshape(N, H, W, -1)
    catp = jnp.pad(cat, ((0, 0), (1, 1), (1, 1), (0, 0)))
    out = jnp.zeros((N, H, W, params["wb"].shape[-1]), jnp.float32)
    for dy in range(3):
        for dx in range(3):
            out = out + jnp.einsum("nhwc,co->nhwo",
                                   catp[:, dy:dy + H, dx:dx + W, :],
                                   params["wb"][dy * 3 + dx], precision="highest")
    out = out * params["scale_b"] + params["bias_b"]
    return jnp.transpose(out, (0, 3, 1, 2))


if __name__ == "__main__":
    # Small shapes consistent with the module: features=4, out_features=8, 16x16 spatial.
    N, FEATURES, H, W = 2, 4, 16, 16
    OUT_FEATURES = 8

    key = jax.random.PRNGKey(0)
    kx, kp = jax.random.split(key)
    x = jax.random.normal(kx, (N, FEATURES, H, W), jnp.float32)
    params = init_params(kp, FEATURES, OUT_FEATURES, SIZES, H, W)

    fwd = jax.jit(psp_module_forward)
    out = jax.block_until_ready(fwd(x, params))

    assert out.shape == (N, OUT_FEATURES, H, W), out.shape
    assert bool(jnp.all(jnp.isfinite(out)))

    ref = jax.block_until_ready(psp_module_reference(x, params))
    # Tolerance covers bf16 MXU inputs (f32 accumulation / BN); kernel math is exact otherwise.
    np.testing.assert_allclose(np.asarray(out), np.asarray(ref), rtol=2e-2, atol=3e-2)

    print("KERNEL_OK")
</pallas_src>

<mosaic_0001>
module attributes {stable_mosaic.version = 11 : i64} {
  func.func @_stages_kernel(%arg0: i32, %arg1: memref<1x256x4xbf16, #tpu.memory_space<vmem>>, %arg2: memref<50x256xbf16, #tpu.memory_space<vmem>>, %arg3: memref<4x32xbf16, #tpu.memory_space<vmem>>, %arg4: memref<50x32xf32, #tpu.memory_space<vmem>>, %arg5: memref<1x32xf32, #tpu.memory_space<vmem>>, %arg6: memref<256x50xbf16, #tpu.memory_space<vmem>>, %arg7: memref<1x256x32xbf16, #tpu.memory_space<vmem>>) attributes {dimension_semantics = [#tpu.dimension_semantics<parallel>], iteration_bounds = array<i64: 2>, scalar_prefetch = 0 : i64, scratch_operands = 0 : i64, tpu.core_type = #tpu.core_type<tc>, window_params = [{transform_indices = @transform_0, window_bounds = array<i64: 1, 256, 4>}, {pipeline_mode = #tpu.pipeline_mode<synchronous>, transform_indices = @transform_1, window_bounds = array<i64: 50, 256>}, {pipeline_mode = #tpu.pipeline_mode<synchronous>, transform_indices = @transform_2, window_bounds = array<i64: 4, 32>}, {pipeline_mode = #tpu.pipeline_mode<synchronous>, transform_indices = @transform_3, window_bounds = array<i64: 50, 32>}, {pipeline_mode = #tpu.pipeline_mode<synchronous>, transform_indices = @transform_4, window_bounds = array<i64: 1, 32>}, {pipeline_mode = #tpu.pipeline_mode<synchronous>, transform_indices = @transform_5, window_bounds = array<i64: 256, 50>}, {transform_indices = @transform_6, window_bounds = array<i64: 1, 256, 32>}]} {
    %c0 = arith.constant 0 : index
    %c0_0 = arith.constant 0 : index
    %c0_1 = arith.constant 0 : index
    %0 = vector.load %arg1[%c0, %c0_0, %c0_1] : memref<1x256x4xbf16, #tpu.memory_space<vmem>>, vector<1x256x4xbf16>
    %1 = vector.shape_cast %0 : vector<1x256x4xbf16> to vector<256x4xbf16>
    %c0_2 = arith.constant 0 : index
    %c0_3 = arith.constant 0 : index
    %2 = vector.load %arg2[%c0_2, %c0_3] : memref<50x256xbf16, #tpu.memory_space<vmem>>, vector<50x256xbf16>
    %cst = arith.constant dense<0.000000e+00> : vector<50x4xf32>
    %3 = tpu.matmul %2, %1, %cst {dimension_numbers = #tpu.dot_dimension_numbers<[1], [0], [0], [1], [0, 0, 1, 1], [], []>} : vector<50x256xbf16>, vector<256x4xbf16>, vector<50x4xf32> -> vector<50x4xf32>
    %4 = arith.truncf %3 : vector<50x4xf32> to vector<50x4xbf16>
    %c0_4 = arith.constant 0 : index
    %c0_5 = arith.constant 0 : index
    %5 = vector.load %arg3[%c0_4, %c0_5] : memref<4x32xbf16, #tpu.memory_space<vmem>>, vector<4x32xbf16>
    %cst_6 = arith.constant dense<0.000000e+00> : vector<50x32xf32>
    %6 = tpu.matmul %4, %5, %cst_6 {dimension_numbers = #tpu.dot_dimension_numbers<[1], [0], [0], [1], [0, 0, 1, 1], [], []>} : vector<50x4xbf16>, vector<4x32xbf16>, vector<50x32xf32> -> vector<50x32xf32>
    %c0_7 = arith.constant 0 : index
    %c0_8 = arith.constant 0 : index
    %7 = vector.load %arg4[%c0_7, %c0_8] : memref<50x32xf32, #tpu.memory_space<vmem>>, vector<50x32xf32>
    %8 = arith.mulf %6, %7 : vector<50x32xf32>
    %c0_9 = arith.constant 0 : index
    %c0_10 = arith.constant 0 : index
    %9 = vector.load %arg6[%c0_9, %c0_10] : memref<256x50xbf16, #tpu.memory_space<vmem>>, vector<256x50xbf16>
    %10 = arith.truncf %8 : vector<50x32xf32> to vector<50x32xbf16>
    %cst_11 = arith.constant dense<0.000000e+00> : vector<256x32xf32>
    %11 = tpu.matmul %9, %10, %cst_11 {dimension_numbers = #tpu.dot_dimension_numbers<[1], [0], [0], [1], [0, 0, 1, 1], [], []>} : vector<256x50xbf16>, vector<50x32xbf16>, vector<256x32xf32> -> vector<256x32xf32>
    %c0_12 = arith.constant 0 : index
    %c0_13 = arith.constant 0 : index
    %12 = vector.load %arg5[%c0_12, %c0_13] : memref<1x32xf32, #tpu.memory_space<vmem>>, vector<1x32xf32>
    %13 = vector.broadcast %12 : vector<1x32xf32> to vector<256x32xf32>
    %14 = arith.addf %11, %13 : vector<256x32xf32>
    %15 = arith.truncf %14 : vector<256x32xf32> to vector<256x32xbf16>
    %c0_14 = arith.constant 0 : index
    %c0_15 = arith.constant 0 : index
    %c0_16 = arith.constant 0 : index
    %16 = vector.load %arg7[%c0_14, %c0_15, %c0_16] : memref<1x256x32xbf16, #tpu.memory_space<vmem>>, vector<1x256x32xbf16>
    %17 = vector.shape_cast %16 : vector<1x256x32xbf16> to vector<256x32xbf16>
    %18 = vector.shape_cast %15 : vector<256x32xbf16> to vector<1x256x32xbf16>
    tpu.vector_store %arg7[%c0_14, %c0_15, %c0_16], %18 {strides = array<i32>} : memref<1x256x32xbf16, #tpu.memory_space<vmem>>, vector<1x256x32xbf16>,
    return
  }
  func.func @transform_0(%arg0: i32) -> (i32, i32, i32) {
    %c0_i32 = arith.constant 0 : i32
    %c0_i32_0 = arith.constant 0 : i32
    %c0_i32_1 = arith.constant 0 : i32
    return %arg0, %c0_i32, %c0_i32_0 : i32, i32, i32
  }
  func.func @transform_1(%arg0: i32) -> (i32, i32) {
    %c0_i32 = arith.constant 0 : i32
    %c0_i32_0 = arith.constant 0 : i32
    %c0_i32_1 = arith.constant 0 : i32
    return %c0_i32, %c0_i32_0 : i32, i32
  }
  func.func @transform_2(%arg0: i32) -> (i32, i32) {
    %c0_i32 = arith.constant 0 : i32
    %c0_i32_0 = arith.constant 0 : i32
    %c0_i32_1 = arith.constant 0 : i32
    return %c0_i32, %c0_i32_0 : i32, i32
  }
  func.func @transform_3(%arg0: i32) -> (i32, i32) {
    %c0_i32 = arith.constant 0 : i32
    %c0_i32_0 = arith.constant 0 : i32
    %c0_i32_1 = arith.constant 0 : i32
    return %c0_i32, %c0_i32_0 : i32, i32
  }
  func.func @transform_4(%arg0: i32) -> (i32, i32) {
    %c0_i32 = arith.constant 0 : i32
    %c0_i32_0 = arith.constant 0 : i32
    %c0_i32_1 = arith.constant 0 : i32
    return %c0_i32, %c0_i32_0 : i32, i32
  }
  func.func @transform_5(%arg0: i32) -> (i32, i32) {
    %c0_i32 = arith.constant 0 : i32
    %c0_i32_0 = arith.constant 0 : i32
    %c0_i32_1 = arith.constant 0 : i32
    return %c0_i32, %c0_i32_0 : i32, i32
  }
  func.func @transform_6(%arg0: i32) -> (i32, i32, i32) {
    %c0_i32 = arith.constant 0 : i32
    %c0_i32_0 = arith.constant 0 : i32
    %c0_i32_1 = arith.constant 0 : i32
    return %arg0, %c0_i32, %c0_i32_0 : i32, i32, i32
  }
}

module attributes {stable_mosaic.version = 11 : i64} {
  func.func @_bottleneck_kernel(%arg0: i32, %arg1: memref<1x256x32xbf16, #tpu.memory_space<vmem>>, %arg2: memref<1x256x4xbf16, #tpu.memory_space<vmem>>, %arg3: memref<9x32x8xbf16, #tpu.memory_space<vmem>>, %arg4: memref<9x4x8xbf16, #tpu.memory_space<vmem>>, %arg5: memref<1x8xf32, #tpu.memory_space<vmem>>, %arg6: memref<1x8xf32, #tpu.memory_space<vmem>>, %arg7: memref<1x16x16x8xf32, #tpu.memory_space<vmem>>, %arg8: memref<342x32xbf16, #tpu.memory_space<vmem>>, %arg9: memref<342x4xbf16, #tpu.memory_space<vmem>>) attributes {dimension_semantics = [#tpu.dimension_semantics<parallel>], iteration_bounds = array<i64: 2>, scalar_prefetch = 0 : i64, scratch_operands = 2 : i64, tpu.core_type = #tpu.core_type<tc>, window_params = [{transform_indices = @transform_0, window_bounds = array<i64: 1, 256, 32>}, {transform_indices = @transform_1, window_bounds = array<i64: 1, 256, 4>}, {pipeline_mode = #tpu.pipeline_mode<synchronous>, transform_indices = @transform_2, window_bounds = array<i64: 9, 32, 8>}, {pipeline_mode = #tpu.pipeline_mode<synchronous>, transform_indices = @transform_3, window_bounds = array<i64: 9, 4, 8>}, {pipeline_mode = #tpu.pipeline_mode<synchronous>, transform_indices = @transform_4, window_bounds = array<i64: 1, 8>}, {pipeline_mode = #tpu.pipeline_mode<synchronous>, transform_indices = @transform_5, window_bounds = array<i64: 1, 8>}, {transform_indices = @transform_6, window_bounds = array<i64: 1, 16, 16, 8>}]} {
    %cst = arith.constant 0.000000e+00 : bf16
    %0 = vector.broadcast %cst : bf16 to vector<342x32xbf16>
    %c0 = arith.constant 0 : index
    %c0_0 = arith.constant 0 : index
    %1 = vector.load %arg8[%c0, %c0_0] : memref<342x32xbf16, #tpu.memory_space<vmem>>, vector<342x32xbf16>
    tpu.vector_store %arg8[%c0, %c0_0], %0 {strides = array<i32>} : memref<342x32xbf16, #tpu.memory_space<vmem>>, vector<342x32xbf16>,
    %cst_1 = arith.constant 0.000000e+00 : bf16
    %2 = vector.broadcast %cst_1 : bf16 to vector<342x4xbf16>
    %c0_2 = arith.constant 0 : index
    %c0_3 = arith.constant 0 : index
    %3 = vector.load %arg9[%c0_2, %c0_3] : memref<342x4xbf16, #tpu.memory_space<vmem>>, vector<342x4xbf16>
    tpu.vector_store %arg9[%c0_2, %c0_3], %2 {strides = array<i32>} : memref<342x4xbf16, #tpu.memory_space<vmem>>, vector<342x4xbf16>,
    %c0_4 = arith.constant 0 : index
    %c0_5 = arith.constant 0 : index
    %c0_6 = arith.constant 0 : index
    %4 = vector.load %arg1[%c0_4, %c0_5, %c0_6] : memref<1x256x32xbf16, #tpu.memory_space<vmem>>, vector<1x16x32xbf16>
    %5 = vector.shape_cast %4 : vector<1x16x32xbf16> to vector<16x32xbf16>
    %c19 = arith.constant 19 : index
    %c0_7 = arith.constant 0 : index
    %6 = vector.load %arg8[%c19, %c0_7] : memref<342x32xbf16, #tpu.memory_space<vmem>>, vector<16x32xbf16>
    tpu.vector_store %arg8[%c19, %c0_7], %5 {strides = array<i32>} : memref<342x32xbf16, #tpu.memory_space<vmem>>, vector<16x32xbf16>,
    %c0_8 = arith.constant 0 : index
    %c0_9 = arith.constant 0 : index
    %c0_10 = arith.constant 0 : index
    %7 = vector.load %arg2[%c0_8, %c0_9, %c0_10] : memref<1x256x4xbf16, #tpu.memory_space<vmem>>, vector<1x16x4xbf16>
    %8 = vector.shape_cast %7 : vector<1x16x4xbf16> to vector<16x4xbf16>
    %c19_11 = arith.constant 19 : index
    %c0_12 = arith.constant 0 : index
    %9 = vector.load %arg9[%c19_11, %c0_12] : memref<342x4xbf16, #tpu.memory_space<vmem>>, vector<16x4xbf16>
    tpu.vector_store %arg9[%c19_11, %c0_12], %8 {strides = array<i32>} : memref<342x4xbf16, #tpu.memory_space<vmem>>, vector<16x4xbf16>,
    %c0_13 = arith.constant 0 : index
    %c16 = arith.constant 16 : index
    %c0_14 = arith.constant 0 : index
    %10 = vector.load %arg1[%c0_13, %c16, %c0_14] : memref<1x256x32xbf16, #tpu.memory_space<vmem>>, vector<1x16x32xbf16>
    %11 = vector.shape_cast %10 : vector<1x16x32xbf16> to vector<16x32xbf16>
    %c37 = arith.constant 37 : index
    %c0_15 = arith.constant 0 : index
    %12 = vector.load %arg8[%c37, %c0_15] : memref<342x32xbf16, #tpu.memory_space<vmem>>, vector<16x32xbf16>
    tpu.vector_store %arg8[%c37, %c0_15], %11 {strides = array<i32>} : memref<342x32xbf16, #tpu.memory_space<vmem>>, vector<16x32xbf16>,
    %c0_16 = arith.constant 0 : index
    %c16_17 = arith.constant 16 : index
    %c0_18 = arith.constant 0 : index
    %13 = vector.load %arg2[%c0_16, %c16_17, %c0_18] : memref<1x256x4xbf16, #tpu.memory_space<vmem>>, vector<1x16x4xbf16>
    %14 = vector.shape_cast %13 : vector<1x16x4xbf16> to vector<16x4xbf16>
    %c37_19 = arith.constant 37 : index
    %c0_20 = arith.constant 0 : index
    %15 = vector.load %arg9[%c37_19, %c0_20] : memref<342x4xbf16, #tpu.memory_space<vmem>>, vector<16x4xbf16>
    tpu.vector_store %arg9[%c37_19, %c0_20], %14 {strides = array<i32>} : memref<342x4xbf16, #tpu.memory_space<vmem>>, vector<16x4xbf16>,
    %c0_21 = arith.constant 0 : index
    %c32 = arith.constant 32 : index
    %c0_22 = arith.constant 0 : index
    %16 = vector.load %arg1[%c0_21, %c32, %c0_22] : memref<1x256x32xbf16, #tpu.memory_space<vmem>>, vector<1x16x32xbf16>
    %17 = vector.shape_cast %16 : vector<1x16x32xbf16> to vector<16x32xbf16>
    %c55 = arith.constant 55 : index
    %c0_23 = arith.constant 0 : index
    %18 = vector.load %arg8[%c55, %c0_23] : memref<342x32xbf16, #tpu.memory_space<vmem>>, vector<16x32xbf16>
    tpu.vector_store %arg8[%c55, %c0_23], %17 {strides = array<i32>} : memref<342x32xbf16, #tpu.memory_space<vmem>>, vector<16x32xbf16>,
    %c0_24 = arith.constant 0 : index
    %c32_25 = arith.constant 32 : index
    %c0_26 = arith.constant 0 : index
    %19 = vector.load %arg2[%c0_24, %c32_25, %c0_26] : memref<1x256x4xbf16, #tpu.memory_space<vmem>>, vector<1x16x4xbf16>
    %20 = vector.shape_cast %19 : vector<1x16x4xbf16> to vector<16x4xbf16>
    %c55_27 = arith.constant 55 : index
    %c0_28 = arith.constant 0 : index
    %21 = vector.load %arg9[%c55_27, %c0_28] : memref<342x4xbf16, #tpu.memory_space<vmem>>, vector<16x4xbf16>
    tpu.vector_store %arg9[%c55_27, %c0_28], %20 {strides = array<i32>} : memref<342x4xbf16, #tpu.memory_space<vmem>>, vector<16x4xbf16>,
    %c0_29 = arith.constant 0 : index
    %c48 = arith.constant 48 : index
    %c0_30 = arith.constant 0 : index
    %22 = vector.load %arg1[%c0_29, %c48, %c0_30] : memref<1x256x32xbf16, #tpu.memory_space<vmem>>, vector<1x16x32xbf16>
    %23 = vector.shape_cast %22 : vector<1x16x32xbf16> to vector<16x32xbf16>
    %c73 = arith.constant 73 : index
    %c0_31 = arith.constant 0 : index
    %24 = vector.load %arg8[%c73, %c0_31] : memref<342x32xbf16, #tpu.memory_space<vmem>>, vector<16x32xbf16>
    tpu.vector_store %arg8[%c73, %c0_31], %23 {strides = array<i32>} : memref<342x32xbf16, #tpu.memory_space<vmem>>, vector<16x32xbf16>,
    %c0_32 = arith.constant 0 : index
    %c48_33 = arith.constant 48 : index
    %c0_34 = arith.constant 0 : index
    %25 = vector.load %arg2[%c0_32, %c48_33, %c0_34] : memref<1x256x4xbf16, #tpu.memory_space<vmem>>, vector<1x16x4xbf16>
    %26 = vector.shape_cast %25 : vector<1x16x4xbf16> to vector<16x4xbf16>
    %c73_35 = arith.constant 73 : index
    %c0_36 = arith.constant 0 : index
    %27 = vector.load %arg9[%c73_35, %c0_36] : memref<342x4xbf16, #tpu.memory_space<vmem>>, vector<16x4xbf16>
    tpu.vector_store %arg9[%c73_35, %c0_36], %26 {strides = array<i32>} : memref<342x4xbf16, #tpu.memory_space<vmem>>, vector<16x4xbf16>,
    %c0_37 = arith.constant 0 : index
    %c64 = arith.constant 64 : index
    %c0_38 = arith.constant 0 : index
    %28 = vector.load %arg1[%c0_37, %c64, %c0_38] : memref<1x256x32xbf16, #tpu.memory_space<vmem>>, vector<1x16x32xbf16>
    %29 = vector.shape_cast %28 : vector<1x16x32xbf16> to vector<16x32xbf16>
    %c91 = arith.constant 91 : index
    %c0_39 = arith.constant 0 : index
    %30 = vector.load %arg8[%c91, %c0_39] : memref<342x32xbf16, #tpu.memory_space<vmem>>, vector<16x32xbf16>
    tpu.vector_store %arg8[%c91, %c0_39], %29 {strides = array<i32>} : memref<342x32xbf16, #tpu.memory_space<vmem>>, vector<16x32xbf16>,
    %c0_40 = arith.constant 0 : index
    %c64_41 = arith.constant 64 : index
    %c0_42 = arith.constant 0 : index
    %31 = vector.load %arg2[%c0_40, %c64_41, %c0_42] : memref<1x256x4xbf16, #tpu.memory_space<vmem>>, vector<1x16x4xbf16>
    %32 = vector.shape_cast %31 : vector<1x16x4xbf16> to vector<16x4xbf16>
    %c91_43 = arith.constant 91 : index
    %c0_44 = arith.constant 0 : index
    %33 = vector.load %arg9[%c91_43, %c0_44] : memref<342x4xbf16, #tpu.memory_space<vmem>>, vector<16x4xbf16>
    tpu.vector_store %arg9[%c91_43, %c0_44], %32 {strides = array<i32>} : memref<342x4xbf16, #tpu.memory_space<vmem>>, vector<16x4xbf16>,
    %c0_45 = arith.constant 0 : index
    %c80 = arith.constant 80 : index
    %c0_46 = arith.constant 0 : index
    %34 = vector.load %arg1[%c0_45, %c80, %c0_46] : memref<1x256x32xbf16, #tpu.memory_space<vmem>>, vector<1x16x32xbf16>
    %35 = vector.shape_cast %34 : vector<1x16x32xbf16> to vector<16x32xbf16>
    %c109 = arith.constant 109 : index
    %c0_47 = arith.constant 0 : index
    %36 = vector.load %arg8[%c109, %c0_47] : memref<342x32xbf16, #tpu.memory_space<vmem>>, vector<16x32xbf16>
    tpu.vector_store %arg8[%c109, %c0_47], %35 {strides = array<i32>} : memref<342x32xbf16, #tpu.memory_space<vmem>>, vector<16x32xbf16>,
    %c0_48 = arith.constant 0 : index
    %c80_49 = arith.constant 80 : index
    %c0_50 = arith.constant 0 : index
    %37 = vector.load %arg2[%c0_48, %c80_49, %c0_50] : memref<1x256x4xbf16, #tpu.memory_space<vmem>>, vector<1x16x4xbf16>
    %38 = vector.shape_cast %37 : vector<1x16x4xbf16> to vector<16x4xbf16>
    %c109_51 = arith.constant 109 : index
    %c0_52 = arith.constant 0 : index
    %39 = vector.load %arg9[%c109_51, %c0_52] : memref<342x4xbf16, #tpu.memory_space<vmem>>, vector<16x4xbf16>
    tpu.vector_store %arg9[%c109_51, %c0_52], %38 {strides = array<i32>} : memref<342x4xbf16, #tpu.memory_space<vmem>>, vector<16x4xbf16>,
    %c0_53 = arith.constant 0 : index
    %c96 = arith.constant 96 : index
    %c0_54 = arith.constant 0 : index
    %40 = vector.load %arg1[%c0_53, %c96, %c0_54] : memref<1x256x32xbf16, #tpu.memory_space<vmem>>, vector<1x16x32xbf16>
    %41 = vector.shape_cast %40 : vector<1x16x32xbf16> to vector<16x32xbf16>
    %c127 = arith.constant 127 : index
    %c0_55 = arith.constant 0 : index
    %42 = vector.load %arg8[%c127, %c0_55] : memref<342x32xbf16, #tpu.memory_space<vmem>>, vector<16x32xbf16>
    tpu.vector_store %arg8[%c127, %c0_55], %41 {strides = array<i32>} : memref<342x32xbf16, #tpu.memory_space<vmem>>, vector<16x32xbf16>,
    %c0_56 = arith.constant 0 : index
    %c96_57 = arith.constant 96 : index
    %c0_58 = arith.constant 0 : index
    %43 = vector.load %arg2[%c0_56, %c96_57, %c0_58] : memref<1x256x4xbf16, #tpu.memory_space<vmem>>, vector<1x16x4xbf16>
    %44 = vector.shape_cast %43 : vector<1x16x4xbf16> to vector<16x4xbf16>
    %c127_59 = arith.constant 127 : index
    %c0_60 = arith.constant 0 : index
    %45 = vector.load %arg9[%c127_59, %c0_60] : memref<342x4xbf16, #tpu.memory_space<vmem>>, vector<16x4xbf16>
    tpu.vector_store %arg9[%c127_59, %c0_60], %44 {strides = array<i32>} : memref<342x4xbf16, #tpu.memory_space<vmem>>, vector<16x4xbf16>,
    %c0_61 = arith.constant 0 : index
    %c112 = arith.constant 112 : index
    %c0_62 = arith.constant 0 : index
    %46 = vector.load %arg1[%c0_61, %c112, %c0_62] : memref<1x256x32xbf16, #tpu.memory_space<vmem>>, vector<1x16x32xbf16>
    %47 = vector.shape_cast %46 : vector<1x16x32xbf16> to vector<16x32xbf16>
    %c145 = arith.constant 145 : index
    %c0_63 = arith.constant 0 : index
    %48 = vector.load %arg8[%c145, %c0_63] : memref<342x32xbf16, #tpu.memory_space<vmem>>, vector<16x32xbf16>
    tpu.vector_store %arg8[%c145, %c0_63], %47 {strides = array<i32>} : memref<342x32xbf16, #tpu.memory_space<vmem>>, vector<16x32xbf16>,
    %c0_64 = arith.constant 0 : index
    %c112_65 = arith.constant 112 : index
    %c0_66 = arith.constant 0 : index
    %49 = vector.load %arg2[%c0_64, %c112_65, %c0_66] : memref<1x256x4xbf16, #tpu.memory_space<vmem>>, vector<1x16x4xbf16>
    %50 = vector.shape_cast %49 : vector<1x16x4xbf16> to vector<16x4xbf16>
    %c145_67 = arith.constant 145 : index
    %c0_68 = arith.constant 0 : index
    %51 = vector.load %arg9[%c145_67, %c0_68] : memref<342x4xbf16, #tpu.memory_space<vmem>>, vector<16x4xbf16>
    tpu.vector_store %arg9[%c145_67, %c0_68], %50 {strides = array<i32>} : memref<342x4xbf16, #tpu.memory_space<vmem>>, vector<16x4xbf16>,
    %c0_69 = arith.constant 0 : index
    %c128 = arith.constant 128 : index
    %c0_70 = arith.constant 0 : index
    %52 = vector.load %arg1[%c0_69, %c128, %c0_70] : memref<1x256x32xbf16, #tpu.memory_space<vmem>>, vector<1x16x32xbf16>
    %53 = vector.shape_cast %52 : vector<1x16x32xbf16> to vector<16x32xbf16>
    %c163 = arith.constant 163 : index
    %c0_71 = arith.constant 0 : index
    %54 = vector.load %arg8[%c163, %c0_71] : memref<342x32xbf16, #tpu.memory_space<vmem>>, vector<16x32xbf16>
    tpu.vector_store %arg8[%c163, %c0_71], %53 {strides = array<i32>} : memref<342x32xbf16, #tpu.memory_space<vmem>>, vector<16x32xbf16>,
    %c0_72 = arith.constant 0 : index
    %c128_73 = arith.constant 128 : index
    %c0_74 = arith.constant 0 : index
    %55 = vector.load %arg2[%c0_72, %c128_73, %c0_74] : memref<1x256x4xbf16, #tpu.memory_space<vmem>>, vector<1x16x4xbf16>
    %56 = vector.shape_cast %55 : vector<1x16x4xbf16> to vector<16x4xbf16>
    %c163_75 = arith.constant 163 : index
    %c0_76 = arith.constant 0 : index
    %57 = vector.load %arg9[%c163_75, %c0_76] : memref<342x4xbf16, #tpu.memory_space<vmem>>, vector<16x4xbf16>
    tpu.vector_store %arg9[%c163_75, %c0_76], %56 {strides = array<i32>} : memref<342x4xbf16, #tpu.memory_space<vmem>>, vector<16x4xbf16>,
    %c0_77 = arith.constant 0 : index
    %c144 = arith.constant 144 : index
    %c0_78 = arith.constant 0 : index
    %58 = vector.load %arg1[%c0_77, %c144, %c0_78] : memref<1x256x32xbf16, #tpu.memory_space<vmem>>, vector<1x16x32xbf16>
    %59 = vector.shape_cast %58 : vector<1x16x32xbf16> to vector<16x32xbf16>
    %c181 = arith.constant 181 : index
    %c0_79 = arith.constant 0 : index
    %60 = vector.load %arg8[%c181, %c0_79] : memref<342x32xbf16, #tpu.memory_space<vmem>>, vector<16x32xbf16>
    tpu.vector_store %arg8[%c181, %c0_79], %59 {strides = array<i32>} : memref<342x32xbf16, #tpu.memory_space<vmem>>, vector<16x32xbf16>,
    %c0_80 = arith.constant 0 : index
    %c144_81 = arith.constant 144 : index
    %c0_82 = arith.constant 0 : index
    %61 = vector.load %arg2[%c0_80, %c144_81, %c0_82] : memref<1x256x4xbf16, #tpu.memory_space<vmem>>, vector<1x16x4xbf16>
    %62 = vector.shape_cast %61 : vector<1x16x4xbf16> to vector<16x4xbf16>
    %c181_83 = arith.constant 181 : index
    %c0_84 = arith.constant 0 : index
    %63 = vector.load %arg9[%c181_83, %c0_84] : memref<342x4xbf16, #tpu.memory_space<vmem>>, vector<16x4xbf16>
    tpu.vector_store %arg9[%c181_83, %c0_84], %62 {strides = array<i32>} : memref<342x4xbf16, #tpu.memory_space<vmem>>, vector<16x4xbf16>,
    %c0_85 = arith.constant 0 : index
    %c160 = arith.constant 160 : index
    %c0_86 = arith.constant 0 : index
    %64 = vector.load %arg1[%c0_85, %c160, %c0_86] : memref<1x256x32xbf16, #tpu.memory_space<vmem>>, vector<1x16x32xbf16>
    %65 = vector.shape_cast %64 : vector<1x16x32xbf16> to vector<16x32xbf16>
    %c199 = arith.constant 199 : index
    %c0_87 = arith.constant 0 : index
    %66 = vector.load %arg8[%c199, %c0_87] : memref<342x32xbf16, #tpu.memory_space<vmem>>, vector<16x32xbf16>
    tpu.vector_store %arg8[%c199, %c0_87], %65 {strides = array<i32>} : memref<342x32xbf16, #tpu.memory_space<vmem>>, vector<16x32xbf16>,
    %c0_88 = arith.constant 0 : index
    %c160_89 = arith.constant 160 : index
    %c0_90 = arith.constant 0 : index
    %67 = vector.load %arg2[%c0_88, %c160_89, %c0_90] : memref<1x256x4xbf16, #tpu.memory_space<vmem>>, vector<1x16x4xbf16>
    %68 = vector.shape_cast %67 : vector<1x16x4xbf16> to vector<16x4xbf16>
    %c199_91 = arith.constant 199 : index
    %c0_92 = arith.constant 0 : index
    %69 = vector.load %arg9[%c199_91, %c0_92] : memref<342x4xbf16, #tpu.memory_space<vmem>>, vector<16x4xbf16>
    tpu.vector_store %arg9[%c199_91, %c0_92], %68 {strides = array<i32>} : memref<342x4xbf16, #tpu.memory_space<vmem>>, vector<16x4xbf16>,
    %c0_93 = arith.constant 0 : index
    %c176 = arith.constant 176 : index
    %c0_94 = arith.constant 0 : index
    %70 = vector.load %arg1[%c0_93, %c176, %c0_94] : memref<1x256x32xbf16, #tpu.memory_space<vmem>>, vector<1x16x32xbf16>
    %71 = vector.shape_cast %70 : vector<1x16x32xbf16> to vector<16x32xbf16>
    %c217 = arith.constant 217 : index
    %c0_95 = arith.constant 0 : index
    %72 = vector.load %arg8[%c217, %c0_95] : memref<342x32xbf16, #tpu.memory_space<vmem>>, vector<16x32xbf16>
    tpu.vector_store %arg8[%c217, %c0_95], %71 {strides = array<i32>} : memref<342x32xbf16, #tpu.memory_space<vmem>>, vector<16x32xbf16>,
    %c0_96 = arith.constant 0 : index
    %c176_97 = arith.constant 176 : index
    %c0_98 = arith.constant 0 : index
    %73 = vector.load %arg2[%c0_96, %c176_97, %c0_98] : memref<1x256x4xbf16, #tpu.memory_space<vmem>>, vector<1x16x4xbf16>
    %74 = vector.shape_cast %73 : vector<1x16x4xbf16> to vector<16x4xbf16>
    %c217_99 = arith.constant 217 : index
    %c0_100 = arith.constant 0 : index
    %75 = vector.load %arg9[%c217_99, %c0_100] : memref<342x4xbf16, #tpu.memory_space<vmem>>, vector<16x4xbf16>
    tpu.vector_store %arg9[%c217_99, %c0_100], %74 {strides = array<i32>} : memref<342x4xbf16, #tpu.memory_space<vmem>>, vector<16x4xbf16>,
    %c0_101 = arith.constant 0 : index
    %c192 = arith.constant 192 : index
    %c0_102 = arith.constant 0 : index
    %76 = vector.load %arg1[%c0_101, %c192, %c0_102] : memref<1x256x32xbf16, #tpu.memory_space<vmem>>, vector<1x16x32xbf16>
    %77 = vector.shape_cast %76 : vector<1x16x32xbf16> to vector<16x32xbf16>
    %c235 = arith.constant 235 : index
    %c0_103 = arith.constant 0 : index
    %78 = vector.load %arg8[%c235, %c0_103] : memref<342x32xbf16, #tpu.memory_space<vmem>>, vector<16x32xbf16>
    tpu.vector_store %arg8[%c235, %c0_103], %77 {strides = array<i32>} : memref<342x32xbf16, #tpu.memory_space<vmem>>, vector<16x32xbf16>,
    %c0_104 = arith.constant 0 : index
    %c192_105 = arith.constant 192 : index
    %c0_106 = arith.constant 0 : index
    %79 = vector.load %arg2[%c0_104, %c192_105, %c0_106] : memref<1x256x4xbf16, #tpu.memory_space<vmem>>, vector<1x16x4xbf16>
    %80 = vector.shape_cast %79 : vector<1x16x4xbf16> to vector<16x4xbf16>
    %c235_107 = arith.constant 235 : index
    %c0_108 = arith.constant 0 : index
    %81 = vector.load %arg9[%c235_107, %c0_108] : memref<342x4xbf16, #tpu.memory_space<vmem>>, vector<16x4xbf16>
    tpu.vector_store %arg9[%c235_107, %c0_108], %80 {strides = array<i32>} : memref<342x4xbf16, #tpu.memory_space<vmem>>, vector<16x4xbf16>,
    %c0_109 = arith.constant 0 : index
    %c208 = arith.constant 208 : index
    %c0_110 = arith.constant 0 : index
    %82 = vector.load %arg1[%c0_109, %c208, %c0_110] : memref<1x256x32xbf16, #tpu.memory_space<vmem>>, vector<1x16x32xbf16>
    %83 = vector.shape_cast %82 : vector<1x16x32xbf16> to vector<16x32xbf16>
    %c253 = arith.constant 253 : index
    %c0_111 = arith.constant 0 : index
    %84 = vector.load %arg8[%c253, %c0_111] : memref<342x32xbf16, #tpu.memory_space<vmem>>, vector<16x32xbf16>
    tpu.vector_store %arg8[%c253, %c0_111], %83 {strides = array<i32>} : memref<342x32xbf16, #tpu.memory_space<vmem>>, vector<16x32xbf16>,
    %c0_112 = arith.constant 0 : index
    %c208_113 = arith.constant 208 : index
    %c0_114 = arith.constant 0 : index
    %85 = vector.load %arg2[%c0_112, %c208_113, %c0_114] : memref<1x256x4xbf16, #tpu.memory_space<vmem>>, vector<1x16x4xbf16>
    %86 = vector.shape_cast %85 : vector<1x16x4xbf16> to vector<16x4xbf16>
    %c253_115 = arith.constant 253 : index
    %c0_116 = arith.constant 0 : index
    %87 = vector.load %arg9[%c253_115, %c0_116] : memref<342x4xbf16, #tpu.memory_space<vmem>>, vector<16x4xbf16>
    tpu.vector_store %arg9[%c253_115, %c0_116], %86 {strides = array<i32>} : memref<342x4xbf16, #tpu.memory_space<vmem>>, vector<16x4xbf16>,
    %c0_117 = arith.constant 0 : index
    %c224 = arith.constant 224 : index
    %c0_118 = arith.constant 0 : index
    %88 = vector.load %arg1[%c0_117, %c224, %c0_118] : memref<1x256x32xbf16, #tpu.memory_space<vmem>>, vector<1x16x32xbf16>
    %89 = vector.shape_cast %88 : vector<1x16x32xbf16> to vector<16x32xbf16>
    %c271 = arith.constant 271 : index
    %c0_119 = arith.constant 0 : index
    %90 = vector.load %arg8[%c271, %c0_119] : memref<342x32xbf16, #tpu.memory_space<vmem>>, vector<16x32xbf16>
    tpu.vector_store %arg8[%c271, %c0_119], %89 {strides = array<i32>} : memref<342x32xbf16, #tpu.memory_space<vmem>>, vector<16x32xbf16>,
    %c0_120 = arith.constant 0 : index
    %c224_121 = arith.constant 224 : index
    %c0_122 = arith.constant 0 : index
    %91 = vector.load %arg2[%c0_120, %c224_121, %c0_122] : memref<1x256x4xbf16, #tpu.memory_space<vmem>>, vector<1x16x4xbf16>
    %92 = vector.shape_cast %91 : vector<1x16x4xbf16> to vector<16x4xbf16>
    %c271_123 = arith.constant 271 : index
    %c0_124 = arith.constant 0 : index
    %93 = vector.load %arg9[%c271_123, %c0_124] : memref<342x4xbf16, #tpu.memory_space<vmem>>, vector<16x4xbf16>
    tpu.vector_store %arg9[%c271_123, %c0_124], %92 {strides = array<i32>} : memref<342x4xbf16, #tpu.memory_space<vmem>>, vector<16x4xbf16>,
    %c0_125 = arith.constant 0 : index
    %c240 = arith.constant 240 : index
    %c0_126 = arith.constant 0 : index
    %94 = vector.load %arg1[%c0_125, %c240, %c0_126] : memref<1x256x32xbf16, #tpu.memory_space<vmem>>, vector<1x16x32xbf16>
    %95 = vector.shape_cast %94 : vector<1x16x32xbf16> to vector<16x32xbf16>
    %c289 = arith.constant 289 : index
    %c0_127 = arith.constant 0 : index
    %96 = vector.load %arg8[%c289, %c0_127] : memref<342x32xbf16, #tpu.memory_space<vmem>>, vector<16x32xbf16>
    tpu.vector_store %arg8[%c289, %c0_127], %95 {strides = array<i32>} : memref<342x32xbf16, #tpu.memory_space<vmem>>, vector<16x32xbf16>,
    %c0_128 = arith.constant 0 : index
    %c240_129 = arith.constant 240 : index
    %c0_130 = arith.constant 0 : index
    %97 = vector.load %arg2[%c0_128, %c240_129, %c0_130] : memref<1x256x4xbf16, #tpu.memory_space<vmem>>, vector<1x16x4xbf16>
    %98 = vector.shape_cast %97 : vector<1x16x4xbf16> to vector<16x4xbf16>
    %c289_131 = arith.constant 289 : index
    %c0_132 = arith.constant 0 : index
    %99 = vector.load %arg9[%c289_131, %c0_132] : memref<342x4xbf16, #tpu.memory_space<vmem>>, vector<16x4xbf16>
    tpu.vector_store %arg9[%c289_131, %c0_132], %98 {strides = array<i32>} : memref<342x4xbf16, #tpu.memory_space<vmem>>, vector<16x4xbf16>,
    %cst_133 = arith.constant 0.000000e+00 : f32
    %100 = vector.broadcast %cst_133 : f32 to vector<288x8xf32>
    %c0_134 = arith.constant 0 : index
    %c0_135 = arith.constant 0 : index
    %101 = vector.load %arg8[%c0_134, %c0_135] : memref<342x32xbf16, #tpu.memory_space<vmem>>, vector<288x32xbf16>
    %c0_136 = arith.constant 0 : index
    %c0_137 = arith.constant 0 : index
    %c0_138 = arith.constant 0 : index
    %102 = vector.load %arg3[%c0_136, %c0_137, %c0_138] : memref<9x32x8xbf16, #tpu.memory_space<vmem>>, vector<1x32x8xbf16>
    %103 = vector.shape_cast %102 : vector<1x32x8xbf16> to vector<32x8xbf16>
    %cst_139 = arith.constant dense<0.000000e+00> : vector<288x8xf32>
    %104 = tpu.matmul %101, %103, %cst_139 {dimension_numbers = #tpu.dot_dimension_numbers<[1], [0], [0], [1], [0, 0, 1, 1], [], []>} : vector<288x32xbf16>, vector<32x8xbf16>, vector<288x8xf32> -> vector<288x8xf32>
    %105 = arith.addf %100, %104 : vector<288x8xf32>
    %c0_140 = arith.constant 0 : index
    %c0_141 = arith.constant 0 : index
    %106 = vector.load %arg9[%c0_140, %c0_141] : memref<342x4xbf16, #tpu.memory_space<vmem>>, vector<288x4xbf16>
    %c0_142 = arith.constant 0 : index
    %c0_143 = arith.constant 0 : index
    %c0_144 = arith.constant 0 : index
    %107 = vector.load %arg4[%c0_142, %c0_143, %c0_144] : memref<9x4x8xbf16, #tpu.memory_space<vmem>>, vector<1x4x8xbf16>
    %108 = vector.shape_cast %107 : vector<1x4x8xbf16> to vector<4x8xbf16>
    %cst_145 = arith.constant dense<0.000000e+00> : vector<288x8xf32>
    %109 = tpu.matmul %106, %108, %cst_145 {dimension_numbers = #tpu.dot_dimension_numbers<[1], [0], [0], [1], [0, 0, 1, 1], [], []>} : vector<288x4xbf16>, vector<4x8xbf16>, vector<288x8xf32> -> vector<288x8xf32>
    %110 = arith.addf %105, %109 : vector<288x8xf32>
    %c1 = arith.constant 1 : index
    %c0_146 = arith.constant 0 : index
    %111 = vector.load %arg8[%c1, %c0_146] : memref<342x32xbf16, #tpu.memory_space<vmem>>, vector<288x32xbf16>
    %c1_147 = arith.constant 1 : index
    %c0_148 = arith.constant 0 : index
    %c0_149 = arith.constant 0 : index
    %112 = vector.load %arg3[%c1_147, %c0_148, %c0_149] : memref<9x32x8xbf16, #tpu.memory_space<vmem>>, vector<1x32x8xbf16>
    %113 = vector.shape_cast %112 : vector<1x32x8xbf16> to vector<32x8xbf16>
    %cst_150 = arith.constant dense<0.000000e+00> : vector<288x8xf32>
    %114 = tpu.matmul %111, %113, %cst_150 {dimension_numbers = #tpu.dot_dimension_numbers<[1], [0], [0], [1], [0, 0, 1, 1], [], []>} : vector<288x32xbf16>, vector<32x8xbf16>, vector<288x8xf32> -> vector<288x8xf32>
    %115 = arith.addf %110, %114 : vector<288x8xf32>
    %c1_151 = arith.constant 1 : index
    %c0_152 = arith.constant 0 : index
    %116 = vector.load %arg9[%c1_151, %c0_152] : memref<342x4xbf16, #tpu.memory_space<vmem>>, vector<288x4xbf16>
    %c1_153 = arith.constant 1 : index
    %c0_154 = arith.constant 0 : index
    %c0_155 = arith.constant 0 : index
    %117 = vector.load %arg4[%c1_153, %c0_154, %c0_155] : memref<9x4x8xbf16, #tpu.memory_space<vmem>>, vector<1x4x8xbf16>
    %118 = vector.shape_cast %117 : vector<1x4x8xbf16> to vector<4x8xbf16>
    %cst_156 = arith.constant dense<0.000000e+00> : vector<288x8xf32>
    %119 = tpu.matmul %116, %118, %cst_156 {dimension_numbers = #tpu.dot_dimension_numbers<[1], [0], [0], [1], [0, 0, 1, 1], [], []>} : vector<288x4xbf16>, vector<4x8xbf16>, vector<288x8xf32> -> vector<288x8xf32>
    %120 = arith.addf %115, %119 : vector<288x8xf32>
    %c2 = arith.constant 2 : index
    %c0_157 = arith.constant 0 : index
    %121 = vector.load %arg8[%c2, %c0_157] : memref<342x32xbf16, #tpu.memory_space<vmem>>, vector<288x32xbf16>
    %c2_158 = arith.constant 2 : index
    %c0_159 = arith.constant 0 : index
    %c0_160 = arith.constant 0 : index
    %122 = vector.load %arg3[%c2_158, %c0_159, %c0_160] : memref<9x32x8xbf16, #tpu.memory_space<vmem>>, vector<1x32x8xbf16>
    %123 = vector.shape_cast %122 : vector<1x32x8xbf16> to vector<32x8xbf16>
    %cst_161 = arith.constant dense<0.000000e+00> : vector<288x8xf32>
    %124 = tpu.matmul %121, %123, %cst_161 {dimension_numbers = #tpu.dot_dimension_numbers<[1], [0], [0], [1], [0, 0, 1, 1], [], []>} : vector<288x32xbf16>, vector<32x8xbf16>, vector<288x8xf32> -> vector<288x8xf32>
    %125 = arith.addf %120, %124 : vector<288x8xf32>
    %c2_162 = arith.constant 2 : index
    %c0_163 = arith.constant 0 : index
    %126 = vector.load %arg9[%c2_162, %c0_163] : memref<342x4xbf16, #tpu.memory_space<vmem>>, vector<288x4xbf16>
    %c2_164 = arith.constant 2 : index
    %c0_165 = arith.constant 0 : index
    %c0_166 = arith.constant 0 : index
    %127 = vector.load %arg4[%c2_164, %c0_165, %c0_166] : memref<9x4x8xbf16, #tpu.memory_space<vmem>>, vector<1x4x8xbf16>
    %128 = vector.shape_cast %127 : vector<1x4x8xbf16> to vector<4x8xbf16>
    %cst_167 = arith.constant dense<0.000000e+00> : vector<288x8xf32>
    %129 = tpu.matmul %126, %128, %cst_167 {dimension_numbers = #tpu.dot_dimension_numbers<[1], [0], [0], [1], [0, 0, 1, 1], [], []>} : vector<288x4xbf16>, vector<4x8xbf16>, vector<288x8xf32> -> vector<288x8xf32>
    %130 = arith.addf %125, %129 : vector<288x8xf32>
    %c18 = arith.constant 18 : index
    %c0_168 = arith.constant 0 : index
    %131 = vector.load %arg8[%c18, %c0_168] : memref<342x32xbf16, #tpu.memory_space<vmem>>, vector<288x32xbf16>
    %c3 = arith.constant 3 : index
    %c0_169 = arith.constant 0 : index
    %c0_170 = arith.constant 0 : index
    %132 = vector.load %arg3[%c3, %c0_169, %c0_170] : memref<9x32x8xbf16, #tpu.memory_space<vmem>>, vector<1x32x8xbf16>
    %133 = vector.shape_cast %132 : vector<1x32x8xbf16> to vector<32x8xbf16>
    %cst_171 = arith.constant dense<0.000000e+00> : vector<288x8xf32>
    %134 = tpu.matmul %131, %133, %cst_171 {dimension_numbers = #tpu.dot_dimension_numbers<[1], [0], [0], [1], [0, 0, 1, 1], [], []>} : vector<288x32xbf16>, vector<32x8xbf16>, vector<288x8xf32> -> vector<288x8xf32>
    %135 = arith.addf %130, %134 : vector<288x8xf32>
    %c18_172 = arith.constant 18 : index
    %c0_173 = arith.constant 0 : index
    %136 = vector.load %arg9[%c18_172, %c0_173] : memref<342x4xbf16, #tpu.memory_space<vmem>>, vector<288x4xbf16>
    %c3_174 = arith.constant 3 : index
    %c0_175 = arith.constant 0 : index
    %c0_176 = arith.constant 0 : index
    %137 = vector.load %arg4[%c3_174, %c0_175, %c0_176] : memref<9x4x8xbf16, #tpu.memory_space<vmem>>, vector<1x4x8xbf16>
    %138 = vector.shape_cast %137 : vector<1x4x8xbf16> to vector<4x8xbf16>
    %cst_177 = arith.constant dense<0.000000e+00> : vector<288x8xf32>
    %139 = tpu.matmul %136, %138, %cst_177 {dimension_numbers = #tpu.dot_dimension_numbers<[1], [0], [0], [1], [0, 0, 1, 1], [], []>} : vector<288x4xbf16>, vector<4x8xbf16>, vector<288x8xf32> -> vector<288x8xf32>
    %140 = arith.addf %135, %139 : vector<288x8xf32>
    %c19_178 = arith.constant 19 : index
    %c0_179 = arith.constant 0 : index
    %141 = vector.load %arg8[%c19_178, %c0_179] : memref<342x32xbf16, #tpu.memory_space<vmem>>, vector<288x32xbf16>
    %c4 = arith.constant 4 : index
    %c0_180 = arith.constant 0 : index
    %c0_181 = arith.constant 0 : index
    %142 = vector.load %arg3[%c4, %c0_180, %c0_181] : memref<9x32x8xbf16, #tpu.memory_space<vmem>>, vector<1x32x8xbf16>
    %143 = vector.shape_cast %142 : vector<1x32x8xbf16> to vector<32x8xbf16>
    %cst_182 = arith.constant dense<0.000000e+00> : vector<288x8xf32>
    %144 = tpu.matmul %141, %143, %cst_182 {dimension_numbers = #tpu.dot_dimension_numbers<[1], [0], [0], [1], [0, 0, 1, 1], [], []>} : vector<288x32xbf16>, vector<32x8xbf16>, vector<288x8xf32> -> vector<288x8xf32>
    %145 = arith.addf %140, %144 : vector<288x8xf32>
    %c19_183 = arith.constant 19 : index
    %c0_184 = arith.constant 0 : index
    %146 = vector.load %arg9[%c19_183, %c0_184] : memref<342x4xbf16, #tpu.memory_space<vmem>>, vector<288x4xbf16>
    %c4_185 = arith.constant 4 : index
    %c0_186 = arith.constant 0 : index
    %c0_187 = arith.constant 0 : index
    %147 = vector.load %arg4[%c4_185, %c0_186, %c0_187] : memref<9x4x8xbf16, #tpu.memory_space<vmem>>, vector<1x4x8xbf16>
    %148 = vector.shape_cast %147 : vector<1x4x8xbf16> to vector<4x8xbf16>
    %cst_188 = arith.constant dense<0.000000e+00> : vector<288x8xf32>
    %149 = tpu.matmul %146, %148, %cst_188 {dimension_numbers = #tpu.dot_dimension_numbers<[1], [0], [0], [1], [0, 0, 1, 1], [], []>} : vector<288x4xbf16>, vector<4x8xbf16>, vector<288x8xf32> -> vector<288x8xf32>
    %150 = arith.addf %145, %149 : vector<288x8xf32>
    %c20 = arith.constant 20 : index
    %c0_189 = arith.constant 0 : index
    %151 = vector.load %arg8[%c20, %c0_189] : memref<342x32xbf16, #tpu.memory_space<vmem>>, vector<288x32xbf16>
    %c5 = arith.constant 5 : index
    %c0_190 = arith.constant 0 : index
    %c0_191 = arith.constant 0 : index
    %152 = vector.load %arg3[%c5, %c0_190, %c0_191] : memref<9x32x8xbf16, #tpu.memory_space<vmem>>, vector<1x32x8xbf16>
    %153 = vector.shape_cast %152 : vector<1x32x8xbf16> to vector<32x8xbf16>
    %cst_192 = arith.constant dense<0.000000e+00> : vector<288x8xf32>
    %154 = tpu.matmul %151, %153, %cst_192 {dimension_numbers = #tpu.dot_dimension_numbers<[1], [0], [0], [1], [0, 0, 1, 1], [], []>} : vector<288x32xbf16>, vector<32x8xbf16>, vector<288x8xf32> -> vector<288x8xf32>
    %155 = arith.addf %150, %154 : vector<288x8xf32>
    %c20_193 = arith.constant 20 : index
    %c0_194 = arith.constant 0 : index
    %156 = vector.load %arg9[%c20_193, %c0_194] : memref<342x4xbf16, #tpu.memory_space<vmem>>, vector<288x4xbf16>
    %c5_195 = arith.constant 5 : index
    %c0_196 = arith.constant 0 : index
    %c0_197 = arith.constant 0 : index
    %157 = vector.load %arg4[%c5_195, %c0_196, %c0_197] : memref<9x4x8xbf16, #tpu.memory_space<vmem>>, vector<1x4x8xbf16>
    %158 = vector.shape_cast %157 : vector<1x4x8xbf16> to vector<4x8xbf16>
    %cst_198 = arith.constant dense<0.000000e+00> : vector<288x8xf32>
    %159 = tpu.matmul %156, %158, %cst_198 {dimension_numbers = #tpu.dot_dimension_numbers<[1], [0], [0], [1], [0, 0, 1, 1], [], []>} : vector<288x4xbf16>, vector<4x8xbf16>, vector<288x8xf32> -> vector<288x8xf32>
    %160 = arith.addf %155, %159 : vector<288x8xf32>
    %c36 = arith.constant 36 : index
    %c0_199 = arith.constant 0 : index
    %161 = vector.load %arg8[%c36, %c0_199] : memref<342x32xbf16, #tpu.memory_space<vmem>>, vector<288x32xbf16>
    %c6 = arith.constant 6 : index
    %c0_200 = arith.constant 0 : index
    %c0_201 = arith.constant 0 : index
    %162 = vector.load %arg3[%c6, %c0_200, %c0_201] : memref<9x32x8xbf16, #tpu.memory_space<vmem>>, vector<1x32x8xbf16>
    %163 = vector.shape_cast %162 : vector<1x32x8xbf16> to vector<32x8xbf16>
    %cst_202 = arith.constant dense<0.000000e+00> : vector<288x8xf32>
    %164 = tpu.matmul %161, %163, %cst_202 {dimension_numbers = #tpu.dot_dimension_numbers<[1], [0], [0], [1], [0, 0, 1, 1], [], []>} : vector<288x32xbf16>, vector<32x8xbf16>, vector<288x8xf32> -> vector<288x8xf32>
    %165 = arith.addf %160, %164 : vector<288x8xf32>
    %c36_203 = arith.constant 36 : index
    %c0_204 = arith.constant 0 : index
    %166 = vector.load %arg9[%c36_203, %c0_204] : memref<342x4xbf16, #tpu.memory_space<vmem>>, vector<288x4xbf16>
    %c6_205 = arith.constant 6 : index
    %c0_206 = arith.constant 0 : index
    %c0_207 = arith.constant 0 : index
    %167 = vector.load %arg4[%c6_205, %c0_206, %c0_207] : memref<9x4x8xbf16, #tpu.memory_space<vmem>>, vector<1x4x8xbf16>
    %168 = vector.shape_cast %167 : vector<1x4x8xbf16> to vector<4x8xbf16>
    %cst_208 = arith.constant dense<0.000000e+00> : vector<288x8xf32>
    %169 = tpu.matmul %166, %168, %cst_208 {dimension_numbers = #tpu.dot_dimension_numbers<[1], [0], [0], [1], [0, 0, 1, 1], [], []>} : vector<288x4xbf16>, vector<4x8xbf16>, vector<288x8xf32> -> vector<288x8xf32>
    %170 = arith.addf %165, %169 : vector<288x8xf32>
    %c37_209 = arith.constant 37 : index
    %c0_210 = arith.constant 0 : index
    %171 = vector.load %arg8[%c37_209, %c0_210] : memref<342x32xbf16, #tpu.memory_space<vmem>>, vector<288x32xbf16>
    %c7 = arith.constant 7 : index
    %c0_211 = arith.constant 0 : index
    %c0_212 = arith.constant 0 : index
    %172 = vector.load %arg3[%c7, %c0_211, %c0_212] : memref<9x32x8xbf16, #tpu.memory_space<vmem>>, vector<1x32x8xbf16>
    %173 = vector.shape_cast %172 : vector<1x32x8xbf16> to vector<32x8xbf16>
    %cst_213 = arith.constant dense<0.000000e+00> : vector<288x8xf32>
    %174 = tpu.matmul %171, %173, %cst_213 {dimension_numbers = #tpu.dot_dimension_numbers<[1], [0], [0], [1], [0, 0, 1, 1], [], []>} : vector<288x32xbf16>, vector<32x8xbf16>, vector<288x8xf32> -> vector<288x8xf32>
    %175 = arith.addf %170, %174 : vector<288x8xf32>
    %c37_214 = arith.constant 37 : index
    %c0_215 = arith.constant 0 : index
    %176 = vector.load %arg9[%c37_214, %c0_215] : memref<342x4xbf16, #tpu.memory_space<vmem>>, vector<288x4xbf16>
    %c7_216 = arith.constant 7 : index
    %c0_217 = arith.constant 0 : index
    %c0_218 = arith.constant 0 : index
    %177 = vector.load %arg4[%c7_216, %c0_217, %c0_218] : memref<9x4x8xbf16, #tpu.memory_space<vmem>>, vector<1x4x8xbf16>
    %178 = vector.shape_cast %177 : vector<1x4x8xbf16> to vector<4x8xbf16>
    %cst_219 = arith.constant dense<0.000000e+00> : vector<288x8xf32>
    %179 = tpu.matmul %176, %178, %cst_219 {dimension_numbers = #tpu.dot_dimension_numbers<[1], [0], [0], [1], [0, 0, 1, 1], [], []>} : vector<288x4xbf16>, vector<4x8xbf16>, vector<288x8xf32> -> vector<288x8xf32>
    %180 = arith.addf %175, %179 : vector<288x8xf32>
    %c38 = arith.constant 38 : index
    %c0_220 = arith.constant 0 : index
    %181 = vector.load %arg8[%c38, %c0_220] : memref<342x32xbf16, #tpu.memory_space<vmem>>, vector<288x32xbf16>
    %c8 = arith.constant 8 : index
    %c0_221 = arith.constant 0 : index
    %c0_222 = arith.constant 0 : index
    %182 = vector.load %arg3[%c8, %c0_221, %c0_222] : memref<9x32x8xbf16, #tpu.memory_space<vmem>>, vector<1x32x8xbf16>
    %183 = vector.shape_cast %182 : vector<1x32x8xbf16> to vector<32x8xbf16>
    %cst_223 = arith.constant dense<0.000000e+00> : vector<288x8xf32>
    %184 = tpu.matmul %181, %183, %cst_223 {dimension_numbers = #tpu.dot_dimension_numbers<[1], [0], [0], [1], [0, 0, 1, 1], [], []>} : vector<288x32xbf16>, vector<32x8xbf16>, vector<288x8xf32> -> vector<288x8xf32>
    %185 = arith.addf %180, %184 : vector<288x8xf32>
    %c38_224 = arith.constant 38 : index
    %c0_225 = arith.constant 0 : index
    %186 = vector.load %arg9[%c38_224, %c0_225] : memref<342x4xbf16, #tpu.memory_space<vmem>>, vector<288x4xbf16>
    %c8_226 = arith.constant 8 : index
    %c0_227 = arith.constant 0 : index
    %c0_228 = arith.constant 0 : index
    %187 = vector.load %arg4[%c8_226, %c0_227, %c0_228] : memref<9x4x8xbf16, #tpu.memory_space<vmem>>, vector<1x4x8xbf16>
    %188 = vector.shape_cast %187 : vector<1x4x8xbf16> to vector<4x8xbf16>
    %cst_229 = arith.constant dense<0.000000e+00> : vector<288x8xf32>
    %189 = tpu.matmul %186, %188, %cst_229 {dimension_numbers = #tpu.dot_dimension_numbers<[1], [0], [0], [1], [0, 0, 1, 1], [], []>} : vector<288x4xbf16>, vector<4x8xbf16>, vector<288x8xf32> -> vector<288x8xf32>
    %190 = arith.addf %185, %189 : vector<288x8xf32>
    %c0_230 = arith.constant 0 : index
    %c0_231 = arith.constant 0 : index
    %191 = vector.load %arg5[%c0_230, %c0_231] : memref<1x8xf32, #tpu.memory_space<vmem>>, vector<1x8xf32>
    %192 = vector.shape_cast %191 : vector<1x8xf32> to vector<8xf32>
    %193 = vector.shape_cast %192 : vector<8xf32> to vector<1x8xf32>
    %194 = vector.broadcast %193 : vector<1x8xf32> to vector<288x8xf32>
    %195 = arith.mulf %190, %194 : vector<288x8xf32>
    %c0_232 = arith.constant 0 : index
    %c0_233 = arith.constant 0 : index
    %196 = vector.load %arg6[%c0_232, %c0_233] : memref<1x8xf32, #tpu.memory_space<vmem>>, vector<1x8xf32>
    %197 = vector.shape_cast %196 : vector<1x8xf32> to vector<8xf32>
    %198 = vector.shape_cast %197 : vector<8xf32> to vector<1x8xf32>
    %199 = vector.broadcast %198 : vector<1x8xf32> to vector<288x8xf32>
    %200 = arith.addf %195, %199 : vector<288x8xf32>
    %201 = vector.extract_strided_slice %200 {offsets = [0, 0], sizes = [16, 8], strides = [1, 1]} : vector<288x8xf32> to vector<16x8xf32>
    %c0_234 = arith.constant 0 : index
    %c0_235 = arith.constant 0 : index
    %c0_236 = arith.constant 0 : index
    %c0_237 = arith.constant 0 : index
    %202 = vector.load %arg7[%c0_234, %c0_235, %c0_236, %c0_237] : memref<1x16x16x8xf32, #tpu.memory_space<vmem>>, vector<1x1x16x8xf32>
    %203 = vector.shape_cast %202 : vector<1x1x16x8xf32> to vector<16x8xf32>
    %204 = vector.shape_cast %201 : vector<16x8xf32> to vector<1x1x16x8xf32>
    tpu.vector_store %arg7[%c0_234, %c0_235, %c0_236, %c0_237], %204 {strides = array<i32>} : memref<1x16x16x8xf32, #tpu.memory_space<vmem>>, vector<1x1x16x8xf32>,
    %205 = vector.extract_strided_slice %200 {offsets = [18, 0], sizes = [16, 8], strides = [1, 1]} : vector<288x8xf32> to vector<16x8xf32>
    %c0_238 = arith.constant 0 : index
    %c1_239 = arith.constant 1 : index
    %c0_240 = arith.constant 0 : index
    %c0_241 = arith.constant 0 : index
    %206 = vector.load %arg7[%c0_238, %c1_239, %c0_240, %c0_241] : memref<1x16x16x8xf32, #tpu.memory_space<vmem>>, vector<1x1x16x8xf32>
    %207 = vector.shape_cast %206 : vector<1x1x16x8xf32> to vector<16x8xf32>
    %208 = vector.shape_cast %205 : vector<16x8xf32> to vector<1x1x16x8xf32>
    tpu.vector_store %arg7[%c0_238, %c1_239, %c0_240, %c0_241], %208 {strides = array<i32>} : memref<1x16x16x8xf32, #tpu.memory_space<vmem>>, vector<1x1x16x8xf32>,
    %209 = vector.extract_strided_slice %200 {offsets = [36, 0], sizes = [16, 8], strides = [1, 1]} : vector<288x8xf32> to vector<16x8xf32>
    %c0_242 = arith.constant 0 : index
    %c2_243 = arith.constant 2 : index
    %c0_244 = arith.constant 0 : index
    %c0_245 = arith.constant 0 : index
    %210 = vector.load %arg7[%c0_242, %c2_243, %c0_244, %c0_245] : memref<1x16x16x8xf32, #tpu.memory_space<vmem>>, vector<1x1x16x8xf32>
    %211 = vector.shape_cast %210 : vector<1x1x16x8xf32> to vector<16x8xf32>
    %212 = vector.shape_cast %209 : vector<16x8xf32> to vector<1x1x16x8xf32>
    tpu.vector_store %arg7[%c0_242, %c2_243, %c0_244, %c0_245], %212 {strides = array<i32>} : memref<1x16x16x8xf32, #tpu.memory_space<vmem>>, vector<1x1x16x8xf32>,
    %213 = vector.extract_strided_slice %200 {offsets = [54, 0], sizes = [16, 8], strides = [1, 1]} : vector<288x8xf32> to vector<16x8xf32>
    %c0_246 = arith.constant 0 : index
    %c3_247 = arith.constant 3 : index
    %c0_248 = arith.constant 0 : index
    %c0_249 = arith.constant 0 : index
    %214 = vector.load %arg7[%c0_246, %c3_247, %c0_248, %c0_249] : memref<1x16x16x8xf32, #tpu.memory_space<vmem>>, vector<1x1x16x8xf32>
    %215 = vector.shape_cast %214 : vector<1x1x16x8xf32> to vector<16x8xf32>
    %216 = vector.shape_cast %213 : vector<16x8xf32> to vector<1x1x16x8xf32>
    tpu.vector_store %arg7[%c0_246, %c3_247, %c0_248, %c0_249], %216 {strides = array<i32>} : memref<1x16x16x8xf32, #tpu.memory_space<vmem>>, vector<1x1x16x8xf32>,
    %217 = vector.extract_strided_slice %200 {offsets = [72, 0], sizes = [16, 8], strides = [1, 1]} : vector<288x8xf32> to vector<16x8xf32>
    %c0_250 = arith.constant 0 : index
    %c4_251 = arith.constant 4 : index
    %c0_252 = arith.constant 0 : index
    %c0_253 = arith.constant 0 : index
    %218 = vector.load %arg7[%c0_250, %c4_251, %c0_252, %c0_253] : memref<1x16x16x8xf32, #tpu.memory_space<vmem>>, vector<1x1x16x8xf32>
    %219 = vector.shape_cast %218 : vector<1x1x16x8xf32> to vector<16x8xf32>
    %220 = vector.shape_cast %217 : vector<16x8xf32> to vector<1x1x16x8xf32>
    tpu.vector_store %arg7[%c0_250, %c4_251, %c0_252, %c0_253], %220 {strides = array<i32>} : memref<1x16x16x8xf32, #tpu.memory_space<vmem>>, vector<1x1x16x8xf32>,
    %221 = vector.extract_strided_slice %200 {offsets = [90, 0], sizes = [16, 8], strides = [1, 1]} : vector<288x8xf32> to vector<16x8xf32>
    %c0_254 = arith.constant 0 : index
    %c5_255 = arith.constant 5 : index
    %c0_256 = arith.constant 0 : index
    %c0_257 = arith.constant 0 : index
    %222 = vector.load %arg7[%c0_254, %c5_255, %c0_256, %c0_257] : memref<1x16x16x8xf32, #tpu.memory_space<vmem>>, vector<1x1x16x8xf32>
    %223 = vector.shape_cast %222 : vector<1x1x16x8xf32> to vector<16x8xf32>
    %224 = vector.shape_cast %221 : vector<16x8xf32> to vector<1x1x16x8xf32>
    tpu.vector_store %arg7[%c0_254, %c5_255, %c0_256, %c0_257], %224 {strides = array<i32>} : memref<1x16x16x8xf32, #tpu.memory_space<vmem>>, vector<1x1x16x8xf32>,
    %225 = vector.extract_strided_slice %200 {offsets = [108, 0], sizes = [16, 8], strides = [1, 1]} : vector<288x8xf32> to vector<16x8xf32>
    %c0_258 = arith.constant 0 : index
    %c6_259 = arith.constant 6 : index
    %c0_260 = arith.constant 0 : index
    %c0_261 = arith.constant 0 : index
    %226 = vector.load %arg7[%c0_258, %c6_259, %c0_260, %c0_261] : memref<1x16x16x8xf32, #tpu.memory_space<vmem>>, vector<1x1x16x8xf32>
    %227 = vector.shape_cast %226 : vector<1x1x16x8xf32> to vector<16x8xf32>
    %228 = vector.shape_cast %225 : vector<16x8xf32> to vector<1x1x16x8xf32>
    tpu.vector_store %arg7[%c0_258, %c6_259, %c0_260, %c0_261], %228 {strides = array<i32>} : memref<1x16x16x8xf32, #tpu.memory_space<vmem>>, vector<1x1x16x8xf32>,
    %229 = vector.extract_strided_slice %200 {offsets = [126, 0], sizes = [16, 8], strides = [1, 1]} : vector<288x8xf32> to vector<16x8xf32>
    %c0_262 = arith.constant 0 : index
    %c7_263 = arith.constant 7 : index
    %c0_264 = arith.constant 0 : index
    %c0_265 = arith.constant 0 : index
    %230 = vector.load %arg7[%c0_262, %c7_263, %c0_264, %c0_265] : memref<1x16x16x8xf32, #tpu.memory_space<vmem>>, vector<1x1x16x8xf32>
    %231 = vector.shape_cast %230 : vector<1x1x16x8xf32> to vector<16x8xf32>
    %232 = vector.shape_cast %229 : vector<16x8xf32> to vector<1x1x16x8xf32>
    tpu.vector_store %arg7[%c0_262, %c7_263, %c0_264, %c0_265], %232 {strides = array<i32>} : memref<1x16x16x8xf32, #tpu.memory_space<vmem>>, vector<1x1x16x8xf32>,
    %233 = vector.extract_strided_slice %200 {offsets = [144, 0], sizes = [16, 8], strides = [1, 1]} : vector<288x8xf32> to vector<16x8xf32>
    %c0_266 = arith.constant 0 : index
    %c8_267 = arith.constant 8 : index
    %c0_268 = arith.constant 0 : index
    %c0_269 = arith.constant 0 : index
    %234 = vector.load %arg7[%c0_266, %c8_267, %c0_268, %c0_269] : memref<1x16x16x8xf32, #tpu.memory_space<vmem>>, vector<1x1x16x8xf32>
    %235 = vector.shape_cast %234 : vector<1x1x16x8xf32> to vector<16x8xf32>
    %236 = vector.shape_cast %233 : vector<16x8xf32> to vector<1x1x16x8xf32>
    tpu.vector_store %arg7[%c0_266, %c8_267, %c0_268, %c0_269], %236 {strides = array<i32>} : memref<1x16x16x8xf32, #tpu.memory_space<vmem>>, vector<1x1x16x8xf32>,
    %237 = vector.extract_strided_slice %200 {offsets = [162, 0], sizes = [16, 8], strides = [1, 1]} : vector<288x8xf32> to vector<16x8xf32>
    %c0_270 = arith.constant 0 : index
    %c9 = arith.constant 9 : index
    %c0_271 = arith.constant 0 : index
    %c0_272 = arith.constant 0 : index
    %238 = vector.load %arg7[%c0_270, %c9, %c0_271, %c0_272] : memref<1x16x16x8xf32, #tpu.memory_space<vmem>>, vector<1x1x16x8xf32>
    %239 = vector.shape_cast %238 : vector<1x1x16x8xf32> to vector<16x8xf32>
    %240 = vector.shape_cast %237 : vector<16x8xf32> to vector<1x1x16x8xf32>
    tpu.vector_store %arg7[%c0_270, %c9, %c0_271, %c0_272], %240 {strides = array<i32>} : memref<1x16x16x8xf32, #tpu.memory_space<vmem>>, vector<1x1x16x8xf32>,
    %241 = vector.extract_strided_slice %200 {offsets = [180, 0], sizes = [16, 8], strides = [1, 1]} : vector<288x8xf32> to vector<16x8xf32>
    %c0_273 = arith.constant 0 : index
    %c10 = arith.constant 10 : index
    %c0_274 = arith.constant 0 : index
    %c0_275 = arith.constant 0 : index
    %242 = vector.load %arg7[%c0_273, %c10, %c0_274, %c0_275] : memref<1x16x16x8xf32, #tpu.memory_space<vmem>>, vector<1x1x16x8xf32>
    %243 = vector.shape_cast %242 : vector<1x1x16x8xf32> to vector<16x8xf32>
    %244 = vector.shape_cast %241 : vector<16x8xf32> to vector<1x1x16x8xf32>
    tpu.vector_store %arg7[%c0_273, %c10, %c0_274, %c0_275], %244 {strides = array<i32>} : memref<1x16x16x8xf32, #tpu.memory_space<vmem>>, vector<1x1x16x8xf32>,
    %245 = vector.extract_strided_slice %200 {offsets = [198, 0], sizes = [16, 8], strides = [1, 1]} : vector<288x8xf32> to vector<16x8xf32>
    %c0_276 = arith.constant 0 : index
    %c11 = arith.constant 11 : index
    %c0_277 = arith.constant 0 : index
    %c0_278 = arith.constant 0 : index
    %246 = vector.load %arg7[%c0_276, %c11, %c0_277, %c0_278] : memref<1x16x16x8xf32, #tpu.memory_space<vmem>>, vector<1x1x16x8xf32>
    %247 = vector.shape_cast %246 : vector<1x1x16x8xf32> to vector<16x8xf32>
    %248 = vector.shape_cast %245 : vector<16x8xf32> to vector<1x1x16x8xf32>
    tpu.vector_store %arg7[%c0_276, %c11, %c0_277, %c0_278], %248 {strides = array<i32>} : memref<1x16x16x8xf32, #tpu.memory_space<vmem>>, vector<1x1x16x8xf32>,
    %249 = vector.extract_strided_slice %200 {offsets = [216, 0], sizes = [16, 8], strides = [1, 1]} : vector<288x8xf32> to vector<16x8xf32>
    %c0_279 = arith.constant 0 : index
    %c12 = arith.constant 12 : index
    %c0_280 = arith.constant 0 : index
    %c0_281 = arith.constant 0 : index
    %250 = vector.load %arg7[%c0_279, %c12, %c0_280, %c0_281] : memref<1x16x16x8xf32, #tpu.memory_space<vmem>>, vector<1x1x16x8xf32>
    %251 = vector.shape_cast %250 : vector<1x1x16x8xf32> to vector<16x8xf32>
    %252 = vector.shape_cast %249 : vector<16x8xf32> to vector<1x1x16x8xf32>
    tpu.vector_store %arg7[%c0_279, %c12, %c0_280, %c0_281], %252 {strides = array<i32>} : memref<1x16x16x8xf32, #tpu.memory_space<vmem>>, vector<1x1x16x8xf32>,
    %253 = vector.extract_strided_slice %200 {offsets = [234, 0], sizes = [16, 8], strides = [1, 1]} : vector<288x8xf32> to vector<16x8xf32>
    %c0_282 = arith.constant 0 : index
    %c13 = arith.constant 13 : index
    %c0_283 = arith.constant 0 : index
    %c0_284 = arith.constant 0 : index
    %254 = vector.load %arg7[%c0_282, %c13, %c0_283, %c0_284] : memref<1x16x16x8xf32, #tpu.memory_space<vmem>>, vector<1x1x16x8xf32>
    %255 = vector.shape_cast %254 : vector<1x1x16x8xf32> to vector<16x8xf32>
    %256 = vector.shape_cast %253 : vector<16x8xf32> to vector<1x1x16x8xf32>
    tpu.vector_store %arg7[%c0_282, %c13, %c0_283, %c0_284], %256 {strides = array<i32>} : memref<1x16x16x8xf32, #tpu.memory_space<vmem>>, vector<1x1x16x8xf32>,
    %257 = vector.extract_strided_slice %200 {offsets = [252, 0], sizes = [16, 8], strides = [1, 1]} : vector<288x8xf32> to vector<16x8xf32>
    %c0_285 = arith.constant 0 : index
    %c14 = arith.constant 14 : index
    %c0_286 = arith.constant 0 : index
    %c0_287 = arith.constant 0 : index
    %258 = vector.load %arg7[%c0_285, %c14, %c0_286, %c0_287] : memref<1x16x16x8xf32, #tpu.memory_space<vmem>>, vector<1x1x16x8xf32>
    %259 = vector.shape_cast %258 : vector<1x1x16x8xf32> to vector<16x8xf32>
    %260 = vector.shape_cast %257 : vector<16x8xf32> to vector<1x1x16x8xf32>
    tpu.vector_store %arg7[%c0_285, %c14, %c0_286, %c0_287], %260 {strides = array<i32>} : memref<1x16x16x8xf32, #tpu.memory_space<vmem>>, vector<1x1x16x8xf32>,
    %261 = vector.extract_strided_slice %200 {offsets = [270, 0], sizes = [16, 8], strides = [1, 1]} : vector<288x8xf32> to vector<16x8xf32>
    %c0_288 = arith.constant 0 : index
    %c15 = arith.constant 15 : index
    %c0_289 = arith.constant 0 : index
    %c0_290 = arith.constant 0 : index
    %262 = vector.load %arg7[%c0_288, %c15, %c0_289, %c0_290] : memref<1x16x16x8xf32, #tpu.memory_space<vmem>>, vector<1x1x16x8xf32>
    %263 = vector.shape_cast %262 : vector<1x1x16x8xf32> to vector<16x8xf32>
    %264 = vector.shape_cast %261 : vector<16x8xf32> to vector<1x1x16x8xf32>
    tpu.vector_store %arg7[%c0_288, %c15, %c0_289, %c0_290], %264 {strides = array<i32>} : memref<1x16x16x8xf32, #tpu.memory_space<vmem>>, vector<1x1x16x8xf32>,
    return
  }
  func.func @transform_0(%arg0: i32) -> (i32, i32, i32) {
    %c0_i32 = arith.constant 0 : i32
    %c0_i32_0 = arith.constant 0 : i32
    %c0_i32_1 = arith.constant 0 : i32
    return %arg0, %c0_i32, %c0_i32_0 : i32, i32, i32
  }
  func.func @transform_1(%arg0: i32) -> (i32, i32, i32) {
    %c0_i32 = arith.constant 0 : i32
    %c0_i32_0 = arith.constant 0 : i32
    %c0_i32_1 = arith.constant 0 : i32
    return %arg0, %c0_i32, %c0_i32_0 : i32, i32, i32
  }
  func.func @transform_2(%arg0: i32) -> (i32, i32, i32) {
    %c0_i32 = arith.constant 0 : i32
    %c0_i32_0 = arith.constant 0 : i32
    %c0_i32_1 = arith.constant 0 : i32
    %c0_i32_2 = arith.constant 0 : i32
    return %c0_i32, %c0_i32_0, %c0_i32_1 : i32, i32, i32
  }
  func.func @transform_3(%arg0: i32) -> (i32, i32, i32) {
    %c0_i32 = arith.constant 0 : i32
    %c0_i32_0 = arith.constant 0 : i32
    %c0_i32_1 = arith.constant 0 : i32
    %c0_i32_2 = arith.constant 0 : i32
    return %c0_i32, %c0_i32_0, %c0_i32_1 : i32, i32, i32
  }
  func.func @transform_4(%arg0: i32) -> (i32, i32) {
    %c0_i32 = arith.constant 0 : i32
    %c0_i32_0 = arith.constant 0 : i32
    %c0_i32_1 = arith.constant 0 : i32
    return %c0_i32, %c0_i32_0 : i32, i32
  }
  func.func @transform_5(%arg0: i32) -> (i32, i32) {
    %c0_i32 = arith.constant 0 : i32
    %c0_i32_0 = arith.constant 0 : i32
    %c0_i32_1 = arith.constant 0 : i32
    return %c0_i32, %c0_i32_0 : i32, i32
  }
  func.func @transform_6(%arg0: i32) -> (i32, i32, i32, i32) {
    %c0_i32 = arith.constant 0 : i32
    %c0_i32_0 = arith.constant 0 : i32
    %c0_i32_1 = arith.constant 0 : i32
    %c0_i32_2 = arith.constant 0 : i32
    return %arg0, %c0_i32, %c0_i32_0, %c0_i32_1 : i32, i32, i32, i32
  }
}

</mosaic_0001>

<llo_original>
// kernel: psp_module_forward.2
$region0: #{psp_module_forward.2}
  #allocation0 [shape = 'u32[]', space=smem, size = 0x4, offset = 0x4, fixed_abs, tag = 'smem constant byte address 0x4 - core index']
  #allocation1 [shape = 'u32[144,128]{1,0:T(1,128)}', space=vmem, size = 0x12000, scoped, tag = 'internal scratch']
  %s0 = inlined_call_operand.vmem [shape: bf16[2,256,4], index: 0, kind: input, shape index: {}]
  %s1 = inlined_call_operand.vmem [shape: bf16[50,256], index: 1, kind: input, shape index: {}]
  %s2 = inlined_call_operand.vmem [shape: bf16[4,32], index: 2, kind: input, shape index: {}]
  %s3 = inlined_call_operand.vmem [shape: f32[50,32], index: 3, kind: input, shape index: {}]
  %s4 = inlined_call_operand.vmem [shape: f32[1,32], index: 4, kind: input, shape index: {}]
  %s5 = inlined_call_operand.vmem [shape: bf16[256,50], index: 5, kind: input, shape index: {}]
  %s6 = inlined_call_operand.vmem [shape: bf16[2,256,32], index: 6, kind: output, shape index: {}]
  %s7 = sld [smem:[#allocation0]]
  $region57: #{psp_module_forward.2} parent=0
    _
  %s9 = ssub.s32 1, %s7
  %s10 = scalar_select 0, %s9, %s7
  loop: start=0, step=1, limit=4
  $region2: #{psp_module_forward.2} parent=0 // loop_pre_header
    _
  $region3: #{psp_module_forward.2} parent=0 // loop_header
    %s12 = sphi 0, %s16
    %p13 = scmp.ge.s32.totalorder %s12, 4
    %s22 = sphi 0, %s24
    %s25 = sphi 0, %s22
    %s26 = sphi 0, %s25
    %s42 = sphi 0, %s26
    %s46 = sphi 0, %s46
    %s48 = sphi 0, %s46
    %s49 = sphi 0, %s48
    %s63 = sphi 0, %s49
    %s67 = sphi 0, %s67
    %s69 = sphi 0, %s67
    %s70 = sphi 0, %s69
    %s84 = sphi 0, %s70
    %s88 = sphi 0, %s88
    %s90 = sphi 0, %s88
    %s91 = sphi 0, %s90
    %s105 = sphi 0, %s91
    %s109 = sphi 0, %s109
    %s111 = sphi 0, %s109
    %s112 = sphi 0, %s111
    %s126 = sphi 0, %s112
    %s130 = sphi 0, %s130
    %s132 = sphi 0, %s130
    %s133 = sphi 0, %s132
    %s147 = sphi 0, %s133
    %s153 = sphi 0, %s155
    %s156 = sphi 0, %s153
    %s157 = sphi 0, %s156
    %s173 = sphi 0, %s157
  $region4: #{psp_module_forward.2} parent=0 // loop_header_branch
    %15 = sbr.rel (%p13) target = $region8
  $region5: #{psp_module_forward.2} parent=0 // loop_body
    %s17 = ssub.s32 %s12, 1
    %s18 = ssub.s32 %s12, 2
    %s19 = sadd.s32 %s12, 1
    %s20 = ssub.s32 %s12, %s19
    %p21 = scmp.eq.s32.totalorder %s20, 0
    %s23 = sadd.s32 %s22, 1
    %s24 = scalar_select %p21, %s22, %s23
    %p27 = pneg %p21
    %p28 = scmp.eq.s32.totalorder %s12, 1
    %p29 = por %p27, %p28
    %p30 = scmp.ne.s32.totalorder %s22, %s25
    %p31 = scmp.eq.s32.totalorder %s12, 0
    %p32 = por %p30, %p31
    %p33 = scmp.ne.s32.totalorder %s22, %s25
    %p34 = scmp.eq.s32.totalorder %s17, 1
    %p35 = por %p33, %p34
    %p36 = scmp.ne.s32.totalorder %s25, %s26
    %p37 = scmp.eq.s32.totalorder %s17, 0
    %p38 = por %p36, %p37
    %p39 = scmp.ne.s32.totalorder %s25, %s26
    %p40 = scmp.eq.s32.totalorder %s18, 1
    %p41 = por %p39, %p40
    %p43 = scmp.ne.s32.totalorder %s26, %s42
    %p44 = scmp.eq.s32.totalorder %s18, 0
    %p45 = por %p43, %p44
    %s47 = sadd.s32 %s46, 1
    %p50 = scmp.eq.s32.totalorder %s12, 1
    %p51 = scmp.ne.s32.totalorder %s46, %s48
    %p52 = scmp.eq.s32.totalorder %s12, 0
    %p53 = por %p51, %p52
    %p54 = scmp.ne.s32.totalorder %s46, %s48
    %p55 = scmp.eq.s32.totalorder %s17, 1
    %p56 = por %p54, %p55
    %p57 = scmp.ne.s32.totalorder %s48, %s49
    %p58 = scmp.eq.s32.totalorder %s17, 0
    %p59 = por %p57, %p58
    %p60 = scmp.ne.s32.totalorder %s48, %s49
    %p61 = scmp.eq.s32.totalorder %s18, 1
    %p62 = por %p60, %p61
    %p64 = scmp.ne.s32.totalorder %s49, %s63
    %p65 = scmp.eq.s32.totalorder %s18, 0
    %p66 = por %p64, %p65
    %s68 = sadd.s32 %s67, 1
    %p71 = scmp.eq.s32.totalorder %s12, 1
    %p72 = scmp.ne.s32.totalorder %s67, %s69
    %p73 = scmp.eq.s32.totalorder %s12, 0
    %p74 = por %p72, %p73
    %p75 = scmp.ne.s32.totalorder %s67, %s69
    %p76 = scmp.eq.s32.totalorder %s17, 1
    %p77 = por %p75, %p76
    %p78 = scmp.ne.s32.totalorder %s69, %s70
    %p79 = scmp.eq.s32.totalorder %s17, 0
    %p80 = por %p78, %p79
    %p81 = scmp.ne.s32.totalorder %s69, %s70
    %p82 = scmp.eq.s32.totalorder %s18, 1
    %p83 = por %p81, %p82
    %p85 = scmp.ne.s32.totalorder %s70, %s84
    %p86 = scmp.eq.s32.totalorder %s18, 0
    %p87 = por %p85, %p86
    %s89 = sadd.s32 %s88, 1
    %p92 = scmp.eq.s32.totalorder %s12, 1
    %p93 = scmp.ne.s32.totalorder %s88, %s90
    %p94 = scmp.eq.s32.totalorder %s12, 0
    %p95 = por %p93, %p94
    %p96 = scmp.ne.s32.totalorder %s88, %s90
    %p97 = scmp.eq.s32.totalorder %s17, 1
    %p98 = por %p96, %p97
    %p99 = scmp.ne.s32.totalorder %s90, %s91
    %p100 = scmp.eq.s32.totalorder %s17, 0
    %p101 = por %p99, %p100
    %p102 = scmp.ne.s32.totalorder %s90, %s91
    %p103 = scmp.eq.s32.totalorder %s18, 1
    %p104 = por %p102, %p103
    %p106 = scmp.ne.s32.totalorder %s91, %s105
    %p107 = scmp.eq.s32.totalorder %s18, 0
    %p108 = por %p106, %p107
    %s110 = sadd.s32 %s109, 1
    %p113 = scmp.eq.s32.totalorder %s12, 1
    %p114 = scmp.ne.s32.totalorder %s109, %s111
    %p115 = scmp.eq.s32.totalorder %s12, 0
    %p116 = por %p114, %p115
    %p117 = scmp.ne.s32.totalorder %s109, %s111
    %p118 = scmp.eq.s32.totalorder %s17, 1
    %p119 = por %p117, %p118
    %p120 = scmp.ne.s32.totalorder %s111, %s112
    %p121 = scmp.eq.s32.totalorder %s17, 0
    %p122 = por %p120, %p121
    %p123 = scmp.ne.s32.totalorder %s111, %s112
    %p124 = scmp.eq.s32.totalorder %s18, 1
    %p125 = por %p123, %p124
    %p127 = scmp.ne.s32.totalorder %s112, %s126
    %p128 = scmp.eq.s32.totalorder %s18, 0
    %p129 = por %p127, %p128
    %s131 = sadd.s32 %s130, 1
    %p134 = scmp.eq.s32.totalorder %s12, 1
    %p135 = scmp.ne.s32.totalorder %s130, %s132
    %p136 = scmp.eq.s32.totalorder %s12, 0
    %p137 = por %p135, %p136
    %p138 = scmp.ne.s32.totalorder %s130, %s132
    %p139 = scmp.eq.s32.totalorder %s17, 1
    %p140 = por %p138, %p139
    %p141 = scmp.ne.s32.totalorder %s132, %s133
    %p142 = scmp.eq.s32.totalorder %s17, 0
    %p143 = por %p141, %p142
    %p144 = scmp.ne.s32.totalorder %s132, %s133
    %p145 = scmp.eq.s32.totalorder %s18, 1
    %p146 = por %p144, %p145
    %p148 = scmp.ne.s32.totalorder %s133, %s147
    %p149 = scmp.eq.s32.totalorder %s18, 0
    %p150 = por %p148, %p149
    %s151 = ssub.s32 %s12, %s19
    %p152 = scmp.eq.s32.totalorder %s151, 0
    %s154 = sadd.s32 %s153, 1
    %s155 = scalar_select %p152, %s153, %s154
    %p158 = pneg %p152
    %p159 = scmp.eq.s32.totalorder %s12, 1
    %p160 = por %p158, %p159
    %p161 = scmp.ne.s32.totalorder %s153, %s156
    %p162 = scmp.eq.s32.totalorder %s12, 0
    %p163 = por %p161, %p162
    %p164 = scmp.ne.s32.totalorder %s153, %s156
    %p165 = scmp.eq.s32.totalorder %s17, 1
    %p166 = por %p164, %p165
    %p167 = scmp.ne.s32.totalorder %s156, %s157
    %p168 = scmp.eq.s32.totalorder %s17, 0
    %p169 = por %p167, %p168
    %p170 = scmp.ne.s32.totalorder %s156, %s157
    %p171 = scmp.eq.s32.totalorder %s18, 1
    %p172 = por %p170, %p171
    %p174 = scmp.ne.s32.totalorder %s157, %s173
    %p175 = scmp.eq.s32.totalorder %s18, 0
    %p176 = por %p174, %p175
    %p177 = scmp.le.s32.totalorder 1, %s12
    %p178 = scmp.lt.s32.totalorder %s12, 3
    %p179 = pnand %p177, %p178
    %p180 = pneg %p179
    // Predicated region
    $region9: #{psp_module_forward.2} parent=5 // pred_check
      _
    $region10: #{psp_module_forward.2} parent=5 // pred_check_branch
      %182 = sbr.rel (%p179) target = $region12
    $region11: #{psp_module_forward.2} parent=5 // pred_region
      %s183 = ssub.s32 %s12, 1
      // Predicated region
      $region13: #{psp_module_forward.2} parent=11 // pred_check
        %p184 = pneg %p59
      $region14: #{psp_module_forward.2} parent=11 // pred_check_branch
        %186 = sbr.rel (%p184) target = $region16
      $region15: #{psp_module_forward.2} parent=11 // pred_region
        _
      $region16: #{psp_module_forward.2} parent=11 // pred_fallthru
        _
      // Predicated region
      $region17: #{psp_module_forward.2} parent=11 // pred_check
        %p187 = pneg %p80
      $region18: #{psp_module_forward.2} parent=11 // pred_check_branch
        %189 = sbr.rel (%p187) target = $region20
      $region19: #{psp_module_forward.2} parent=11 // pred_region
        _
      $region20: #{psp_module_forward.2} parent=11 // pred_fallthru
        _
      // Predicated region
      $region21: #{psp_module_forward.2} parent=11 // pred_check
        %p190 = pneg %p101
      $region22: #{psp_module_forward.2} parent=11 // pred_check_branch
        %192 = sbr.rel (%p190) target = $region24
      $region23: #{psp_module_forward.2} parent=11 // pred_region
        _
      $region24: #{psp_module_forward.2} parent=11 // pred_fallthru
        _
      // Predicated region
      $region25: #{psp_module_forward.2} parent=11 // pred_check
        %p193 = pneg %p122
      $region26: #{psp_module_forward.2} parent=11 // pred_check_branch
        %195 = sbr.rel (%p193) target = $region28
      $region27: #{psp_module_forward.2} parent=11 // pred_region
        _
      $region28: #{psp_module_forward.2} parent=11 // pred_fallthru
        _
      // Predicated region
      $region29: #{psp_module_forward.2} parent=11 // pred_check
        %p196 = pneg %p143
      $region30: #{psp_module_forward.2} parent=11 // pred_check_branch
        %198 = sbr.rel (%p196) target = $region32
      $region31: #{psp_module_forward.2} parent=11 // pred_region
        _
      $region32: #{psp_module_forward.2} parent=11 // pred_fallthru
        _
    $region12: #{psp_module_forward.2} parent=5 // pred_fallthru
      _
    %p199 = scmp.lt.s32.totalorder %s12, 2
    // Predicated region
    $region33: #{psp_module_forward.2} parent=5 // pred_check
      %p200 = pneg %p199
    $region34: #{psp_module_forward.2} parent=5 // pred_check_branch
      %202 = sbr.rel (%p200) target = $region36
    $region35: #{psp_module_forward.2} parent=5 // pred_region
      // Predicated region
      $region37: #{psp_module_forward.2} parent=35 // pred_check
        %p203 = pneg %p32
      $region38: #{psp_module_forward.2} parent=35 // pred_check_branch
        %205 = sbr.rel (%p203) target = $region40
      $region39: #{psp_module_forward.2} parent=35 // pred_region
        %p206 = scmp.lt.s32.totalorder %s12, 1
        %s207 = scalar_select %p206, %s12, 1
        %s208 = smul.addr %s207, 32
        %s209 = smul.addr %s208, 4
        %s210 = scalar_lea.vmem %s0, %s209
      $region40: #{psp_module_forward.2} parent=35 // pred_fallthru
        _
    $region36: #{psp_module_forward.2} parent=5 // pred_fallthru
      _
    %p211 = scmp.le.s32.totalorder 1, %s12
    %p212 = scmp.lt.s32.totalorder %s12, 3
    %p213 = pnand %p211, %p212
    %p214 = pneg %p213
    // Predicated region
    $region41: #{psp_module_forward.2} parent=5 // pred_check
      _
    $region42: #{psp_module_forward.2} parent=5 // pred_check_branch
      %216 = sbr.rel (%p213) target = $region44
    $region43: #{psp_module_forward.2} parent=5 // pred_region
      %s217 = ssub.s32 %s12, 1
      %p218 = scmp.lt.s32.totalorder %s17, 1
      %s219 = scalar_select %p218, %s17, 1
      %s220 = smul.addr %s219, 32
      %s221 = smul.addr %s220, 4
      %s222 = scalar_lea.vmem %s0, %s221
      %p223 = pneg %p38
      %p224 = pneg %p35
      %p225 = pneg %p59
      %p226 = pneg %p56
      %p227 = pneg %p80
      %p228 = pneg %p77
      %p229 = pneg %p101
      %p230 = pneg %p98
      %p231 = pneg %p122
      %p232 = pneg %p119
      %p233 = pneg %p143
      %p234 = pneg %p140
      %p235 = pneg %p169
      %p236 = pneg %p166
      %p237 = scmp.lt.s32.totalorder %s17, 1
      %s238 = scalar_select %p237, %s17, 1
      %s239 = smul.addr %s238, 32
      %s240 = smul.addr %s239, 4
      %s241 = scalar_lea.vmem %s6, %s240
      %p242 = scmp.lt.s32.totalorder %s17, 1
      %s243 = scalar_select %p242, %s17, 1
      %s244 = smul.addr %s243, 32
      %s245 = smul.addr %s244, 4
      %s246 = scalar_lea.vmem %s0, %s245
      %p247 = scmp.lt.s32.totalorder %s17, 1
      %s248 = scalar_select %p247, %s17, 1
      %s249 = smul.addr %s248, 32
      %s250 = smul.addr %s249, 4
      %s251 = scalar_lea.vmem %s6, %s250
      %v253 = vld [vmem:[%s246] sm:$0xf]
      %v254 = vld [vmem:[%s246 + $0x4] sm:$0xf]
      %v255 = vld [vmem:[%s246 + $0x8] sm:$0xf]
      %v256 = vld [vmem:[%s246 + $0xc] sm:$0xf]
      %v257 = vld [vmem:[%s246 + $0x10] sm:$0xf]
      %v258 = vld [vmem:[%s246 + $0x14] sm:$0xf]
      %v259 = vld [vmem:[%s246 + $0x18] sm:$0xf]
      %v260 = vld [vmem:[%s246 + $0x1c] sm:$0xf]
      %v261 = vld [vmem:[%s246 + $0x20] sm:$0xf]
      %v262 = vld [vmem:[%s246 + $0x24] sm:$0xf]
      %v263 = vld [vmem:[%s246 + $0x28] sm:$0xf]
      %v264 = vld [vmem:[%s246 + $0x2c] sm:$0xf]
      %v265 = vld [vmem:[%s246 + $0x30] sm:$0xf]
      %v266 = vld [vmem:[%s246 + $0x34] sm:$0xf]
      %v267 = vld [vmem:[%s246 + $0x38] sm:$0xf]
      %v268 = vld [vmem:[%s246 + $0x3c] sm:$0xf]
      %v269 = vld [vmem:[%s246 + $0x40] sm:$0xf]
      %v270 = vld [vmem:[%s246 + $0x44] sm:$0xf]
      %v271 = vld [vmem:[%s246 + $0x48] sm:$0xf]
      %v272 = vld [vmem:[%s246 + $0x4c] sm:$0xf]
      %v273 = vld [vmem:[%s246 + $0x50] sm:$0xf]
      %v274 = vld [vmem:[%s246 + $0x54] sm:$0xf]
      %v275 = vld [vmem:[%s246 + $0x58] sm:$0xf]
      %v276 = vld [vmem:[%s246 + $0x5c] sm:$0xf]
      %v277 = vld [vmem:[%s246 + $0x60] sm:$0xf]
      %v278 = vld [vmem:[%s246 + $0x64] sm:$0xf]
      %v279 = vld [vmem:[%s246 + $0x68] sm:$0xf]
      %v280 = vld [vmem:[%s246 + $0x6c] sm:$0xf]
      %v281 = vld [vmem:[%s246 + $0x70] sm:$0xf]
      %v282 = vld [vmem:[%s246 + $0x74] sm:$0xf]
      %v283 = vld [vmem:[%s246 + $0x78] sm:$0xf]
      %v284 = vld [vmem:[%s246 + $0x7c] sm:$0xf]
      %v285 = vld [vmem:[%s1] sm:$0xff]
      %v286 = vld [vmem:[%s1 + $0x8] sm:$0xff]
      %v287 = vld [vmem:[%s1 + $0x10] sm:$0xff]
      %v288 = vld [vmem:[%s1 + $0x18] sm:$0xff]
      %v289 = vld [vmem:[%s1 + $0x20] sm:$0xff]
      %v290 = vld [vmem:[%s1 + $0x28] sm:$0xff]
      %v291 = vld [vmem:[%s1 + $0x30] sm:$0x11]
      %v299 = vunpack.c.l.b16 %v285
      %v300 = vunpack.c.h.b16 %v285
      %v301 = vunpack.c.l.b16 %v286
      %v302 = vunpack.c.h.b16 %v286
      %v303 = vunpack.c.l.b16 %v287
      %v304 = vunpack.c.h.b16 %v287
      %v305 = vunpack.c.l.b16 %v288
      %v306 = vunpack.c.h.b16 %v288
      %v307 = vunpack.c.l.b16 %v289
      %v308 = vunpack.c.h.b16 %v289
      %v309 = vunpack.c.l.b16 %v290
      %v310 = vunpack.c.h.b16 %v290
      %v311 = vunpack.c.l.b16 %v291
      %v312 = vunpack.c.h.b16 %v291
      %v313 = vpack.c.b16 %v301, %v299
      %v314 = vpack.c.b16 %v302, %v300
      %v315 = vpack.c.b16 %v305, %v303
      %v316 = vpack.c.b16 %v306, %v304
      %v317 = vpack.c.b16 %v309, %v307
      %v318 = vpack.c.b16 %v310, %v308
      %v319 = vpack.c.b16 %v311, %v311
      %v320 = vpack.c.b16 %v312, %v312
      %v361 = vunpack.c.l.b16 %v253
      %v362 = vunpack.c.l.b16 %v254
      %v363 = vunpack.c.l.b16 %v255
      %v364 = vunpack.c.l.b16 %v256
      %v365 = vunpack.c.l.b16 %v257
      %v366 = vunpack.c.l.b16 %v258
      %v367 = vunpack.c.l.b16 %v259
      %v368 = vunpack.c.l.b16 %v260
      %v369 = vunpack.c.l.b16 %v261
      %v370 = vunpack.c.l.b16 %v262
      %v371 = vunpack.c.l.b16 %v263
      %v372 = vunpack.c.l.b16 %v264
      %v373 = vunpack.c.l.b16 %v265
      %v374 = vunpack.c.l.b16 %v266
      %v375 = vunpack.c.l.b16 %v267
      %v376 = vunpack.c.l.b16 %v268
      %v377 = vunpack.c.l.b16 %v269
      %v378 = vunpack.c.l.b16 %v270
      %v379 = vunpack.c.l.b16 %v271
      %v380 = vunpack.c.l.b16 %v272
      %v381 = vunpack.c.l.b16 %v273
      %v382 = vunpack.c.l.b16 %v274
      %v383 = vunpack.c.l.b16 %v275
      %v384 = vunpack.c.l.b16 %v276
      %v385 = vunpack.c.l.b16 %v277
      %v386 = vunpack.c.l.b16 %v278
      %v387 = vunpack.c.l.b16 %v279
      %v388 = vunpack.c.l.b16 %v280
      %v389 = vunpack.c.l.b16 %v281
      %v390 = vunpack.c.l.b16 %v282
      %v391 = vunpack.c.l.b16 %v283
      %v392 = vunpack.c.l.b16 %v284
      %v393 = vpack.c.b16 %v362, %v361
      %v394 = vpack.c.b16 %v364, %v363
      %v395 = vpack.c.b16 %v366, %v365
      %v396 = vpack.c.b16 %v368, %v367
      %v397 = vpack.c.b16 %v370, %v369
      %v398 = vpack.c.b16 %v372, %v371
      %v399 = vpack.c.b16 %v374, %v373
      %v400 = vpack.c.b16 %v376, %v375
      %v401 = vpack.c.b16 %v378, %v377
      %v402 = vpack.c.b16 %v380, %v379
      %v403 = vpack.c.b16 %v382, %v381
      %v404 = vpack.c.b16 %v384, %v383
      %v405 = vpack.c.b16 %v386, %v385
      %v406 = vpack.c.b16 %v388, %v387
      %v407 = vpack.c.b16 %v390, %v389
      %v408 = vpack.c.b16 %v392, %v391
      %425 = vmatprep.subr.bf16.mxu0 0
      %426 = vmatpush1.bf16.msra.mxu0 %v393
      %427 = vmatprep.subr.bf16.mxu0 0
      %428 = vmatpush1.bf16.msra.mxu0 %v394
      %429 = vmatprep.subr.bf16.mxu0 0
      %430 = vmatpush1.bf16.msra.mxu0 %v395
      %431 = vmatprep.subr.bf16.mxu0 0
      %432 = vmatpush1.bf16.msra.mxu0 %v396
      %433 = vmatprep.subr.bf16.mxu0 0
      %434 = vmatpush1.bf16.msra.mxu0 %v397
      %435 = vmatprep.subr.bf16.mxu0 0
      %436 = vmatpush1.bf16.msra.mxu0 %v398
      %437 = vmatprep.subr.bf16.mxu0 0
      %438 = vmatpush1.bf16.msra.mxu0 %v399
      %439 = vmatprep.subr.bf16.mxu0 0
      %440 = vmatpush1.bf16.msra.mxu0 %v400
      %441 = vmatprep.subr.bf16.mxu0 0
      %442 = vmatpush1.bf16.msra.mxu0 %v401
      %443 = vmatprep.subr.bf16.mxu0 0
      %444 = vmatpush1.bf16.msra.mxu0 %v402
      %445 = vmatprep.subr.bf16.mxu0 0
      %446 = vmatpush1.bf16.msra.mxu0 %v403
      %447 = vmatprep.subr.bf16.mxu0 0
      %448 = vmatpush1.bf16.msra.mxu0 %v404
      %449 = vmatprep.subr.bf16.mxu0 0
      %450 = vmatpush1.bf16.msra.mxu0 %v405
      %451 = vmatprep.subr.bf16.mxu0 0
      %452 = vmatpush1.bf16.msra.mxu0 %v406
      %453 = vmatprep.subr.bf16.mxu0 0
      %454 = vmatpush1.bf16.msra.mxu0 %v407
      %455 = vmatprep.subr.bf16.mxu0 0
      %456 = vmatpush1.bf16.msra.mxu0 %v408
      %457 = vmatprep.mubr.bf16.mxu0 %v314
      %458 = vmatmul.mubr.bf16.gmra.mrb[0].mxu0 %v313
      %v459 = vpop.f32.mrb[0].mxu0
      %v460 = vadd.f32 0.0, %v459
      %v461 = vpop.f32.mrb[0].mxu0
      %v462 = vpop.f32.mrb[0].mxu0
      %v463 = vadd.f32 0.0, %v462
      %v464 = vpop.f32.mrb[0].mxu0
      %465 = vmatprep.mubr.bf16.mxu0 %v316
      %466 = vmatmul.mubr.bf16.gmra.mrb[0].mxu0 %v315
      %v467 = vpop.f32.mrb[0].mxu0
      %v468 = vadd.f32 0.0, %v467
      %v469 = vpop.f32.mrb[0].mxu0
      %v470 = vpop.f32.mrb[0].mxu0
      %v471 = vadd.f32 0.0, %v470
      %v472 = vpop.f32.mrb[0].mxu0
      %473 = vmatprep.mubr.bf16.mxu0 %v318
      %474 = vmatmul.mubr.bf16.gmra.mrb[0].mxu0 %v317
      %v475 = vpop.f32.mrb[0].mxu0
      %v476 = vadd.f32 0.0, %v475
      %v477 = vpop.f32.mrb[0].mxu0
      %v478 = vpop.f32.mrb[0].mxu0
      %v479 = vadd.f32 0.0, %v478
      %v480 = vpop.f32.mrb[0].mxu0
      %481 = vmatprep.mubr.bf16.mxu0 %v320
      %482 = vmatmul.mubr.bf16.gmra.mrb[0].mxu0 %v319
      %v483 = vpop.f32.mrb[0].mxu0
      %v484 = vadd.f32 0.0, %v483
      %v485 = vpop.f32.mrb[0].mxu0
      %v486 = vpop.f32.mrb[0].mxu0
      %v487 = vpop.f32.mrb[0].mxu0
      %488 = vdwg.mxu0
      %v489 = vpack.c.bf16 %v463, %v460
      %v490 = vpack.c.bf16 %v471, %v468
      %v491 = vpack.c.bf16 %v479, %v476
      %v492 = vpack.c.bf16 %v484, %v484
      %v493 = vld [vmem:[%s2] sm:$0x3]
      %vm494 = vcmask 31744
      %v496 = vsel %vm494, %v489, 0
      %v499 = vsel %vm494, %v490, 0
      %v502 = vsel %vm494, %v491, 0
      %v505 = vsel %vm494, %v492, 0
      %vm507 = vcmask 1041408
      %v509 = vsel %vm507, %v493, 0
      %511 = vmatprep.subr.bf16.mxu0 0
      %512 = vmatpush1.bf16.msra.mxu0 %v509
      %513 = vmatprep.subr.bf16.mxu0 0
      %514 = vmatpush1.bf16.msra.mxu0 0
      %515 = vmatprep.subr.bf16.mxu0 0
      %516 = vmatpush1.bf16.msra.mxu0 0
      %517 = vmatprep.subr.bf16.mxu0 0
      %518 = vmatpush1.bf16.msra.mxu0 0
      %519 = vmatprep.subr.bf16.mxu0 0
      %520 = vmatpush1.bf16.msra.mxu0 0
      %521 = vmatprep.subr.bf16.mxu0 0
      %522 = vmatpush1.bf16.msra.mxu0 0
      %523 = vmatprep.subr.bf16.mxu0 0
      %524 = vmatpush1.bf16.msra.mxu0 0
      %525 = vmatprep.subr.bf16.mxu0 0
      %526 = vmatpush1.bf16.msra.mxu0 0
      %527 = vmatprep.subr.bf16.mxu0 0
      %528 = vmatpush1.bf16.msra.mxu0 0
      %529 = vmatprep.subr.bf16.mxu0 0
      %530 = vmatpush1.bf16.msra.mxu0 0
      %531 = vmatprep.subr.bf16.mxu0 0
      %532 = vmatpush1.bf16.msra.mxu0 0
      %533 = vmatprep.subr.bf16.mxu0 0
      %534 = vmatpush1.bf16.msra.mxu0 0
      %535 = vmatprep.subr.bf16.mxu0 0
      %536 = vmatpush1.bf16.msra.mxu0 0
      %537 = vmatprep.subr.bf16.mxu0 0
      %538 = vmatpush1.bf16.msra.mxu0 0
      %539 = vmatprep.subr.bf16.mxu0 0
      %540 = vmatpush1.bf16.msra.mxu0 0
      %541 = vmatprep.subr.bf16.mxu0 0
      %542 = vmatpush1.bf16.msra.mxu0 0
      %543 = vmatprep.mubr.bf16.mxu0 0
      %544 = vmatmul.mubr.bf16.gmra.mrb[0].mxu0 %v496
      %v545 = vpop.f32.mrb[0].mxu0
      %v546 = vadd.f32 0.0, %v545
      %v547 = vpop.f32.mrb[0].mxu0
      %v548 = vpop.f32.mrb[0].mxu0
      %v549 = vadd.f32 0.0, %v548
      %v550 = vpop.f32.mrb[0].mxu0
      %551 = vmatprep.mubr.bf16.mxu0 0
      %552 = vmatmul.mubr.bf16.gmra.mrb[0].mxu0 %v499
      %v553 = vpop.f32.mrb[0].mxu0
      %v554 = vadd.f32 0.0, %v553
      %v555 = vpop.f32.mrb[0].mxu0
      %v556 = vpop.f32.mrb[0].mxu0
      %v557 = vadd.f32 0.0, %v556
      %v558 = vpop.f32.mrb[0].mxu0
      %559 = vmatprep.mubr.bf16.mxu0 0
      %560 = vmatmul.mubr.bf16.gmra.mrb[0].mxu0 %v502
      %v561 = vpop.f32.mrb[0].mxu0
      %v562 = vadd.f32 0.0, %v561
      %v563 = vpop.f32.mrb[0].mxu0
      %v564 = vpop.f32.mrb[0].mxu0
      %v565 = vadd.f32 0.0, %v564
      %v566 = vpop.f32.mrb[0].mxu0
      %567 = vmatprep.mubr.bf16.mxu0 0
      %568 = vmatmul.mubr.bf16.gmra.mrb[0].mxu0 %v505
      %v569 = vpop.f32.mrb[0].mxu0
      %v570 = vadd.f32 0.0, %v569
      %v571 = vpop.f32.mrb[0].mxu0
      %v572 = vpop.f32.mrb[0].mxu0
      %v573 = vpop.f32.mrb[0].mxu0
      %574 = vdwg.mxu0
      %v575 = vld [vmem:[%s3] sm:$0xff]
      %v576 = vld [vmem:[%s3 + $0x8] sm:$0xff]
      %v577 = vld [vmem:[%s3 + $0x10] sm:$0xff]
      %v578 = vld [vmem:[%s3 + $0x18] sm:$0xff]
      %v579 = vld [vmem:[%s3 + $0x20] sm:$0xff]
      %v580 = vld [vmem:[%s3 + $0x28] sm:$0xff]
      %v581 = vld [vmem:[%s3 + $0x30] sm:$0x3]
      %v582 = vmul.f32 %v546, %v575
      %v583 = vmul.f32 %v549, %v576
      %v584 = vmul.f32 %v554, %v577
      %v585 = vmul.f32 %v557, %v578
      %v586 = vmul.f32 %v562, %v579
      %v587 = vmul.f32 %v565, %v580
      %v588 = vmul.f32 %v570, %v581
      %v589 = vld [vmem:[%s5] sm:$0xf]
      %v590 = vld [vmem:[%s5 + $0x4] sm:$0xf]
      %v591 = vld [vmem:[%s5 + $0x8] sm:$0xf]
      %v592 = vld [vmem:[%s5 + $0xc] sm:$0xf]
      %v593 = vld [vmem:[%s5 + $0x10] sm:$0xf]
      %v594 = vld [vmem:[%s5 + $0x14] sm:$0xf]
      %v595 = vld [vmem:[%s5 + $0x18] sm:$0xf]
      %v596 = vld [vmem:[%s5 + $0x1c] sm:$0xf]
      %v597 = vld [vmem:[%s5 + $0x20] sm:$0xf]
      %v598 = vld [vmem:[%s5 + $0x24] sm:$0xf]
      %v599 = vld [vmem:[%s5 + $0x28] sm:$0xf]
      %v600 = vld [vmem:[%s5 + $0x2c] sm:$0xf]
      %v601 = vld [vmem:[%s5 + $0x30] sm:$0xf]
      %v602 = vld [vmem:[%s5 + $0x34] sm:$0xf]
      %v603 = vld [vmem:[%s5 + $0x38] sm:$0xf]
      %v604 = vld [vmem:[%s5 + $0x3c] sm:$0xf]
      %v605 = vld [vmem:[%s5 + $0x40] sm:$0xf]
      %v606 = vld [vmem:[%s5 + $0x44] sm:$0xf]
      %v607 = vld [vmem:[%s5 + $0x48] sm:$0xf]
      %v608 = vld [vmem:[%s5 + $0x4c] sm:$0xf]
      %v609 = vld [vmem:[%s5 + $0x50] sm:$0xf]
      %v610 = vld [vmem:[%s5 + $0x54] sm:$0xf]
      %v611 = vld [vmem:[%s5 + $0x58] sm:$0xf]
      %v612 = vld [vmem:[%s5 + $0x5c] sm:$0xf]
      %v613 = vld [vmem:[%s5 + $0x60] sm:$0xf]
      %v614 = vld [vmem:[%s5 + $0x64] sm:$0xf]
      %v615 = vld [vmem:[%s5 + $0x68] sm:$0xf]
      %v616 = vld [vmem:[%s5 + $0x6c] sm:$0xf]
      %v617 = vld [vmem:[%s5 + $0x70] sm:$0xf]
      %v618 = vld [vmem:[%s5 + $0x74] sm:$0xf]
      %v619 = vld [vmem:[%s5 + $0x78] sm:$0xf]
      %v620 = vld [vmem:[%s5 + $0x7c] sm:$0xf]
      %v621 = vpack.c.bf16 %v583, %v582
      %v622 = vpack.c.bf16 %v585, %v584
      %v623 = vpack.c.bf16 %v587, %v586
      %v624 = vpack.c.bf16 %v588, %v588
      %v625 = vld [vmem:[%s4] sm:$0x1]
      %v627 = vlaneseq
      %v628 = vshrl.u32 %v627, 7
      %v629 = vsub.s32 0, %v628
      %v630 = vrot.slane %v625, %v629
      %v664 = vunpack.c.l.b16 %v589
      %v665 = vunpack.c.l.b16 %v590
      %v666 = vunpack.c.l.b16 %v591
      %v667 = vunpack.c.l.b16 %v592
      %v668 = vunpack.c.l.b16 %v593
      %v669 = vunpack.c.l.b16 %v594
      %v670 = vunpack.c.l.b16 %v595
      %v671 = vunpack.c.l.b16 %v596
      %v672 = vunpack.c.l.b16 %v597
      %v673 = vunpack.c.l.b16 %v598
      %v674 = vunpack.c.l.b16 %v599
      %v675 = vunpack.c.l.b16 %v600
      %v676 = vunpack.c.l.b16 %v601
      %v677 = vunpack.c.l.b16 %v602
      %v678 = vunpack.c.l.b16 %v603
      %v679 = vunpack.c.l.b16 %v604
      %v680 = vunpack.c.l.b16 %v605
      %v681 = vunpack.c.l.b16 %v606
      %v682 = vunpack.c.l.b16 %v607
      %v683 = vunpack.c.l.b16 %v608
      %v684 = vunpack.c.l.b16 %v609
      %v685 = vunpack.c.l.b16 %v610
      %v686 = vunpack.c.l.b16 %v611
      %v687 = vunpack.c.l.b16 %v612
      %v688 = vunpack.c.l.b16 %v613
      %v689 = vunpack.c.l.b16 %v614
      %v690 = vunpack.c.l.b16 %v615
      %v691 = vunpack.c.l.b16 %v616
      %v692 = vunpack.c.l.b16 %v617
      %v693 = vunpack.c.l.b16 %v618
      %v694 = vunpack.c.l.b16 %v619
      %v695 = vunpack.c.l.b16 %v620
      %v696 = vpack.c.b16 %v665, %v664
      %v697 = vpack.c.b16 %v667, %v666
      %v698 = vpack.c.b16 %v669, %v668
      %v699 = vpack.c.b16 %v671, %v670
      %v700 = vpack.c.b16 %v673, %v672
      %v701 = vpack.c.b16 %v675, %v674
      %v702 = vpack.c.b16 %v677, %v676
      %v703 = vpack.c.b16 %v679, %v678
      %v704 = vpack.c.b16 %v681, %v680
      %v705 = vpack.c.b16 %v683, %v682
      %v706 = vpack.c.b16 %v685, %v684
      %v707 = vpack.c.b16 %v687, %v686
      %v708 = vpack.c.b16 %v689, %v688
      %v709 = vpack.c.b16 %v691, %v690
      %v710 = vpack.c.b16 %v693, %v692
      %v711 = vpack.c.b16 %v695, %v694
      %vm712 = vcmask 408576
      %v714 = vsel %vm712, %v696, 0
      %v717 = vsel %vm712, %v697, 0
      %v720 = vsel %vm712, %v698, 0
      %v723 = vsel %vm712, %v699, 0
      %v726 = vsel %vm712, %v700, 0
      %v729 = vsel %vm712, %v701, 0
      %v732 = vsel %vm712, %v702, 0
      %v735 = vsel %vm712, %v703, 0
      %v738 = vsel %vm712, %v704, 0
      %v741 = vsel %vm712, %v705, 0
      %v744 = vsel %vm712, %v706, 0
      %v747 = vsel %vm712, %v707, 0
      %v750 = vsel %vm712, %v708, 0
      %v753 = vsel %vm712, %v709, 0
      %v756 = vsel %vm712, %v710, 0
      %v759 = vsel %vm712, %v711, 0
      %vm761 = vcmask 1040384
      %v763 = vsel %vm761, %v624, 0
      %765 = vmatprep.subr.bf16.mxu0 0
      %766 = vmatpush1.bf16.msra.mxu0 %v621
      %767 = vmatprep.subr.bf16.mxu0 0
      %768 = vmatpush1.bf16.msra.mxu0 %v622
      %769 = vmatprep.subr.bf16.mxu0 0
      %770 = vmatpush1.bf16.msra.mxu0 %v623
      %771 = vmatprep.subr.bf16.mxu0 0
      %772 = vmatpush1.bf16.msra.mxu0 %v763
      %773 = vmatprep.subr.bf16.mxu0 0
      %774 = vmatpush1.bf16.msra.mxu0 0
      %775 = vmatprep.subr.bf16.mxu0 0
      %776 = vmatpush1.bf16.msra.mxu0 0
      %777 = vmatprep.subr.bf16.mxu0 0
      %778 = vmatpush1.bf16.msra.mxu0 0
      %779 = vmatprep.subr.bf16.mxu0 0
      %780 = vmatpush1.bf16.msra.mxu0 0
      %781 = vmatprep.subr.bf16.mxu0 0
      %782 = vmatpush1.bf16.msra.mxu0 0
      %783 = vmatprep.subr.bf16.mxu0 0
      %784 = vmatpush1.bf16.msra.mxu0 0
      %785 = vmatprep.subr.bf16.mxu0 0
      %786 = vmatpush1.bf16.msra.mxu0 0
      %787 = vmatprep.subr.bf16.mxu0 0
      %788 = vmatpush1.bf16.msra.mxu0 0
      %789 = vmatprep.subr.bf16.mxu0 0
      %790 = vmatpush1.bf16.msra.mxu0 0
      %791 = vmatprep.subr.bf16.mxu0 0
      %792 = vmatpush1.bf16.msra.mxu0 0
      %793 = vmatprep.subr.bf16.mxu0 0
      %794 = vmatpush1.bf16.msra.mxu0 0
      %795 = vmatprep.subr.bf16.mxu0 0
      %796 = vmatpush1.bf16.msra.mxu0 0
      %797 = vmatprep.mubr.bf16.mxu0 0
      %798 = vmatmul.mubr.bf16.gmra.mrb[0].mxu0 %v714
      %v799 = vpop.f32.mrb[0].mxu0
      %v800 = vadd.f32 %v630, %v799
      %v801 = vpop.f32.mrb[0].mxu0
      %v802 = vpop.f32.mrb[0].mxu0
      %v803 = vadd.f32 %v630, %v802
      %v804 = vpop.f32.mrb[0].mxu0
      %805 = vmatprep.mubr.bf16.mxu0 0
      %806 = vmatmul.mubr.bf16.gmra.mrb[0].mxu0 %v717
      %v807 = vpop.f32.mrb[0].mxu0
      %v808 = vadd.f32 %v630, %v807
      %v809 = vpop.f32.mrb[0].mxu0
      %v810 = vpop.f32.mrb[0].mxu0
      %v811 = vadd.f32 %v630, %v810
      %v812 = vpop.f32.mrb[0].mxu0
      %813 = vmatprep.mubr.bf16.mxu0 0
      %814 = vmatmul.mubr.bf16.gmra.mrb[0].mxu0 %v720
      %v815 = vpop.f32.mrb[0].mxu0
      %v816 = vadd.f32 %v630, %v815
      %v817 = vpop.f32.mrb[0].mxu0
      %v818 = vpop.f32.mrb[0].mxu0
      %v819 = vadd.f32 %v630, %v818
      %v820 = vpop.f32.mrb[0].mxu0
      %821 = vmatprep.mubr.bf16.mxu0 0
      %822 = vmatmul.mubr.bf16.gmra.mrb[0].mxu0 %v723
      %v823 = vpop.f32.mrb[0].mxu0
      %v824 = vadd.f32 %v630, %v823
      %v825 = vpop.f32.mrb[0].mxu0
      %v826 = vpop.f32.mrb[0].mxu0
      %v827 = vadd.f32 %v630, %v826
      %v828 = vpop.f32.mrb[0].mxu0
      %829 = vmatprep.mubr.bf16.mxu0 0
      %830 = vmatmul.mubr.bf16.gmra.mrb[0].mxu0 %v726
      %v831 = vpop.f32.mrb[0].mxu0
      %v832 = vadd.f32 %v630, %v831
      %v833 = vpop.f32.mrb[0].mxu0
      %v834 = vpop.f32.mrb[0].mxu0
      %v835 = vadd.f32 %v630, %v834
      %v836 = vpop.f32.mrb[0].mxu0
      %837 = vmatprep.mubr.bf16.mxu0 0
      %838 = vmatmul.mubr.bf16.gmra.mrb[0].mxu0 %v729
      %v839 = vpop.f32.mrb[0].mxu0
      %v840 = vadd.f32 %v630, %v839
      %v841 = vpop.f32.mrb[0].mxu0
      %v842 = vpop.f32.mrb[0].mxu0
      %v843 = vadd.f32 %v630, %v842
      %v844 = vpop.f32.mrb[0].mxu0
      %845 = vmatprep.mubr.bf16.mxu0 0
      %846 = vmatmul.mubr.bf16.gmra.mrb[0].mxu0 %v732
      %v847 = vpop.f32.mrb[0].mxu0
      %v848 = vadd.f32 %v630, %v847
      %v849 = vpop.f32.mrb[0].mxu0
      %v850 = vpop.f32.mrb[0].mxu0
      %v851 = vadd.f32 %v630, %v850
      %v852 = vpop.f32.mrb[0].mxu0
      %853 = vmatprep.mubr.bf16.mxu0 0
      %854 = vmatmul.mubr.bf16.gmra.mrb[0].mxu0 %v735
      %v855 = vpop.f32.mrb[0].mxu0
      %v856 = vadd.f32 %v630, %v855
      %v857 = vpop.f32.mrb[0].mxu0
      %v858 = vpop.f32.mrb[0].mxu0
      %v859 = vadd.f32 %v630, %v858
      %v860 = vpop.f32.mrb[0].mxu0
      %861 = vmatprep.mubr.bf16.mxu0 0
      %862 = vmatmul.mubr.bf16.gmra.mrb[0].mxu0 %v738
      %v863 = vpop.f32.mrb[0].mxu0
      %v864 = vadd.f32 %v630, %v863
      %v865 = vpop.f32.mrb[0].mxu0
      %v866 = vpop.f32.mrb[0].mxu0
      %v867 = vadd.f32 %v630, %v866
      %v868 = vpop.f32.mrb[0].mxu0
      %869 = vmatprep.mubr.bf16.mxu0 0
      %870 = vmatmul.mubr.bf16.gmra.mrb[0].mxu0 %v741
      %v871 = vpop.f32.mrb[0].mxu0
      %v872 = vadd.f32 %v630, %v871
      %v873 = vpop.f32.mrb[0].mxu0
      %v874 = vpop.f32.mrb[0].mxu0
      %v875 = vadd.f32 %v630, %v874
      %v876 = vpop.f32.mrb[0].mxu0
      %877 = vmatprep.mubr.bf16.mxu0 0
      %878 = vmatmul.mubr.bf16.gmra.mrb[0].mxu0 %v744
      %v879 = vpop.f32.mrb[0].mxu0
      %v880 = vadd.f32 %v630, %v879
      %v881 = vpop.f32.mrb[0].mxu0
      %v882 = vpop.f32.mrb[0].mxu0
      %v883 = vadd.f32 %v630, %v882
      %v884 = vpop.f32.mrb[0].mxu0
      %885 = vmatprep.mubr.bf16.mxu0 0
      %886 = vmatmul.mubr.bf16.gmra.mrb[0].mxu0 %v747
      %v887 = vpop.f32.mrb[0].mxu0
      %v888 = vadd.f32 %v630, %v887
      %v889 = vpop.f32.mrb[0].mxu0
      %v890 = vpop.f32.mrb[0].mxu0
      %v891 = vadd.f32 %v630, %v890
      %v892 = vpop.f32.mrb[0].mxu0
      %893 = vmatprep.mubr.bf16.mxu0 0
      %894 = vmatmul.mubr.bf16.gmra.mrb[0].mxu0 %v750
      %v895 = vpop.f32.mrb[0].mxu0
      %v896 = vadd.f32 %v630, %v895
      %v897 = vpop.f32.mrb[0].mxu0
      %v898 = vpop.f32.mrb[0].mxu0
      %v899 = vadd.f32 %v630, %v898
      %v900 = vpop.f32.mrb[0].mxu0
      %901 = vmatprep.mubr.bf16.mxu0 0
      %902 = vmatmul.mubr.bf16.gmra.mrb[0].mxu0 %v753
      %v903 = vpop.f32.mrb[0].mxu0
      %v904 = vadd.f32 %v630, %v903
      %v905 = vpop.f32.mrb[0].mxu0
      %v906 = vpop.f32.mrb[0].mxu0
      %v907 = vadd.f32 %v630, %v906
      %v908 = vpop.f32.mrb[0].mxu0
      %909 = vmatprep.mubr.bf16.mxu0 0
      %910 = vmatmul.mubr.bf16.gmra.mrb[0].mxu0 %v756
      %v911 = vpop.f32.mrb[0].mxu0
      %v912 = vadd.f32 %v630, %v911
      %v913 = vpop.f32.mrb[0].mxu0
      %v914 = vpop.f32.mrb[0].mxu0
      %v915 = vadd.f32 %v630, %v914
      %v916 = vpop.f32.mrb[0].mxu0
      %917 = vmatprep.mubr.bf16.mxu0 0
      %918 = vmatmul.mubr.bf16.gmra.mrb[0].mxu0 %v759
      %v919 = vpop.f32.mrb[0].mxu0
      %v920 = vadd.f32 %v630, %v919
      %v921 = vpop.f32.mrb[0].mxu0
      %v922 = vpop.f32.mrb[0].mxu0
      %v923 = vadd.f32 %v630, %v922
      %v924 = vpop.f32.mrb[0].mxu0
      %925 = vdwg.mxu0
      %v926 = vpack.c.bf16 %v803, %v800
      %v927 = vpack.c.bf16 %v811, %v808
      %v928 = vpack.c.bf16 %v819, %v816
      %v929 = vpack.c.bf16 %v827, %v824
      %v930 = vpack.c.bf16 %v835, %v832
      %v931 = vpack.c.bf16 %v843, %v840
      %v932 = vpack.c.bf16 %v851, %v848
      %v933 = vpack.c.bf16 %v859, %v856
      %v934 = vpack.c.bf16 %v867, %v864
      %v935 = vpack.c.bf16 %v875, %v872
      %v936 = vpack.c.bf16 %v883, %v880
      %v937 = vpack.c.bf16 %v891, %v888
      %v938 = vpack.c.bf16 %v899, %v896
      %v939 = vpack.c.bf16 %v907, %v904
      %v940 = vpack.c.bf16 %v915, %v912
      %v941 = vpack.c.bf16 %v923, %v920
      %v958 = vunpack.c.l.b16 %v926
      %v959 = vunpack.c.h.b16 %v926
      %v960 = vunpack.c.l.b16 %v927
      %v961 = vunpack.c.h.b16 %v927
      %v962 = vunpack.c.l.b16 %v928
      %v963 = vunpack.c.h.b16 %v928
      %v964 = vunpack.c.l.b16 %v929
      %v965 = vunpack.c.h.b16 %v929
      %v966 = vunpack.c.l.b16 %v930
      %v967 = vunpack.c.h.b16 %v930
      %v968 = vunpack.c.l.b16 %v931
      %v969 = vunpack.c.h.b16 %v931
      %v970 = vunpack.c.l.b16 %v932
      %v971 = vunpack.c.h.b16 %v932
      %v972 = vunpack.c.l.b16 %v933
      %v973 = vunpack.c.h.b16 %v933
      %v974 = vunpack.c.l.b16 %v934
      %v975 = vunpack.c.h.b16 %v934
      %v976 = vunpack.c.l.b16 %v935
      %v977 = vunpack.c.h.b16 %v935
      %v978 = vunpack.c.l.b16 %v936
      %v979 = vunpack.c.h.b16 %v936
      %v980 = vunpack.c.l.b16 %v937
      %v981 = vunpack.c.h.b16 %v937
      %v982 = vunpack.c.l.b16 %v938
      %v983 = vunpack.c.h.b16 %v938
      %v984 = vunpack.c.l.b16 %v939
      %v985 = vunpack.c.h.b16 %v939
      %v986 = vunpack.c.l.b16 %v940
      %v987 = vunpack.c.h.b16 %v940
      %v988 = vunpack.c.l.b16 %v941
      %v989 = vunpack.c.h.b16 %v941
      %v990 = vpack.c.b16 %v958, %v958
      %v991 = vpack.c.b16 %v959, %v959
      %v992 = vpack.c.b16 %v960, %v960
      %v993 = vpack.c.b16 %v961, %v961
      %v994 = vpack.c.b16 %v962, %v962
      %v995 = vpack.c.b16 %v963, %v963
      %v996 = vpack.c.b16 %v964, %v964
      %v997 = vpack.c.b16 %v965, %v965
      %v998 = vpack.c.b16 %v966, %v966
      %v999 = vpack.c.b16 %v967, %v967
      %v1000 = vpack.c.b16 %v968, %v968
      %v1001 = vpack.c.b16 %v969, %v969
      %v1002 = vpack.c.b16 %v970, %v970
      %v1003 = vpack.c.b16 %v971, %v971
      %v1004 = vpack.c.b16 %v972, %v972
      %v1005 = vpack.c.b16 %v973, %v973
      %v1006 = vpack.c.b16 %v974, %v974
      %v1007 = vpack.c.b16 %v975, %v975
      %v1008 = vpack.c.b16 %v976, %v976
      %v1009 = vpack.c.b16 %v977, %v977
      %v1010 = vpack.c.b16 %v978, %v978
      %v1011 = vpack.c.b16 %v979, %v979
      %v1012 = vpack.c.b16 %v980, %v980
      %v1013 = vpack.c.b16 %v981, %v981
      %v1014 = vpack.c.b16 %v982, %v982
      %v1015 = vpack.c.b16 %v983, %v983
      %v1016 = vpack.c.b16 %v984, %v984
      %v1017 = vpack.c.b16 %v985, %v985
      %v1018 = vpack.c.b16 %v986, %v986
      %v1019 = vpack.c.b16 %v987, %v987
      %v1020 = vpack.c.b16 %v988, %v988
      %v1021 = vpack.c.b16 %v989, %v989
      %vm1054 = vcmask 257024
      %1055 = vst.msk [vmem:[%s251] sm:$0xf] %vm1054, %v990
      %1056 = vst.msk [vmem:[%s251 + $0x4] sm:$0xf] %vm1054, %v991
      %1057 = vst.msk [vmem:[%s251 + $0x8] sm:$0xf] %vm1054, %v992
      %1058 = vst.msk [vmem:[%s251 + $0xc] sm:$0xf] %vm1054, %v993
      %1059 = vst.msk [vmem:[%s251 + $0x10] sm:$0xf] %vm1054, %v994
      %1060 = vst.msk [vmem:[%s251 + $0x14] sm:$0xf] %vm1054, %v995
      %1061 = vst.msk [vmem:[%s251 + $0x18] sm:$0xf] %vm1054, %v996
      %1062 = vst.msk [vmem:[%s251 + $0x1c] sm:$0xf] %vm1054, %v997
      %1063 = vst.msk [vmem:[%s251 + $0x20] sm:$0xf] %vm1054, %v998
      %1064 = vst.msk [vmem:[%s251 + $0x24] sm:$0xf] %vm1054, %v999
      %1065 = vst.msk [vmem:[%s251 + $0x28] sm:$0xf] %vm1054, %v1000
      %1066 = vst.msk [vmem:[%s251 + $0x2c] sm:$0xf] %vm1054, %v1001
      %1067 = vst.msk [vmem:[%s251 + $0x30] sm:$0xf] %vm1054, %v1002
      %1068 = vst.msk [vmem:[%s251 + $0x34] sm:$0xf] %vm1054, %v1003
      %1069 = vst.msk [vmem:[%s251 + $0x38] sm:$0xf] %vm1054, %v1004
      %1070 = vst.msk [vmem:[%s251 + $0x3c] sm:$0xf] %vm1054, %v1005
      %1071 = vst.msk [vmem:[%s251 + $0x40] sm:$0xf] %vm1054, %v1006
      %1072 = vst.msk [vmem:[%s251 + $0x44] sm:$0xf] %vm1054, %v1007
      %1073 = vst.msk [vmem:[%s251 + $0x48] sm:$0xf] %vm1054, %v1008
      %1074 = vst.msk [vmem:[%s251 + $0x4c] sm:$0xf] %vm1054, %v1009
      %1075 = vst.msk [vmem:[%s251 + $0x50] sm:$0xf] %vm1054, %v1010
      %1076 = vst.msk [vmem:[%s251 + $0x54] sm:$0xf] %vm1054, %v1011
      %1077 = vst.msk [vmem:[%s251 + $0x58] sm:$0xf] %vm1054, %v1012
      %1078 = vst.msk [vmem:[%s251 + $0x5c] sm:$0xf] %vm1054, %v1013
      %1079 = vst.msk [vmem:[%s251 + $0x60] sm:$0xf] %vm1054, %v1014
      %1080 = vst.msk [vmem:[%s251 + $0x64] sm:$0xf] %vm1054, %v1015
      %1081 = vst.msk [vmem:[%s251 + $0x68] sm:$0xf] %vm1054, %v1016
      %1082 = vst.msk [vmem:[%s251 + $0x6c] sm:$0xf] %vm1054, %v1017
      %1083 = vst.msk [vmem:[%s251 + $0x70] sm:$0xf] %vm1054, %v1018
      %1084 = vst.msk [vmem:[%s251 + $0x74] sm:$0xf] %vm1054, %v1019
      %1085 = vst.msk [vmem:[%s251 + $0x78] sm:$0xf] %vm1054, %v1020
      %1086 = vst.msk [vmem:[%s251 + $0x7c] sm:$0xf] %vm1054, %v1021
      %p1087 = scmp.lt.s32.totalorder %s17, 1
      %s1088 = scalar_select %p1087, %s17, 1
      %s1089 = smul.addr %s1088, 32
      %s1090 = smul.addr %s1089, 4
      %s1091 = scalar_lea.vmem %s6, %s1090
      // Predicated region
      $region45: #{psp_module_forward.2} parent=43 // pred_check
        %p1092 = pneg %p166
      $region46: #{psp_module_forward.2} parent=43 // pred_check_branch
        %1094 = sbr.rel (%p1092) target = $region48
      $region47: #{psp_module_forward.2} parent=43 // pred_region
        _
      $region48: #{psp_module_forward.2} parent=43 // pred_fallthru
        _
    $region44: #{psp_module_forward.2} parent=5 // pred_fallthru
      _
    %p1095 = scmp.le.s32.totalorder 2, %s12
    // Predicated region
    $region49: #{psp_module_forward.2} parent=5 // pred_check
      %p1096 = pneg %p1095
    $region50: #{psp_module_forward.2} parent=5 // pred_check_branch
      %1098 = sbr.rel (%p1096) target = $region52
    $region51: #{psp_module_forward.2} parent=5 // pred_region
      %s1099 = ssub.s32 %s12, 2
      // Predicated region
      $region53: #{psp_module_forward.2} parent=51 // pred_check
        %p1100 = pneg %p172
      $region54: #{psp_module_forward.2} parent=51 // pred_check_branch
        %1102 = sbr.rel (%p1100) target = $region56
      $region55: #{psp_module_forward.2} parent=51 // pred_region
        %p1103 = scmp.lt.s32.totalorder %s18, 1
        %s1104 = scalar_select %p1103, %s18, 1
        %s1105 = smul.addr %s1104, 32
        %s1106 = smul.addr %s1105, 4
        %s1107 = scalar_lea.vmem %s6, %s1106
      $region56: #{psp_module_forward.2} parent=51 // pred_fallthru
        _
    $region52: #{psp_module_forward.2} parent=5 // pred_fallthru
      _
  $region6: #{psp_module_forward.2} parent=0 // loop_footer
    %s16 = sadd.s32 1, %s12
  $region7: #{psp_module_forward.2} parent=0 // loop_footer_branch
    %11 = sbr.rel target = $region3
  $region8: #{psp_module_forward.2} parent=0 // loop_exit
    _

// kernel: psp_module_forward.3
$region0: #{psp_module_forward.3}
  #allocation0 [shape = 'u32[]', space=smem, size = 0x4, offset = 0x4, fixed_abs, tag = 'smem constant byte address 0x4 - core index']
  #allocation1 [shape = 'u32[144,128]{1,0:T(1,128)}', space=vmem, size = 0x12000, scoped, tag = 'internal scratch']
  #allocation2 [shape = 'bf16[342,32]{1,0:T(8,128)(2,1)}', space=vmem, size = 0x15800, scoped, tag = 'scratch operand']
  #allocation3 [shape = 'bf16[342,4]{1,0:T(8,128)(2,1)}', space=vmem, size = 0x15800, scoped, tag = 'scratch operand']
  %s0 = inlined_call_operand.vmem [shape: bf16[2,256,32], index: 0, kind: input, shape index: {}]
  %s1 = inlined_call_operand.vmem [shape: bf16[2,256,4], index: 1, kind: input, shape index: {}]
  %s2 = inlined_call_operand.vmem [shape: bf16[9,32,8], index: 2, kind: input, shape index: {}]
  %s3 = inlined_call_operand.vmem [shape: bf16[9,4,8], index: 3, kind: input, shape index: {}]
  %s4 = inlined_call_operand.vmem [shape: f32[1,8], index: 4, kind: input, shape index: {}]
  %s5 = inlined_call_operand.vmem [shape: f32[1,8], index: 5, kind: input, shape index: {}]
  %s6 = inlined_call_operand.vmem [shape: f32[2,16,16,8], index: 6, kind: output, shape index: {}]
  %s7 = sld [smem:[#allocation0]]
  $region57: #{psp_module_forward.3} parent=0
    _
  %s9 = ssub.s32 1, %s7
  %s10 = scalar_select 0, %s9, %s7
  loop: start=0, step=1, limit=4
  $region2: #{psp_module_forward.3} parent=0 // loop_pre_header
    _
  $region3: #{psp_module_forward.3} parent=0 // loop_header
    %s12 = sphi 0, %s16
    %p13 = scmp.ge.s32.totalorder %s12, 4
    %s22 = sphi 0, %s24
    %s25 = sphi 0, %s22
    %s26 = sphi 0, %s25
    %s42 = sphi 0, %s26
    %s48 = sphi 0, %s50
    %s51 = sphi 0, %s48
    %s52 = sphi 0, %s51
    %s68 = sphi 0, %s52
    %s72 = sphi 0, %s72
    %s74 = sphi 0, %s72
    %s75 = sphi 0, %s74
    %s89 = sphi 0, %s75
    %s93 = sphi 0, %s93
    %s95 = sphi 0, %s93
    %s96 = sphi 0, %s95
    %s110 = sphi 0, %s96
    %s114 = sphi 0, %s114
    %s116 = sphi 0, %s114
    %s117 = sphi 0, %s116
    %s131 = sphi 0, %s117
    %s135 = sphi 0, %s135
    %s137 = sphi 0, %s135
    %s138 = sphi 0, %s137
    %s152 = sphi 0, %s138
    %s158 = sphi 0, %s160
    %s161 = sphi 0, %s158
    %s162 = sphi 0, %s161
    %s178 = sphi 0, %s162
  $region4: #{psp_module_forward.3} parent=0 // loop_header_branch
    %15 = sbr.rel (%p13) target = $region8
  $region5: #{psp_module_forward.3} parent=0 // loop_body
    %s17 = ssub.s32 %s12, 1
    %s18 = ssub.s32 %s12, 2
    %s19 = sadd.s32 %s12, 1
    %s20 = ssub.s32 %s12, %s19
    %p21 = scmp.eq.s32.totalorder %s20, 0
    %s23 = sadd.s32 %s22, 1
    %s24 = scalar_select %p21, %s22, %s23
    %p27 = pneg %p21
    %p28 = scmp.eq.s32.totalorder %s12, 1
    %p29 = por %p27, %p28
    %p30 = scmp.ne.s32.totalorder %s22, %s25
    %p31 = scmp.eq.s32.totalorder %s12, 0
    %p32 = por %p30, %p31
    %p33 = scmp.ne.s32.totalorder %s22, %s25
    %p34 = scmp.eq.s32.totalorder %s17, 1
    %p35 = por %p33, %p34
    %p36 = scmp.ne.s32.totalorder %s25, %s26
    %p37 = scmp.eq.s32.totalorder %s17, 0
    %p38 = por %p36, %p37
    %p39 = scmp.ne.s32.totalorder %s25, %s26
    %p40 = scmp.eq.s32.totalorder %s18, 1
    %p41 = por %p39, %p40
    %p43 = scmp.ne.s32.totalorder %s26, %s42
    %p44 = scmp.eq.s32.totalorder %s18, 0
    %p45 = por %p43, %p44
    %s46 = ssub.s32 %s12, %s19
    %p47 = scmp.eq.s32.totalorder %s46, 0
    %s49 = sadd.s32 %s48, 1
    %s50 = scalar_select %p47, %s48, %s49
    %p53 = pneg %p47
    %p54 = scmp.eq.s32.totalorder %s12, 1
    %p55 = por %p53, %p54
    %p56 = scmp.ne.s32.totalorder %s48, %s51
    %p57 = scmp.eq.s32.totalorder %s12, 0
    %p58 = por %p56, %p57
    %p59 = scmp.ne.s32.totalorder %s48, %s51
    %p60 = scmp.eq.s32.totalorder %s17, 1
    %p61 = por %p59, %p60
    %p62 = scmp.ne.s32.totalorder %s51, %s52
    %p63 = scmp.eq.s32.totalorder %s17, 0
    %p64 = por %p62, %p63
    %p65 = scmp.ne.s32.totalorder %s51, %s52
    %p66 = scmp.eq.s32.totalorder %s18, 1
    %p67 = por %p65, %p66
    %p69 = scmp.ne.s32.totalorder %s52, %s68
    %p70 = scmp.eq.s32.totalorder %s18, 0
    %p71 = por %p69, %p70
    %s73 = sadd.s32 %s72, 1
    %p76 = scmp.eq.s32.totalorder %s12, 1
    %p77 = scmp.ne.s32.totalorder %s72, %s74
    %p78 = scmp.eq.s32.totalorder %s12, 0
    %p79 = por %p77, %p78
    %p80 = scmp.ne.s32.totalorder %s72, %s74
    %p81 = scmp.eq.s32.totalorder %s17, 1
    %p82 = por %p80, %p81
    %p83 = scmp.ne.s32.totalorder %s74, %s75
    %p84 = scmp.eq.s32.totalorder %s17, 0
    %p85 = por %p83, %p84
    %p86 = scmp.ne.s32.totalorder %s74, %s75
    %p87 = scmp.eq.s32.totalorder %s18, 1
    %p88 = por %p86, %p87
    %p90 = scmp.ne.s32.totalorder %s75, %s89
    %p91 = scmp.eq.s32.totalorder %s18, 0
    %p92 = por %p90, %p91
    %s94 = sadd.s32 %s93, 1
    %p97 = scmp.eq.s32.totalorder %s12, 1
    %p98 = scmp.ne.s32.totalorder %s93, %s95
    %p99 = scmp.eq.s32.totalorder %s12, 0
    %p100 = por %p98, %p99
    %p101 = scmp.ne.s32.totalorder %s93, %s95
    %p102 = scmp.eq.s32.totalorder %s17, 1
    %p103 = por %p101, %p102
    %p104 = scmp.ne.s32.totalorder %s95, %s96
    %p105 = scmp.eq.s32.totalorder %s17, 0
    %p106 = por %p104, %p105
    %p107 = scmp.ne.s32.totalorder %s95, %s96
    %p108 = scmp.eq.s32.totalorder %s18, 1
    %p109 = por %p107, %p108
    %p111 = scmp.ne.s32.totalorder %s96, %s110
    %p112 = scmp.eq.s32.totalorder %s18, 0
    %p113 = por %p111, %p112
    %s115 = sadd.s32 %s114, 1
    %p118 = scmp.eq.s32.totalorder %s12, 1
    %p119 = scmp.ne.s32.totalorder %s114, %s116
    %p120 = scmp.eq.s32.totalorder %s12, 0
    %p121 = por %p119, %p120
    %p122 = scmp.ne.s32.totalorder %s114, %s116
    %p123 = scmp.eq.s32.totalorder %s17, 1
    %p124 = por %p122, %p123
    %p125 = scmp.ne.s32.totalorder %s116, %s117
    %p126 = scmp.eq.s32.totalorder %s17, 0
    %p127 = por %p125, %p126
    %p128 = scmp.ne.s32.totalorder %s116, %s117
    %p129 = scmp.eq.s32.totalorder %s18, 1
    %p130 = por %p128, %p129
    %p132 = scmp.ne.s32.totalorder %s117, %s131
    %p133 = scmp.eq.s32.totalorder %s18, 0
    %p134 = por %p132, %p133
    %s136 = sadd.s32 %s135, 1
    %p139 = scmp.eq.s32.totalorder %s12, 1
    %p140 = scmp.ne.s32.totalorder %s135, %s137
    %p141 = scmp.eq.s32.totalorder %s12, 0
    %p142 = por %p140, %p141
    %p143 = scmp.ne.s32.totalorder %s135, %s137
    %p144 = scmp.eq.s32.totalorder %s17, 1
    %p145 = por %p143, %p144
    %p146 = scmp.ne.s32.totalorder %s137, %s138
    %p147 = scmp.eq.s32.totalorder %s17, 0
    %p148 = por %p146, %p147
    %p149 = scmp.ne.s32.totalorder %s137, %s138
    %p150 = scmp.eq.s32.totalorder %s18, 1
    %p151 = por %p149, %p150
    %p153 = scmp.ne.s32.totalorder %s138, %s152
    %p154 = scmp.eq.s32.totalorder %s18, 0
    %p155 = por %p153, %p154
    %s156 = ssub.s32 %s12, %s19
    %p157 = scmp.eq.s32.totalorder %s156, 0
    %s159 = sadd.s32 %s158, 1
    %s160 = scalar_select %p157, %s158, %s159
    %p163 = pneg %p157
    %p164 = scmp.eq.s32.totalorder %s12, 1
    %p165 = por %p163, %p164
    %p166 = scmp.ne.s32.totalorder %s158, %s161
    %p167 = scmp.eq.s32.totalorder %s12, 0
    %p168 = por %p166, %p167
    %p169 = scmp.ne.s32.totalorder %s158, %s161
    %p170 = scmp.eq.s32.totalorder %s17, 1
    %p171 = por %p169, %p170
    %p172 = scmp.ne.s32.totalorder %s161, %s162
    %p173 = scmp.eq.s32.totalorder %s17, 0
    %p174 = por %p172, %p173
    %p175 = scmp.ne.s32.totalorder %s161, %s162
    %p176 = scmp.eq.s32.totalorder %s18, 1
    %p177 = por %p175, %p176
    %p179 = scmp.ne.s32.totalorder %s162, %s178
    %p180 = scmp.eq.s32.totalorder %s18, 0
    %p181 = por %p179, %p180
    %p182 = scmp.le.s32.totalorder 1, %s12
    %p183 = scmp.lt.s32.totalorder %s12, 3
    %p184 = pnand %p182, %p183
    %p185 = pneg %p184
    // Predicated region
    $region9: #{psp_module_forward.3} parent=5 // pred_check
      _
    $region10: #{psp_module_forward.3} parent=5 // pred_check_branch
      %187 = sbr.rel (%p184) target = $region12
    $region11: #{psp_module_forward.3} parent=5 // pred_region
      %s188 = ssub.s32 %s12, 1
      // Predicated region
      $region13: #{psp_module_forward.3} parent=11 // pred_check
        %p189 = pneg %p85
      $region14: #{psp_module_forward.3} parent=11 // pred_check_branch
        %191 = sbr.rel (%p189) target = $region16
      $region15: #{psp_module_forward.3} parent=11 // pred_region
        _
      $region16: #{psp_module_forward.3} parent=11 // pred_fallthru
        _
      // Predicated region
      $region17: #{psp_module_forward.3} parent=11 // pred_check
        %p192 = pneg %p106
      $region18: #{psp_module_forward.3} parent=11 // pred_check_branch
        %194 = sbr.rel (%p192) target = $region20
      $region19: #{psp_module_forward.3} parent=11 // pred_region
        _
      $region20: #{psp_module_forward.3} parent=11 // pred_fallthru
        _
      // Predicated region
      $region21: #{psp_module_forward.3} parent=11 // pred_check
        %p195 = pneg %p127
      $region22: #{psp_module_forward.3} parent=11 // pred_check_branch
        %197 = sbr.rel (%p195) target = $region24
      $region23: #{psp_module_forward.3} parent=11 // pred_region
        _
      $region24: #{psp_module_forward.3} parent=11 // pred_fallthru
        _
      // Predicated region
      $region25: #{psp_module_forward.3} parent=11 // pred_check
        %p198 = pneg %p148
      $region26: #{psp_module_forward.3} parent=11 // pred_check_branch
        %200 = sbr.rel (%p198) target = $region28
      $region27: #{psp_module_forward.3} parent=11 // pred_region
        _
      $region28: #{psp_module_forward.3} parent=11 // pred_fallthru
        _
    $region12: #{psp_module_forward.3} parent=5 // pred_fallthru
      _
    %p201 = scmp.lt.s32.totalorder %s12, 2
    // Predicated region
    $region29: #{psp_module_forward.3} parent=5 // pred_check
      %p202 = pneg %p201
    $region30: #{psp_module_forward.3} parent=5 // pred_check_branch
      %204 = sbr.rel (%p202) target = $region32
    $region31: #{psp_module_forward.3} parent=5 // pred_region
      // Predicated region
      $region33: #{psp_module_forward.3} parent=31 // pred_check
        %p205 = pneg %p32
      $region34: #{psp_module_forward.3} parent=31 // pred_check_branch
        %207 = sbr.rel (%p205) target = $region36
      $region35: #{psp_module_forward.3} parent=31 // pred_region
        %p208 = scmp.lt.s32.totalorder %s12, 1
        %s209 = scalar_select %p208, %s12, 1
        %s210 = smul.addr %s209, 32
        %s211 = smul.addr %s210, 4
        %s212 = scalar_lea.vmem %s0, %s211
      $region36: #{psp_module_forward.3} parent=31 // pred_fallthru
        _
      // Predicated region
      $region37: #{psp_module_forward.3} parent=31 // pred_check
        %p213 = pneg %p58
      $region38: #{psp_module_forward.3} parent=31 // pred_check_branch
        %215 = sbr.rel (%p213) target = $region40
      $region39: #{psp_module_forward.3} parent=31 // pred_region
        %p216 = scmp.lt.s32.totalorder %s12, 1
        %s217 = scalar_select %p216, %s12, 1
        %s218 = smul.addr %s217, 32
        %s219 = smul.addr %s218, 4
        %s220 = scalar_lea.vmem %s1, %s219
      $region40: #{psp_module_forward.3} parent=31 // pred_fallthru
        _
    $region32: #{psp_module_forward.3} parent=5 // pred_fallthru
      _
    %p221 = scmp.le.s32.totalorder 1, %s12
    %p222 = scmp.lt.s32.totalorder %s12, 3
    %p223 = pnand %p221, %p222
    %p224 = pneg %p223
    // Predicated region
    $region41: #{psp_module_forward.3} parent=5 // pred_check
      _
    $region42: #{psp_module_forward.3} parent=5 // pred_check_branch
      %226 = sbr.rel (%p223) target = $region44
    $region43: #{psp_module_forward.3} parent=5 // pred_region
      %s227 = ssub.s32 %s12, 1
      %p228 = scmp.lt.s32.totalorder %s17, 1
      %s229 = scalar_select %p228, %s17, 1
      %s230 = smul.addr %s229, 32
      %s231 = smul.addr %s230, 4
      %s232 = scalar_lea.vmem %s0, %s231
      %p233 = pneg %p38
      %p234 = pneg %p35
      %p235 = scmp.lt.s32.totalorder %s17, 1
      %s236 = scalar_select %p235, %s17, 1
      %s237 = smul.addr %s236, 32
      %s238 = smul.addr %s237, 4
      %s239 = scalar_lea.vmem %s1, %s238
      %p240 = pneg %p64
      %p241 = pneg %p61
      %p242 = pneg %p85
      %p243 = pneg %p82
      %p244 = pneg %p106
      %p245 = pneg %p103
      %p246 = pneg %p127
      %p247 = pneg %p124
      %p248 = pneg %p148
      %p249 = pneg %p145
      %p250 = pneg %p174
      %p251 = pneg %p171
      %p252 = scmp.lt.s32.totalorder %s17, 1
      %s253 = scalar_select %p252, %s17, 1
      %s254 = smul.addr %s253, 32
      %s255 = smul.addr %s254, 8
      %s256 = scalar_lea.vmem %s6, %s255
      %p257 = scmp.lt.s32.totalorder %s17, 1
      %s258 = scalar_select %p257, %s17, 1
      %s259 = smul.addr %s258, 32
      %s260 = smul.addr %s259, 4
      %s261 = scalar_lea.vmem %s0, %s260
      %p262 = scmp.lt.s32.totalorder %s17, 1
      %s263 = scalar_select %p262, %s17, 1
      %s264 = smul.addr %s263, 32
      %s265 = smul.addr %s264, 4
      %s266 = scalar_lea.vmem %s1, %s265
      %p267 = scmp.lt.s32.totalorder %s17, 1
      %s268 = scalar_select %p267, %s17, 1
      %s269 = smul.addr %s268, 32
      %s270 = smul.addr %s269, 8
      %s271 = scalar_lea.vmem %s6, %s270
      %vm273 = vcmask 257024
      %274 = vst.msk [vmem:[#allocation2] sm:$0xf] %vm273, 0
      %275 = vst.msk [vmem:[#allocation2 + $0x4] sm:$0xf] %vm273, 0
      %276 = vst.msk [vmem:[#allocation2 + $0x8] sm:$0xf] %vm273, 0
      %277 = vst.msk [vmem:[#allocation2 + $0xc] sm:$0xf] %vm273, 0
      %278 = vst.msk [vmem:[#allocation2 + $0x10] sm:$0xf] %vm273, 0
      %279 = vst.msk [vmem:[#allocation2 + $0x14] sm:$0xf] %vm273, 0
      %280 = vst.msk [vmem:[#allocation2 + $0x18] sm:$0xf] %vm273, 0
      %281 = vst.msk [vmem:[#allocation2 + $0x1c] sm:$0xf] %vm273, 0
      %282 = vst.msk [vmem:[#allocation2 + $0x20] sm:$0xf] %vm273, 0
      %283 = vst.msk [vmem:[#allocation2 + $0x24] sm:$0xf] %vm273, 0
      %284 = vst.msk [vmem:[#allocation2 + $0x28] sm:$0xf] %vm273, 0
      %285 = vst.msk [vmem:[#allocation2 + $0x2c] sm:$0xf] %vm273, 0
      %286 = vst.msk [vmem:[#allocation2 + $0x30] sm:$0xf] %vm273, 0
      %287 = vst.msk [vmem:[#allocation2 + $0x34] sm:$0xf] %vm273, 0
      %288 = vst.msk [vmem:[#allocation2 + $0x38] sm:$0xf] %vm273, 0
      %289 = vst.msk [vmem:[#allocation2 + $0x3c] sm:$0xf] %vm273, 0
      %290 = vst.msk [vmem:[#allocation2 + $0x40] sm:$0xf] %vm273, 0
      %291 = vst.msk [vmem:[#allocation2 + $0x44] sm:$0xf] %vm273, 0
      %292 = vst.msk [vmem:[#allocation2 + $0x48] sm:$0xf] %vm273, 0
      %293 = vst.msk [vmem:[#allocation2 + $0x4c] sm:$0xf] %vm273, 0
      %294 = vst.msk [vmem:[#allocation2 + $0x50] sm:$0xf] %vm273, 0
      %295 = vst.msk [vmem:[#allocation2 + $0x54] sm:$0xf] %vm273, 0
      %296 = vst.msk [vmem:[#allocation2 + $0x58] sm:$0xf] %vm273, 0
      %297 = vst.msk [vmem:[#allocation2 + $0x5c] sm:$0xf] %vm273, 0
      %298 = vst.msk [vmem:[#allocation2 + $0x60] sm:$0xf] %vm273, 0
      %299 = vst.msk [vmem:[#allocation2 + $0x64] sm:$0xf] %vm273, 0
      %300 = vst.msk [vmem:[#allocation2 + $0x68] sm:$0xf] %vm273, 0
      %301 = vst.msk [vmem:[#allocation2 + $0x6c] sm:$0xf] %vm273, 0
      %302 = vst.msk [vmem:[#allocation2 + $0x70] sm:$0xf] %vm273, 0
      %303 = vst.msk [vmem:[#allocation2 + $0x74] sm:$0xf] %vm273, 0
      %304 = vst.msk [vmem:[#allocation2 + $0x78] sm:$0xf] %vm273, 0
      %305 = vst.msk [vmem:[#allocation2 + $0x7c] sm:$0xf] %vm273, 0
      %306 = vst.msk [vmem:[#allocation2 + $0x80] sm:$0xf] %vm273, 0
      %307 = vst.msk [vmem:[#allocation2 + $0x84] sm:$0xf] %vm273, 0
      %308 = vst.msk [vmem:[#allocation2 + $0x88] sm:$0xf] %vm273, 0
      %309 = vst.msk [vmem:[#allocation2 + $0x8c] sm:$0xf] %vm273, 0
      %310 = vst.msk [vmem:[#allocation2 + $0x90] sm:$0xf] %vm273, 0
      %311 = vst.msk [vmem:[#allocation2 + $0x94] sm:$0xf] %vm273, 0
      %312 = vst.msk [vmem:[#allocation2 + $0x98] sm:$0xf] %vm273, 0
      %313 = vst.msk [vmem:[#allocation2 + $0x9c] sm:$0xf] %vm273, 0
      %314 = vst.msk [vmem:[#allocation2 + $0xa0] sm:$0xf] %vm273, 0
      %315 = vst.msk [vmem:[#allocation2 + $0xa4] sm:$0xf] %vm273, 0
      %vm316 = vcmask 256000
      %317 = vst.msk [vmem:[#allocation2 + $0xa8] sm:$0x7] %vm316, 0
      %vm318 = vcmask 27648
      %319 = vst.msk [vmem:[#allocation3] sm:$0xf] %vm318, 0
      %320 = vst.msk [vmem:[#allocation3 + $0x4] sm:$0xf] %vm318, 0
      %321 = vst.msk [vmem:[#allocation3 + $0x8] sm:$0xf] %vm318, 0
      %322 = vst.msk [vmem:[#allocation3 + $0xc] sm:$0xf] %vm318, 0
      %323 = vst.msk [vmem:[#allocation3 + $0x10] sm:$0xf] %vm318, 0
      %324 = vst.msk [vmem:[#allocation3 + $0x14] sm:$0xf] %vm318, 0
      %325 = vst.msk [vmem:[#allocation3 + $0x18] sm:$0xf] %vm318, 0
      %326 = vst.msk [vmem:[#allocation3 + $0x1c] sm:$0xf] %vm318, 0
      %327 = vst.msk [vmem:[#allocation3 + $0x20] sm:$0xf] %vm318, 0
      %328 = vst.msk [vmem:[#allocation3 + $0x24] sm:$0xf] %vm318, 0
      %329 = vst.msk [vmem:[#allocation3 + $0x28] sm:$0xf] %vm318, 0
      %330 = vst.msk [vmem:[#allocation3 + $0x2c] sm:$0xf] %vm318, 0
      %331 = vst.msk [vmem:[#allocation3 + $0x30] sm:$0xf] %vm318, 0
      %332 = vst.msk [vmem:[#allocation3 + $0x34] sm:$0xf] %vm318, 0
      %333 = vst.msk [vmem:[#allocation3 + $0x38] sm:$0xf] %vm318, 0
      %334 = vst.msk [vmem:[#allocation3 + $0x3c] sm:$0xf] %vm318, 0
      %335 = vst.msk [vmem:[#allocation3 + $0x40] sm:$0xf] %vm318, 0
      %336 = vst.msk [vmem:[#allocation3 + $0x44] sm:$0xf] %vm318, 0
      %337 = vst.msk [vmem:[#allocation3 + $0x48] sm:$0xf] %vm318, 0
      %338 = vst.msk [vmem:[#allocation3 + $0x4c] sm:$0xf] %vm318, 0
      %339 = vst.msk [vmem:[#allocation3 + $0x50] sm:$0xf] %vm318, 0
      %340 = vst.msk [vmem:[#allocation3 + $0x54] sm:$0xf] %vm318, 0
      %341 = vst.msk [vmem:[#allocation3 + $0x58] sm:$0xf] %vm318, 0
      %342 = vst.msk [vmem:[#allocation3 + $0x5c] sm:$0xf] %vm318, 0
      %343 = vst.msk [vmem:[#allocation3 + $0x60] sm:$0xf] %vm318, 0
      %344 = vst.msk [vmem:[#allocation3 + $0x64] sm:$0xf] %vm318, 0
      %345 = vst.msk [vmem:[#allocation3 + $0x68] sm:$0xf] %vm318, 0
      %346 = vst.msk [vmem:[#allocation3 + $0x6c] sm:$0xf] %vm318, 0
      %347 = vst.msk [vmem:[#allocation3 + $0x70] sm:$0xf] %vm318, 0
      %348 = vst.msk [vmem:[#allocation3 + $0x74] sm:$0xf] %vm318, 0
      %349 = vst.msk [vmem:[#allocation3 + $0x78] sm:$0xf] %vm318, 0
      %350 = vst.msk [vmem:[#allocation3 + $0x7c] sm:$0xf] %vm318, 0
      %351 = vst.msk [vmem:[#allocation3 + $0x80] sm:$0xf] %vm318, 0
      %352 = vst.msk [vmem:[#allocation3 + $0x84] sm:$0xf] %vm318, 0
      %353 = vst.msk [vmem:[#allocation3 + $0x88] sm:$0xf] %vm318, 0
      %354 = vst.msk [vmem:[#allocation3 + $0x8c] sm:$0xf] %vm318, 0
      %355 = vst.msk [vmem:[#allocation3 + $0x90] sm:$0xf] %vm318, 0
      %356 = vst.msk [vmem:[#allocation3 + $0x94] sm:$0xf] %vm318, 0
      %357 = vst.msk [vmem:[#allocation3 + $0x98] sm:$0xf] %vm318, 0
      %358 = vst.msk [vmem:[#allocation3 + $0x9c] sm:$0xf] %vm318, 0
      %359 = vst.msk [vmem:[#allocation3 + $0xa0] sm:$0xf] %vm318, 0
      %360 = vst.msk [vmem:[#allocation3 + $0xa4] sm:$0xf] %vm318, 0
      %vm361 = vcmask 26624
      %362 = vst.msk [vmem:[#allocation3 + $0xa8] sm:$0x7] %vm361, 0
      %v363 = vld [vmem:[%s261] sm:$0xf]
      %v364 = vld [vmem:[%s261 + $0x4] sm:$0xf]
      %vm365 = vsmask.f32 1280
      %vm366 = vsmask.f32 5392
      %vm367 = vmor %vm365, %vm366
      %v369 = vshrl.u32 %v363, 16
      %v371 = vrot.slane %v369, 6
      %v372 = vshll.u32 %v363, 16
      %v374 = vrot.slane %v372, 7
      %v375 = vor.u32 %v371, %v374
      %v376 = vrot.slane %v375, 4
      %v378 = vshrl.u32 %v364, 16
      %v380 = vrot.slane %v378, 6
      %v381 = vshll.u32 %v364, 16
      %v383 = vrot.slane %v381, 7
      %v384 = vor.u32 %v380, %v383
      %v385 = vsel %vm367, %v376, %v384
      %v386 = vrot.slane %v384, 4
      %vm390 = vcmask 257025
      %vm391 = vsmask.f32 7942
      %vm392 = vmand %vm390, %vm391
      %v393 = vld [vmem:[#allocation2 + $0x8] sm:$0xe]
      %v394 = vsel %vm392, %v375, %v393
      %395 = vst [vmem:[#allocation2 + $0x8] sm:$0xe] %v394
      %396 = vst.msk [vmem:[#allocation2 + $0xc] sm:$0xf] %vm273, %v385
      %vm397 = vcmask 254976
      %vm398 = vmand %vm397, %vm365
      %v399 = vld [vmem:[#allocation2 + $0x10] sm:$0x3]
      %v400 = vsel %vm398, %v386, %v399
      %401 = vst [vmem:[#allocation2 + $0x10] sm:$0x3] %v400
      %v402 = vld [vmem:[%s266] sm:$0xf]
      %v403 = vld [vmem:[%s266 + $0x4] sm:$0xf]
      %v405 = vshrl.u32 %v402, 16
      %v407 = vrot.slane %v405, 6
      %v408 = vshll.u32 %v402, 16
      %v410 = vrot.slane %v408, 7
      %v411 = vor.u32 %v407, %v410
      %v412 = vrot.slane %v411, 4
      %v414 = vshrl.u32 %v403, 16
      %v416 = vrot.slane %v414, 6
      %v417 = vshll.u32 %v403, 16
      %v419 = vrot.slane %v417, 7
      %v420 = vor.u32 %v416, %v419
      %v421 = vsel %vm367, %v412, %v420
      %v422 = vrot.slane %v420, 4
      %vm426 = vcmask 27649
      %vm427 = vmand %vm426, %vm391
      %v428 = vld [vmem:[#allocation3 + $0x8] sm:$0xe]
      %v429 = vsel %vm427, %v411, %v428
      %430 = vst [vmem:[#allocation3 + $0x8] sm:$0xe] %v429
      %431 = vst.msk [vmem:[#allocation3 + $0xc] sm:$0xf] %vm318, %v421
      %vm432 = vcmask 25600
      %vm433 = vmand %vm432, %vm365
      %v434 = vld [vmem:[#allocation3 + $0x10] sm:$0x3]
      %v435 = vsel %vm433, %v422, %v434
      %436 = vst [vmem:[#allocation3 + $0x10] sm:$0x3] %v435
      %v437 = vld [vmem:[%s261 + $0x8] sm:$0xf]
      %v438 = vld [vmem:[%s261 + $0xc] sm:$0xf]
      %vm439 = vsmask.f32 2304
      %vm440 = vsmask.f32 6416
      %vm441 = vmor %vm439, %vm440
      %v443 = vshrl.u32 %v437, 16
      %v445 = vrot.slane %v443, 5
      %v446 = vshll.u32 %v437, 16
      %v448 = vrot.slane %v446, 6
      %v449 = vor.u32 %v445, %v448
      %v450 = vrot.slane %v449, 4
      %v452 = vshrl.u32 %v438, 16
      %v454 = vrot.slane %v452, 5
      %v455 = vshll.u32 %v438, 16
      %v457 = vrot.slane %v455, 6
      %v458 = vor.u32 %v454, %v457
      %v459 = vsel %vm441, %v450, %v458
      %v460 = vrot.slane %v458, 4
      %vm464 = vcmask 257026
      %vm465 = vsmask.f32 7946
      %vm466 = vmand %vm464, %vm465
      %v467 = vld [vmem:[#allocation2 + $0x10] sm:$0xc]
      %v468 = vsel %vm466, %v449, %v467
      %469 = vst [vmem:[#allocation2 + $0x10] sm:$0xc] %v468
      %470 = vst.msk [vmem:[#allocation2 + $0x14] sm:$0xf] %vm273, %v459
      %vm471 = vcmask 256000
      %vm472 = vmand %vm471, %vm439
      %v473 = vld [vmem:[#allocation2 + $0x18] sm:$0x7]
      %v474 = vsel %vm472, %v460, %v473
      %475 = vst [vmem:[#allocation2 + $0x18] sm:$0x7] %v474
      %v476 = vld [vmem:[%s266 + $0x8] sm:$0xf]
      %v477 = vld [vmem:[%s266 + $0xc] sm:$0xf]
      %v479 = vshrl.u32 %v476, 16
      %v481 = vrot.slane %v479, 5
      %v482 = vshll.u32 %v476, 16
      %v484 = vrot.slane %v482, 6
      %v485 = vor.u32 %v481, %v484
      %v486 = vrot.slane %v485, 4
      %v488 = vshrl.u32 %v477, 16
      %v490 = vrot.slane %v488, 5
      %v491 = vshll.u32 %v477, 16
      %v493 = vrot.slane %v491, 6
      %v494 = vor.u32 %v490, %v493
      %v495 = vsel %vm441, %v486, %v494
      %v496 = vrot.slane %v494, 4
      %vm500 = vcmask 27650
      %vm501 = vmand %vm500, %vm465
      %v502 = vld [vmem:[#allocation3 + $0x10] sm:$0xc]
      %v503 = vsel %vm501, %v485, %v502
      %504 = vst [vmem:[#allocation3 + $0x10] sm:$0xc] %v503
      %505 = vst.msk [vmem:[#allocation3 + $0x14] sm:$0xf] %vm318, %v495
      %vm506 = vcmask 26624
      %vm507 = vmand %vm506, %vm439
      %v508 = vld [vmem:[#allocation3 + $0x18] sm:$0x7]
      %v509 = vsel %vm507, %v496, %v508
      %510 = vst [vmem:[#allocation3 + $0x18] sm:$0x7] %v509
      %v511 = vld [vmem:[%s261 + $0x10] sm:$0xf]
      %v512 = vld [vmem:[%s261 + $0x14] sm:$0xf]
      %vm513 = vsmask.f32 3328
      %vm514 = vsmask.f32 7440
      %vm515 = vmor %vm513, %vm514
      %v517 = vshll.u32 %v511, 16
      %v519 = vrot.slane %v517, 5
      %v520 = vshrl.u32 %v511, 16
      %v522 = vrot.slane %v520, 4
      %v523 = vor.u32 %v522, %v519
      %v524 = vrot.slane %v523, 4
      %v526 = vshll.u32 %v512, 16
      %v528 = vrot.slane %v526, 5
      %v529 = vsel %vm515, %v524, %v528
      %v530 = vshrl.u32 %v512, 16
      %v532 = vrot.slane %v530, 4
      %v533 = vor.u32 %v532, %v528
      %v534 = vrot.slane %v533, 4
      %vm538 = vcmask 257027
      %vm539 = vsmask.f32 7950
      %vm540 = vmand %vm538, %vm539
      %v541 = vld [vmem:[#allocation2 + $0x18] sm:$0x8]
      %v542 = vsel %vm540, %v519, %v541
      %543 = vst [vmem:[#allocation2 + $0x18] sm:$0x8] %v542
      %544 = vst.msk [vmem:[#allocation2 + $0x1c] sm:$0xf] %vm273, %v529
      %vm545 = vcmask 257024
      %vm546 = vmand %vm545, %vm513
      %v547 = vld [vmem:[#allocation2 + $0x20] sm:$0xf]
      %v548 = vsel %vm546, %v534, %v547
      %549 = vst [vmem:[#allocation2 + $0x20] sm:$0xf] %v548
      %v550 = vld [vmem:[%s266 + $0x10] sm:$0xf]
      %v551 = vld [vmem:[%s266 + $0x14] sm:$0xf]
      %v553 = vshll.u32 %v550, 16
      %v555 = vrot.slane %v553, 5
      %v556 = vshrl.u32 %v550, 16
      %v558 = vrot.slane %v556, 4
      %v559 = vor.u32 %v558, %v555
      %v560 = vrot.slane %v559, 4
      %v562 = vshll.u32 %v551, 16
      %v564 = vrot.slane %v562, 5
      %v565 = vsel %vm515, %v560, %v564
      %v566 = vshrl.u32 %v551, 16
      %v568 = vrot.slane %v566, 4
      %v569 = vor.u32 %v568, %v564
      %v570 = vrot.slane %v569, 4
      %vm574 = vcmask 27651
      %vm575 = vmand %vm574, %vm539
      %v576 = vld [vmem:[#allocation3 + $0x18] sm:$0x8]
      %v577 = vsel %vm575, %v555, %v576
      %578 = vst [vmem:[#allocation3 + $0x18] sm:$0x8] %v577
      %579 = vst.msk [vmem:[#allocation3 + $0x1c] sm:$0xf] %vm318, %v565
      %vm580 = vcmask 27648
      %vm581 = vmand %vm580, %vm513
      %v582 = vld [vmem:[#allocation3 + $0x20] sm:$0xf]
      %v583 = vsel %vm581, %v570, %v582
      %584 = vst [vmem:[#allocation3 + $0x20] sm:$0xf] %v583
      %v585 = vld [vmem:[%s261 + $0x18] sm:$0xf]
      %v586 = vld [vmem:[%s261 + $0x1c] sm:$0xf]
      %vm587 = vsmask.f32 256
      %vm588 = vsmask.f32 4368
      %vm589 = vmor %vm587, %vm588
      %v591 = vshrl.u32 %v585, 16
      %v593 = vrot.slane %v591, 7
      %v594 = vshll.u32 %v585, 16
      %v596 = vor.u32 %v593, %v594
      %v597 = vrot.slane %v593, 4
      %v599 = vshrl.u32 %v586, 16
      %v601 = vrot.slane %v599, 7
      %v602 = vshll.u32 %v586, 16
      %v604 = vor.u32 %v601, %v602
      %v605 = vsel %vm589, %v597, %v604
      %v606 = vrot.slane %v601, 4
      %vm610 = vsmask.f32 7938
      %vm611 = vmand %vm545, %vm610
      %v612 = vld [vmem:[#allocation2 + $0x24] sm:$0xf]
      %v613 = vsel %vm611, %v596, %v612
      %614 = vst [vmem:[#allocation2 + $0x24] sm:$0xf] %v613
      %615 = vst.msk [vmem:[#allocation2 + $0x28] sm:$0xf] %vm273, %v605
      %vm616 = vcmask 253952
      %vm617 = vmand %vm616, %vm587
      %v618 = vld [vmem:[#allocation2 + $0x2c] sm:$0x1]
      %v619 = vsel %vm617, %v606, %v618
      %620 = vst [vmem:[#allocation2 + $0x2c] sm:$0x1] %v619
      %v621 = vld [vmem:[%s266 + $0x18] sm:$0xf]
      %v622 = vld [vmem:[%s266 + $0x1c] sm:$0xf]
      %v624 = vshrl.u32 %v621, 16
      %v626 = vrot.slane %v624, 7
      %v627 = vshll.u32 %v621, 16
      %v629 = vor.u32 %v626, %v627
      %v630 = vrot.slane %v626, 4
      %v632 = vshrl.u32 %v622, 16
      %v634 = vrot.slane %v632, 7
      %v635 = vshll.u32 %v622, 16
      %v637 = vor.u32 %v634, %v635
      %v638 = vsel %vm589, %v630, %v637
      %v639 = vrot.slane %v634, 4
      %vm643 = vmand %vm580, %vm610
      %v644 = vld [vmem:[#allocation3 + $0x24] sm:$0xf]
      %v645 = vsel %vm643, %v629, %v644
      %646 = vst [vmem:[#allocation3 + $0x24] sm:$0xf] %v645
      %647 = vst.msk [vmem:[#allocation3 + $0x28] sm:$0xf] %vm318, %v638
      %vm648 = vcmask 24576
      %vm649 = vmand %vm648, %vm587
      %v650 = vld [vmem:[#allocation3 + $0x2c] sm:$0x1]
      %v651 = vsel %vm649, %v639, %v650
      %652 = vst [vmem:[#allocation3 + $0x2c] sm:$0x1] %v651
      %v653 = vld [vmem:[%s261 + $0x20] sm:$0xf]
      %v654 = vld [vmem:[%s261 + $0x24] sm:$0xf]
      %v656 = vshrl.u32 %v653, 16
      %v658 = vrot.slane %v656, 6
      %v659 = vshll.u32 %v653, 16
      %v661 = vrot.slane %v659, 7
      %v662 = vor.u32 %v658, %v661
      %v663 = vrot.slane %v662, 4
      %v665 = vshrl.u32 %v654, 16
      %v667 = vrot.slane %v665, 6
      %v668 = vshll.u32 %v654, 16
      %v670 = vrot.slane %v668, 7
      %v671 = vor.u32 %v667, %v670
      %v672 = vsel %vm367, %v663, %v671
      %v673 = vrot.slane %v671, 4
      %v677 = vld [vmem:[#allocation2 + $0x2c] sm:$0xe]
      %v678 = vsel %vm392, %v662, %v677
      %679 = vst [vmem:[#allocation2 + $0x2c] sm:$0xe] %v678
      %680 = vst.msk [vmem:[#allocation2 + $0x30] sm:$0xf] %vm273, %v672
      %v681 = vld [vmem:[#allocation2 + $0x34] sm:$0x3]
      %v682 = vsel %vm398, %v673, %v681
      %683 = vst [vmem:[#allocation2 + $0x34] sm:$0x3] %v682
      %v684 = vld [vmem:[%s266 + $0x20] sm:$0xf]
      %v685 = vld [vmem:[%s266 + $0x24] sm:$0xf]
      %v687 = vshrl.u32 %v684, 16
      %v689 = vrot.slane %v687, 6
      %v690 = vshll.u32 %v684, 16
      %v692 = vrot.slane %v690, 7
      %v693 = vor.u32 %v689, %v692
      %v694 = vrot.slane %v693, 4
      %v696 = vshrl.u32 %v685, 16
      %v698 = vrot.slane %v696, 6
      %v699 = vshll.u32 %v685, 16
      %v701 = vrot.slane %v699, 7
      %v702 = vor.u32 %v698, %v701
      %v703 = vsel %vm367, %v694, %v702
      %v704 = vrot.slane %v702, 4
      %v708 = vld [vmem:[#allocation3 + $0x2c] sm:$0xe]
      %v709 = vsel %vm427, %v693, %v708
      %710 = vst [vmem:[#allocation3 + $0x2c] sm:$0xe] %v709
      %711 = vst.msk [vmem:[#allocation3 + $0x30] sm:$0xf] %vm318, %v703
      %v712 = vld [vmem:[#allocation3 + $0x34] sm:$0x3]
      %v713 = vsel %vm433, %v704, %v712
      %714 = vst [vmem:[#allocation3 + $0x34] sm:$0x3] %v713
      %v715 = vld [vmem:[%s261 + $0x28] sm:$0xf]
      %v716 = vld [vmem:[%s261 + $0x2c] sm:$0xf]
      %v718 = vshrl.u32 %v715, 16
      %v720 = vrot.slane %v718, 5
      %v721 = vshll.u32 %v715, 16
      %v723 = vrot.slane %v721, 6
      %v724 = vor.u32 %v720, %v723
      %v725 = vrot.slane %v724, 4
      %v727 = vshrl.u32 %v716, 16
      %v729 = vrot.slane %v727, 5
      %v730 = vshll.u32 %v716, 16
      %v732 = vrot.slane %v730, 6
      %v733 = vor.u32 %v729, %v732
      %v734 = vsel %vm441, %v725, %v733
      %v735 = vrot.slane %v733, 4
      %v739 = vld [vmem:[#allocation2 + $0x34] sm:$0xc]
      %v740 = vsel %vm466, %v724, %v739
      %741 = vst [vmem:[#allocation2 + $0x34] sm:$0xc] %v740
      %742 = vst.msk [vmem:[#allocation2 + $0x38] sm:$0xf] %vm273, %v734
      %v743 = vld [vmem:[#allocation2 + $0x3c] sm:$0x7]
      %v744 = vsel %vm472, %v735, %v743
      %745 = vst [vmem:[#allocation2 + $0x3c] sm:$0x7] %v744
      %v746 = vld [vmem:[%s266 + $0x28] sm:$0xf]
      %v747 = vld [vmem:[%s266 + $0x2c] sm:$0xf]
      %v749 = vshrl.u32 %v746, 16
      %v751 = vrot.slane %v749, 5
      %v752 = vshll.u32 %v746, 16
      %v754 = vrot.slane %v752, 6
      %v755 = vor.u32 %v751, %v754
      %v756 = vrot.slane %v755, 4
      %v758 = vshrl.u32 %v747, 16
      %v760 = vrot.slane %v758, 5
      %v761 = vshll.u32 %v747, 16
      %v763 = vrot.slane %v761, 6
      %v764 = vor.u32 %v760, %v763
      %v765 = vsel %vm441, %v756, %v764
      %v766 = vrot.slane %v764, 4
      %v770 = vld [vmem:[#allocation3 + $0x34] sm:$0xc]
      %v771 = vsel %vm501, %v755, %v770
      %772 = vst [vmem:[#allocation3 + $0x34] sm:$0xc] %v771
      %773 = vst.msk [vmem:[#allocation3 + $0x38] sm:$0xf] %vm318, %v765
      %v774 = vld [vmem:[#allocation3 + $0x3c] sm:$0x7]
      %v775 = vsel %vm507, %v766, %v774
      %776 = vst [vmem:[#allocation3 + $0x3c] sm:$0x7] %v775
      %v777 = vld [vmem:[%s261 + $0x30] sm:$0xf]
      %v778 = vld [vmem:[%s261 + $0x34] sm:$0xf]
      %v780 = vshll.u32 %v777, 16
      %v782 = vrot.slane %v780, 5
      %v783 = vshrl.u32 %v777, 16
      %v785 = vrot.slane %v783, 4
      %v786 = vor.u32 %v785, %v782
      %v787 = vrot.slane %v786, 4
      %v789 = vshll.u32 %v778, 16
      %v791 = vrot.slane %v789, 5
      %v792 = vsel %vm515, %v787, %v791
      %v793 = vshrl.u32 %v778, 16
      %v795 = vrot.slane %v793, 4
      %v796 = vor.u32 %v795, %v791
      %v797 = vrot.slane %v796, 4
      %v801 = vld [vmem:[#allocation2 + $0x3c] sm:$0x8]
      %v802 = vsel %vm540, %v782, %v801
      %803 = vst [vmem:[#allocation2 + $0x3c] sm:$0x8] %v802
      %804 = vst.msk [vmem:[#allocation2 + $0x40] sm:$0xf] %vm273, %v792
      %v805 = vld [vmem:[#allocation2 + $0x44] sm:$0xf]
      %v806 = vsel %vm546, %v797, %v805
      %807 = vst [vmem:[#allocation2 + $0x44] sm:$0xf] %v806
      %v808 = vld [vmem:[%s266 + $0x30] sm:$0xf]
      %v809 = vld [vmem:[%s266 + $0x34] sm:$0xf]
      %v811 = vshll.u32 %v808, 16
      %v813 = vrot.slane %v811, 5
      %v814 = vshrl.u32 %v808, 16
      %v816 = vrot.slane %v814, 4
      %v817 = vor.u32 %v816, %v813
      %v818 = vrot.slane %v817, 4
      %v820 = vshll.u32 %v809, 16
      %v822 = vrot.slane %v820, 5
      %v823 = vsel %vm515, %v818, %v822
      %v824 = vshrl.u32 %v809, 16
      %v826 = vrot.slane %v824, 4
      %v827 = vor.u32 %v826, %v822
      %v828 = vrot.slane %v827, 4
      %v832 = vld [vmem:[#allocation3 + $0x3c] sm:$0x8]
      %v833 = vsel %vm575, %v813, %v832
      %834 = vst [vmem:[#allocation3 + $0x3c] sm:$0x8] %v833
      %835 = vst.msk [vmem:[#allocation3 + $0x40] sm:$0xf] %vm318, %v823
      %v836 = vld [vmem:[#allocation3 + $0x44] sm:$0xf]
      %v837 = vsel %vm581, %v828, %v836
      %838 = vst [vmem:[#allocation3 + $0x44] sm:$0xf] %v837
      %v839 = vld [vmem:[%s261 + $0x38] sm:$0xf]
      %v840 = vld [vmem:[%s261 + $0x3c] sm:$0xf]
      %v842 = vshrl.u32 %v839, 16
      %v844 = vrot.slane %v842, 7
      %v845 = vshll.u32 %v839, 16
      %v847 = vor.u32 %v844, %v845
      %v848 = vrot.slane %v844, 4
      %v850 = vshrl.u32 %v840, 16
      %v852 = vrot.slane %v850, 7
      %v853 = vshll.u32 %v840, 16
      %v855 = vor.u32 %v852, %v853
      %v856 = vsel %vm589, %v848, %v855
      %v857 = vrot.slane %v852, 4
      %v861 = vld [vmem:[#allocation2 + $0x48] sm:$0xf]
      %v862 = vsel %vm611, %v847, %v861
      %863 = vst [vmem:[#allocation2 + $0x48] sm:$0xf] %v862
      %864 = vst.msk [vmem:[#allocation2 + $0x4c] sm:$0xf] %vm273, %v856
      %v865 = vld [vmem:[#allocation2 + $0x50] sm:$0x1]
      %v866 = vsel %vm617, %v857, %v865
      %867 = vst [vmem:[#allocation2 + $0x50] sm:$0x1] %v866
      %v868 = vld [vmem:[%s266 + $0x38] sm:$0xf]
      %v869 = vld [vmem:[%s266 + $0x3c] sm:$0xf]
      %v871 = vshrl.u32 %v868, 16
      %v873 = vrot.slane %v871, 7
      %v874 = vshll.u32 %v868, 16
      %v876 = vor.u32 %v873, %v874
      %v877 = vrot.slane %v873, 4
      %v879 = vshrl.u32 %v869, 16
      %v881 = vrot.slane %v879, 7
      %v882 = vshll.u32 %v869, 16
      %v884 = vor.u32 %v881, %v882
      %v885 = vsel %vm589, %v877, %v884
      %v886 = vrot.slane %v881, 4
      %v890 = vld [vmem:[#allocation3 + $0x48] sm:$0xf]
      %v891 = vsel %vm643, %v876, %v890
      %892 = vst [vmem:[#allocation3 + $0x48] sm:$0xf] %v891
      %893 = vst.msk [vmem:[#allocation3 + $0x4c] sm:$0xf] %vm318, %v885
      %v894 = vld [vmem:[#allocation3 + $0x50] sm:$0x1]
      %v895 = vsel %vm649, %v886, %v894
      %896 = vst [vmem:[#allocation3 + $0x50] sm:$0x1] %v895
      %v897 = vld [vmem:[%s261 + $0x40] sm:$0xf]
      %v898 = vld [vmem:[%s261 + $0x44] sm:$0xf]
      %v900 = vshrl.u32 %v897, 16
      %v902 = vrot.slane %v900, 6
      %v903 = vshll.u32 %v897, 16
      %v905 = vrot.slane %v903, 7
      %v906 = vor.u32 %v902, %v905
      %v907 = vrot.slane %v906, 4
      %v909 = vshrl.u32 %v898, 16
      %v911 = vrot.slane %v909, 6
      %v912 = vshll.u32 %v898, 16
      %v914 = vrot.slane %v912, 7
      %v915 = vor.u32 %v911, %v914
      %v916 = vsel %vm367, %v907, %v915
      %v917 = vrot.slane %v915, 4
      %v921 = vld [vmem:[#allocation2 + $0x50] sm:$0xe]
      %v922 = vsel %vm392, %v906, %v921
      %923 = vst [vmem:[#allocation2 + $0x50] sm:$0xe] %v922
      %924 = vst.msk [vmem:[#allocation2 + $0x54] sm:$0xf] %vm273, %v916
      %v925 = vld [vmem:[#allocation2 + $0x58] sm:$0x3]
      %v926 = vsel %vm398, %v917, %v925
      %927 = vst [vmem:[#allocation2 + $0x58] sm:$0x3] %v926
      %v928 = vld [vmem:[%s266 + $0x40] sm:$0xf]
      %v929 = vld [vmem:[%s266 + $0x44] sm:$0xf]
      %v931 = vshrl.u32 %v928, 16
      %v933 = vrot.slane %v931, 6
      %v934 = vshll.u32 %v928, 16
      %v936 = vrot.slane %v934, 7
      %v937 = vor.u32 %v933, %v936
      %v938 = vrot.slane %v937, 4
      %v940 = vshrl.u32 %v929, 16
      %v942 = vrot.slane %v940, 6
      %v943 = vshll.u32 %v929, 16
      %v945 = vrot.slane %v943, 7
      %v946 = vor.u32 %v942, %v945
      %v947 = vsel %vm367, %v938, %v946
      %v948 = vrot.slane %v946, 4
      %v952 = vld [vmem:[#allocation3 + $0x50] sm:$0xe]
      %v953 = vsel %vm427, %v937, %v952
      %954 = vst [vmem:[#allocation3 + $0x50] sm:$0xe] %v953
      %955 = vst.msk [vmem:[#allocation3 + $0x54] sm:$0xf] %vm318, %v947
      %v956 = vld [vmem:[#allocation3 + $0x58] sm:$0x3]
      %v957 = vsel %vm433, %v948, %v956
      %958 = vst [vmem:[#allocation3 + $0x58] sm:$0x3] %v957
      %v959 = vld [vmem:[%s261 + $0x48] sm:$0xf]
      %v960 = vld [vmem:[%s261 + $0x4c] sm:$0xf]
      %v962 = vshrl.u32 %v959, 16
      %v964 = vrot.slane %v962, 5
      %v965 = vshll.u32 %v959, 16
      %v967 = vrot.slane %v965, 6
      %v968 = vor.u32 %v964, %v967
      %v969 = vrot.slane %v968, 4
      %v971 = vshrl.u32 %v960, 16
      %v973 = vrot.slane %v971, 5
      %v974 = vshll.u32 %v960, 16
      %v976 = vrot.slane %v974, 6
      %v977 = vor.u32 %v973, %v976
      %v978 = vsel %vm441, %v969, %v977
      %v979 = vrot.slane %v977, 4
      %v983 = vld [vmem:[#allocation2 + $0x58] sm:$0xc]
      %v984 = vsel %vm466, %v968, %v983
      %985 = vst [vmem:[#allocation2 + $0x58] sm:$0xc] %v984
      %986 = vst.msk [vmem:[#allocation2 + $0x5c] sm:$0xf] %vm273, %v978
      %v987 = vld [vmem:[#allocation2 + $0x60] sm:$0x7]
      %v988 = vsel %vm472, %v979, %v987
      %989 = vst [vmem:[#allocation2 + $0x60] sm:$0x7] %v988
      %v990 = vld [vmem:[%s266 + $0x48] sm:$0xf]
      %v991 = vld [vmem:[%s266 + $0x4c] sm:$0xf]
      %v993 = vshrl.u32 %v990, 16
      %v995 = vrot.slane %v993, 5
      %v996 = vshll.u32 %v990, 16
      %v998 = vrot.slane %v996, 6
      %v999 = vor.u32 %v995, %v998
      %v1000 = vrot.slane %v999, 4
      %v1002 = vshrl.u32 %v991, 16
      %v1004 = vrot.slane %v1002, 5
      %v1005 = vshll.u32 %v991, 16
      %v1007 = vrot.slane %v1005, 6
      %v1008 = vor.u32 %v1004, %v1007
      %v1009 = vsel %vm441, %v1000, %v1008
      %v1010 = vrot.slane %v1008, 4
      %v1014 = vld [vmem:[#allocation3 + $0x58] sm:$0xc]
      %v1015 = vsel %vm501, %v999, %v1014
      %1016 = vst [vmem:[#allocation3 + $0x58] sm:$0xc] %v1015
      %1017 = vst.msk [vmem:[#allocation3 + $0x5c] sm:$0xf] %vm318, %v1009
      %v1018 = vld [vmem:[#allocation3 + $0x60] sm:$0x7]
      %v1019 = vsel %vm507, %v1010, %v1018
      %1020 = vst [vmem:[#allocation3 + $0x60] sm:$0x7] %v1019
      %v1021 = vld [vmem:[%s261 + $0x50] sm:$0xf]
      %v1022 = vld [vmem:[%s261 + $0x54] sm:$0xf]
      %v1024 = vshll.u32 %v1021, 16
      %v1026 = vrot.slane %v1024, 5
      %v1027 = vshrl.u32 %v1021, 16
      %v1029 = vrot.slane %v1027, 4
      %v1030 = vor.u32 %v1029, %v1026
      %v1031 = vrot.slane %v1030, 4
      %v1033 = vshll.u32 %v1022, 16
      %v1035 = vrot.slane %v1033, 5
      %v1036 = vsel %vm515, %v1031, %v1035
      %v1037 = vshrl.u32 %v1022, 16
      %v1039 = vrot.slane %v1037, 4
      %v1040 = vor.u32 %v1039, %v1035
      %v1041 = vrot.slane %v1040, 4
      %v1045 = vld [vmem:[#allocation2 + $0x60] sm:$0x8]
      %v1046 = vsel %vm540, %v1026, %v1045
      %1047 = vst [vmem:[#allocation2 + $0x60] sm:$0x8] %v1046
      %1048 = vst.msk [vmem:[#allocation2 + $0x64] sm:$0xf] %vm273, %v1036
      %v1049 = vld [vmem:[#allocation2 + $0x68] sm:$0xf]
      %v1050 = vsel %vm546, %v1041, %v1049
      %1051 = vst [vmem:[#allocation2 + $0x68] sm:$0xf] %v1050
      %v1052 = vld [vmem:[%s266 + $0x50] sm:$0xf]
      %v1053 = vld [vmem:[%s266 + $0x54] sm:$0xf]
      %v1055 = vshll.u32 %v1052, 16
      %v1057 = vrot.slane %v1055, 5
      %v1058 = vshrl.u32 %v1052, 16
      %v1060 = vrot.slane %v1058, 4
      %v1061 = vor.u32 %v1060, %v1057
      %v1062 = vrot.slane %v1061, 4
      %v1064 = vshll.u32 %v1053, 16
      %v1066 = vrot.slane %v1064, 5
      %v1067 = vsel %vm515, %v1062, %v1066
      %v1068 = vshrl.u32 %v1053, 16
      %v1070 = vrot.slane %v1068, 4
      %v1071 = vor.u32 %v1070, %v1066
      %v1072 = vrot.slane %v1071, 4
      %v1076 = vld [vmem:[#allocation3 + $0x60] sm:$0x8]
      %v1077 = vsel %vm575, %v1057, %v1076
      %1078 = vst [vmem:[#allocation3 + $0x60] sm:$0x8] %v1077
      %1079 = vst.msk [vmem:[#allocation3 + $0x64] sm:$0xf] %vm318, %v1067
      %v1080 = vld [vmem:[#allocation3 + $0x68] sm:$0xf]
      %v1081 = vsel %vm581, %v1072, %v1080
      %1082 = vst [vmem:[#allocation3 + $0x68] sm:$0xf] %v1081
      %v1083 = vld [vmem:[%s261 + $0x58] sm:$0xf]
      %v1084 = vld [vmem:[%s261 + $0x5c] sm:$0xf]
      %v1086 = vshrl.u32 %v1083, 16
      %v1088 = vrot.slane %v1086, 7
      %v1089 = vshll.u32 %v1083, 16
      %v1091 = vor.u32 %v1088, %v1089
      %v1092 = vrot.slane %v1088, 4
      %v1094 = vshrl.u32 %v1084, 16
      %v1096 = vrot.slane %v1094, 7
      %v1097 = vshll.u32 %v1084, 16
      %v1099 = vor.u32 %v1096, %v1097
      %v1100 = vsel %vm589, %v1092, %v1099
      %v1101 = vrot.slane %v1096, 4
      %v1105 = vld [vmem:[#allocation2 + $0x6c] sm:$0xf]
      %v1106 = vsel %vm611, %v1091, %v1105
      %1107 = vst [vmem:[#allocation2 + $0x6c] sm:$0xf] %v1106
      %1108 = vst.msk [vmem:[#allocation2 + $0x70] sm:$0xf] %vm273, %v1100
      %v1109 = vld [vmem:[#allocation2 + $0x74] sm:$0x1]
      %v1110 = vsel %vm617, %v1101, %v1109
      %1111 = vst [vmem:[#allocation2 + $0x74] sm:$0x1] %v1110
      %v1112 = vld [vmem:[%s266 + $0x58] sm:$0xf]
      %v1113 = vld [vmem:[%s266 + $0x5c] sm:$0xf]
      %v1115 = vshrl.u32 %v1112, 16
      %v1117 = vrot.slane %v1115, 7
      %v1118 = vshll.u32 %v1112, 16
      %v1120 = vor.u32 %v1117, %v1118
      %v1121 = vrot.slane %v1117, 4
      %v1123 = vshrl.u32 %v1113, 16
      %v1125 = vrot.slane %v1123, 7
      %v1126 = vshll.u32 %v1113, 16
      %v1128 = vor.u32 %v1125, %v1126
      %v1129 = vsel %vm589, %v1121, %v1128
      %v1130 = vrot.slane %v1125, 4
      %v1134 = vld [vmem:[#allocation3 + $0x6c] sm:$0xf]
      %v1135 = vsel %vm643, %v1120, %v1134
      %1136 = vst [vmem:[#allocation3 + $0x6c] sm:$0xf] %v1135
      %1137 = vst.msk [vmem:[#allocation3 + $0x70] sm:$0xf] %vm318, %v1129
      %v1138 = vld [vmem:[#allocation3 + $0x74] sm:$0x1]
      %v1139 = vsel %vm649, %v1130, %v1138
      %1140 = vst [vmem:[#allocation3 + $0x74] sm:$0x1] %v1139
      %v1141 = vld [vmem:[%s261 + $0x60] sm:$0xf]
      %v1142 = vld [vmem:[%s261 + $0x64] sm:$0xf]
      %v1144 = vshrl.u32 %v1141, 16
      %v1146 = vrot.slane %v1144, 6
      %v1147 = vshll.u32 %v1141, 16
      %v1149 = vrot.slane %v1147, 7
      %v1150 = vor.u32 %v1146, %v1149
      %v1151 = vrot.slane %v1150, 4
      %v1153 = vshrl.u32 %v1142, 16
      %v1155 = vrot.slane %v1153, 6
      %v1156 = vshll.u32 %v1142, 16
      %v1158 = vrot.slane %v1156, 7
      %v1159 = vor.u32 %v1155, %v1158
      %v1160 = vsel %vm367, %v1151, %v1159
      %v1161 = vrot.slane %v1159, 4
      %v1165 = vld [vmem:[#allocation2 + $0x74] sm:$0xe]
      %v1166 = vsel %vm392, %v1150, %v1165
      %1167 = vst [vmem:[#allocation2 + $0x74] sm:$0xe] %v1166
      %1168 = vst.msk [vmem:[#allocation2 + $0x78] sm:$0xf] %vm273, %v1160
      %v1169 = vld [vmem:[#allocation2 + $0x7c] sm:$0x3]
      %v1170 = vsel %vm398, %v1161, %v1169
      %1171 = vst [vmem:[#allocation2 + $0x7c] sm:$0x3] %v1170
      %v1172 = vld [vmem:[%s266 + $0x60] sm:$0xf]
      %v1173 = vld [vmem:[%s266 + $0x64] sm:$0xf]
      %v1175 = vshrl.u32 %v1172, 16
      %v1177 = vrot.slane %v1175, 6
      %v1178 = vshll.u32 %v1172, 16
      %v1180 = vrot.slane %v1178, 7
      %v1181 = vor.u32 %v1177, %v1180
      %v1182 = vrot.slane %v1181, 4
      %v1184 = vshrl.u32 %v1173, 16
      %v1186 = vrot.slane %v1184, 6
      %v1187 = vshll.u32 %v1173, 16
      %v1189 = vrot.slane %v1187, 7
      %v1190 = vor.u32 %v1186, %v1189
      %v1191 = vsel %vm367, %v1182, %v1190
      %v1192 = vrot.slane %v1190, 4
      %v1196 = vld [vmem:[#allocation3 + $0x74] sm:$0xe]
      %v1197 = vsel %vm427, %v1181, %v1196
      %1198 = vst [vmem:[#allocation3 + $0x74] sm:$0xe] %v1197
      %1199 = vst.msk [vmem:[#allocation3 + $0x78] sm:$0xf] %vm318, %v1191
      %v1200 = vld [vmem:[#allocation3 + $0x7c] sm:$0x3]
      %v1201 = vsel %vm433, %v1192, %v1200
      %1202 = vst [vmem:[#allocation3 + $0x7c] sm:$0x3] %v1201
      %v1203 = vld [vmem:[%s261 + $0x68] sm:$0xf]
      %v1204 = vld [vmem:[%s261 + $0x6c] sm:$0xf]
      %v1206 = vshrl.u32 %v1203, 16
      %v1208 = vrot.slane %v1206, 5
      %v1209 = vshll.u32 %v1203, 16
      %v1211 = vrot.slane %v1209, 6
      %v1212 = vor.u32 %v1208, %v1211
      %v1213 = vrot.slane %v1212, 4
      %v1215 = vshrl.u32 %v1204, 16
      %v1217 = vrot.slane %v1215, 5
      %v1218 = vshll.u32 %v1204, 16
      %v1220 = vrot.slane %v1218, 6
      %v1221 = vor.u32 %v1217, %v1220
      %v1222 = vsel %vm441, %v1213, %v1221
      %v1223 = vrot.slane %v1221, 4
      %v1227 = vld [vmem:[#allocation2 + $0x7c] sm:$0xc]
      %v1228 = vsel %vm466, %v1212, %v1227
      %1229 = vst [vmem:[#allocation2 + $0x7c] sm:$0xc] %v1228
      %1230 = vst.msk [vmem:[#allocation2 + $0x80] sm:$0xf] %vm273, %v1222
      %v1231 = vld [vmem:[#allocation2 + $0x84] sm:$0x7]
      %v1232 = vsel %vm472, %v1223, %v1231
      %1233 = vst [vmem:[#allocation2 + $0x84] sm:$0x7] %v1232
      %v1234 = vld [vmem:[%s266 + $0x68] sm:$0xf]
      %v1235 = vld [vmem:[%s266 + $0x6c] sm:$0xf]
      %v1237 = vshrl.u32 %v1234, 16
      %v1239 = vrot.slane %v1237, 5
      %v1240 = vshll.u32 %v1234, 16
      %v1242 = vrot.slane %v1240, 6
      %v1243 = vor.u32 %v1239, %v1242
      %v1244 = vrot.slane %v1243, 4
      %v1246 = vshrl.u32 %v1235, 16
      %v1248 = vrot.slane %v1246, 5
      %v1249 = vshll.u32 %v1235, 16
      %v1251 = vrot.slane %v1249, 6
      %v1252 = vor.u32 %v1248, %v1251
      %v1253 = vsel %vm441, %v1244, %v1252
      %v1254 = vrot.slane %v1252, 4
      %v1258 = vld [vmem:[#allocation3 + $0x7c] sm:$0xc]
      %v1259 = vsel %vm501, %v1243, %v1258
      %1260 = vst [vmem:[#allocation3 + $0x7c] sm:$0xc] %v1259
      %1261 = vst.msk [vmem:[#allocation3 + $0x80] sm:$0xf] %vm318, %v1253
      %v1262 = vld [vmem:[#allocation3 + $0x84] sm:$0x7]
      %v1263 = vsel %vm507, %v1254, %v1262
      %1264 = vst [vmem:[#allocation3 + $0x84] sm:$0x7] %v1263
      %v1265 = vld [vmem:[%s261 + $0x70] sm:$0xf]
      %v1266 = vld [vmem:[%s261 + $0x74] sm:$0xf]
      %v1268 = vshll.u32 %v1265, 16
      %v1270 = vrot.slane %v1268, 5
      %v1271 = vshrl.u32 %v1265, 16
      %v1273 = vrot.slane %v1271, 4
      %v1274 = vor.u32 %v1273, %v1270
      %v1275 = vrot.slane %v1274, 4
      %v1277 = vshll.u32 %v1266, 16
      %v1279 = vrot.slane %v1277, 5
      %v1280 = vsel %vm515, %v1275, %v1279
      %v1281 = vshrl.u32 %v1266, 16
      %v1283 = vrot.slane %v1281, 4
      %v1284 = vor.u32 %v1283, %v1279
      %v1285 = vrot.slane %v1284, 4
      %v1289 = vld [vmem:[#allocation2 + $0x84] sm:$0x8]
      %v1290 = vsel %vm540, %v1270, %v1289
      %1291 = vst [vmem:[#allocation2 + $0x84] sm:$0x8] %v1290
      %1292 = vst.msk [vmem:[#allocation2 + $0x88] sm:$0xf] %vm273, %v1280
      %v1293 = vld [vmem:[#allocation2 + $0x8c] sm:$0xf]
      %v1294 = vsel %vm546, %v1285, %v1293
      %1295 = vst [vmem:[#allocation2 + $0x8c] sm:$0xf] %v1294
      %v1296 = vld [vmem:[%s266 + $0x70] sm:$0xf]
      %v1297 = vld [vmem:[%s266 + $0x74] sm:$0xf]
      %v1299 = vshll.u32 %v1296, 16
      %v1301 = vrot.slane %v1299, 5
      %v1302 = vshrl.u32 %v1296, 16
      %v1304 = vrot.slane %v1302, 4
      %v1305 = vor.u32 %v1304, %v1301
      %v1306 = vrot.slane %v1305, 4
      %v1308 = vshll.u32 %v1297, 16
      %v1310 = vrot.slane %v1308, 5
      %v1311 = vsel %vm515, %v1306, %v1310
      %v1312 = vshrl.u32 %v1297, 16
      %v1314 = vrot.slane %v1312, 4
      %v1315 = vor.u32 %v1314, %v1310
      %v1316 = vrot.slane %v1315, 4
      %v1320 = vld [vmem:[#allocation3 + $0x84] sm:$0x8]
      %v1321 = vsel %vm575, %v1301, %v1320
      %1322 = vst [vmem:[#allocation3 + $0x84] sm:$0x8] %v1321
      %1323 = vst.msk [vmem:[#allocation3 + $0x88] sm:$0xf] %vm318, %v1311
      %v1324 = vld [vmem:[#allocation3 + $0x8c] sm:$0xf]
      %v1325 = vsel %vm581, %v1316, %v1324
      %1326 = vst [vmem:[#allocation3 + $0x8c] sm:$0xf] %v1325
      %v1327 = vld [vmem:[%s261 + $0x78] sm:$0xf]
      %v1328 = vld [vmem:[%s261 + $0x7c] sm:$0xf]
      %v1330 = vshrl.u32 %v1327, 16
      %v1332 = vrot.slane %v1330, 7
      %v1333 = vshll.u32 %v1327, 16
      %v1335 = vor.u32 %v1332, %v1333
      %v1336 = vrot.slane %v1332, 4
      %v1338 = vshrl.u32 %v1328, 16
      %v1340 = vrot.slane %v1338, 7
      %v1341 = vshll.u32 %v1328, 16
      %v1343 = vor.u32 %v1340, %v1341
      %v1344 = vsel %vm589, %v1336, %v1343
      %v1345 = vrot.slane %v1340, 4
      %v1349 = vld [vmem:[#allocation2 + $0x90] sm:$0xf]
      %v1350 = vsel %vm611, %v1335, %v1349
      %1351 = vst [vmem:[#allocation2 + $0x90] sm:$0xf] %v1350
      %1352 = vst.msk [vmem:[#allocation2 + $0x94] sm:$0xf] %vm273, %v1344
      %v1353 = vld [vmem:[#allocation2 + $0x98] sm:$0x1]
      %v1354 = vsel %vm617, %v1345, %v1353
      %1355 = vst [vmem:[#allocation2 + $0x98] sm:$0x1] %v1354
      %v1356 = vld [vmem:[%s266 + $0x78] sm:$0xf]
      %v1357 = vld [vmem:[%s266 + $0x7c] sm:$0xf]
      %v1359 = vshrl.u32 %v1356, 16
      %v1361 = vrot.slane %v1359, 7
      %v1362 = vshll.u32 %v1356, 16
      %v1364 = vor.u32 %v1361, %v1362
      %v1365 = vrot.slane %v1361, 4
      %v1367 = vshrl.u32 %v1357, 16
      %v1369 = vrot.slane %v1367, 7
      %v1370 = vshll.u32 %v1357, 16
      %v1372 = vor.u32 %v1369, %v1370
      %v1373 = vsel %vm589, %v1365, %v1372
      %v1374 = vrot.slane %v1369, 4
      %v1378 = vld [vmem:[#allocation3 + $0x90] sm:$0xf]
      %v1379 = vsel %vm643, %v1364, %v1378
      %1380 = vst [vmem:[#allocation3 + $0x90] sm:$0xf] %v1379
      %1381 = vst.msk [vmem:[#allocation3 + $0x94] sm:$0xf] %vm318, %v1373
      %v1382 = vld [vmem:[#allocation3 + $0x98] sm:$0x1]
      %v1383 = vsel %vm649, %v1374, %v1382
      %1384 = vst [vmem:[#allocation3 + $0x98] sm:$0x1] %v1383
      %v1385 = vld [vmem:[#allocation2] sm:$0xf]
      %v1386 = vld [vmem:[#allocation2 + $0x4] sm:$0xf]
      %v1387 = vld [vmem:[#allocation2 + $0x8] sm:$0xf]
      %v1388 = vld [vmem:[#allocation2 + $0xc] sm:$0xf]
      %v1389 = vld [vmem:[#allocation2 + $0x10] sm:$0xf]
      %v1390 = vld [vmem:[#allocation2 + $0x14] sm:$0xf]
      %v1391 = vld [vmem:[#allocation2 + $0x18] sm:$0xf]
      %v1392 = vld [vmem:[#allocation2 + $0x1c] sm:$0xf]
      %v1393 = vld [vmem:[#allocation2 + $0x20] sm:$0xf]
      %v1394 = vld [vmem:[#allocation2 + $0x24] sm:$0xf]
      %v1395 = vld [vmem:[#allocation2 + $0x28] sm:$0xf]
      %v1396 = vld [vmem:[#allocation2 + $0x2c] sm:$0xf]
      %v1397 = vld [vmem:[#allocation2 + $0x30] sm:$0xf]
      %v1398 = vld [vmem:[#allocation2 + $0x34] sm:$0xf]
      %v1399 = vld [vmem:[#allocation2 + $0x38] sm:$0xf]
      %v1400 = vld [vmem:[#allocation2 + $0x3c] sm:$0xf]
      %v1401 = vld [vmem:[#allocation2 + $0x40] sm:$0xf]
      %v1402 = vld [vmem:[#allocation2 + $0x44] sm:$0xf]
      %v1403 = vld [vmem:[#allocation2 + $0x48] sm:$0xf]
      %v1404 = vld [vmem:[#allocation2 + $0x4c] sm:$0xf]
      %v1405 = vld [vmem:[#allocation2 + $0x50] sm:$0xf]
      %v1406 = vld [vmem:[#allocation2 + $0x54] sm:$0xf]
      %v1407 = vld [vmem:[#allocation2 + $0x58] sm:$0xf]
      %v1408 = vld [vmem:[#allocation2 + $0x5c] sm:$0xf]
      %v1409 = vld [vmem:[#allocation2 + $0x60] sm:$0xf]
      %v1410 = vld [vmem:[#allocation2 + $0x64] sm:$0xf]
      %v1411 = vld [vmem:[#allocation2 + $0x68] sm:$0xf]
      %v1412 = vld [vmem:[#allocation2 + $0x6c] sm:$0xf]
      %v1413 = vld [vmem:[#allocation2 + $0x70] sm:$0xf]
      %v1414 = vld [vmem:[#allocation2 + $0x74] sm:$0xf]
      %v1415 = vld [vmem:[#allocation2 + $0x78] sm:$0xf]
      %v1416 = vld [vmem:[#allocation2 + $0x7c] sm:$0xf]
      %v1417 = vld [vmem:[#allocation2 + $0x80] sm:$0xf]
      %v1418 = vld [vmem:[#allocation2 + $0x84] sm:$0xf]
      %v1419 = vld [vmem:[#allocation2 + $0x88] sm:$0xf]
      %v1420 = vld [vmem:[#allocation2 + $0x8c] sm:$0xf]
      %v1421 = vld [vmem:[%s2] sm:$0xf]
      %v1422 = vld [vmem:[%s2 + $0x4] sm:$0xf]
      %v1423 = vld [vmem:[%s2 + $0x8] sm:$0xf]
      %v1424 = vld [vmem:[%s2 + $0xc] sm:$0xf]
      %v1425 = vld [vmem:[#allocation3] sm:$0xf]
      %v1426 = vld [vmem:[#allocation3 + $0x4] sm:$0xf]
      %v1427 = vld [vmem:[#allocation3 + $0x8] sm:$0xf]
      %v1428 = vld [vmem:[#allocation3 + $0xc] sm:$0xf]
      %v1429 = vld [vmem:[#allocation3 + $0x10] sm:$0xf]
      %v1430 = vld [vmem:[#allocation3 + $0x14] sm:$0xf]
      %v1431 = vld [vmem:[#allocation3 + $0x18] sm:$0xf]
      %v1432 = vld [vmem:[#allocation3 + $0x1c] sm:$0xf]
      %v1433 = vld [vmem:[#allocation3 + $0x20] sm:$0xf]
      %v1434 = vld [vmem:[#allocation3 + $0x24] sm:$0xf]
      %v1435 = vld [vmem:[#allocation3 + $0x28] sm:$0xf]
      %v1436 = vld [vmem:[#allocation3 + $0x2c] sm:$0xf]
      %v1437 = vld [vmem:[#allocation3 + $0x30] sm:$0xf]
      %v1438 = vld [vmem:[#allocation3 + $0x34] sm:$0xf]
      %v1439 = vld [vmem:[#allocation3 + $0x38] sm:$0xf]
      %v1440 = vld [vmem:[#allocation3 + $0x3c] sm:$0xf]
      %v1441 = vld [vmem:[#allocation3 + $0x40] sm:$0xf]
      %v1442 = vld [vmem:[#allocation3 + $0x44] sm:$0xf]
      %v1443 = vld [vmem:[#allocation3 + $0x48] sm:$0xf]
      %v1444 = vld [vmem:[#allocation3 + $0x4c] sm:$0xf]
      %v1445 = vld [vmem:[#allocation3 + $0x50] sm:$0xf]
      %v1446 = vld [vmem:[#allocation3 + $0x54] sm:$0xf]
      %v1447 = vld [vmem:[#allocation3 + $0x58] sm:$0xf]
      %v1448 = vld [vmem:[#allocation3 + $0x5c] sm:$0xf]
      %v1449 = vld [vmem:[#allocation3 + $0x60] sm:$0xf]
      %v1450 = vld [vmem:[#allocation3 + $0x64] sm:$0xf]
      %v1451 = vld [vmem:[#allocation3 + $0x68] sm:$0xf]
      %v1452 = vld [vmem:[#allocation3 + $0x6c] sm:$0xf]
      %v1453 = vld [vmem:[#allocation3 + $0x70] sm:$0xf]
      %v1454 = vld [vmem:[#allocation3 + $0x74] sm:$0xf]
      %v1455 = vld [vmem:[#allocation3 + $0x78] sm:$0xf]
      %v1456 = vld [vmem:[#allocation3 + $0x7c] sm:$0xf]
      %v1457 = vld [vmem:[#allocation3 + $0x80] sm:$0xf]
      %v1458 = vld [vmem:[#allocation3 + $0x84] sm:$0xf]
      %v1459 = vld [vmem:[#allocation3 + $0x88] sm:$0xf]
      %v1460 = vld [vmem:[#allocation3 + $0x8c] sm:$0xf]
      %v1461 = vld [vmem:[%s3] sm:$0x3]
      %v1498 = vunpack.c.l.b16 %v1425
      %v1499 = vunpack.c.l.b16 %v1426
      %v1500 = vunpack.c.l.b16 %v1427
      %v1501 = vunpack.c.l.b16 %v1428
      %v1502 = vunpack.c.l.b16 %v1429
      %v1503 = vunpack.c.l.b16 %v1430
      %v1504 = vunpack.c.l.b16 %v1431
      %v1505 = vunpack.c.l.b16 %v1432
      %v1506 = vunpack.c.l.b16 %v1433
      %v1507 = vunpack.c.l.b16 %v1434
      %v1508 = vunpack.c.l.b16 %v1435
      %v1509 = vunpack.c.l.b16 %v1436
      %v1510 = vunpack.c.l.b16 %v1437
      %v1511 = vunpack.c.l.b16 %v1438
      %v1512 = vunpack.c.l.b16 %v1439
      %v1513 = vunpack.c.l.b16 %v1440
      %v1514 = vunpack.c.l.b16 %v1441
      %v1515 = vunpack.c.l.b16 %v1442
      %v1516 = vunpack.c.l.b16 %v1443
      %v1517 = vunpack.c.l.b16 %v1444
      %v1518 = vunpack.c.l.b16 %v1445
      %v1519 = vunpack.c.l.b16 %v1446
      %v1520 = vunpack.c.l.b16 %v1447
      %v1521 = vunpack.c.l.b16 %v1448
      %v1522 = vunpack.c.l.b16 %v1449
      %v1523 = vunpack.c.l.b16 %v1450
      %v1524 = vunpack.c.l.b16 %v1451
      %v1525 = vunpack.c.l.b16 %v1452
      %v1526 = vunpack.c.l.b16 %v1453
      %v1527 = vunpack.c.l.b16 %v1454
      %v1528 = vunpack.c.l.b16 %v1455
      %v1529 = vunpack.c.l.b16 %v1456
      %v1530 = vunpack.c.l.b16 %v1457
      %v1531 = vunpack.c.l.b16 %v1458
      %v1532 = vunpack.c.l.b16 %v1459
      %v1533 = vunpack.c.l.b16 %v1460
      %v1534 = vpack.c.b16 %v1499, %v1498
      %v1535 = vpack.c.b16 %v1501, %v1500
      %v1536 = vpack.c.b16 %v1503, %v1502
      %v1537 = vpack.c.b16 %v1505, %v1504
      %v1538 = vpack.c.b16 %v1507, %v1506
      %v1539 = vpack.c.b16 %v1509, %v1508
      %v1540 = vpack.c.b16 %v1511, %v1510
      %v1541 = vpack.c.b16 %v1513, %v1512
      %v1542 = vpack.c.b16 %v1515, %v1514
      %v1543 = vpack.c.b16 %v1517, %v1516
      %v1544 = vpack.c.b16 %v1519, %v1518
      %v1545 = vpack.c.b16 %v1521, %v1520
      %v1546 = vpack.c.b16 %v1523, %v1522
      %v1547 = vpack.c.b16 %v1525, %v1524
      %v1548 = vpack.c.b16 %v1527, %v1526
      %v1549 = vpack.c.b16 %v1529, %v1528
      %v1550 = vpack.c.b16 %v1531, %v1530
      %v1551 = vpack.c.b16 %v1533, %v1532
      %vm1552 = vcmask 31744
      %v1554 = vsel %vm1552, %v1534, 0
      %v1557 = vsel %vm1552, %v1535, 0
      %v1560 = vsel %vm1552, %v1536, 0
      %v1563 = vsel %vm1552, %v1537, 0
      %v1566 = vsel %vm1552, %v1538, 0
      %v1569 = vsel %vm1552, %v1539, 0
      %v1572 = vsel %vm1552, %v1540, 0
      %v1575 = vsel %vm1552, %v1541, 0
      %v1578 = vsel %vm1552, %v1542, 0
      %v1581 = vsel %vm1552, %v1543, 0
      %v1584 = vsel %vm1552, %v1544, 0
      %v1587 = vsel %vm1552, %v1545, 0
      %v1590 = vsel %vm1552, %v1546, 0
      %v1593 = vsel %vm1552, %v1547, 0
      %v1596 = vsel %vm1552, %v1548, 0
      %v1599 = vsel %vm1552, %v1549, 0
      %v1602 = vsel %vm1552, %v1550, 0
      %v1605 = vsel %vm1552, %v1551, 0
      %vm1607 = vcmask 1041408
      %v1609 = vsel %vm1607, %v1461, 0
      %1611 = vmatprep.subr.bf16.mxu0 0
      %1612 = vmatpush1.bf16.msra.mxu0 %v1609
      %1613 = vmatprep.subr.bf16.mxu0 0
      %1614 = vmatpush1.bf16.msra.mxu0 0
      %1615 = vmatprep.subr.bf16.mxu0 0
      %1616 = vmatpush1.bf16.msra.mxu0 0
      %1617 = vmatprep.subr.bf16.mxu0 0
      %1618 = vmatpush1.bf16.msra.mxu0 0
      %1619 = vmatprep.subr.bf16.mxu0 0
      %1620 = vmatpush1.bf16.msra.mxu0 0
      %1621 = vmatprep.subr.bf16.mxu0 0
      %1622 = vmatpush1.bf16.msra.mxu0 0
      %1623 = vmatprep.subr.bf16.mxu0 0
      %1624 = vmatpush1.bf16.msra.mxu0 0
      %1625 = vmatprep.subr.bf16.mxu0 0
      %1626 = vmatpush1.bf16.msra.mxu0 0
      %1627 = vmatprep.subr.bf16.mxu0 0
      %1628 = vmatpush1.bf16.msra.mxu0 0
      %1629 = vmatprep.subr.bf16.mxu0 0
      %1630 = vmatpush1.bf16.msra.mxu0 0
      %1631 = vmatprep.subr.bf16.mxu0 0
      %1632 = vmatpush1.bf16.msra.mxu0 0
      %1633 = vmatprep.subr.bf16.mxu0 0
      %1634 = vmatpush1.bf16.msra.mxu0 0
      %1635 = vmatprep.subr.bf16.mxu0 0
      %1636 = vmatpush1.bf16.msra.mxu0 0
      %1637 = vmatprep.subr.bf16.mxu0 0
      %1638 = vmatpush1.bf16.msra.mxu0 0
      %1639 = vmatprep.subr.bf16.mxu0 0
      %1640 = vmatpush1.bf16.msra.mxu0 0
      %1641 = vmatprep.subr.bf16.mxu0 0
      %1642 = vmatpush1.bf16.msra.mxu0 0
      %1643 = vmatprep.mubr.bf16.mxu0 0
      %1644 = vmatmul.mubr.bf16.gmra.mrb[0].mxu0 %v1554
      %v1645 = vpop.f32.mrb[0].mxu0
      %v1646 = vadd.f32 0.0, %v1645
      %v1647 = vpop.f32.mrb[0].mxu0
      %v1648 = vpop.f32.mrb[0].mxu0
      %v1649 = vadd.f32 0.0, %v1648
      %v1650 = vpop.f32.mrb[0].mxu0
      %1651 = vmatprep.mubr.bf16.mxu0 0
      %1652 = vmatmul.mubr.bf16.gmra.mrb[0].mxu0 %v1557
      %v1653 = vpop.f32.mrb[0].mxu0
      %v1654 = vadd.f32 0.0, %v1653
      %v1655 = vpop.f32.mrb[0].mxu0
      %v1656 = vpop.f32.mrb[0].mxu0
      %v1657 = vadd.f32 0.0, %v1656
      %v1658 = vpop.f32.mrb[0].mxu0
      %1659 = vmatprep.mubr.bf16.mxu0 0
      %1660 = vmatmul.mubr.bf16.gmra.mrb[0].mxu0 %v1560
      %v1661 = vpop.f32.mrb[0].mxu0
      %v1662 = vadd.f32 0.0, %v1661
      %v1663 = vpop.f32.mrb[0].mxu0
      %v1664 = vpop.f32.mrb[0].mxu0
      %v1665 = vadd.f32 0.0, %v1664
      %v1666 = vpop.f32.mrb[0].mxu0
      %1667 = vmatprep.mubr.bf16.mxu0 0
      %1668 = vmatmul.mubr.bf16.gmra.mrb[0].mxu0 %v1563
      %v1669 = vpop.f32.mrb[0].mxu0
      %v1670 = vadd.f32 0.0, %v1669
      %v1671 = vpop.f32.mrb[0].mxu0
      %v1672 = vpop.f32.mrb[0].mxu0
      %v1673 = vadd.f32 0.0, %v1672
      %v1674 = vpop.f32.mrb[0].mxu0
      %1675 = vmatprep.mubr.bf16.mxu0 0
      %1676 = vmatmul.mubr.bf16.gmra.mrb[0].mxu0 %v1566
      %v1677 = vpop.f32.mrb[0].mxu0
      %v1678 = vadd.f32 0.0, %v1677
      %v1679 = vpop.f32.mrb[0].mxu0
      %v1680 = vpop.f32.mrb[0].mxu0
      %v1681 = vadd.f32 0.0, %v1680
      %v1682 = vpop.f32.mrb[0].mxu0
      %1683 = vmatprep.mubr.bf16.mxu0 0
      %1684 = vmatmul.mubr.bf16.gmra.mrb[0].mxu0 %v1569
      %v1685 = vpop.f32.mrb[0].mxu0
      %v1686 = vadd.f32 0.0, %v1685
      %v1687 = vpop.f32.mrb[0].mxu0
      %v1688 = vpop.f32.mrb[0].mxu0
      %v1689 = vadd.f32 0.0, %v1688
      %v1690 = vpop.f32.mrb[0].mxu0
      %1691 = vmatprep.mubr.bf16.mxu0 0
      %1692 = vmatmul.mubr.bf16.gmra.mrb[0].mxu0 %v1572
      %v1693 = vpop.f32.mrb[0].mxu0
      %v1694 = vadd.f32 0.0, %v1693
      %v1695 = vpop.f32.mrb[0].mxu0
      %v1696 = vpop.f32.mrb[0].mxu0
      %v1697 = vadd.f32 0.0, %v1696
      %v1698 = vpop.f32.mrb[0].mxu0
      %1699 = vmatprep.mubr.bf16.mxu0 0
      %1700 = vmatmul.mubr.bf16.gmra.mrb[0].mxu0 %v1575
      %v1701 = vpop.f32.mrb[0].mxu0
      %v1702 = vadd.f32 0.0, %v1701
      %v1703 = vpop.f32.mrb[0].mxu0
      %v1704 = vpop.f32.mrb[0].mxu0
      %v1705 = vadd.f32 0.0, %v1704
      %v1706 = vpop.f32.mrb[0].mxu0
      %1707 = vmatprep.mubr.bf16.mxu0 0
      %1708 = vmatmul.mubr.bf16.gmra.mrb[0].mxu0 %v1578
      %v1709 = vpop.f32.mrb[0].mxu0
      %v1710 = vadd.f32 0.0, %v1709
      %v1711 = vpop.f32.mrb[0].mxu0
      %v1712 = vpop.f32.mrb[0].mxu0
      %v1713 = vadd.f32 0.0, %v1712
      %v1714 = vpop.f32.mrb[0].mxu0
      %1715 = vmatprep.mubr.bf16.mxu0 0
      %1716 = vmatmul.mubr.bf16.gmra.mrb[0].mxu0 %v1581
      %v1717 = vpop.f32.mrb[0].mxu0
      %v1718 = vadd.f32 0.0, %v1717
      %v1719 = vpop.f32.mrb[0].mxu0
      %v1720 = vpop.f32.mrb[0].mxu0
      %v1721 = vadd.f32 0.0, %v1720
      %v1722 = vpop.f32.mrb[0].mxu0
      %1723 = vmatprep.mubr.bf16.mxu0 0
      %1724 = vmatmul.mubr.bf16.gmra.mrb[0].mxu0 %v1584
      %v1725 = vpop.f32.mrb[0].mxu0
      %v1726 = vadd.f32 0.0, %v1725
      %v1727 = vpop.f32.mrb[0].mxu0
      %v1728 = vpop.f32.mrb[0].mxu0
      %v1729 = vadd.f32 0.0, %v1728
      %v1730 = vpop.f32.mrb[0].mxu0
      %1731 = vmatprep.mubr.bf16.mxu0 0
      %1732 = vmatmul.mubr.bf16.gmra.mrb[0].mxu0 %v1587
      %v1733 = vpop.f32.mrb[0].mxu0
      %v1734 = vadd.f32 0.0, %v1733
      %v1735 = vpop.f32.mrb[0].mxu0
      %v1736 = vpop.f32.mrb[0].mxu0
      %v1737 = vadd.f32 0.0, %v1736
      %v1738 = vpop.f32.mrb[0].mxu0
      %1739 = vmatprep.mubr.bf16.mxu0 0
      %1740 = vmatmul.mubr.bf16.gmra.mrb[0].mxu0 %v1590
      %v1741 = vpop.f32.mrb[0].mxu0
      %v1742 = vadd.f32 0.0, %v1741
      %v1743 = vpop.f32.mrb[0].mxu0
      %v1744 = vpop.f32.mrb[0].mxu0
      %v1745 = vadd.f32 0.0, %v1744
      %v1746 = vpop.f32.mrb[0].mxu0
      %1747 = vmatprep.mubr.bf16.mxu0 0
      %1748 = vmatmul.mubr.bf16.gmra.mrb[0].mxu0 %v1593
      %v1749 = vpop.f32.mrb[0].mxu0
      %v1750 = vadd.f32 0.0, %v1749
      %v1751 = vpop.f32.mrb[0].mxu0
      %v1752 = vpop.f32.mrb[0].mxu0
      %v1753 = vadd.f32 0.0, %v1752
      %v1754 = vpop.f32.mrb[0].mxu0
      %1755 = vmatprep.mubr.bf16.mxu0 0
      %1756 = vmatmul.mubr.bf16.gmra.mrb[0].mxu0 %v1596
      %v1757 = vpop.f32.mrb[0].mxu0
      %v1758 = vadd.f32 0.0, %v1757
      %v1759 = vpop.f32.mrb[0].mxu0
      %v1760 = vpop.f32.mrb[0].mxu0
      %v1761 = vadd.f32 0.0, %v1760
      %v1762 = vpop.f32.mrb[0].mxu0
      %1763 = vmatprep.mubr.bf16.mxu0 0
      %1764 = vmatmul.mubr.bf16.gmra.mrb[0].mxu0 %v1599
      %v1765 = vpop.f32.mrb[0].mxu0
      %v1766 = vadd.f32 0.0, %v1765
      %v1767 = vpop.f32.mrb[0].mxu0
      %v1768 = vpop.f32.mrb[0].mxu0
      %v1769 = vadd.f32 0.0, %v1768
      %v1770 = vpop.f32.mrb[0].mxu0
      %1771 = vmatprep.mubr.bf16.mxu0 0
      %1772 = vmatmul.mubr.bf16.gmra.mrb[0].mxu0 %v1602
      %v1773 = vpop.f32.mrb[0].mxu0
      %v1774 = vadd.f32 0.0, %v1773
      %v1775 = vpop.f32.mrb[0].mxu0
      %v1776 = vpop.f32.mrb[0].mxu0
      %v1777 = vadd.f32 0.0, %v1776
      %v1778 = vpop.f32.mrb[0].mxu0
      %1779 = vmatprep.mubr.bf16.mxu0 0
      %1780 = vmatmul.mubr.bf16.gmra.mrb[0].mxu0 %v1605
      %v1781 = vpop.f32.mrb[0].mxu0
      %v1782 = vadd.f32 0.0, %v1781
      %v1783 = vpop.f32.mrb[0].mxu0
      %v1784 = vpop.f32.mrb[0].mxu0
      %v1785 = vadd.f32 0.0, %v1784
      %v1786 = vpop.f32.mrb[0].mxu0
      %1787 = vdwg.mxu0
      %v1824 = vunpack.c.l.b16 %v1385
      %v1825 = vunpack.c.l.b16 %v1386
      %v1826 = vunpack.c.l.b16 %v1387
      %v1827 = vunpack.c.l.b16 %v1388
      %v1828 = vunpack.c.l.b16 %v1389
      %v1829 = vunpack.c.l.b16 %v1390
      %v1830 = vunpack.c.l.b16 %v1391
      %v1831 = vunpack.c.l.b16 %v1392
      %v1832 = vunpack.c.l.b16 %v1393
      %v1833 = vunpack.c.l.b16 %v1394
      %v1834 = vunpack.c.l.b16 %v1395
      %v1835 = vunpack.c.l.b16 %v1396
      %v1836 = vunpack.c.l.b16 %v1397
      %v1837 = vunpack.c.l.b16 %v1398
      %v1838 = vunpack.c.l.b16 %v1399
      %v1839 = vunpack.c.l.b16 %v1400
      %v1840 = vunpack.c.l.b16 %v1401
      %v1841 = vunpack.c.l.b16 %v1402
      %v1842 = vunpack.c.l.b16 %v1403
      %v1843 = vunpack.c.l.b16 %v1404
      %v1844 = vunpack.c.l.b16 %v1405
      %v1845 = vunpack.c.l.b16 %v1406
      %v1846 = vunpack.c.l.b16 %v1407
      %v1847 = vunpack.c.l.b16 %v1408
      %v1848 = vunpack.c.l.b16 %v1409
      %v1849 = vunpack.c.l.b16 %v1410
      %v1850 = vunpack.c.l.b16 %v1411
      %v1851 = vunpack.c.l.b16 %v1412
      %v1852 = vunpack.c.l.b16 %v1413
      %v1853 = vunpack.c.l.b16 %v1414
      %v1854 = vunpack.c.l.b16 %v1415
      %v1855 = vunpack.c.l.b16 %v1416
      %v1856 = vunpack.c.l.b16 %v1417
      %v1857 = vunpack.c.l.b16 %v1418
      %v1858 = vunpack.c.l.b16 %v1419
      %v1859 = vunpack.c.l.b16 %v1420
      %v1860 = vpack.c.b16 %v1825, %v1824
      %v1861 = vpack.c.b16 %v1827, %v1826
      %v1862 = vpack.c.b16 %v1829, %v1828
      %v1863 = vpack.c.b16 %v1831, %v1830
      %v1864 = vpack.c.b16 %v1833, %v1832
      %v1865 = vpack.c.b16 %v1835, %v1834
      %v1866 = vpack.c.b16 %v1837, %v1836
      %v1867 = vpack.c.b16 %v1839, %v1838
      %v1868 = vpack.c.b16 %v1841, %v1840
      %v1869 = vpack.c.b16 %v1843, %v1842
      %v1870 = vpack.c.b16 %v1845, %v1844
      %v1871 = vpack.c.b16 %v1847, %v1846
      %v1872 = vpack.c.b16 %v1849, %v1848
      %v1873 = vpack.c.b16 %v1851, %v1850
      %v1874 = vpack.c.b16 %v1853, %v1852
      %v1875 = vpack.c.b16 %v1855, %v1854
      %v1876 = vpack.c.b16 %v1857, %v1856
      %v1877 = vpack.c.b16 %v1859, %v1858
      %v1882 = vunpack.c.l.b16 %v1421
      %v1883 = vunpack.c.l.b16 %v1422
      %v1884 = vunpack.c.l.b16 %v1423
      %v1885 = vunpack.c.l.b16 %v1424
      %v1886 = vpack.c.b16 %v1883, %v1882
      %v1887 = vpack.c.b16 %v1885, %v1884
      %vm1890 = vcmask 261120
      %v1892 = vsel %vm1890, %v1860, 0
      %v1895 = vsel %vm1890, %v1861, 0
      %v1898 = vsel %vm1890, %v1862, 0
      %v1901 = vsel %vm1890, %v1863, 0
      %v1904 = vsel %vm1890, %v1864, 0
      %v1907 = vsel %vm1890, %v1865, 0
      %v1910 = vsel %vm1890, %v1866, 0
      %v1913 = vsel %vm1890, %v1867, 0
      %v1916 = vsel %vm1890, %v1868, 0
      %v1919 = vsel %vm1890, %v1869, 0
      %v1922 = vsel %vm1890, %v1870, 0
      %v1925 = vsel %vm1890, %v1871, 0
      %v1928 = vsel %vm1890, %v1872, 0
      %v1931 = vsel %vm1890, %v1873, 0
      %v1934 = vsel %vm1890, %v1874, 0
      %v1937 = vsel %vm1890, %v1875, 0
      %v1940 = vsel %vm1890, %v1876, 0
      %v1943 = vsel %vm1890, %v1877, 0
      %1945 = vmatprep.subr.bf16.mxu0 0
      %1946 = vmatpush1.bf16.msra.mxu0 %v1886
      %1947 = vmatprep.subr.bf16.mxu0 0
      %1948 = vmatpush1.bf16.msra.mxu0 %v1887
      %1949 = vmatprep.subr.bf16.mxu0 0
      %1950 = vmatpush1.bf16.msra.mxu0 0
      %1951 = vmatprep.subr.bf16.mxu0 0
      %1952 = vmatpush1.bf16.msra.mxu0 0
      %1953 = vmatprep.subr.bf16.mxu0 0
      %1954 = vmatpush1.bf16.msra.mxu0 0
      %1955 = vmatprep.subr.bf16.mxu0 0
      %1956 = vmatpush1.bf16.msra.mxu0 0
      %1957 = vmatprep.subr.bf16.mxu0 0
      %1958 = vmatpush1.bf16.msra.mxu0 0
      %1959 = vmatprep.subr.bf16.mxu0 0
      %1960 = vmatpush1.bf16.msra.mxu0 0
      %1961 = vmatprep.subr.bf16.mxu0 0
      %1962 = vmatpush1.bf16.msra.mxu0 0
      %1963 = vmatprep.subr.bf16.mxu0 0
      %1964 = vmatpush1.bf16.msra.mxu0 0
      %1965 = vmatprep.subr.bf16.mxu0 0
      %1966 = vmatpush1.bf16.msra.mxu0 0
      %1967 = vmatprep.subr.bf16.mxu0 0
      %1968 = vmatpush1.bf16.msra.mxu0 0
      %1969 = vmatprep.subr.bf16.mxu0 0
      %1970 = vmatpush1.bf16.msra.mxu0 0
      %1971 = vmatprep.subr.bf16.mxu0 0
      %1972 = vmatpush1.bf16.msra.mxu0 0
      %1973 = vmatprep.subr.bf16.mxu0 0
      %1974 = vmatpush1.bf16.msra.mxu0 0
      %1975 = vmatprep.subr.bf16.mxu0 0
      %1976 = vmatpush1.bf16.msra.mxu0 0
      %1977 = vmatprep.mubr.bf16.mxu0 0
      %1978 = vmatmul.mubr.bf16.gmra.mrb[0].mxu0 %v1892
      %v1979 = vpop.f32.mrb[0].mxu0
      %v1980 = vadd.f32 %v1646, %v1979
      %v1981 = vpop.f32.mrb[0].mxu0
      %v1982 = vpop.f32.mrb[0].mxu0
      %v1983 = vadd.f32 %v1649, %v1982
      %v1984 = vpop.f32.mrb[0].mxu0
      %1985 = vmatprep.mubr.bf16.mxu0 0
      %1986 = vmatmul.mubr.bf16.gmra.mrb[0].mxu0 %v1895
      %v1987 = vpop.f32.mrb[0].mxu0
      %v1988 = vadd.f32 %v1654, %v1987
      %v1989 = vpop.f32.mrb[0].mxu0
      %v1990 = vpop.f32.mrb[0].mxu0
      %v1991 = vadd.f32 %v1657, %v1990
      %v1992 = vpop.f32.mrb[0].mxu0
      %1993 = vmatprep.mubr.bf16.mxu0 0
      %1994 = vmatmul.mubr.bf16.gmra.mrb[0].mxu0 %v1898
      %v1995 = vpop.f32.mrb[0].mxu0
      %v1996 = vadd.f32 %v1662, %v1995
      %v1997 = vpop.f32.mrb[0].mxu0
      %v1998 = vpop.f32.mrb[0].mxu0
      %v1999 = vadd.f32 %v1665, %v1998
      %v2000 = vpop.f32.mrb[0].mxu0
      %2001 = vmatprep.mubr.bf16.mxu0 0
      %2002 = vmatmul.mubr.bf16.gmra.mrb[0].mxu0 %v1901
      %v2003 = vpop.f32.mrb[0].mxu0
      %v2004 = vadd.f32 %v1670, %v2003
      %v2005 = vpop.f32.mrb[0].mxu0
      %v2006 = vpop.f32.mrb[0].mxu0
      %v2007 = vadd.f32 %v1673, %v2006
      %v2008 = vpop.f32.mrb[0].mxu0
      %2009 = vmatprep.mubr.bf16.mxu0 0
      %2010 = vmatmul.mubr.bf16.gmra.mrb[0].mxu0 %v1904
      %v2011 = vpop.f32.mrb[0].mxu0
      %v2012 = vadd.f32 %v1678, %v2011
      %v2013 = vpop.f32.mrb[0].mxu0
      %v2014 = vpop.f32.mrb[0].mxu0
      %v2015 = vadd.f32 %v1681, %v2014
      %v2016 = vpop.f32.mrb[0].mxu0
      %2017 = vmatprep.mubr.bf16.mxu0 0
      %2018 = vmatmul.mubr.bf16.gmra.mrb[0].mxu0 %v1907
      %v2019 = vpop.f32.mrb[0].mxu0
      %v2020 = vadd.f32 %v1686, %v2019
      %v2021 = vpop.f32.mrb[0].mxu0
      %v2022 = vpop.f32.mrb[0].mxu0
      %v2023 = vadd.f32 %v1689, %v2022
      %v2024 = vpop.f32.mrb[0].mxu0
      %2025 = vmatprep.mubr.bf16.mxu0 0
      %2026 = vmatmul.mubr.bf16.gmra.mrb[0].mxu0 %v1910
      %v2027 = vpop.f32.mrb[0].mxu0
      %v2028 = vadd.f32 %v1694, %v2027
      %v2029 = vpop.f32.mrb[0].mxu0
      %v2030 = vpop.f32.mrb[0].mxu0
      %v2031 = vadd.f32 %v1697, %v2030
      %v2032 = vpop.f32.mrb[0].mxu0
      %2033 = vmatprep.mubr.bf16.mxu0 0
      %2034 = vmatmul.mubr.bf16.gmra.mrb[0].mxu0 %v1913
      %v2035 = vpop.f32.mrb[0].mxu0
      %v2036 = vadd.f32 %v1702, %v2035
      %v2037 = vpop.f32.mrb[0].mxu0
      %v2038 = vpop.f32.mrb[0].mxu0
      %v2039 = vadd.f32 %v1705, %v2038
      %v2040 = vpop.f32.mrb[0].mxu0
      %2041 = vmatprep.mubr.bf16.mxu0 0
      %2042 = vmatmul.mubr.bf16.gmra.mrb[0].mxu0 %v1916
      %v2043 = vpop.f32.mrb[0].mxu0
      %v2044 = vadd.f32 %v1710, %v2043
      %v2045 = vpop.f32.mrb[0].mxu0
      %v2046 = vpop.f32.mrb[0].mxu0
      %v2047 = vadd.f32 %v1713, %v2046
      %v2048 = vpop.f32.mrb[0].mxu0
      %2049 = vmatprep.mubr.bf16.mxu0 0
      %2050 = vmatmul.mubr.bf16.gmra.mrb[0].mxu0 %v1919
      %v2051 = vpop.f32.mrb[0].mxu0
      %v2052 = vadd.f32 %v1718, %v2051
      %v2053 = vpop.f32.mrb[0].mxu0
      %v2054 = vpop.f32.mrb[0].mxu0
      %v2055 = vadd.f32 %v1721, %v2054
      %v2056 = vpop.f32.mrb[0].mxu0
      %2057 = vmatprep.mubr.bf16.mxu0 0
      %2058 = vmatmul.mubr.bf16.gmra.mrb[0].mxu0 %v1922
      %v2059 = vpop.f32.mrb[0].mxu0
      %v2060 = vadd.f32 %v1726, %v2059
      %v2061 = vpop.f32.mrb[0].mxu0
      %v2062 = vpop.f32.mrb[0].mxu0
      %v2063 = vadd.f32 %v1729, %v2062
      %v2064 = vpop.f32.mrb[0].mxu0
      %2065 = vmatprep.mubr.bf16.mxu0 0
      %2066 = vmatmul.mubr.bf16.gmra.mrb[0].mxu0 %v1925
      %v2067 = vpop.f32.mrb[0].mxu0
      %v2068 = vadd.f32 %v1734, %v2067
      %v2069 = vpop.f32.mrb[0].mxu0
      %v2070 = vpop.f32.mrb[0].mxu0
      %v2071 = vadd.f32 %v1737, %v2070
      %v2072 = vpop.f32.mrb[0].mxu0
      %2073 = vmatprep.mubr.bf16.mxu0 0
      %2074 = vmatmul.mubr.bf16.gmra.mrb[0].mxu0 %v1928
      %v2075 = vpop.f32.mrb[0].mxu0
      %v2076 = vadd.f32 %v1742, %v2075
      %v2077 = vpop.f32.mrb[0].mxu0
      %v2078 = vpop.f32.mrb[0].mxu0
      %v2079 = vadd.f32 %v1745, %v2078
      %v2080 = vpop.f32.mrb[0].mxu0
      %2081 = vmatprep.mubr.bf16.mxu0 0
      %2082 = vmatmul.mubr.bf16.gmra.mrb[0].mxu0 %v1931
      %v2083 = vpop.f32.mrb[0].mxu0
      %v2084 = vadd.f32 %v1750, %v2083
      %v2085 = vpop.f32.mrb[0].mxu0
      %v2086 = vpop.f32.mrb[0].mxu0
      %v2087 = vadd.f32 %v1753, %v2086
      %v2088 = vpop.f32.mrb[0].mxu0
      %2089 = vmatprep.mubr.bf16.mxu0 0
      %2090 = vmatmul.mubr.bf16.gmra.mrb[0].mxu0 %v1934
      %v2091 = vpop.f32.mrb[0].mxu0
      %v2092 = vadd.f32 %v1758, %v2091
      %v2093 = vpop.f32.mrb[0].mxu0
      %v2094 = vpop.f32.mrb[0].mxu0
      %v2095 = vadd.f32 %v1761, %v2094
      %v2096 = vpop.f32.mrb[0].mxu0
      %2097 = vmatprep.mubr.bf16.mxu0 0
      %2098 = vmatmul.mubr.bf16.gmra.mrb[0].mxu0 %v1937
      %v2099 = vpop.f32.mrb[0].mxu0
      %v2100 = vadd.f32 %v1766, %v2099
      %v2101 = vpop.f32.mrb[0].mxu0
      %v2102 = vpop.f32.mrb[0].mxu0
      %v2103 = vadd.f32 %v1769, %v2102
      %v2104 = vpop.f32.mrb[0].mxu0
      %2105 = vmatprep.mubr.bf16.mxu0 0
      %2106 = vmatmul.mubr.bf16.gmra.mrb[0].mxu0 %v1940
      %v2107 = vpop.f32.mrb[0].mxu0
      %v2108 = vadd.f32 %v1774, %v2107
      %v2109 = vpop.f32.mrb[0].mxu0
      %v2110 = vpop.f32.mrb[0].mxu0
      %v2111 = vadd.f32 %v1777, %v2110
      %v2112 = vpop.f32.mrb[0].mxu0
      %2113 = vmatprep.mubr.bf16.mxu0 0
      %2114 = vmatmul.mubr.bf16.gmra.mrb[0].mxu0 %v1943
      %v2115 = vpop.f32.mrb[0].mxu0
      %v2116 = vadd.f32 %v1782, %v2115
      %v2117 = vpop.f32.mrb[0].mxu0
      %v2118 = vpop.f32.mrb[0].mxu0
      %v2119 = vadd.f32 %v1785, %v2118
      %v2120 = vpop.f32.mrb[0].mxu0
      %2121 = vdwg.mxu0
      %v2122 = vld [vmem:[#allocation2] sm:$0xf]
      %v2123 = vld [vmem:[#allocation2 + $0x4] sm:$0xf]
      %v2124 = vld [vmem:[#allocation2 + $0x8] sm:$0xf]
      %v2125 = vld [vmem:[#allocation2 + $0xc] sm:$0xf]
      %v2126 = vld [vmem:[#allocation2 + $0x10] sm:$0xf]
      %v2127 = vld [vmem:[#allocation2 + $0x14] sm:$0xf]
      %v2128 = vld [vmem:[#allocation2 + $0x18] sm:$0xf]
      %v2129 = vld [vmem:[#allocation2 + $0x1c] sm:$0xf]
      %v2130 = vld [vmem:[#allocation2 + $0x20] sm:$0xf]
      %v2131 = vld [vmem:[#allocation2 + $0x24] sm:$0xf]
      %v2132 = vld [vmem:[#allocation2 + $0x28] sm:$0xf]
      %v2133 = vld [vmem:[#allocation2 + $0x2c] sm:$0xf]
      %v2134 = vld [vmem:[#allocation2 + $0x30] sm:$0xf]
      %v2135 = vld [vmem:[#allocation2 + $0x34] sm:$0xf]
      %v2136 = vld [vmem:[#allocation2 + $0x38] sm:$0xf]
      %v2137 = vld [vmem:[#allocation2 + $0x3c] sm:$0xf]
      %v2138 = vld [vmem:[#allocation2 + $0x40] sm:$0xf]
      %v2139 = vld [vmem:[#allocation2 + $0x44] sm:$0xf]
      %v2140 = vld [vmem:[#allocation2 + $0x48] sm:$0xf]
      %v2141 = vld [vmem:[#allocation2 + $0x4c] sm:$0xf]
      %v2142 = vld [vmem:[#allocation2 + $0x50] sm:$0xf]
      %v2143 = vld [vmem:[#allocation2 + $0x54] sm:$0xf]
      %v2144 = vld [vmem:[#allocation2 + $0x58] sm:$0xf]
      %v2145 = vld [vmem:[#allocation2 + $0x5c] sm:$0xf]
      %v2146 = vld [vmem:[#allocation2 + $0x60] sm:$0xf]
      %v2147 = vld [vmem:[#allocation2 + $0x64] sm:$0xf]
      %v2148 = vld [vmem:[#allocation2 + $0x68] sm:$0xf]
      %v2149 = vld [vmem:[#allocation2 + $0x6c] sm:$0xf]
      %v2150 = vld [vmem:[#allocation2 + $0x70] sm:$0xf]
      %v2151 = vld [vmem:[#allocation2 + $0x74] sm:$0xf]
      %v2152 = vld [vmem:[#allocation2 + $0x78] sm:$0xf]
      %v2153 = vld [vmem:[#allocation2 + $0x7c] sm:$0xf]
      %v2154 = vld [vmem:[#allocation2 + $0x80] sm:$0xf]
      %v2155 = vld [vmem:[#allocation2 + $0x84] sm:$0xf]
      %v2156 = vld [vmem:[#allocation2 + $0x88] sm:$0xf]
      %v2157 = vld [vmem:[#allocation2 + $0x8c] sm:$0xf]
      %v2158 = vld [vmem:[#allocation2 + $0x90] sm:$0x1]
      %s2159 = scalar_lea.vmem %s2, 16
      %v2160 = vld [vmem:[%s2159] sm:$0xf]
      %v2161 = vld [vmem:[%s2159 + $0x4] sm:$0xf]
      %v2162 = vld [vmem:[%s2159 + $0x8] sm:$0xf]
      %v2163 = vld [vmem:[%s2159 + $0xc] sm:$0xf]
      %v2201 = vunpack.c.l.b16 %v2122
      %v2202 = vunpack.c.l.b16 %v2123
      %v2203 = vunpack.c.l.b16 %v2124
      %v2204 = vunpack.c.l.b16 %v2125
      %v2205 = vunpack.c.l.b16 %v2126
      %v2206 = vunpack.c.l.b16 %v2127
      %v2207 = vunpack.c.l.b16 %v2128
      %v2208 = vunpack.c.l.b16 %v2129
      %v2209 = vunpack.c.l.b16 %v2130
      %v2210 = vunpack.c.l.b16 %v2131
      %v2211 = vunpack.c.l.b16 %v2132
      %v2212 = vunpack.c.l.b16 %v2133
      %v2213 = vunpack.c.l.b16 %v2134
      %v2214 = vunpack.c.l.b16 %v2135
      %v2215 = vunpack.c.l.b16 %v2136
      %v2216 = vunpack.c.l.b16 %v2137
      %v2217 = vunpack.c.l.b16 %v2138
      %v2218 = vunpack.c.l.b16 %v2139
      %v2219 = vunpack.c.l.b16 %v2140
      %v2220 = vunpack.c.l.b16 %v2141
      %v2221 = vunpack.c.l.b16 %v2142
      %v2222 = vunpack.c.l.b16 %v2143
      %v2223 = vunpack.c.l.b16 %v2144
      %v2224 = vunpack.c.l.b16 %v2145
      %v2225 = vunpack.c.l.b16 %v2146
      %v2226 = vunpack.c.l.b16 %v2147
      %v2227 = vunpack.c.l.b16 %v2148
      %v2228 = vunpack.c.l.b16 %v2149
      %v2229 = vunpack.c.l.b16 %v2150
      %v2230 = vunpack.c.l.b16 %v2151
      %v2231 = vunpack.c.l.b16 %v2152
      %v2232 = vunpack.c.l.b16 %v2153
      %v2233 = vunpack.c.l.b16 %v2154
      %v2234 = vunpack.c.l.b16 %v2155
      %v2235 = vunpack.c.l.b16 %v2156
      %v2236 = vunpack.c.l.b16 %v2157
      %v2237 = vunpack.c.l.b16 %v2158
      %v2238 = vpack.c.b16 %v2202, %v2201
      %v2239 = vpack.c.b16 %v2204, %v2203
      %v2240 = vpack.c.b16 %v2206, %v2205
      %v2241 = vpack.c.b16 %v2208, %v2207
      %v2242 = vpack.c.b16 %v2210, %v2209
      %v2243 = vpack.c.b16 %v2212, %v2211
      %v2244 = vpack.c.b16 %v2214, %v2213
      %v2245 = vpack.c.b16 %v2216, %v2215
      %v2246 = vpack.c.b16 %v2218, %v2217
      %v2247 = vpack.c.b16 %v2220, %v2219
      %v2248 = vpack.c.b16 %v2222, %v2221
      %v2249 = vpack.c.b16 %v2224, %v2223
      %v2250 = vpack.c.b16 %v2226, %v2225
      %v2251 = vpack.c.b16 %v2228, %v2227
      %v2252 = vpack.c.b16 %v2230, %v2229
      %v2253 = vpack.c.b16 %v2232, %v2231
      %v2254 = vpack.c.b16 %v2234, %v2233
      %v2255 = vpack.c.b16 %v2236, %v2235
      %v2256 = vpack.c.b16 %v2237, %v2237
      %vm2257 = vsmask.f32 7424
      %v2259 = vshrl.u32 %v2238, 16
      %v2261 = vshll.u32 %v2238, 16
      %v2263 = vrot.slane %v2261, 1
      %v2264 = vor.u32 %v2259, %v2263
      %v2266 = vshll.u32 %v2239, 16
      %v2268 = vrot.slane %v2266, 1
      %v2269 = vsel %vm2257, %v2264, %v2268
      %v2270 = vshrl.u32 %v2239, 16
      %v2272 = vor.u32 %v2270, %v2268
      %v2274 = vshll.u32 %v2240, 16
      %v2276 = vrot.slane %v2274, 1
      %v2277 = vsel %vm2257, %v2272, %v2276
      %v2278 = vshrl.u32 %v2240, 16
      %v2280 = vor.u32 %v2278, %v2276
      %v2282 = vshll.u32 %v2241, 16
      %v2284 = vrot.slane %v2282, 1
      %v2285 = vsel %vm2257, %v2280, %v2284
      %v2286 = vshrl.u32 %v2241, 16
      %v2288 = vor.u32 %v2286, %v2284
      %v2290 = vshll.u32 %v2242, 16
      %v2292 = vrot.slane %v2290, 1
      %v2293 = vsel %vm2257, %v2288, %v2292
      %v2294 = vshrl.u32 %v2242, 16
      %v2296 = vor.u32 %v2294, %v2292
      %v2298 = vshll.u32 %v2243, 16
      %v2300 = vrot.slane %v2298, 1
      %v2301 = vsel %vm2257, %v2296, %v2300
      %v2302 = vshrl.u32 %v2243, 16
      %v2304 = vor.u32 %v2302, %v2300
      %v2306 = vshll.u32 %v2244, 16
      %v2308 = vrot.slane %v2306, 1
      %v2309 = vsel %vm2257, %v2304, %v2308
      %v2310 = vshrl.u32 %v2244, 16
      %v2312 = vor.u32 %v2310, %v2308
      %v2314 = vshll.u32 %v2245, 16
      %v2316 = vrot.slane %v2314, 1
      %v2317 = vsel %vm2257, %v2312, %v2316
      %v2318 = vshrl.u32 %v2245, 16
      %v2320 = vor.u32 %v2318, %v2316
      %v2322 = vshll.u32 %v2246, 16
      %v2324 = vrot.slane %v2322, 1
      %v2325 = vsel %vm2257, %v2320, %v2324
      %v2326 = vshrl.u32 %v2246, 16
      %v2328 = vor.u32 %v2326, %v2324
      %v2330 = vshll.u32 %v2247, 16
      %v2332 = vrot.slane %v2330, 1
      %v2333 = vsel %vm2257, %v2328, %v2332
      %v2334 = vshrl.u32 %v2247, 16
      %v2336 = vor.u32 %v2334, %v2332
      %v2338 = vshll.u32 %v2248, 16
      %v2340 = vrot.slane %v2338, 1
      %v2341 = vsel %vm2257, %v2336, %v2340
      %v2342 = vshrl.u32 %v2248, 16
      %v2344 = vor.u32 %v2342, %v2340
      %v2346 = vshll.u32 %v2249, 16
      %v2348 = vrot.slane %v2346, 1
      %v2349 = vsel %vm2257, %v2344, %v2348
      %v2350 = vshrl.u32 %v2249, 16
      %v2352 = vor.u32 %v2350, %v2348
      %v2354 = vshll.u32 %v2250, 16
      %v2356 = vrot.slane %v2354, 1
      %v2357 = vsel %vm2257, %v2352, %v2356
      %v2358 = vshrl.u32 %v2250, 16
      %v2360 = vor.u32 %v2358, %v2356
      %v2362 = vshll.u32 %v2251, 16
      %v2364 = vrot.slane %v2362, 1
      %v2365 = vsel %vm2257, %v2360, %v2364
      %v2366 = vshrl.u32 %v2251, 16
      %v2368 = vor.u32 %v2366, %v2364
      %v2370 = vshll.u32 %v2252, 16
      %v2372 = vrot.slane %v2370, 1
      %v2373 = vsel %vm2257, %v2368, %v2372
      %v2374 = vshrl.u32 %v2252, 16
      %v2376 = vor.u32 %v2374, %v2372
      %v2378 = vshll.u32 %v2253, 16
      %v2380 = vrot.slane %v2378, 1
      %v2381 = vsel %vm2257, %v2376, %v2380
      %v2382 = vshrl.u32 %v2253, 16
      %v2384 = vor.u32 %v2382, %v2380
      %v2386 = vshll.u32 %v2254, 16
      %v2388 = vrot.slane %v2386, 1
      %v2389 = vsel %vm2257, %v2384, %v2388
      %v2390 = vshrl.u32 %v2254, 16
      %v2392 = vor.u32 %v2390, %v2388
      %v2394 = vshll.u32 %v2255, 16
      %v2396 = vrot.slane %v2394, 1
      %v2397 = vsel %vm2257, %v2392, %v2396
      %v2398 = vshrl.u32 %v2255, 16
      %v2400 = vor.u32 %v2398, %v2396
      %v2402 = vshll.u32 %v2256, 16
      %v2404 = vrot.slane %v2402, 1
      %v2405 = vsel %vm2257, %v2400, %v2404
      %v2410 = vunpack.c.l.b16 %v2160
      %v2411 = vunpack.c.l.b16 %v2161
      %v2412 = vunpack.c.l.b16 %v2162
      %v2413 = vunpack.c.l.b16 %v2163
      %v2414 = vpack.c.b16 %v2411, %v2410
      %v2415 = vpack.c.b16 %v2413, %v2412
      %v2419 = vsel %vm1890, %v2269, 0
      %v2422 = vsel %vm1890, %v2277, 0
      %v2425 = vsel %vm1890, %v2285, 0
      %v2428 = vsel %vm1890, %v2293, 0
      %v2431 = vsel %vm1890, %v2301, 0
      %v2434 = vsel %vm1890, %v2309, 0
      %v2437 = vsel %vm1890, %v2317, 0
      %v2440 = vsel %vm1890, %v2325, 0
      %v2443 = vsel %vm1890, %v2333, 0
      %v2446 = vsel %vm1890, %v2341, 0
      %v2449 = vsel %vm1890, %v2349, 0
      %v2452 = vsel %vm1890, %v2357, 0
      %v2455 = vsel %vm1890, %v2365, 0
      %v2458 = vsel %vm1890, %v2373, 0
      %v2461 = vsel %vm1890, %v2381, 0
      %v2464 = vsel %vm1890, %v2389, 0
      %v2467 = vsel %vm1890, %v2397, 0
      %v2470 = vsel %vm1890, %v2405, 0
      %2472 = vmatprep.subr.bf16.mxu0 0
      %2473 = vmatpush1.bf16.msra.mxu0 %v2414
      %2474 = vmatprep.subr.bf16.mxu0 0
      %2475 = vmatpush1.bf16.msra.mxu0 %v2415
      %2476 = vmatprep.subr.bf16.mxu0 0
      %2477 = vmatpush1.bf16.msra.mxu0 0
      %2478 = vmatprep.subr.bf16.mxu0 0
      %2479 = vmatpush1.bf16.msra.mxu0 0
      %2480 = vmatprep.subr.bf16.mxu0 0
      %2481 = vmatpush1.bf16.msra.mxu0 0
      %2482 = vmatprep.subr.bf16.mxu0 0
      %2483 = vmatpush1.bf16.msra.mxu0 0
      %2484 = vmatprep.subr.bf16.mxu0 0
      %2485 = vmatpush1.bf16.msra.mxu0 0
      %2486 = vmatprep.subr.bf16.mxu0 0
      %2487 = vmatpush1.bf16.msra.mxu0 0
      %2488 = vmatprep.subr.bf16.mxu0 0
      %2489 = vmatpush1.bf16.msra.mxu0 0
      %2490 = vmatprep.subr.bf16.mxu0 0
      %2491 = vmatpush1.bf16.msra.mxu0 0
      %2492 = vmatprep.subr.bf16.mxu0 0
      %2493 = vmatpush1.bf16.msra.mxu0 0
      %2494 = vmatprep.subr.bf16.mxu0 0
      %2495 = vmatpush1.bf16.msra.mxu0 0
      %2496 = vmatprep.subr.bf16.mxu0 0
      %2497 = vmatpush1.bf16.msra.mxu0 0
      %2498 = vmatprep.subr.bf16.mxu0 0
      %2499 = vmatpush1.bf16.msra.mxu0 0
      %2500 = vmatprep.subr.bf16.mxu0 0
      %2501 = vmatpush1.bf16.msra.mxu0 0
      %2502 = vmatprep.subr.bf16.mxu0 0
      %2503 = vmatpush1.bf16.msra.mxu0 0
      %2504 = vmatprep.mubr.bf16.mxu0 0
      %2505 = vmatmul.mubr.bf16.gmra.mrb[0].mxu0 %v2419
      %v2506 = vpop.f32.mrb[0].mxu0
      %v2507 = vadd.f32 0.0, %v2506
      %v2508 = vpop.f32.mrb[0].mxu0
      %v2509 = vpop.f32.mrb[0].mxu0
      %v2510 = vadd.f32 0.0, %v2509
      %v2511 = vpop.f32.mrb[0].mxu0
      %2512 = vmatprep.mubr.bf16.mxu0 0
      %2513 = vmatmul.mubr.bf16.gmra.mrb[0].mxu0 %v2422
      %v2514 = vpop.f32.mrb[0].mxu0
      %v2515 = vadd.f32 0.0, %v2514
      %v2516 = vpop.f32.mrb[0].mxu0
      %v2517 = vpop.f32.mrb[0].mxu0
      %v2518 = vadd.f32 0.0, %v2517
      %v2519 = vpop.f32.mrb[0].mxu0
      %2520 = vmatprep.mubr.bf16.mxu0 0
      %2521 = vmatmul.mubr.bf16.gmra.mrb[0].mxu0 %v2425
      %v2522 = vpop.f32.mrb[0].mxu0
      %v2523 = vadd.f32 0.0, %v2522
      %v2524 = vpop.f32.mrb[0].mxu0
      %v2525 = vpop.f32.mrb[0].mxu0
      %v2526 = vadd.f32 0.0, %v2525
      %v2527 = vpop.f32.mrb[0].mxu0
      %2528 = vmatprep.mubr.bf16.mxu0 0
      %2529 = vmatmul.mubr.bf16.gmra.mrb[0].mxu0 %v2428
      %v2530 = vpop.f32.mrb[0].mxu0
      %v2531 = vadd.f32 0.0, %v2530
      %v2532 = vpop.f32.mrb[0].mxu0
      %v2533 = vpop.f32.mrb[0].mxu0
      %v2534 = vadd.f32 0.0, %v2533
      %v2535 = vpop.f32.mrb[0].mxu0
      %2536 = vmatprep.mubr.bf16.mxu0 0
      %2537 = vmatmul.mubr.bf16.gmra.mrb[0].mxu0 %v2431
      %v2538 = vpop.f32.mrb[0].mxu0
      %v2539 = vadd.f32 0.0, %v2538
      %v2540 = vpop.f32.mrb[0].mxu0
      %v2541 = vpop.f32.mrb[0].mxu0
      %v2542 = vadd.f32 0.0, %v2541
      %v2543 = vpop.f32.mrb[0].mxu0
      %2544 = vmatprep.mubr.bf16.mxu0 0
      %2545 = vmatmul.mubr.bf16.gmra.mrb[0].mxu0 %v2434
      %v2546 = vpop.f32.mrb[0].mxu0
      %v2547 = vadd.f32 0.0, %v2546
      %v2548 = vpop.f32.mrb[0].mxu0
      %v2549 = vpop.f32.mrb[0].mxu0
      %v2550 = vadd.f32 0.0, %v2549
      %v2551 = vpop.f32.mrb[0].mxu0
      %2552 = vmatprep.mubr.bf16.mxu0 0
      %2553 = vmatmul.mubr.bf16.gmra.mrb[0].mxu0 %v2437
      %v2554 = vpop.f32.mrb[0].mxu0
      %v2555 = vadd.f32 0.0, %v2554
      %v2556 = vpop.f32.mrb[0].mxu0
      %v2557 = vpop.f32.mrb[0].mxu0
      %v2558 = vadd.f32 0.0, %v2557
      %v2559 = vpop.f32.mrb[0].mxu0
      %2560 = vmatprep.mubr.bf16.mxu0 0
      %2561 = vmatmul.mubr.bf16.gmra.mrb[0].mxu0 %v2440
      %v2562 = vpop.f32.mrb[0].mxu0
      %v2563 = vadd.f32 0.0, %v2562
      %v2564 = vpop.f32.mrb[0].mxu0
      %v2565 = vpop.f32.mrb[0].mxu0
      %v2566 = vadd.f32 0.0, %v2565
      %v2567 = vpop.f32.mrb[0].mxu0
      %2568 = vmatprep.mubr.bf16.mxu0 0
      %2569 = vmatmul.mubr.bf16.gmra.mrb[0].mxu0 %v2443
      %v2570 = vpop.f32.mrb[0].mxu0
      %v2571 = vadd.f32 0.0, %v2570
      %v2572 = vpop.f32.mrb[0].mxu0
      %v2573 = vpop.f32.mrb[0].mxu0
      %v2574 = vadd.f32 0.0, %v2573
      %v2575 = vpop.f32.mrb[0].mxu0
      %2576 = vmatprep.mubr.bf16.mxu0 0
      %2577 = vmatmul.mubr.bf16.gmra.mrb[0].mxu0 %v2446
      %v2578 = vpop.f32.mrb[0].mxu0
      %v2579 = vadd.f32 0.0, %v2578
      %v2580 = vpop.f32.mrb[0].mxu0
      %v2581 = vpop.f32.mrb[0].mxu0
      %v2582 = vadd.f32 0.0, %v2581
      %v2583 = vpop.f32.mrb[0].mxu0
      %2584 = vmatprep.mubr.bf16.mxu0 0
      %2585 = vmatmul.mubr.bf16.gmra.mrb[0].mxu0 %v2449
      %v2586 = vpop.f32.mrb[0].mxu0
      %v2587 = vadd.f32 0.0, %v2586
      %v2588 = vpop.f32.mrb[0].mxu0
      %v2589 = vpop.f32.mrb[0].mxu0
      %v2590 = vadd.f32 0.0, %v2589
      %v2591 = vpop.f32.mrb[0].mxu0
      %2592 = vmatprep.mubr.bf16.mxu0 0
      %2593 = vmatmul.mubr.bf16.gmra.mrb[0].mxu0 %v2452
      %v2594 = vpop.f32.mrb[0].mxu0
      %v2595 = vadd.f32 0.0, %v2594
      %v2596 = vpop.f32.mrb[0].mxu0
      %v2597 = vpop.f32.mrb[0].mxu0
      %v2598 = vadd.f32 0.0, %v2597
      %v2599 = vpop.f32.mrb[0].mxu0
      %2600 = vmatprep.mubr.bf16.mxu0 0
      %2601 = vmatmul.mubr.bf16.gmra.mrb[0].mxu0 %v2455
      %v2602 = vpop.f32.mrb[0].mxu0
      %v2603 = vadd.f32 0.0, %v2602
      %v2604 = vpop.f32.mrb[0].mxu0
      %v2605 = vpop.f32.mrb[0].mxu0
      %v2606 = vadd.f32 0.0, %v2605
      %v2607 = vpop.f32.mrb[0].mxu0
      %2608 = vmatprep.mubr.bf16.mxu0 0
      %2609 = vmatmul.mubr.bf16.gmra.mrb[0].mxu0 %v2458
      %v2610 = vpop.f32.mrb[0].mxu0
      %v2611 = vadd.f32 0.0, %v2610
      %v2612 = vpop.f32.mrb[0].mxu0
      %v2613 = vpop.f32.mrb[0].mxu0
      %v2614 = vadd.f32 0.0, %v2613
      %v2615 = vpop.f32.mrb[0].mxu0
      %2616 = vmatprep.mubr.bf16.mxu0 0
      %2617 = vmatmul.mubr.bf16.gmra.mrb[0].mxu0 %v2461
      %v2618 = vpop.f32.mrb[0].mxu0
      %v2619 = vadd.f32 0.0, %v2618
      %v2620 = vpop.f32.mrb[0].mxu0
      %v2621 = vpop.f32.mrb[0].mxu0
      %v2622 = vadd.f32 0.0, %v2621
      %v2623 = vpop.f32.mrb[0].mxu0
      %2624 = vmatprep.mubr.bf16.mxu0 0
      %2625 = vmatmul.mubr.bf16.gmra.mrb[0].mxu0 %v2464
      %v2626 = vpop.f32.mrb[0].mxu0
      %v2627 = vadd.f32 0.0, %v2626
      %v2628 = vpop.f32.mrb[0].mxu0
      %v2629 = vpop.f32.mrb[0].mxu0
      %v2630 = vadd.f32 0.0, %v2629
      %v2631 = vpop.f32.mrb[0].mxu0
      %2632 = vmatprep.mubr.bf16.mxu0 0
      %2633 = vmatmul.mubr.bf16.gmra.mrb[0].mxu0 %v2467
      %v2634 = vpop.f32.mrb[0].mxu0
      %v2635 = vadd.f32 0.0, %v2634
      %v2636 = vpop.f32.mrb[0].mxu0
      %v2637 = vpop.f32.mrb[0].mxu0
      %v2638 = vadd.f32 0.0, %v2637
      %v2639 = vpop.f32.mrb[0].mxu0
      %2640 = vmatprep.mubr.bf16.mxu0 0
      %2641 = vmatmul.mubr.bf16.gmra.mrb[0].mxu0 %v2470
      %v2642 = vpop.f32.mrb[0].mxu0
      %v2643 = vadd.f32 0.0, %v2642
      %v2644 = vpop.f32.mrb[0].mxu0
      %v2645 = vpop.f32.mrb[0].mxu0
      %v2646 = vadd.f32 0.0, %v2645
      %v2647 = vpop.f32.mrb[0].mxu0
      %2648 = vdwg.mxu0
      %v2649 = vadd.f32 %v1980, %v2507
      %v2650 = vadd.f32 %v1983, %v2510
      %v2651 = vadd.f32 %v1988, %v2515
      %v2652 = vadd.f32 %v1991, %v2518
      %v2653 = vadd.f32 %v1996, %v2523
      %v2654 = vadd.f32 %v1999, %v2526
      %v2655 = vadd.f32 %v2004, %v2531
      %v2656 = vadd.f32 %v2007, %v2534
      %v2657 = vadd.f32 %v2012, %v2539
      %v2658 = vadd.f32 %v2015, %v2542
      %v2659 = vadd.f32 %v2020, %v2547
      %v2660 = vadd.f32 %v2023, %v2550
      %v2661 = vadd.f32 %v2028, %v2555
      %v2662 = vadd.f32 %v2031, %v2558
      %v2663 = vadd.f32 %v2036, %v2563
      %v2664 = vadd.f32 %v2039, %v2566
      %v2665 = vadd.f32 %v2044, %v2571
      %v2666 = vadd.f32 %v2047, %v2574
      %v2667 = vadd.f32 %v2052, %v2579
      %v2668 = vadd.f32 %v2055, %v2582
      %v2669 = vadd.f32 %v2060, %v2587
      %v2670 = vadd.f32 %v2063, %v2590
      %v2671 = vadd.f32 %v2068, %v2595
      %v2672 = vadd.f32 %v2071, %v2598
      %v2673 = vadd.f32 %v2076, %v2603
      %v2674 = vadd.f32 %v2079, %v2606
      %v2675 = vadd.f32 %v2084, %v2611
      %v2676 = vadd.f32 %v2087, %v2614
      %v2677 = vadd.f32 %v2092, %v2619
      %v2678 = vadd.f32 %v2095, %v2622
      %v2679 = vadd.f32 %v2100, %v2627
      %v2680 = vadd.f32 %v2103, %v2630
      %v2681 = vadd.f32 %v2108, %v2635
      %v2682 = vadd.f32 %v2111, %v2638
      %v2683 = vadd.f32 %v2116, %v2643
      %v2684 = vadd.f32 %v2119, %v2646
      %v2685 = vld [vmem:[#allocation3] sm:$0xf]
      %v2686 = vld [vmem:[#allocation3 + $0x4] sm:$0xf]
      %v2687 = vld [vmem:[#allocation3 + $0x8] sm:$0xf]
      %v2688 = vld [vmem:[#allocation3 + $0xc] sm:$0xf]
      %v2689 = vld [vmem:[#allocation3 + $0x10] sm:$0xf]
      %v2690 = vld [vmem:[#allocation3 + $0x14] sm:$0xf]
      %v2691 = vld [vmem:[#allocation3 + $0x18] sm:$0xf]
      %v2692 = vld [vmem:[#allocation3 + $0x1c] sm:$0xf]
      %v2693 = vld [vmem:[#allocation3 + $0x20] sm:$0xf]
      %v2694 = vld [vmem:[#allocation3 + $0x24] sm:$0xf]
      %v2695 = vld [vmem:[#allocation3 + $0x28] sm:$0xf]
      %v2696 = vld [vmem:[#allocation3 + $0x2c] sm:$0xf]
      %v2697 = vld [vmem:[#allocation3 + $0x30] sm:$0xf]
      %v2698 = vld [vmem:[#allocation3 + $0x34] sm:$0xf]
      %v2699 = vld [vmem:[#allocation3 + $0x38] sm:$0xf]
      %v2700 = vld [vmem:[#allocation3 + $0x3c] sm:$0xf]
      %v2701 = vld [vmem:[#allocation3 + $0x40] sm:$0xf]
      %v2702 = vld [vmem:[#allocation3 + $0x44] sm:$0xf]
      %v2703 = vld [vmem:[#allocation3 + $0x48] sm:$0xf]
      %v2704 = vld [vmem:[#allocation3 + $0x4c] sm:$0xf]
      %v2705 = vld [vmem:[#allocation3 + $0x50] sm:$0xf]
      %v2706 = vld [vmem:[#allocation3 + $0x54] sm:$0xf]
      %v2707 = vld [vmem:[#allocation3 + $0x58] sm:$0xf]
      %v2708 = vld [vmem:[#allocation3 + $0x5c] sm:$0xf]
      %v2709 = vld [vmem:[#allocation3 + $0x60] sm:$0xf]
      %v2710 = vld [vmem:[#allocation3 + $0x64] sm:$0xf]
      %v2711 = vld [vmem:[#allocation3 + $0x68] sm:$0xf]
      %v2712 = vld [vmem:[#allocation3 + $0x6c] sm:$0xf]
      %v2713 = vld [vmem:[#allocation3 + $0x70] sm:$0xf]
      %v2714 = vld [vmem:[#allocation3 + $0x74] sm:$0xf]
      %v2715 = vld [vmem:[#allocation3 + $0x78] sm:$0xf]
      %v2716 = vld [vmem:[#allocation3 + $0x7c] sm:$0xf]
      %v2717 = vld [vmem:[#allocation3 + $0x80] sm:$0xf]
      %v2718 = vld [vmem:[#allocation3 + $0x84] sm:$0xf]
      %v2719 = vld [vmem:[#allocation3 + $0x88] sm:$0xf]
      %v2720 = vld [vmem:[#allocation3 + $0x8c] sm:$0xf]
      %v2721 = vld [vmem:[#allocation3 + $0x90] sm:$0x1]
      %s2722 = scalar_lea.vmem %s3, 2
      %v2723 = vld [vmem:[%s2722] sm:$0x3]
      %v2761 = vunpack.c.l.b16 %v2685
      %v2762 = vunpack.c.l.b16 %v2686
      %v2763 = vunpack.c.l.b16 %v2687
      %v2764 = vunpack.c.l.b16 %v2688
      %v2765 = vunpack.c.l.b16 %v2689
      %v2766 = vunpack.c.l.b16 %v2690
      %v2767 = vunpack.c.l.b16 %v2691
      %v2768 = vunpack.c.l.b16 %v2692
      %v2769 = vunpack.c.l.b16 %v2693
      %v2770 = vunpack.c.l.b16 %v2694
      %v2771 = vunpack.c.l.b16 %v2695
      %v2772 = vunpack.c.l.b16 %v2696
      %v2773 = vunpack.c.l.b16 %v2697
      %v2774 = vunpack.c.l.b16 %v2698
      %v2775 = vunpack.c.l.b16 %v2699
      %v2776 = vunpack.c.l.b16 %v2700
      %v2777 = vunpack.c.l.b16 %v2701
      %v2778 = vunpack.c.l.b16 %v2702
      %v2779 = vunpack.c.l.b16 %v2703
      %v2780 = vunpack.c.l.b16 %v2704
      %v2781 = vunpack.c.l.b16 %v2705
      %v2782 = vunpack.c.l.b16 %v2706
      %v2783 = vunpack.c.l.b16 %v2707
      %v2784 = vunpack.c.l.b16 %v2708
      %v2785 = vunpack.c.l.b16 %v2709
      %v2786 = vunpack.c.l.b16 %v2710
      %v2787 = vunpack.c.l.b16 %v2711
      %v2788 = vunpack.c.l.b16 %v2712
      %v2789 = vunpack.c.l.b16 %v2713
      %v2790 = vunpack.c.l.b16 %v2714
      %v2791 = vunpack.c.l.b16 %v2715
      %v2792 = vunpack.c.l.b16 %v2716
      %v2793 = vunpack.c.l.b16 %v2717
      %v2794 = vunpack.c.l.b16 %v2718
      %v2795 = vunpack.c.l.b16 %v2719
      %v2796 = vunpack.c.l.b16 %v2720
      %v2797 = vunpack.c.l.b16 %v2721
      %v2798 = vpack.c.b16 %v2762, %v2761
      %v2799 = vpack.c.b16 %v2764, %v2763
      %v2800 = vpack.c.b16 %v2766, %v2765
      %v2801 = vpack.c.b16 %v2768, %v2767
      %v2802 = vpack.c.b16 %v2770, %v2769
      %v2803 = vpack.c.b16 %v2772, %v2771
      %v2804 = vpack.c.b16 %v2774, %v2773
      %v2805 = vpack.c.b16 %v2776, %v2775
      %v2806 = vpack.c.b16 %v2778, %v2777
      %v2807 = vpack.c.b16 %v2780, %v2779
      %v2808 = vpack.c.b16 %v2782, %v2781
      %v2809 = vpack.c.b16 %v2784, %v2783
      %v2810 = vpack.c.b16 %v2786, %v2785
      %v2811 = vpack.c.b16 %v2788, %v2787
      %v2812 = vpack.c.b16 %v2790, %v2789
      %v2813 = vpack.c.b16 %v2792, %v2791
      %v2814 = vpack.c.b16 %v2794, %v2793
      %v2815 = vpack.c.b16 %v2796, %v2795
      %v2816 = vpack.c.b16 %v2797, %v2797
      %v2818 = vshrl.u32 %v2798, 16
      %v2820 = vshll.u32 %v2798, 16
      %v2822 = vrot.slane %v2820, 1
      %v2823 = vor.u32 %v2818, %v2822
      %v2825 = vshll.u32 %v2799, 16
      %v2827 = vrot.slane %v2825, 1
      %v2828 = vsel %vm2257, %v2823, %v2827
      %v2829 = vshrl.u32 %v2799, 16
      %v2831 = vor.u32 %v2829, %v2827
      %v2833 = vshll.u32 %v2800, 16
      %v2835 = vrot.slane %v2833, 1
      %v2836 = vsel %vm2257, %v2831, %v2835
      %v2837 = vshrl.u32 %v2800, 16
      %v2839 = vor.u32 %v2837, %v2835
      %v2841 = vshll.u32 %v2801, 16
      %v2843 = vrot.slane %v2841, 1
      %v2844 = vsel %vm2257, %v2839, %v2843
      %v2845 = vshrl.u32 %v2801, 16
      %v2847 = vor.u32 %v2845, %v2843
      %v2849 = vshll.u32 %v2802, 16
      %v2851 = vrot.slane %v2849, 1
      %v2852 = vsel %vm2257, %v2847, %v2851
      %v2853 = vshrl.u32 %v2802, 16
      %v2855 = vor.u32 %v2853, %v2851
      %v2857 = vshll.u32 %v2803, 16
      %v2859 = vrot.slane %v2857, 1
      %v2860 = vsel %vm2257, %v2855, %v2859
      %v2861 = vshrl.u32 %v2803, 16
      %v2863 = vor.u32 %v2861, %v2859
      %v2865 = vshll.u32 %v2804, 16
      %v2867 = vrot.slane %v2865, 1
      %v2868 = vsel %vm2257, %v2863, %v2867
      %v2869 = vshrl.u32 %v2804, 16
      %v2871 = vor.u32 %v2869, %v2867
      %v2873 = vshll.u32 %v2805, 16
      %v2875 = vrot.slane %v2873, 1
      %v2876 = vsel %vm2257, %v2871, %v2875
      %v2877 = vshrl.u32 %v2805, 16
      %v2879 = vor.u32 %v2877, %v2875
      %v2881 = vshll.u32 %v2806, 16
      %v2883 = vrot.slane %v2881, 1
      %v2884 = vsel %vm2257, %v2879, %v2883
      %v2885 = vshrl.u32 %v2806, 16
      %v2887 = vor.u32 %v2885, %v2883
      %v2889 = vshll.u32 %v2807, 16
      %v2891 = vrot.slane %v2889, 1
      %v2892 = vsel %vm2257, %v2887, %v2891
      %v2893 = vshrl.u32 %v2807, 16
      %v2895 = vor.u32 %v2893, %v2891
      %v2897 = vshll.u32 %v2808, 16
      %v2899 = vrot.slane %v2897, 1
      %v2900 = vsel %vm2257, %v2895, %v2899
      %v2901 = vshrl.u32 %v2808, 16
      %v2903 = vor.u32 %v2901, %v2899
      %v2905 = vshll.u32 %v2809, 16
      %v2907 = vrot.slane %v2905, 1
      %v2908 = vsel %vm2257, %v2903, %v2907
      %v2909 = vshrl.u32 %v2809, 16
      %v2911 = vor.u32 %v2909, %v2907
      %v2913 = vshll.u32 %v2810, 16
      %v2915 = vrot.slane %v2913, 1
      %v2916 = vsel %vm2257, %v2911, %v2915
      %v2917 = vshrl.u32 %v2810, 16
      %v2919 = vor.u32 %v2917, %v2915
      %v2921 = vshll.u32 %v2811, 16
      %v2923 = vrot.slane %v2921, 1
      %v2924 = vsel %vm2257, %v2919, %v2923
      %v2925 = vshrl.u32 %v2811, 16
      %v2927 = vor.u32 %v2925, %v2923
      %v2929 = vshll.u32 %v2812, 16
      %v2931 = vrot.slane %v2929, 1
      %v2932 = vsel %vm2257, %v2927, %v2931
      %v2933 = vshrl.u32 %v2812, 16
      %v2935 = vor.u32 %v2933, %v2931
      %v2937 = vshll.u32 %v2813, 16
      %v2939 = vrot.slane %v2937, 1
      %v2940 = vsel %vm2257, %v2935, %v2939
      %v2941 = vshrl.u32 %v2813, 16
      %v2943 = vor.u32 %v2941, %v2939
      %v2945 = vshll.u32 %v2814, 16
      %v2947 = vrot.slane %v2945, 1
      %v2948 = vsel %vm2257, %v2943, %v2947
      %v2949 = vshrl.u32 %v2814, 16
      %v2951 = vor.u32 %v2949, %v2947
      %v2953 = vshll.u32 %v2815, 16
      %v2955 = vrot.slane %v2953, 1
      %v2956 = vsel %vm2257, %v2951, %v2955
      %v2957 = vshrl.u32 %v2815, 16
      %v2959 = vor.u32 %v2957, %v2955
      %v2961 = vshll.u32 %v2816, 16
      %v2963 = vrot.slane %v2961, 1
      %v2964 = vsel %vm2257, %v2959, %v2963
      %v2966 = vsel %vm1552, %v2828, 0
      %v2969 = vsel %vm1552, %v2836, 0
      %v2972 = vsel %vm1552, %v2844, 0
      %v2975 = vsel %vm1552, %v2852, 0
      %v2978 = vsel %vm1552, %v2860, 0
      %v2981 = vsel %vm1552, %v2868, 0
      %v2984 = vsel %vm1552, %v2876, 0
      %v2987 = vsel %vm1552, %v2884, 0
      %v2990 = vsel %vm1552, %v2892, 0
      %v2993 = vsel %vm1552, %v2900, 0
      %v2996 = vsel %vm1552, %v2908, 0
      %v2999 = vsel %vm1552, %v2916, 0
      %v3002 = vsel %vm1552, %v2924, 0
      %v3005 = vsel %vm1552, %v2932, 0
      %v3008 = vsel %vm1552, %v2940, 0
      %v3011 = vsel %vm1552, %v2948, 0
      %v3014 = vsel %vm1552, %v2956, 0
      %v3017 = vsel %vm1552, %v2964, 0
      %v3020 = vsel %vm1607, %v2723, 0
      %3022 = vmatprep.subr.bf16.mxu0 0
      %3023 = vmatpush1.bf16.msra.mxu0 %v3020
      %3024 = vmatprep.subr.bf16.mxu0 0
      %3025 = vmatpush1.bf16.msra.mxu0 0
      %3026 = vmatprep.subr.bf16.mxu0 0
      %3027 = vmatpush1.bf16.msra.mxu0 0
      %3028 = vmatprep.subr.bf16.mxu0 0
      %3029 = vmatpush1.bf16.msra.mxu0 0
      %3030 = vmatprep.subr.bf16.mxu0 0
      %3031 = vmatpush1.bf16.msra.mxu0 0
      %3032 = vmatprep.subr.bf16.mxu0 0
      %3033 = vmatpush1.bf16.msra.mxu0 0
      %3034 = vmatprep.subr.bf16.mxu0 0
      %3035 = vmatpush1.bf16.msra.mxu0 0
      %3036 = vmatprep.subr.bf16.mxu0 0
      %3037 = vmatpush1.bf16.msra.mxu0 0
      %3038 = vmatprep.subr.bf16.mxu0 0
      %3039 = vmatpush1.bf16.msra.mxu0 0
      %3040 = vmatprep.subr.bf16.mxu0 0
      %3041 = vmatpush1.bf16.msra.mxu0 0
      %3042 = vmatprep.subr.bf16.mxu0 0
      %3043 = vmatpush1.bf16.msra.mxu0 0
      %3044 = vmatprep.subr.bf16.mxu0 0
      %3045 = vmatpush1.bf16.msra.mxu0 0
      %3046 = vmatprep.subr.bf16.mxu0 0
      %3047 = vmatpush1.bf16.msra.mxu0 0
      %3048 = vmatprep.subr.bf16.mxu0 0
      %3049 = vmatpush1.bf16.msra.mxu0 0
      %3050 = vmatprep.subr.bf16.mxu0 0
      %3051 = vmatpush1.bf16.msra.mxu0 0
      %3052 = vmatprep.subr.bf16.mxu0 0
      %3053 = vmatpush1.bf16.msra.mxu0 0
      %3054 = vmatprep.mubr.bf16.mxu0 0
      %3055 = vmatmul.mubr.bf16.gmra.mrb[0].mxu0 %v2966
      %v3056 = vpop.f32.mrb[0].mxu0
      %v3057 = vadd.f32 0.0, %v3056
      %v3058 = vpop.f32.mrb[0].mxu0
      %v3059 = vpop.f32.mrb[0].mxu0
      %v3060 = vadd.f32 0.0, %v3059
      %v3061 = vpop.f32.mrb[0].mxu0
      %3062 = vmatprep.mubr.bf16.mxu0 0
      %3063 = vmatmul.mubr.bf16.gmra.mrb[0].mxu0 %v2969
      %v3064 = vpop.f32.mrb[0].mxu0
      %v3065 = vadd.f32 0.0, %v3064
      %v3066 = vpop.f32.mrb[0].mxu0
      %v3067 = vpop.f32.mrb[0].mxu0
      %v3068 = vadd.f32 0.0, %v3067
      %v3069 = vpop.f32.mrb[0].mxu0
      %3070 = vmatprep.mubr.bf16.mxu0 0
      %3071 = vmatmul.mubr.bf16.gmra.mrb[0].mxu0 %v2972
      %v3072 = vpop.f32.mrb[0].mxu0
      %v3073 = vadd.f32 0.0, %v3072
      %v3074 = vpop.f32.mrb[0].mxu0
      %v3075 = vpop.f32.mrb[0].mxu0
      %v3076 = vadd.f32 0.0, %v3075
      %v3077 = vpop.f32.mrb[0].mxu0
      %3078 = vmatprep.mubr.bf16.mxu0 0
      %3079 = vmatmul.mubr.bf16.gmra.mrb[0].mxu0 %v2975
      %v3080 = vpop.f32.mrb[0].mxu0
      %v3081 = vadd.f32 0.0, %v3080
      %v3082 = vpop.f32.mrb[0].mxu0
      %v3083 = vpop.f32.mrb[0].mxu0
      %v3084 = vadd.f32 0.0, %v3083
      %v3085 = vpop.f32.mrb[0].mxu0
      %3086 = vmatprep.mubr.bf16.mxu0 0
      %3087 = vmatmul.mubr.bf16.gmra.mrb[0].mxu0 %v2978
      %v3088 = vpop.f32.mrb[0].mxu0
      %v3089 = vadd.f32 0.0, %v3088
      %v3090 = vpop.f32.mrb[0].mxu0
      %v3091 = vpop.f32.mrb[0].mxu0
      %v3092 = vadd.f32 0.0, %v3091
      %v3093 = vpop.f32.mrb[0].mxu0
      %3094 = vmatprep.mubr.bf16.mxu0 0
      %3095 = vmatmul.mubr.bf16.gmra.mrb[0].mxu0 %v2981
      %v3096 = vpop.f32.mrb[0].mxu0
      %v3097 = vadd.f32 0.0, %v3096
      %v3098 = vpop.f32.mrb[0].mxu0
      %v3099 = vpop.f32.mrb[0].mxu0
      %v3100 = vadd.f32 0.0, %v3099
      %v3101 = vpop.f32.mrb[0].mxu0
      %3102 = vmatprep.mubr.bf16.mxu0 0
      %3103 = vmatmul.mubr.bf16.gmra.mrb[0].mxu0 %v2984
      %v3104 = vpop.f32.mrb[0].mxu0
      %v3105 = vadd.f32 0.0, %v3104
      %v3106 = vpop.f32.mrb[0].mxu0
      %v3107 = vpop.f32.mrb[0].mxu0
      %v3108 = vadd.f32 0.0, %v3107
      %v3109 = vpop.f32.mrb[0].mxu0
      %3110 = vmatprep.mubr.bf16.mxu0 0
      %3111 = vmatmul.mubr.bf16.gmra.mrb[0].mxu0 %v2987
      %v3112 = vpop.f32.mrb[0].mxu0
      %v3113 = vadd.f32 0.0, %v3112
      %v3114 = vpop.f32.mrb[0].mxu0
      %v3115 = vpop.f32.mrb[0].mxu0
      %v3116 = vadd.f32 0.0, %v3115
      %v3117 = vpop.f32.mrb[0].mxu0
      %3118 = vmatprep.mubr.bf16.mxu0 0
      %3119 = vmatmul.mubr.bf16.gmra.mrb[0].mxu0 %v2990
      %v3120 = vpop.f32.mrb[0].mxu0
      %v3121 = vadd.f32 0.0, %v3120
      %v3122 = vpop.f32.mrb[0].mxu0
      %v3123 = vpop.f32.mrb[0].mxu0
      %v3124 = vadd.f32 0.0, %v3123
      %v3125 = vpop.f32.mrb[0].mxu0
      %3126 = vmatprep.mubr.bf16.mxu0 0
      %3127 = vmatmul.mubr.bf16.gmra.mrb[0].mxu0 %v2993
      %v3128 = vpop.f32.mrb[0].mxu0
      %v3129 = vadd.f32 0.0, %v3128
      %v3130 = vpop.f32.mrb[0].mxu0
      %v3131 = vpop.f32.mrb[0].mxu0
      %v3132 = vadd.f32 0.0, %v3131
      %v3133 = vpop.f32.mrb[0].mxu0
      %3134 = vmatprep.mubr.bf16.mxu0 0
      %3135 = vmatmul.mubr.bf16.gmra.mrb[0].mxu0 %v2996
      %v3136 = vpop.f32.mrb[0].mxu0
      %v3137 = vadd.f32 0.0, %v3136
      %v3138 = vpop.f32.mrb[0].mxu0
      %v3139 = vpop.f32.mrb[0].mxu0
      %v3140 = vadd.f32 0.0, %v3139
      %v3141 = vpop.f32.mrb[0].mxu0
      %3142 = vmatprep.mubr.bf16.mxu0 0
      %3143 = vmatmul.mubr.bf16.gmra.mrb[0].mxu0 %v2999
      %v3144 = vpop.f32.mrb[0].mxu0
      %v3145 = vadd.f32 0.0, %v3144
      %v3146 = vpop.f32.mrb[0].mxu0
      %v3147 = vpop.f32.mrb[0].mxu0
      %v3148 = vadd.f32 0.0, %v3147
      %v3149 = vpop.f32.mrb[0].mxu0
      %3150 = vmatprep.mubr.bf16.mxu0 0
      %3151 = vmatmul.mubr.bf16.gmra.mrb[0].mxu0 %v3002
      %v3152 = vpop.f32.mrb[0].mxu0
      %v3153 = vadd.f32 0.0, %v3152
      %v3154 = vpop.f32.mrb[0].mxu0
      %v3155 = vpop.f32.mrb[0].mxu0
      %v3156 = vadd.f32 0.0, %v3155
      %v3157 = vpop.f32.mrb[0].mxu0
      %3158 = vmatprep.mubr.bf16.mxu0 0
      %3159 = vmatmul.mubr.bf16.gmra.mrb[0].mxu0 %v3005
      %v3160 = vpop.f32.mrb[0].mxu0
      %v3161 = vadd.f32 0.0, %v3160
      %v3162 = vpop.f32.mrb[0].mxu0
      %v3163 = vpop.f32.mrb[0].mxu0
      %v3164 = vadd.f32 0.0, %v3163
      %v3165 = vpop.f32.mrb[0].mxu0
      %3166 = vmatprep.mubr.bf16.mxu0 0
      %3167 = vmatmul.mubr.bf16.gmra.mrb[0].mxu0 %v3008
      %v3168 = vpop.f32.mrb[0].mxu0
      %v3169 = vadd.f32 0.0, %v3168
      %v3170 = vpop.f32.mrb[0].mxu0
      %v3171 = vpop.f32.mrb[0].mxu0
      %v3172 = vadd.f32 0.0, %v3171
      %v3173 = vpop.f32.mrb[0].mxu0
      %3174 = vmatprep.mubr.bf16.mxu0 0
      %3175 = vmatmul.mubr.bf16.gmra.mrb[0].mxu0 %v3011
      %v3176 = vpop.f32.mrb[0].mxu0
      %v3177 = vadd.f32 0.0, %v3176
      %v3178 = vpop.f32.mrb[0].mxu0
      %v3179 = vpop.f32.mrb[0].mxu0
      %v3180 = vadd.f32 0.0, %v3179
      %v3181 = vpop.f32.mrb[0].mxu0
      %3182 = vmatprep.mubr.bf16.mxu0 0
      %3183 = vmatmul.mubr.bf16.gmra.mrb[0].mxu0 %v3014
      %v3184 = vpop.f32.mrb[0].mxu0
      %v3185 = vadd.f32 0.0, %v3184
      %v3186 = vpop.f32.mrb[0].mxu0
      %v3187 = vpop.f32.mrb[0].mxu0
      %v3188 = vadd.f32 0.0, %v3187
      %v3189 = vpop.f32.mrb[0].mxu0
      %3190 = vmatprep.mubr.bf16.mxu0 0
      %3191 = vmatmul.mubr.bf16.gmra.mrb[0].mxu0 %v3017
      %v3192 = vpop.f32.mrb[0].mxu0
      %v3193 = vadd.f32 0.0, %v3192
      %v3194 = vpop.f32.mrb[0].mxu0
      %v3195 = vpop.f32.mrb[0].mxu0
      %v3196 = vadd.f32 0.0, %v3195
      %v3197 = vpop.f32.mrb[0].mxu0
      %3198 = vdwg.mxu0
      %v3199 = vadd.f32 %v2649, %v3057
      %v3200 = vadd.f32 %v2650, %v3060
      %v3201 = vadd.f32 %v2651, %v3065
      %v3202 = vadd.f32 %v2652, %v3068
      %v3203 = vadd.f32 %v2653, %v3073
      %v3204 = vadd.f32 %v2654, %v3076
      %v3205 = vadd.f32 %v2655, %v3081
      %v3206 = vadd.f32 %v2656, %v3084
      %v3207 = vadd.f32 %v2657, %v3089
      %v3208 = vadd.f32 %v2658, %v3092
      %v3209 = vadd.f32 %v2659, %v3097
      %v3210 = vadd.f32 %v2660, %v3100
      %v3211 = vadd.f32 %v2661, %v3105
      %v3212 = vadd.f32 %v2662, %v3108
      %v3213 = vadd.f32 %v2663, %v3113
      %v3214 = vadd.f32 %v2664, %v3116
      %v3215 = vadd.f32 %v2665, %v3121
      %v3216 = vadd.f32 %v2666, %v3124
      %v3217 = vadd.f32 %v2667, %v3129
      %v3218 = vadd.f32 %v2668, %v3132
      %v3219 = vadd.f32 %v2669, %v3137
      %v3220 = vadd.f32 %v2670, %v3140
      %v3221 = vadd.f32 %v2671, %v3145
      %v3222 = vadd.f32 %v2672, %v3148
      %v3223 = vadd.f32 %v2673, %v3153
      %v3224 = vadd.f32 %v2674, %v3156
      %v3225 = vadd.f32 %v2675, %v3161
      %v3226 = vadd.f32 %v2676, %v3164
      %v3227 = vadd.f32 %v2677, %v3169
      %v3228 = vadd.f32 %v2678, %v3172
      %v3229 = vadd.f32 %v2679, %v3177
      %v3230 = vadd.f32 %v2680, %v3180
      %v3231 = vadd.f32 %v2681, %v3185
      %v3232 = vadd.f32 %v2682, %v3188
      %v3233 = vadd.f32 %v2683, %v3193
      %v3234 = vadd.f32 %v2684, %v3196
      %v3235 = vld [vmem:[#allocation2] sm:$0xe]
      %s3236 = scalar_lea.vmem %s2, 32
      %v3237 = vld [vmem:[%s3236] sm:$0xf]
      %v3238 = vld [vmem:[%s3236 + $0x4] sm:$0xf]
      %v3239 = vld [vmem:[%s3236 + $0x8] sm:$0xf]
      %v3240 = vld [vmem:[%s3236 + $0xc] sm:$0xf]
      %v3242 = vunpack.c.l.b16 %v3235
      %v3243 = vpack.c.b16 %v2202, %v3242
      %vm3244 = vcmask 1046528
      %v3245 = vrot.slane %v3243, 1
      %v3246 = vrot.slane %v2239, 1
      %v3247 = vsel %vm3244, %v3245, %v3246
      %v3248 = vrot.slane %v2240, 1
      %v3249 = vsel %vm3244, %v3246, %v3248
      %v3250 = vrot.slane %v2241, 1
      %v3251 = vsel %vm3244, %v3248, %v3250
      %v3252 = vrot.slane %v2242, 1
      %v3253 = vsel %vm3244, %v3250, %v3252
      %v3254 = vrot.slane %v2243, 1
      %v3255 = vsel %vm3244, %v3252, %v3254
      %v3256 = vrot.slane %v2244, 1
      %v3257 = vsel %vm3244, %v3254, %v3256
      %v3258 = vrot.slane %v2245, 1
      %v3259 = vsel %vm3244, %v3256, %v3258
      %v3260 = vrot.slane %v2246, 1
      %v3261 = vsel %vm3244, %v3258, %v3260
      %v3262 = vrot.slane %v2247, 1
      %v3263 = vsel %vm3244, %v3260, %v3262
      %v3264 = vrot.slane %v2248, 1
      %v3265 = vsel %vm3244, %v3262, %v3264
      %v3266 = vrot.slane %v2249, 1
      %v3267 = vsel %vm3244, %v3264, %v3266
      %v3268 = vrot.slane %v2250, 1
      %v3269 = vsel %vm3244, %v3266, %v3268
      %v3270 = vrot.slane %v2251, 1
      %v3271 = vsel %vm3244, %v3268, %v3270
      %v3272 = vrot.slane %v2252, 1
      %v3273 = vsel %vm3244, %v3270, %v3272
      %v3274 = vrot.slane %v2253, 1
      %v3275 = vsel %vm3244, %v3272, %v3274
      %v3276 = vrot.slane %v2254, 1
      %v3277 = vsel %vm3244, %v3274, %v3276
      %v3278 = vrot.slane %v2255, 1
      %v3279 = vsel %vm3244, %v3276, %v3278
      %v3280 = vrot.slane %v2256, 1
      %v3281 = vsel %vm3244, %v3278, %v3280
      %v3286 = vunpack.c.l.b16 %v3237
      %v3287 = vunpack.c.l.b16 %v3238
      %v3288 = vunpack.c.l.b16 %v3239
      %v3289 = vunpack.c.l.b16 %v3240
      %v3290 = vpack.c.b16 %v3287, %v3286
      %v3291 = vpack.c.b16 %v3289, %v3288
      %v3295 = vsel %vm1890, %v3247, 0
      %v3298 = vsel %vm1890, %v3249, 0
      %v3301 = vsel %vm1890, %v3251, 0
      %v3304 = vsel %vm1890, %v3253, 0
      %v3307 = vsel %vm1890, %v3255, 0
      %v3310 = vsel %vm1890, %v3257, 0
      %v3313 = vsel %vm1890, %v3259, 0
      %v3316 = vsel %vm1890, %v3261, 0
      %v3319 = vsel %vm1890, %v3263, 0
      %v3322 = vsel %vm1890, %v3265, 0
      %v3325 = vsel %vm1890, %v3267, 0
      %v3328 = vsel %vm1890, %v3269, 0
      %v3331 = vsel %vm1890, %v3271, 0
      %v3334 = vsel %vm1890, %v3273, 0
      %v3337 = vsel %vm1890, %v3275, 0
      %v3340 = vsel %vm1890, %v3277, 0
      %v3343 = vsel %vm1890, %v3279, 0
      %v3346 = vsel %vm1890, %v3281, 0
      %3348 = vmatprep.subr.bf16.mxu0 0
      %3349 = vmatpush1.bf16.msra.mxu0 %v3290
      %3350 = vmatprep.subr.bf16.mxu0 0
      %3351 = vmatpush1.bf16.msra.mxu0 %v3291
      %3352 = vmatprep.subr.bf16.mxu0 0
      %3353 = vmatpush1.bf16.msra.mxu0 0
      %3354 = vmatprep.subr.bf16.mxu0 0
      %3355 = vmatpush1.bf16.msra.mxu0 0
      %3356 = vmatprep.subr.bf16.mxu0 0
      %3357 = vmatpush1.bf16.msra.mxu0 0
      %3358 = vmatprep.subr.bf16.mxu0 0
      %3359 = vmatpush1.bf16.msra.mxu0 0
      %3360 = vmatprep.subr.bf16.mxu0 0
      %3361 = vmatpush1.bf16.msra.mxu0 0
      %3362 = vmatprep.subr.bf16.mxu0 0
      %3363 = vmatpush1.bf16.msra.mxu0 0
      %3364 = vmatprep.subr.bf16.mxu0 0
      %3365 = vmatpush1.bf16.msra.mxu0 0
      %3366 = vmatprep.subr.bf16.mxu0 0
      %3367 = vmatpush1.bf16.msra.mxu0 0
      %3368 = vmatprep.subr.bf16.mxu0 0
      %3369 = vmatpush1.bf16.msra.mxu0 0
      %3370 = vmatprep.subr.bf16.mxu0 0
      %3371 = vmatpush1.bf16.msra.mxu0 0
      %3372 = vmatprep.subr.bf16.mxu0 0
      %3373 = vmatpush1.bf16.msra.mxu0 0
      %3374 = vmatprep.subr.bf16.mxu0 0
      %3375 = vmatpush1.bf16.msra.mxu0 0
      %3376 = vmatprep.subr.bf16.mxu0 0
      %3377 = vmatpush1.bf16.msra.mxu0 0
      %3378 = vmatprep.subr.bf16.mxu0 0
      %3379 = vmatpush1.bf16.msra.mxu0 0
      %3380 = vmatprep.mubr.bf16.mxu0 0
      %3381 = vmatmul.mubr.bf16.gmra.mrb[0].mxu0 %v3295
      %v3382 = vpop.f32.mrb[0].mxu0
      %v3383 = vadd.f32 0.0, %v3382
      %v3384 = vpop.f32.mrb[0].mxu0
      %v3385 = vpop.f32.mrb[0].mxu0
      %v3386 = vadd.f32 0.0, %v3385
      %v3387 = vpop.f32.mrb[0].mxu0
      %3388 = vmatprep.mubr.bf16.mxu0 0
      %3389 = vmatmul.mubr.bf16.gmra.mrb[0].mxu0 %v3298
      %v3390 = vpop.f32.mrb[0].mxu0
      %v3391 = vadd.f32 0.0, %v3390
      %v3392 = vpop.f32.mrb[0].mxu0
      %v3393 = vpop.f32.mrb[0].mxu0
      %v3394 = vadd.f32 0.0, %v3393
      %v3395 = vpop.f32.mrb[0].mxu0
      %3396 = vmatprep.mubr.bf16.mxu0 0
      %3397 = vmatmul.mubr.bf16.gmra.mrb[0].mxu0 %v3301
      %v3398 = vpop.f32.mrb[0].mxu0
      %v3399 = vadd.f32 0.0, %v3398
      %v3400 = vpop.f32.mrb[0].mxu0
      %v3401 = vpop.f32.mrb[0].mxu0
      %v3402 = vadd.f32 0.0, %v3401
      %v3403 = vpop.f32.mrb[0].mxu0
      %3404 = vmatprep.mubr.bf16.mxu0 0
      %3405 = vmatmul.mubr.bf16.gmra.mrb[0].mxu0 %v3304
      %v3406 = vpop.f32.mrb[0].mxu0
      %v3407 = vadd.f32 0.0, %v3406
      %v3408 = vpop.f32.mrb[0].mxu0
      %v3409 = vpop.f32.mrb[0].mxu0
      %v3410 = vadd.f32 0.0, %v3409
      %v3411 = vpop.f32.mrb[0].mxu0
      %3412 = vmatprep.mubr.bf16.mxu0 0
      %3413 = vmatmul.mubr.bf16.gmra.mrb[0].mxu0 %v3307
      %v3414 = vpop.f32.mrb[0].mxu0
      %v3415 = vadd.f32 0.0, %v3414
      %v3416 = vpop.f32.mrb[0].mxu0
      %v3417 = vpop.f32.mrb[0].mxu0
      %v3418 = vadd.f32 0.0, %v3417
      %v3419 = vpop.f32.mrb[0].mxu0
      %3420 = vmatprep.mubr.bf16.mxu0 0
      %3421 = vmatmul.mubr.bf16.gmra.mrb[0].mxu0 %v3310
      %v3422 = vpop.f32.mrb[0].mxu0
      %v3423 = vadd.f32 0.0, %v3422
      %v3424 = vpop.f32.mrb[0].mxu0
      %v3425 = vpop.f32.mrb[0].mxu0
      %v3426 = vadd.f32 0.0, %v3425
      %v3427 = vpop.f32.mrb[0].mxu0
      %3428 = vmatprep.mubr.bf16.mxu0 0
      %3429 = vmatmul.mubr.bf16.gmra.mrb[0].mxu0 %v3313
      %v3430 = vpop.f32.mrb[0].mxu0
      %v3431 = vadd.f32 0.0, %v3430
      %v3432 = vpop.f32.mrb[0].mxu0
      %v3433 = vpop.f32.mrb[0].mxu0
      %v3434 = vadd.f32 0.0, %v3433
      %v3435 = vpop.f32.mrb[0].mxu0
      %3436 = vmatprep.mubr.bf16.mxu0 0
      %3437 = vmatmul.mubr.bf16.gmra.mrb[0].mxu0 %v3316
      %v3438 = vpop.f32.mrb[0].mxu0
      %v3439 = vadd.f32 0.0, %v3438
      %v3440 = vpop.f32.mrb[0].mxu0
      %v3441 = vpop.f32.mrb[0].mxu0
      %v3442 = vadd.f32 0.0, %v3441
      %v3443 = vpop.f32.mrb[0].mxu0
      %3444 = vmatprep.mubr.bf16.mxu0 0
      %3445 = vmatmul.mubr.bf16.gmra.mrb[0].mxu0 %v3319
      %v3446 = vpop.f32.mrb[0].mxu0
      %v3447 = vadd.f32 0.0, %v3446
      %v3448 = vpop.f32.mrb[0].mxu0
      %v3449 = vpop.f32.mrb[0].mxu0
      %v3450 = vadd.f32 0.0, %v3449
      %v3451 = vpop.f32.mrb[0].mxu0
      %3452 = vmatprep.mubr.bf16.mxu0 0
      %3453 = vmatmul.mubr.bf16.gmra.mrb[0].mxu0 %v3322
      %v3454 = vpop.f32.mrb[0].mxu0
      %v3455 = vadd.f32 0.0, %v3454
      %v3456 = vpop.f32.mrb[0].mxu0
      %v3457 = vpop.f32.mrb[0].mxu0
      %v3458 = vadd.f32 0.0, %v3457
      %v3459 = vpop.f32.mrb[0].mxu0
      %3460 = vmatprep.mubr.bf16.mxu0 0
      %3461 = vmatmul.mubr.bf16.gmra.mrb[0].mxu0 %v3325
      %v3462 = vpop.f32.mrb[0].mxu0
      %v3463 = vadd.f32 0.0, %v3462
      %v3464 = vpop.f32.mrb[0].mxu0
      %v3465 = vpop.f32.mrb[0].mxu0
      %v3466 = vadd.f32 0.0, %v3465
      %v3467 = vpop.f32.mrb[0].mxu0
      %3468 = vmatprep.mubr.bf16.mxu0 0
      %3469 = vmatmul.mubr.bf16.gmra.mrb[0].mxu0 %v3328
      %v3470 = vpop.f32.mrb[0].mxu0
      %v3471 = vadd.f32 0.0, %v3470
      %v3472 = vpop.f32.mrb[0].mxu0
      %v3473 = vpop.f32.mrb[0].mxu0
      %v3474 = vadd.f32 0.0, %v3473
      %v3475 = vpop.f32.mrb[0].mxu0
      %3476 = vmatprep.mubr.bf16.mxu0 0
      %3477 = vmatmul.mubr.bf16.gmra.mrb[0].mxu0 %v3331
      %v3478 = vpop.f32.mrb[0].mxu0
      %v3479 = vadd.f32 0.0, %v3478
      %v3480 = vpop.f32.mrb[0].mxu0
      %v3481 = vpop.f32.mrb[0].mxu0
      %v3482 = vadd.f32 0.0, %v3481
      %v3483 = vpop.f32.mrb[0].mxu0
      %3484 = vmatprep.mubr.bf16.mxu0 0
      %3485 = vmatmul.mubr.bf16.gmra.mrb[0].mxu0 %v3334
      %v3486 = vpop.f32.mrb[0].mxu0
      %v3487 = vadd.f32 0.0, %v3486
      %v3488 = vpop.f32.mrb[0].mxu0
      %v3489 = vpop.f32.mrb[0].mxu0
      %v3490 = vadd.f32 0.0, %v3489
      %v3491 = vpop.f32.mrb[0].mxu0
      %3492 = vmatprep.mubr.bf16.mxu0 0
      %3493 = vmatmul.mubr.bf16.gmra.mrb[0].mxu0 %v3337
      %v3494 = vpop.f32.mrb[0].mxu0
      %v3495 = vadd.f32 0.0, %v3494
      %v3496 = vpop.f32.mrb[0].mxu0
      %v3497 = vpop.f32.mrb[0].mxu0
      %v3498 = vadd.f32 0.0, %v3497
      %v3499 = vpop.f32.mrb[0].mxu0
      %3500 = vmatprep.mubr.bf16.mxu0 0
      %3501 = vmatmul.mubr.bf16.gmra.mrb[0].mxu0 %v3340
      %v3502 = vpop.f32.mrb[0].mxu0
      %v3503 = vadd.f32 0.0, %v3502
      %v3504 = vpop.f32.mrb[0].mxu0
      %v3505 = vpop.f32.mrb[0].mxu0
      %v3506 = vadd.f32 0.0, %v3505
      %v3507 = vpop.f32.mrb[0].mxu0
      %3508 = vmatprep.mubr.bf16.mxu0 0
      %3509 = vmatmul.mubr.bf16.gmra.mrb[0].mxu0 %v3343
      %v3510 = vpop.f32.mrb[0].mxu0
      %v3511 = vadd.f32 0.0, %v3510
      %v3512 = vpop.f32.mrb[0].mxu0
      %v3513 = vpop.f32.mrb[0].mxu0
      %v3514 = vadd.f32 0.0, %v3513
      %v3515 = vpop.f32.mrb[0].mxu0
      %3516 = vmatprep.mubr.bf16.mxu0 0
      %3517 = vmatmul.mubr.bf16.gmra.mrb[0].mxu0 %v3346
      %v3518 = vpop.f32.mrb[0].mxu0
      %v3519 = vadd.f32 0.0, %v3518
      %v3520 = vpop.f32.mrb[0].mxu0
      %v3521 = vpop.f32.mrb[0].mxu0
      %v3522 = vadd.f32 0.0, %v3521
      %v3523 = vpop.f32.mrb[0].mxu0
      %3524 = vdwg.mxu0
      %v3525 = vadd.f32 %v3199, %v3383
      %v3526 = vadd.f32 %v3200, %v3386
      %v3527 = vadd.f32 %v3201, %v3391
      %v3528 = vadd.f32 %v3202, %v3394
      %v3529 = vadd.f32 %v3203, %v3399
      %v3530 = vadd.f32 %v3204, %v3402
      %v3531 = vadd.f32 %v3205, %v3407
      %v3532 = vadd.f32 %v3206, %v3410
      %v3533 = vadd.f32 %v3207, %v3415
      %v3534 = vadd.f32 %v3208, %v3418
      %v3535 = vadd.f32 %v3209, %v3423
      %v3536 = vadd.f32 %v3210, %v3426
      %v3537 = vadd.f32 %v3211, %v3431
      %v3538 = vadd.f32 %v3212, %v3434
      %v3539 = vadd.f32 %v3213, %v3439
      %v3540 = vadd.f32 %v3214, %v3442
      %v3541 = vadd.f32 %v3215, %v3447
      %v3542 = vadd.f32 %v3216, %v3450
      %v3543 = vadd.f32 %v3217, %v3455
      %v3544 = vadd.f32 %v3218, %v3458
      %v3545 = vadd.f32 %v3219, %v3463
      %v3546 = vadd.f32 %v3220, %v3466
      %v3547 = vadd.f32 %v3221, %v3471
      %v3548 = vadd.f32 %v3222, %v3474
      %v3549 = vadd.f32 %v3223, %v3479
      %v3550 = vadd.f32 %v3224, %v3482
      %v3551 = vadd.f32 %v3225, %v3487
      %v3552 = vadd.f32 %v3226, %v3490
      %v3553 = vadd.f32 %v3227, %v3495
      %v3554 = vadd.f32 %v3228, %v3498
      %v3555 = vadd.f32 %v3229, %v3503
      %v3556 = vadd.f32 %v3230, %v3506
      %v3557 = vadd.f32 %v3231, %v3511
      %v3558 = vadd.f32 %v3232, %v3514
      %v3559 = vadd.f32 %v3233, %v3519
      %v3560 = vadd.f32 %v3234, %v3522
      %v3561 = vld [vmem:[#allocation3] sm:$0xe]
      %s3562 = scalar_lea.vmem %s3, 4
      %v3563 = vld [vmem:[%s3562] sm:$0x3]
      %v3565 = vunpack.c.l.b16 %v3561
      %v3566 = vpack.c.b16 %v2762, %v3565
      %v3567 = vrot.slane %v3566, 1
      %v3568 = vrot.slane %v2799, 1
      %v3569 = vsel %vm3244, %v3567, %v3568
      %v3570 = vrot.slane %v2800, 1
      %v3571 = vsel %vm3244, %v3568, %v3570
      %v3572 = vrot.slane %v2801, 1
      %v3573 = vsel %vm3244, %v3570, %v3572
      %v3574 = vrot.slane %v2802, 1
      %v3575 = vsel %vm3244, %v3572, %v3574
      %v3576 = vrot.slane %v2803, 1
      %v3577 = vsel %vm3244, %v3574, %v3576
      %v3578 = vrot.slane %v2804, 1
      %v3579 = vsel %vm3244, %v3576, %v3578
      %v3580 = vrot.slane %v2805, 1
      %v3581 = vsel %vm3244, %v3578, %v3580
      %v3582 = vrot.slane %v2806, 1
      %v3583 = vsel %vm3244, %v3580, %v3582
      %v3584 = vrot.slane %v2807, 1
      %v3585 = vsel %vm3244, %v3582, %v3584
      %v3586 = vrot.slane %v2808, 1
      %v3587 = vsel %vm3244, %v3584, %v3586
      %v3588 = vrot.slane %v2809, 1
      %v3589 = vsel %vm3244, %v3586, %v3588
      %v3590 = vrot.slane %v2810, 1
      %v3591 = vsel %vm3244, %v3588, %v3590
      %v3592 = vrot.slane %v2811, 1
      %v3593 = vsel %vm3244, %v3590, %v3592
      %v3594 = vrot.slane %v2812, 1
      %v3595 = vsel %vm3244, %v3592, %v3594
      %v3596 = vrot.slane %v2813, 1
      %v3597 = vsel %vm3244, %v3594, %v3596
      %v3598 = vrot.slane %v2814, 1
      %v3599 = vsel %vm3244, %v3596, %v3598
      %v3600 = vrot.slane %v2815, 1
      %v3601 = vsel %vm3244, %v3598, %v3600
      %v3602 = vrot.slane %v2816, 1
      %v3603 = vsel %vm3244, %v3600, %v3602
      %v3605 = vsel %vm1552, %v3569, 0
      %v3608 = vsel %vm1552, %v3571, 0
      %v3611 = vsel %vm1552, %v3573, 0
      %v3614 = vsel %vm1552, %v3575, 0
      %v3617 = vsel %vm1552, %v3577, 0
      %v3620 = vsel %vm1552, %v3579, 0
      %v3623 = vsel %vm1552, %v3581, 0
      %v3626 = vsel %vm1552, %v3583, 0
      %v3629 = vsel %vm1552, %v3585, 0
      %v3632 = vsel %vm1552, %v3587, 0
      %v3635 = vsel %vm1552, %v3589, 0
      %v3638 = vsel %vm1552, %v3591, 0
      %v3641 = vsel %vm1552, %v3593, 0
      %v3644 = vsel %vm1552, %v3595, 0
      %v3647 = vsel %vm1552, %v3597, 0
      %v3650 = vsel %vm1552, %v3599, 0
      %v3653 = vsel %vm1552, %v3601, 0
      %v3656 = vsel %vm1552, %v3603, 0
      %v3659 = vsel %vm1607, %v3563, 0
      %3661 = vmatprep.subr.bf16.mxu0 0
      %3662 = vmatpush1.bf16.msra.mxu0 %v3659
      %3663 = vmatprep.subr.bf16.mxu0 0
      %3664 = vmatpush1.bf16.msra.mxu0 0
      %3665 = vmatprep.subr.bf16.mxu0 0
      %3666 = vmatpush1.bf16.msra.mxu0 0
      %3667 = vmatprep.subr.bf16.mxu0 0
      %3668 = vmatpush1.bf16.msra.mxu0 0
      %3669 = vmatprep.subr.bf16.mxu0 0
      %3670 = vmatpush1.bf16.msra.mxu0 0
      %3671 = vmatprep.subr.bf16.mxu0 0
      %3672 = vmatpush1.bf16.msra.mxu0 0
      %3673 = vmatprep.subr.bf16.mxu0 0
      %3674 = vmatpush1.bf16.msra.mxu0 0
      %3675 = vmatprep.subr.bf16.mxu0 0
      %3676 = vmatpush1.bf16.msra.mxu0 0
      %3677 = vmatprep.subr.bf16.mxu0 0
      %3678 = vmatpush1.bf16.msra.mxu0 0
      %3679 = vmatprep.subr.bf16.mxu0 0
      %3680 = vmatpush1.bf16.msra.mxu0 0
      %3681 = vmatprep.subr.bf16.mxu0 0
      %3682 = vmatpush1.bf16.msra.mxu0 0
      %3683 = vmatprep.subr.bf16.mxu0 0
      %3684 = vmatpush1.bf16.msra.mxu0 0
      %3685 = vmatprep.subr.bf16.mxu0 0
      %3686 = vmatpush1.bf16.msra.mxu0 0
      %3687 = vmatprep.subr.bf16.mxu0 0
      %3688 = vmatpush1.bf16.msra.mxu0 0
      %3689 = vmatprep.subr.bf16.mxu0 0
      %3690 = vmatpush1.bf16.msra.mxu0 0
      %3691 = vmatprep.subr.bf16.mxu0 0
      %3692 = vmatpush1.bf16.msra.mxu0 0
      %3693 = vmatprep.mubr.bf16.mxu0 0
      %3694 = vmatmul.mubr.bf16.gmra.mrb[0].mxu0 %v3605
      %v3695 = vpop.f32.mrb[0].mxu0
      %v3696 = vadd.f32 0.0, %v3695
      %v3697 = vpop.f32.mrb[0].mxu0
      %v3698 = vpop.f32.mrb[0].mxu0
      %v3699 = vadd.f32 0.0, %v3698
      %v3700 = vpop.f32.mrb[0].mxu0
      %3701 = vmatprep.mubr.bf16.mxu0 0
      %3702 = vmatmul.mubr.bf16.gmra.mrb[0].mxu0 %v3608
      %v3703 = vpop.f32.mrb[0].mxu0
      %v3704 = vadd.f32 0.0, %v3703
      %v3705 = vpop.f32.mrb[0].mxu0
      %v3706 = vpop.f32.mrb[0].mxu0
      %v3707 = vadd.f32 0.0, %v3706
      %v3708 = vpop.f32.mrb[0].mxu0
      %3709 = vmatprep.mubr.bf16.mxu0 0
      %3710 = vmatmul.mubr.bf16.gmra.mrb[0].mxu0 %v3611
      %v3711 = vpop.f32.mrb[0].mxu0
      %v3712 = vadd.f32 0.0, %v3711
      %v3713 = vpop.f32.mrb[0].mxu0
      %v3714 = vpop.f32.mrb[0].mxu0
      %v3715 = vadd.f32 0.0, %v3714
      %v3716 = vpop.f32.mrb[0].mxu0
      %3717 = vmatprep.mubr.bf16.mxu0 0
      %3718 = vmatmul.mubr.bf16.gmra.mrb[0].mxu0 %v3614
      %v3719 = vpop.f32.mrb[0].mxu0
      %v3720 = vadd.f32 0.0, %v3719
      %v3721 = vpop.f32.mrb[0].mxu0
      %v3722 = vpop.f32.mrb[0].mxu0
      %v3723 = vadd.f32 0.0, %v3722
      %v3724 = vpop.f32.mrb[0].mxu0
      %3725 = vmatprep.mubr.bf16.mxu0 0
      %3726 = vmatmul.mubr.bf16.gmra.mrb[0].mxu0 %v3617
      %v3727 = vpop.f32.mrb[0].mxu0
      %v3728 = vadd.f32 0.0, %v3727
      %v3729 = vpop.f32.mrb[0].mxu0
      %v3730 = vpop.f32.mrb[0].mxu0
      %v3731 = vadd.f32 0.0, %v3730
      %v3732 = vpop.f32.mrb[0].mxu0
      %3733 = vmatprep.mubr.bf16.mxu0 0
      %3734 = vmatmul.mubr.bf16.gmra.mrb[0].mxu0 %v3620
      %v3735 = vpop.f32.mrb[0].mxu0
      %v3736 = vadd.f32 0.0, %v3735
      %v3737 = vpop.f32.mrb[0].mxu0
      %v3738 = vpop.f32.mrb[0].mxu0
      %v3739 = vadd.f32 0.0, %v3738
      %v3740 = vpop.f32.mrb[0].mxu0
      %3741 = vmatprep.mubr.bf16.mxu0 0
      %3742 = vmatmul.mubr.bf16.gmra.mrb[0].mxu0 %v3623
      %v3743 = vpop.f32.mrb[0].mxu0
      %v3744 = vadd.f32 0.0, %v3743
      %v3745 = vpop.f32.mrb[0].mxu0
      %v3746 = vpop.f32.mrb[0].mxu0
      %v3747 = vadd.f32 0.0, %v3746
      %v3748 = vpop.f32.mrb[0].mxu0
      %3749 = vmatprep.mubr.bf16.mxu0 0
      %3750 = vmatmul.mubr.bf16.gmra.mrb[0].mxu0 %v3626
      %v3751 = vpop.f32.mrb[0].mxu0
      %v3752 = vadd.f32 0.0, %v3751
      %v3753 = vpop.f32.mrb[0].mxu0
      %v3754 = vpop.f32.mrb[0].mxu0
      %v3755 = vadd.f32 0.0, %v3754
      %v3756 = vpop.f32.mrb[0].mxu0
      %3757 = vmatprep.mubr.bf16.mxu0 0
      %3758 = vmatmul.mubr.bf16.gmra.mrb[0].mxu0 %v3629
      %v3759 = vpop.f32.mrb[0].mxu0
      %v3760 = vadd.f32 0.0, %v3759
      %v3761 = vpop.f32.mrb[0].mxu0
      %v3762 = vpop.f32.mrb[0].mxu0
      %v3763 = vadd.f32 0.0, %v3762
      %v3764 = vpop.f32.mrb[0].mxu0
      %3765 = vmatprep.mubr.bf16.mxu0 0
      %3766 = vmatmul.mubr.bf16.gmra.mrb[0].mxu0 %v3632
      %v3767 = vpop.f32.mrb[0].mxu0
      %v3768 = vadd.f32 0.0, %v3767
      %v3769 = vpop.f32.mrb[0].mxu0
      %v3770 = vpop.f32.mrb[0].mxu0
      %v3771 = vadd.f32 0.0, %v3770
      %v3772 = vpop.f32.mrb[0].mxu0
      %3773 = vmatprep.mubr.bf16.mxu0 0
      %3774 = vmatmul.mubr.bf16.gmra.mrb[0].mxu0 %v3635
      %v3775 = vpop.f32.mrb[0].mxu0
      %v3776 = vadd.f32 0.0, %v3775
      %v3777 = vpop.f32.mrb[0].mxu0
      %v3778 = vpop.f32.mrb[0].mxu0
      %v3779 = vadd.f32 0.0, %v3778
      %v3780 = vpop.f32.mrb[0].mxu0
      %3781 = vmatprep.mubr.bf16.mxu0 0
      %3782 = vmatmul.mubr.bf16.gmra.mrb[0].mxu0 %v3638
      %v3783 = vpop.f32.mrb[0].mxu0
      %v3784 = vadd.f32 0.0, %v3783
      %v3785 = vpop.f32.mrb[0].mxu0
      %v3786 = vpop.f32.mrb[0].mxu0
      %v3787 = vadd.f32 0.0, %v3786
      %v3788 = vpop.f32.mrb[0].mxu0
      %3789 = vmatprep.mubr.bf16.mxu0 0
      %3790 = vmatmul.mubr.bf16.gmra.mrb[0].mxu0 %v3641
      %v3791 = vpop.f32.mrb[0].mxu0
      %v3792 = vadd.f32 0.0, %v3791
      %v3793 = vpop.f32.mrb[0].mxu0
      %v3794 = vpop.f32.mrb[0].mxu0
      %v3795 = vadd.f32 0.0, %v3794
      %v3796 = vpop.f32.mrb[0].mxu0
      %3797 = vmatprep.mubr.bf16.mxu0 0
      %3798 = vmatmul.mubr.bf16.gmra.mrb[0].mxu0 %v3644
      %v3799 = vpop.f32.mrb[0].mxu0
      %v3800 = vadd.f32 0.0, %v3799
      %v3801 = vpop.f32.mrb[0].mxu0
      %v3802 = vpop.f32.mrb[0].mxu0
      %v3803 = vadd.f32 0.0, %v3802
      %v3804 = vpop.f32.mrb[0].mxu0
      %3805 = vmatprep.mubr.bf16.mxu0 0
      %3806 = vmatmul.mubr.bf16.gmra.mrb[0].mxu0 %v3647
      %v3807 = vpop.f32.mrb[0].mxu0
      %v3808 = vadd.f32 0.0, %v3807
      %v3809 = vpop.f32.mrb[0].mxu0
      %v3810 = vpop.f32.mrb[0].mxu0
      %v3811 = vadd.f32 0.0, %v3810
      %v3812 = vpop.f32.mrb[0].mxu0
      %3813 = vmatprep.mubr.bf16.mxu0 0
      %3814 = vmatmul.mubr.bf16.gmra.mrb[0].mxu0 %v3650
      %v3815 = vpop.f32.mrb[0].mxu0
      %v3816 = vadd.f32 0.0, %v3815
      %v3817 = vpop.f32.mrb[0].mxu0
      %v3818 = vpop.f32.mrb[0].mxu0
      %v3819 = vadd.f32 0.0, %v3818
      %v3820 = vpop.f32.mrb[0].mxu0
      %3821 = vmatprep.mubr.bf16.mxu0 0
      %3822 = vmatmul.mubr.bf16.gmra.mrb[0].mxu0 %v3653
      %v3823 = vpop.f32.mrb[0].mxu0
      %v3824 = vadd.f32 0.0, %v3823
      %v3825 = vpop.f32.mrb[0].mxu0
      %v3826 = vpop.f32.mrb[0].mxu0
      %v3827 = vadd.f32 0.0, %v3826
      %v3828 = vpop.f32.mrb[0].mxu0
      %3829 = vmatprep.mubr.bf16.mxu0 0
      %3830 = vmatmul.mubr.bf16.gmra.mrb[0].mxu0 %v3656
      %v3831 = vpop.f32.mrb[0].mxu0
      %v3832 = vadd.f32 0.0, %v3831
      %v3833 = vpop.f32.mrb[0].mxu0
      %v3834 = vpop.f32.mrb[0].mxu0
      %v3835 = vadd.f32 0.0, %v3834
      %v3836 = vpop.f32.mrb[0].mxu0
      %3837 = vdwg.mxu0
      %v3838 = vadd.f32 %v3525, %v3696
      %v3839 = vadd.f32 %v3526, %v3699
      %v3840 = vadd.f32 %v3527, %v3704
      %v3841 = vadd.f32 %v3528, %v3707
      %v3842 = vadd.f32 %v3529, %v3712
      %v3843 = vadd.f32 %v3530, %v3715
      %v3844 = vadd.f32 %v3531, %v3720
      %v3845 = vadd.f32 %v3532, %v3723
      %v3846 = vadd.f32 %v3533, %v3728
      %v3847 = vadd.f32 %v3534, %v3731
      %v3848 = vadd.f32 %v3535, %v3736
      %v3849 = vadd.f32 %v3536, %v3739
      %v3850 = vadd.f32 %v3537, %v3744
      %v3851 = vadd.f32 %v3538, %v3747
      %v3852 = vadd.f32 %v3539, %v3752
      %v3853 = vadd.f32 %v3540, %v3755
      %v3854 = vadd.f32 %v3541, %v3760
      %v3855 = vadd.f32 %v3542, %v3763
      %v3856 = vadd.f32 %v3543, %v3768
      %v3857 = vadd.f32 %v3544, %v3771
      %v3858 = vadd.f32 %v3545, %v3776
      %v3859 = vadd.f32 %v3546, %v3779
      %v3860 = vadd.f32 %v3547, %v3784
      %v3861 = vadd.f32 %v3548, %v3787
      %v3862 = vadd.f32 %v3549, %v3792
      %v3863 = vadd.f32 %v3550, %v3795
      %v3864 = vadd.f32 %v3551, %v3800
      %v3865 = vadd.f32 %v3552, %v3803
      %v3866 = vadd.f32 %v3553, %v3808
      %v3867 = vadd.f32 %v3554, %v3811
      %v3868 = vadd.f32 %v3555, %v3816
      %v3869 = vadd.f32 %v3556, %v3819
      %v3870 = vadd.f32 %v3557, %v3824
      %v3871 = vadd.f32 %v3558, %v3827
      %v3872 = vadd.f32 %v3559, %v3832
      %v3873 = vadd.f32 %v3560, %v3835
      %v3874 = vld [vmem:[#allocation2 + $0x8] sm:$0xe]
      %v3875 = vld [vmem:[#allocation2 + $0xc] sm:$0xf]
      %v3876 = vld [vmem:[#allocation2 + $0x10] sm:$0xf]
      %v3877 = vld [vmem:[#allocation2 + $0x14] sm:$0xf]
      %v3878 = vld [vmem:[#allocation2 + $0x18] sm:$0xf]
      %v3879 = vld [vmem:[#allocation2 + $0x1c] sm:$0xf]
      %v3880 = vld [vmem:[#allocation2 + $0x20] sm:$0xf]
      %v3881 = vld [vmem:[#allocation2 + $0x24] sm:$0xf]
      %v3882 = vld [vmem:[#allocation2 + $0x28] sm:$0xf]
      %v3883 = vld [vmem:[#allocation2 + $0x2c] sm:$0xf]
      %v3884 = vld [vmem:[#allocation2 + $0x30] sm:$0xf]
      %v3885 = vld [vmem:[#allocation2 + $0x34] sm:$0xf]
      %v3886 = vld [vmem:[#allocation2 + $0x38] sm:$0xf]
      %v3887 = vld [vmem:[#allocation2 + $0x3c] sm:$0xf]
      %v3888 = vld [vmem:[#allocation2 + $0x40] sm:$0xf]
      %v3889 = vld [vmem:[#allocation2 + $0x44] sm:$0xf]
      %v3890 = vld [vmem:[#allocation2 + $0x48] sm:$0xf]
      %v3891 = vld [vmem:[#allocation2 + $0x4c] sm:$0xf]
      %v3892 = vld [vmem:[#allocation2 + $0x50] sm:$0xf]
      %v3893 = vld [vmem:[#allocation2 + $0x54] sm:$0xf]
      %v3894 = vld [vmem:[#allocation2 + $0x58] sm:$0xf]
      %v3895 = vld [vmem:[#allocation2 + $0x5c] sm:$0xf]
      %v3896 = vld [vmem:[#allocation2 + $0x60] sm:$0xf]
      %v3897 = vld [vmem:[#allocation2 + $0x64] sm:$0xf]
      %v3898 = vld [vmem:[#allocation2 + $0x68] sm:$0xf]
      %v3899 = vld [vmem:[#allocation2 + $0x6c] sm:$0xf]
      %v3900 = vld [vmem:[#allocation2 + $0x70] sm:$0xf]
      %v3901 = vld [vmem:[#allocation2 + $0x74] sm:$0xf]
      %v3902 = vld [vmem:[#allocation2 + $0x78] sm:$0xf]
      %v3903 = vld [vmem:[#allocation2 + $0x7c] sm:$0xf]
      %v3904 = vld [vmem:[#allocation2 + $0x80] sm:$0xf]
      %v3905 = vld [vmem:[#allocation2 + $0x84] sm:$0xf]
      %v3906 = vld [vmem:[#allocation2 + $0x88] sm:$0xf]
      %v3907 = vld [vmem:[#allocation2 + $0x8c] sm:$0xf]
      %v3908 = vld [vmem:[#allocation2 + $0x90] sm:$0xf]
      %v3909 = vld [vmem:[#allocation2 + $0x94] sm:$0xf]
      %v3910 = vld [vmem:[#allocation2 + $0x98] sm:$0x1]
      %s3911 = scalar_lea.vmem %s2, 48
      %v3912 = vld [vmem:[%s3911] sm:$0xf]
      %v3913 = vld [vmem:[%s3911 + $0x4] sm:$0xf]
      %v3914 = vld [vmem:[%s3911 + $0x8] sm:$0xf]
      %v3915 = vld [vmem:[%s3911 + $0xc] sm:$0xf]
      %v3953 = vunpack.c.l.b16 %v3874
      %v3954 = vunpack.c.l.b16 %v3875
      %v3955 = vunpack.c.l.b16 %v3876
      %v3956 = vunpack.c.l.b16 %v3877
      %v3957 = vunpack.c.l.b16 %v3878
      %v3958 = vunpack.c.l.b16 %v3879
      %v3959 = vunpack.c.l.b16 %v3880
      %v3960 = vunpack.c.l.b16 %v3881
      %v3961 = vunpack.c.l.b16 %v3882
      %v3962 = vunpack.c.l.b16 %v3883
      %v3963 = vunpack.c.l.b16 %v3884
      %v3964 = vunpack.c.l.b16 %v3885
      %v3965 = vunpack.c.l.b16 %v3886
      %v3966 = vunpack.c.l.b16 %v3887
      %v3967 = vunpack.c.l.b16 %v3888
      %v3968 = vunpack.c.l.b16 %v3889
      %v3969 = vunpack.c.l.b16 %v3890
      %v3970 = vunpack.c.l.b16 %v3891
      %v3971 = vunpack.c.l.b16 %v3892
      %v3972 = vunpack.c.l.b16 %v3893
      %v3973 = vunpack.c.l.b16 %v3894
      %v3974 = vunpack.c.l.b16 %v3895
      %v3975 = vunpack.c.l.b16 %v3896
      %v3976 = vunpack.c.l.b16 %v3897
      %v3977 = vunpack.c.l.b16 %v3898
      %v3978 = vunpack.c.l.b16 %v3899
      %v3979 = vunpack.c.l.b16 %v3900
      %v3980 = vunpack.c.l.b16 %v3901
      %v3981 = vunpack.c.l.b16 %v3902
      %v3982 = vunpack.c.l.b16 %v3903
      %v3983 = vunpack.c.l.b16 %v3904
      %v3984 = vunpack.c.l.b16 %v3905
      %v3985 = vunpack.c.l.b16 %v3906
      %v3986 = vunpack.c.l.b16 %v3907
      %v3987 = vunpack.c.l.b16 %v3908
      %v3988 = vunpack.c.l.b16 %v3909
      %v3989 = vunpack.c.l.b16 %v3910
      %v3990 = vpack.c.b16 %v3954, %v3953
      %v3991 = vpack.c.b16 %v3956, %v3955
      %v3992 = vpack.c.b16 %v3958, %v3957
      %v3993 = vpack.c.b16 %v3960, %v3959
      %v3994 = vpack.c.b16 %v3962, %v3961
      %v3995 = vpack.c.b16 %v3964, %v3963
      %v3996 = vpack.c.b16 %v3966, %v3965
      %v3997 = vpack.c.b16 %v3968, %v3967
      %v3998 = vpack.c.b16 %v3970, %v3969
      %v3999 = vpack.c.b16 %v3972, %v3971
      %v4000 = vpack.c.b16 %v3974, %v3973
      %v4001 = vpack.c.b16 %v3976, %v3975
      %v4002 = vpack.c.b16 %v3978, %v3977
      %v4003 = vpack.c.b16 %v3980, %v3979
      %v4004 = vpack.c.b16 %v3982, %v3981
      %v4005 = vpack.c.b16 %v3984, %v3983
      %v4006 = vpack.c.b16 %v3986, %v3985
      %v4007 = vpack.c.b16 %v3988, %v3987
      %v4008 = vpack.c.b16 %v3989, %v3989
      %v4009 = vrot.slane %v3990, 1
      %v4010 = vrot.slane %v3991, 1
      %v4011 = vsel %vm3244, %v4009, %v4010
      %v4012 = vrot.slane %v3992, 1
      %v4013 = vsel %vm3244, %v4010, %v4012
      %v4014 = vrot.slane %v3993, 1
      %v4015 = vsel %vm3244, %v4012, %v4014
      %v4016 = vrot.slane %v3994, 1
      %v4017 = vsel %vm3244, %v4014, %v4016
      %v4018 = vrot.slane %v3995, 1
      %v4019 = vsel %vm3244, %v4016, %v4018
      %v4020 = vrot.slane %v3996, 1
      %v4021 = vsel %vm3244, %v4018, %v4020
      %v4022 = vrot.slane %v3997, 1
      %v4023 = vsel %vm3244, %v4020, %v4022
      %v4024 = vrot.slane %v3998, 1
      %v4025 = vsel %vm3244, %v4022, %v4024
      %v4026 = vrot.slane %v3999, 1
      %v4027 = vsel %vm3244, %v4024, %v4026
      %v4028 = vrot.slane %v4000, 1
      %v4029 = vsel %vm3244, %v4026, %v4028
      %v4030 = vrot.slane %v4001, 1
      %v4031 = vsel %vm3244, %v4028, %v4030
      %v4032 = vrot.slane %v4002, 1
      %v4033 = vsel %vm3244, %v4030, %v4032
      %v4034 = vrot.slane %v4003, 1
      %v4035 = vsel %vm3244, %v4032, %v4034
      %v4036 = vrot.slane %v4004, 1
      %v4037 = vsel %vm3244, %v4034, %v4036
      %v4038 = vrot.slane %v4005, 1
      %v4039 = vsel %vm3244, %v4036, %v4038
      %v4040 = vrot.slane %v4006, 1
      %v4041 = vsel %vm3244, %v4038, %v4040
      %v4042 = vrot.slane %v4007, 1
      %v4043 = vsel %vm3244, %v4040, %v4042
      %v4044 = vrot.slane %v4008, 1
      %v4045 = vsel %vm3244, %v4042, %v4044
      %v4050 = vunpack.c.l.b16 %v3912
      %v4051 = vunpack.c.l.b16 %v3913
      %v4052 = vunpack.c.l.b16 %v3914
      %v4053 = vunpack.c.l.b16 %v3915
      %v4054 = vpack.c.b16 %v4051, %v4050
      %v4055 = vpack.c.b16 %v4053, %v4052
      %v4059 = vsel %vm1890, %v4011, 0
      %v4062 = vsel %vm1890, %v4013, 0
      %v4065 = vsel %vm1890, %v4015, 0
      %v4068 = vsel %vm1890, %v4017, 0
      %v4071 = vsel %vm1890, %v4019, 0
      %v4074 = vsel %vm1890, %v4021, 0
      %v4077 = vsel %vm1890, %v4023, 0
      %v4080 = vsel %vm1890, %v4025, 0
      %v4083 = vsel %vm1890, %v4027, 0
      %v4086 = vsel %vm1890, %v4029, 0
      %v4089 = vsel %vm1890, %v4031, 0
      %v4092 = vsel %vm1890, %v4033, 0
      %v4095 = vsel %vm1890, %v4035, 0
      %v4098 = vsel %vm1890, %v4037, 0
      %v4101 = vsel %vm1890, %v4039, 0
      %v4104 = vsel %vm1890, %v4041, 0
      %v4107 = vsel %vm1890, %v4043, 0
      %v4110 = vsel %vm1890, %v4045, 0
      %4112 = vmatprep.subr.bf16.mxu0 0
      %4113 = vmatpush1.bf16.msra.mxu0 %v4054
      %4114 = vmatprep.subr.bf16.mxu0 0
      %4115 = vmatpush1.bf16.msra.mxu0 %v4055
      %4116 = vmatprep.subr.bf16.mxu0 0
      %4117 = vmatpush1.bf16.msra.mxu0 0
      %4118 = vmatprep.subr.bf16.mxu0 0
      %4119 = vmatpush1.bf16.msra.mxu0 0
      %4120 = vmatprep.subr.bf16.mxu0 0
      %4121 = vmatpush1.bf16.msra.mxu0 0
      %4122 = vmatprep.subr.bf16.mxu0 0
      %4123 = vmatpush1.bf16.msra.mxu0 0
      %4124 = vmatprep.subr.bf16.mxu0 0
      %4125 = vmatpush1.bf16.msra.mxu0 0
      %4126 = vmatprep.subr.bf16.mxu0 0
      %4127 = vmatpush1.bf16.msra.mxu0 0
      %4128 = vmatprep.subr.bf16.mxu0 0
      %4129 = vmatpush1.bf16.msra.mxu0 0
      %4130 = vmatprep.subr.bf16.mxu0 0
      %4131 = vmatpush1.bf16.msra.mxu0 0
      %4132 = vmatprep.subr.bf16.mxu0 0
      %4133 = vmatpush1.bf16.msra.mxu0 0
      %4134 = vmatprep.subr.bf16.mxu0 0
      %4135 = vmatpush1.bf16.msra.mxu0 0
      %4136 = vmatprep.subr.bf16.mxu0 0
      %4137 = vmatpush1.bf16.msra.mxu0 0
      %4138 = vmatprep.subr.bf16.mxu0 0
      %4139 = vmatpush1.bf16.msra.mxu0 0
      %4140 = vmatprep.subr.bf16.mxu0 0
      %4141 = vmatpush1.bf16.msra.mxu0 0
      %4142 = vmatprep.subr.bf16.mxu0 0
      %4143 = vmatpush1.bf16.msra.mxu0 0
      %4144 = vmatprep.mubr.bf16.mxu0 0
      %4145 = vmatmul.mubr.bf16.gmra.mrb[0].mxu0 %v4059
      %v4146 = vpop.f32.mrb[0].mxu0
      %v4147 = vadd.f32 0.0, %v4146
      %v4148 = vpop.f32.mrb[0].mxu0
      %v4149 = vpop.f32.mrb[0].mxu0
      %v4150 = vadd.f32 0.0, %v4149
      %v4151 = vpop.f32.mrb[0].mxu0
      %4152 = vmatprep.mubr.bf16.mxu0 0
      %4153 = vmatmul.mubr.bf16.gmra.mrb[0].mxu0 %v4062
      %v4154 = vpop.f32.mrb[0].mxu0
      %v4155 = vadd.f32 0.0, %v4154
      %v4156 = vpop.f32.mrb[0].mxu0
      %v4157 = vpop.f32.mrb[0].mxu0
      %v4158 = vadd.f32 0.0, %v4157
      %v4159 = vpop.f32.mrb[0].mxu0
      %4160 = vmatprep.mubr.bf16.mxu0 0
      %4161 = vmatmul.mubr.bf16.gmra.mrb[0].mxu0 %v4065
      %v4162 = vpop.f32.mrb[0].mxu0
      %v4163 = vadd.f32 0.0, %v4162
      %v4164 = vpop.f32.mrb[0].mxu0
      %v4165 = vpop.f32.mrb[0].mxu0
      %v4166 = vadd.f32 0.0, %v4165
      %v4167 = vpop.f32.mrb[0].mxu0
      %4168 = vmatprep.mubr.bf16.mxu0 0
      %4169 = vmatmul.mubr.bf16.gmra.mrb[0].mxu0 %v4068
      %v4170 = vpop.f32.mrb[0].mxu0
      %v4171 = vadd.f32 0.0, %v4170
      %v4172 = vpop.f32.mrb[0].mxu0
      %v4173 = vpop.f32.mrb[0].mxu0
      %v4174 = vadd.f32 0.0, %v4173
      %v4175 = vpop.f32.mrb[0].mxu0
      %4176 = vmatprep.mubr.bf16.mxu0 0
      %4177 = vmatmul.mubr.bf16.gmra.mrb[0].mxu0 %v4071
      %v4178 = vpop.f32.mrb[0].mxu0
      %v4179 = vadd.f32 0.0, %v4178
      %v4180 = vpop.f32.mrb[0].mxu0
      %v4181 = vpop.f32.mrb[0].mxu0
      %v4182 = vadd.f32 0.0, %v4181
      %v4183 = vpop.f32.mrb[0].mxu0
      %4184 = vmatprep.mubr.bf16.mxu0 0
      %4185 = vmatmul.mubr.bf16.gmra.mrb[0].mxu0 %v4074
      %v4186 = vpop.f32.mrb[0].mxu0
      %v4187 = vadd.f32 0.0, %v4186
      %v4188 = vpop.f32.mrb[0].mxu0
      %v4189 = vpop.f32.mrb[0].mxu0
      %v4190 = vadd.f32 0.0, %v4189
      %v4191 = vpop.f32.mrb[0].mxu0
      %4192 = vmatprep.mubr.bf16.mxu0 0
      %4193 = vmatmul.mubr.bf16.gmra.mrb[0].mxu0 %v4077
      %v4194 = vpop.f32.mrb[0].mxu0
      %v4195 = vadd.f32 0.0, %v4194
      %v4196 = vpop.f32.mrb[0].mxu0
      %v4197 = vpop.f32.mrb[0].mxu0
      %v4198 = vadd.f32 0.0, %v4197
      %v4199 = vpop.f32.mrb[0].mxu0
      %4200 = vmatprep.mubr.bf16.mxu0 0
      %4201 = vmatmul.mubr.bf16.gmra.mrb[0].mxu0 %v4080
      %v4202 = vpop.f32.mrb[0].mxu0
      %v4203 = vadd.f32 0.0, %v4202
      %v4204 = vpop.f32.mrb[0].mxu0
      %v4205 = vpop.f32.mrb[0].mxu0
      %v4206 = vadd.f32 0.0, %v4205
      %v4207 = vpop.f32.mrb[0].mxu0
      %4208 = vmatprep.mubr.bf16.mxu0 0
      %4209 = vmatmul.mubr.bf16.gmra.mrb[0].mxu0 %v4083
      %v4210 = vpop.f32.mrb[0].mxu0
      %v4211 = vadd.f32 0.0, %v4210
      %v4212 = vpop.f32.mrb[0].mxu0
      %v4213 = vpop.f32.mrb[0].mxu0
      %v4214 = vadd.f32 0.0, %v4213
      %v4215 = vpop.f32.mrb[0].mxu0
      %4216 = vmatprep.mubr.bf16.mxu0 0
      %4217 = vmatmul.mubr.bf16.gmra.mrb[0].mxu0 %v4086
      %v4218 = vpop.f32.mrb[0].mxu0
      %v4219 = vadd.f32 0.0, %v4218
      %v4220 = vpop.f32.mrb[0].mxu0
      %v4221 = vpop.f32.mrb[0].mxu0
      %v4222 = vadd.f32 0.0, %v4221
      %v4223 = vpop.f32.mrb[0].mxu0
      %4224 = vmatprep.mubr.bf16.mxu0 0
      %4225 = vmatmul.mubr.bf16.gmra.mrb[0].mxu0 %v4089
      %v4226 = vpop.f32.mrb[0].mxu0
      %v4227 = vadd.f32 0.0, %v4226
      %v4228 = vpop.f32.mrb[0].mxu0
      %v4229 = vpop.f32.mrb[0].mxu0
      %v4230 = vadd.f32 0.0, %v4229
      %v4231 = vpop.f32.mrb[0].mxu0
      %4232 = vmatprep.mubr.bf16.mxu0 0
      %4233 = vmatmul.mubr.bf16.gmra.mrb[0].mxu0 %v4092
      %v4234 = vpop.f32.mrb[0].mxu0
      %v4235 = vadd.f32 0.0, %v4234
      %v4236 = vpop.f32.mrb[0].mxu0
      %v4237 = vpop.f32.mrb[0].mxu0
      %v4238 = vadd.f32 0.0, %v4237
      %v4239 = vpop.f32.mrb[0].mxu0
      %4240 = vmatprep.mubr.bf16.mxu0 0
      %4241 = vmatmul.mubr.bf16.gmra.mrb[0].mxu0 %v4095
      %v4242 = vpop.f32.mrb[0].mxu0
      %v4243 = vadd.f32 0.0, %v4242
      %v4244 = vpop.f32.mrb[0].mxu0
      %v4245 = vpop.f32.mrb[0].mxu0
      %v4246 = vadd.f32 0.0, %v4245
      %v4247 = vpop.f32.mrb[0].mxu0
      %4248 = vmatprep.mubr.bf16.mxu0 0
      %4249 = vmatmul.mubr.bf16.gmra.mrb[0].mxu0 %v4098
      %v4250 = vpop.f32.mrb[0].mxu0
      %v4251 = vadd.f32 0.0, %v4250
      %v4252 = vpop.f32.mrb[0].mxu0
      %v4253 = vpop.f32.mrb[0].mxu0
      %v4254 = vadd.f32 0.0, %v4253
      %v4255 = vpop.f32.mrb[0].mxu0
      %4256 = vmatprep.mubr.bf16.mxu0 0
      %4257 = vmatmul.mubr.bf16.gmra.mrb[0].mxu0 %v4101
      %v4258 = vpop.f32.mrb[0].mxu0
      %v4259 = vadd.f32 0.0, %v4258
      %v4260 = vpop.f32.mrb[0].mxu0
      %v4261 = vpop.f32.mrb[0].mxu0
      %v4262 = vadd.f32 0.0, %v4261
      %v4263 = vpop.f32.mrb[0].mxu0
      %4264 = vmatprep.mubr.bf16.mxu0 0
      %4265 = vmatmul.mubr.bf16.gmra.mrb[0].mxu0 %v4104
      %v4266 = vpop.f32.mrb[0].mxu0
      %v4267 = vadd.f32 0.0, %v4266
      %v4268 = vpop.f32.mrb[0].mxu0
      %v4269 = vpop.f32.mrb[0].mxu0
      %v4270 = vadd.f32 0.0, %v4269
      %v4271 = vpop.f32.mrb[0].mxu0
      %4272 = vmatprep.mubr.bf16.mxu0 0
      %4273 = vmatmul.mubr.bf16.gmra.mrb[0].mxu0 %v4107
      %v4274 = vpop.f32.mrb[0].mxu0
      %v4275 = vadd.f32 0.0, %v4274
      %v4276 = vpop.f32.mrb[0].mxu0
      %v4277 = vpop.f32.mrb[0].mxu0
      %v4278 = vadd.f32 0.0, %v4277
      %v4279 = vpop.f32.mrb[0].mxu0
      %4280 = vmatprep.mubr.bf16.mxu0 0
      %4281 = vmatmul.mubr.bf16.gmra.mrb[0].mxu0 %v4110
      %v4282 = vpop.f32.mrb[0].mxu0
      %v4283 = vadd.f32 0.0, %v4282
      %v4284 = vpop.f32.mrb[0].mxu0
      %v4285 = vpop.f32.mrb[0].mxu0
      %v4286 = vadd.f32 0.0, %v4285
      %v4287 = vpop.f32.mrb[0].mxu0
      %4288 = vdwg.mxu0
      %v4289 = vadd.f32 %v3838, %v4147
      %v4290 = vadd.f32 %v3839, %v4150
      %v4291 = vadd.f32 %v3840, %v4155
      %v4292 = vadd.f32 %v3841, %v4158
      %v4293 = vadd.f32 %v3842, %v4163
      %v4294 = vadd.f32 %v3843, %v4166
      %v4295 = vadd.f32 %v3844, %v4171
      %v4296 = vadd.f32 %v3845, %v4174
      %v4297 = vadd.f32 %v3846, %v4179
      %v4298 = vadd.f32 %v3847, %v4182
      %v4299 = vadd.f32 %v3848, %v4187
      %v4300 = vadd.f32 %v3849, %v4190
      %v4301 = vadd.f32 %v3850, %v4195
      %v4302 = vadd.f32 %v3851, %v4198
      %v4303 = vadd.f32 %v3852, %v4203
      %v4304 = vadd.f32 %v3853, %v4206
      %v4305 = vadd.f32 %v3854, %v4211
      %v4306 = vadd.f32 %v3855, %v4214
      %v4307 = vadd.f32 %v3856, %v4219
      %v4308 = vadd.f32 %v3857, %v4222
      %v4309 = vadd.f32 %v3858, %v4227
      %v4310 = vadd.f32 %v3859, %v4230
      %v4311 = vadd.f32 %v3860, %v4235
      %v4312 = vadd.f32 %v3861, %v4238
      %v4313 = vadd.f32 %v3862, %v4243
      %v4314 = vadd.f32 %v3863, %v4246
      %v4315 = vadd.f32 %v3864, %v4251
      %v4316 = vadd.f32 %v3865, %v4254
      %v4317 = vadd.f32 %v3866, %v4259
      %v4318 = vadd.f32 %v3867, %v4262
      %v4319 = vadd.f32 %v3868, %v4267
      %v4320 = vadd.f32 %v3869, %v4270
      %v4321 = vadd.f32 %v3870, %v4275
      %v4322 = vadd.f32 %v3871, %v4278
      %v4323 = vadd.f32 %v3872, %v4283
      %v4324 = vadd.f32 %v3873, %v4286
      %v4325 = vld [vmem:[#allocation3 + $0x8] sm:$0xe]
      %v4326 = vld [vmem:[#allocation3 + $0xc] sm:$0xf]
      %v4327 = vld [vmem:[#allocation3 + $0x10] sm:$0xf]
      %v4328 = vld [vmem:[#allocation3 + $0x14] sm:$0xf]
      %v4329 = vld [vmem:[#allocation3 + $0x18] sm:$0xf]
      %v4330 = vld [vmem:[#allocation3 + $0x1c] sm:$0xf]
      %v4331 = vld [vmem:[#allocation3 + $0x20] sm:$0xf]
      %v4332 = vld [vmem:[#allocation3 + $0x24] sm:$0xf]
      %v4333 = vld [vmem:[#allocation3 + $0x28] sm:$0xf]
      %v4334 = vld [vmem:[#allocation3 + $0x2c] sm:$0xf]
      %v4335 = vld [vmem:[#allocation3 + $0x30] sm:$0xf]
      %v4336 = vld [vmem:[#allocation3 + $0x34] sm:$0xf]
      %v4337 = vld [vmem:[#allocation3 + $0x38] sm:$0xf]
      %v4338 = vld [vmem:[#allocation3 + $0x3c] sm:$0xf]
      %v4339 = vld [vmem:[#allocation3 + $0x40] sm:$0xf]
      %v4340 = vld [vmem:[#allocation3 + $0x44] sm:$0xf]
      %v4341 = vld [vmem:[#allocation3 + $0x48] sm:$0xf]
      %v4342 = vld [vmem:[#allocation3 + $0x4c] sm:$0xf]
      %v4343 = vld [vmem:[#allocation3 + $0x50] sm:$0xf]
      %v4344 = vld [vmem:[#allocation3 + $0x54] sm:$0xf]
      %v4345 = vld [vmem:[#allocation3 + $0x58] sm:$0xf]
      %v4346 = vld [vmem:[#allocation3 + $0x5c] sm:$0xf]
      %v4347 = vld [vmem:[#allocation3 + $0x60] sm:$0xf]
      %v4348 = vld [vmem:[#allocation3 + $0x64] sm:$0xf]
      %v4349 = vld [vmem:[#allocation3 + $0x68] sm:$0xf]
      %v4350 = vld [vmem:[#allocation3 + $0x6c] sm:$0xf]
      %v4351 = vld [vmem:[#allocation3 + $0x70] sm:$0xf]
      %v4352 = vld [vmem:[#allocation3 + $0x74] sm:$0xf]
      %v4353 = vld [vmem:[#allocation3 + $0x78] sm:$0xf]
      %v4354 = vld [vmem:[#allocation3 + $0x7c] sm:$0xf]
      %v4355 = vld [vmem:[#allocation3 + $0x80] sm:$0xf]
      %v4356 = vld [vmem:[#allocation3 + $0x84] sm:$0xf]
      %v4357 = vld [vmem:[#allocation3 + $0x88] sm:$0xf]
      %v4358 = vld [vmem:[#allocation3 + $0x8c] sm:$0xf]
      %v4359 = vld [vmem:[#allocation3 + $0x90] sm:$0xf]
      %v4360 = vld [vmem:[#allocation3 + $0x94] sm:$0xf]
      %v4361 = vld [vmem:[#allocation3 + $0x98] sm:$0x1]
      %s4362 = scalar_lea.vmem %s3, 6
      %v4363 = vld [vmem:[%s4362] sm:$0x3]
      %v4401 = vunpack.c.l.b16 %v4325
      %v4402 = vunpack.c.l.b16 %v4326
      %v4403 = vunpack.c.l.b16 %v4327
      %v4404 = vunpack.c.l.b16 %v4328
      %v4405 = vunpack.c.l.b16 %v4329
      %v4406 = vunpack.c.l.b16 %v4330
      %v4407 = vunpack.c.l.b16 %v4331
      %v4408 = vunpack.c.l.b16 %v4332
      %v4409 = vunpack.c.l.b16 %v4333
      %v4410 = vunpack.c.l.b16 %v4334
      %v4411 = vunpack.c.l.b16 %v4335
      %v4412 = vunpack.c.l.b16 %v4336
      %v4413 = vunpack.c.l.b16 %v4337
      %v4414 = vunpack.c.l.b16 %v4338
      %v4415 = vunpack.c.l.b16 %v4339
      %v4416 = vunpack.c.l.b16 %v4340
      %v4417 = vunpack.c.l.b16 %v4341
      %v4418 = vunpack.c.l.b16 %v4342
      %v4419 = vunpack.c.l.b16 %v4343
      %v4420 = vunpack.c.l.b16 %v4344
      %v4421 = vunpack.c.l.b16 %v4345
      %v4422 = vunpack.c.l.b16 %v4346
      %v4423 = vunpack.c.l.b16 %v4347
      %v4424 = vunpack.c.l.b16 %v4348
      %v4425 = vunpack.c.l.b16 %v4349
      %v4426 = vunpack.c.l.b16 %v4350
      %v4427 = vunpack.c.l.b16 %v4351
      %v4428 = vunpack.c.l.b16 %v4352
      %v4429 = vunpack.c.l.b16 %v4353
      %v4430 = vunpack.c.l.b16 %v4354
      %v4431 = vunpack.c.l.b16 %v4355
      %v4432 = vunpack.c.l.b16 %v4356
      %v4433 = vunpack.c.l.b16 %v4357
      %v4434 = vunpack.c.l.b16 %v4358
      %v4435 = vunpack.c.l.b16 %v4359
      %v4436 = vunpack.c.l.b16 %v4360
      %v4437 = vunpack.c.l.b16 %v4361
      %v4438 = vpack.c.b16 %v4402, %v4401
      %v4439 = vpack.c.b16 %v4404, %v4403
      %v4440 = vpack.c.b16 %v4406, %v4405
      %v4441 = vpack.c.b16 %v4408, %v4407
      %v4442 = vpack.c.b16 %v4410, %v4409
      %v4443 = vpack.c.b16 %v4412, %v4411
      %v4444 = vpack.c.b16 %v4414, %v4413
      %v4445 = vpack.c.b16 %v4416, %v4415
      %v4446 = vpack.c.b16 %v4418, %v4417
      %v4447 = vpack.c.b16 %v4420, %v4419
      %v4448 = vpack.c.b16 %v4422, %v4421
      %v4449 = vpack.c.b16 %v4424, %v4423
      %v4450 = vpack.c.b16 %v4426, %v4425
      %v4451 = vpack.c.b16 %v4428, %v4427
      %v4452 = vpack.c.b16 %v4430, %v4429
      %v4453 = vpack.c.b16 %v4432, %v4431
      %v4454 = vpack.c.b16 %v4434, %v4433
      %v4455 = vpack.c.b16 %v4436, %v4435
      %v4456 = vpack.c.b16 %v4437, %v4437
      %v4457 = vrot.slane %v4438, 1
      %v4458 = vrot.slane %v4439, 1
      %v4459 = vsel %vm3244, %v4457, %v4458
      %v4460 = vrot.slane %v4440, 1
      %v4461 = vsel %vm3244, %v4458, %v4460
      %v4462 = vrot.slane %v4441, 1
      %v4463 = vsel %vm3244, %v4460, %v4462
      %v4464 = vrot.slane %v4442, 1
      %v4465 = vsel %vm3244, %v4462, %v4464
      %v4466 = vrot.slane %v4443, 1
      %v4467 = vsel %vm3244, %v4464, %v4466
      %v4468 = vrot.slane %v4444, 1
      %v4469 = vsel %vm3244, %v4466, %v4468
      %v4470 = vrot.slane %v4445, 1
      %v4471 = vsel %vm3244, %v4468, %v4470
      %v4472 = vrot.slane %v4446, 1
      %v4473 = vsel %vm3244, %v4470, %v4472
      %v4474 = vrot.slane %v4447, 1
      %v4475 = vsel %vm3244, %v4472, %v4474
      %v4476 = vrot.slane %v4448, 1
      %v4477 = vsel %vm3244, %v4474, %v4476
      %v4478 = vrot.slane %v4449, 1
      %v4479 = vsel %vm3244, %v4476, %v4478
      %v4480 = vrot.slane %v4450, 1
      %v4481 = vsel %vm3244, %v4478, %v4480
      %v4482 = vrot.slane %v4451, 1
      %v4483 = vsel %vm3244, %v4480, %v4482
      %v4484 = vrot.slane %v4452, 1
      %v4485 = vsel %vm3244, %v4482, %v4484
      %v4486 = vrot.slane %v4453, 1
      %v4487 = vsel %vm3244, %v4484, %v4486
      %v4488 = vrot.slane %v4454, 1
      %v4489 = vsel %vm3244, %v4486, %v4488
      %v4490 = vrot.slane %v4455, 1
      %v4491 = vsel %vm3244, %v4488, %v4490
      %v4492 = vrot.slane %v4456, 1
      %v4493 = vsel %vm3244, %v4490, %v4492
      %v4495 = vsel %vm1552, %v4459, 0
      %v4498 = vsel %vm1552, %v4461, 0
      %v4501 = vsel %vm1552, %v4463, 0
      %v4504 = vsel %vm1552, %v4465, 0
      %v4507 = vsel %vm1552, %v4467, 0
      %v4510 = vsel %vm1552, %v4469, 0
      %v4513 = vsel %vm1552, %v4471, 0
      %v4516 = vsel %vm1552, %v4473, 0
      %v4519 = vsel %vm1552, %v4475, 0
      %v4522 = vsel %vm1552, %v4477, 0
      %v4525 = vsel %vm1552, %v4479, 0
      %v4528 = vsel %vm1552, %v4481, 0
      %v4531 = vsel %vm1552, %v4483, 0
      %v4534 = vsel %vm1552, %v4485, 0
      %v4537 = vsel %vm1552, %v4487, 0
      %v4540 = vsel %vm1552, %v4489, 0
      %v4543 = vsel %vm1552, %v4491, 0
      %v4546 = vsel %vm1552, %v4493, 0
      %v4549 = vsel %vm1607, %v4363, 0
      %4551 = vmatprep.subr.bf16.mxu0 0
      %4552 = vmatpush1.bf16.msra.mxu0 %v4549
      %4553 = vmatprep.subr.bf16.mxu0 0
      %4554 = vmatpush1.bf16.msra.mxu0 0
      %4555 = vmatprep.subr.bf16.mxu0 0
      %4556 = vmatpush1.bf16.msra.mxu0 0
      %4557 = vmatprep.subr.bf16.mxu0 0
      %4558 = vmatpush1.bf16.msra.mxu0 0
      %4559 = vmatprep.subr.bf16.mxu0 0
      %4560 = vmatpush1.bf16.msra.mxu0 0
      %4561 = vmatprep.subr.bf16.mxu0 0
      %4562 = vmatpush1.bf16.msra.mxu0 0
      %4563 = vmatprep.subr.bf16.mxu0 0
      %4564 = vmatpush1.bf16.msra.mxu0 0
      %4565 = vmatprep.subr.bf16.mxu0 0
      %4566 = vmatpush1.bf16.msra.mxu0 0
      %4567 = vmatprep.subr.bf16.mxu0 0
      %4568 = vmatpush1.bf16.msra.mxu0 0
      %4569 = vmatprep.subr.bf16.mxu0 0
      %4570 = vmatpush1.bf16.msra.mxu0 0
      %4571 = vmatprep.subr.bf16.mxu0 0
      %4572 = vmatpush1.bf16.msra.mxu0 0
      %4573 = vmatprep.subr.bf16.mxu0 0
      %4574 = vmatpush1.bf16.msra.mxu0 0
      %4575 = vmatprep.subr.bf16.mxu0 0
      %4576 = vmatpush1.bf16.msra.mxu0 0
      %4577 = vmatprep.subr.bf16.mxu0 0
      %4578 = vmatpush1.bf16.msra.mxu0 0
      %4579 = vmatprep.subr.bf16.mxu0 0
      %4580 = vmatpush1.bf16.msra.mxu0 0
      %4581 = vmatprep.subr.bf16.mxu0 0
      %4582 = vmatpush1.bf16.msra.mxu0 0
      %4583 = vmatprep.mubr.bf16.mxu0 0
      %4584 = vmatmul.mubr.bf16.gmra.mrb[0].mxu0 %v4495
      %v4585 = vpop.f32.mrb[0].mxu0
      %v4586 = vadd.f32 0.0, %v4585
      %v4587 = vpop.f32.mrb[0].mxu0
      %v4588 = vpop.f32.mrb[0].mxu0
      %v4589 = vadd.f32 0.0, %v4588
      %v4590 = vpop.f32.mrb[0].mxu0
      %4591 = vmatprep.mubr.bf16.mxu0 0
      %4592 = vmatmul.mubr.bf16.gmra.mrb[0].mxu0 %v4498
      %v4593 = vpop.f32.mrb[0].mxu0
      %v4594 = vadd.f32 0.0, %v4593
      %v4595 = vpop.f32.mrb[0].mxu0
      %v4596 = vpop.f32.mrb[0].mxu0
      %v4597 = vadd.f32 0.0, %v4596
      %v4598 = vpop.f32.mrb[0].mxu0
      %4599 = vmatprep.mubr.bf16.mxu0 0
      %4600 = vmatmul.mubr.bf16.gmra.mrb[0].mxu0 %v4501
      %v4601 = vpop.f32.mrb[0].mxu0
      %v4602 = vadd.f32 0.0, %v4601
      %v4603 = vpop.f32.mrb[0].mxu0
      %v4604 = vpop.f32.mrb[0].mxu0
      %v4605 = vadd.f32 0.0, %v4604
      %v4606 = vpop.f32.mrb[0].mxu0
      %4607 = vmatprep.mubr.bf16.mxu0 0
      %4608 = vmatmul.mubr.bf16.gmra.mrb[0].mxu0 %v4504
      %v4609 = vpop.f32.mrb[0].mxu0
      %v4610 = vadd.f32 0.0, %v4609
      %v4611 = vpop.f32.mrb[0].mxu0
      %v4612 = vpop.f32.mrb[0].mxu0
      %v4613 = vadd.f32 0.0, %v4612
      %v4614 = vpop.f32.mrb[0].mxu0
      %4615 = vmatprep.mubr.bf16.mxu0 0
      %4616 = vmatmul.mubr.bf16.gmra.mrb[0].mxu0 %v4507
      %v4617 = vpop.f32.mrb[0].mxu0
      %v4618 = vadd.f32 0.0, %v4617
      %v4619 = vpop.f32.mrb[0].mxu0
      %v4620 = vpop.f32.mrb[0].mxu0
      %v4621 = vadd.f32 0.0, %v4620
      %v4622 = vpop.f32.mrb[0].mxu0
      %4623 = vmatprep.mubr.bf16.mxu0 0
      %4624 = vmatmul.mubr.bf16.gmra.mrb[0].mxu0 %v4510
      %v4625 = vpop.f32.mrb[0].mxu0
      %v4626 = vadd.f32 0.0, %v4625
      %v4627 = vpop.f32.mrb[0].mxu0
      %v4628 = vpop.f32.mrb[0].mxu0
      %v4629 = vadd.f32 0.0, %v4628
      %v4630 = vpop.f32.mrb[0].mxu0
      %4631 = vmatprep.mubr.bf16.mxu0 0
      %4632 = vmatmul.mubr.bf16.gmra.mrb[0].mxu0 %v4513
      %v4633 = vpop.f32.mrb[0].mxu0
      %v4634 = vadd.f32 0.0, %v4633
      %v4635 = vpop.f32.mrb[0].mxu0
      %v4636 = vpop.f32.mrb[0].mxu0
      %v4637 = vadd.f32 0.0, %v4636
      %v4638 = vpop.f32.mrb[0].mxu0
      %4639 = vmatprep.mubr.bf16.mxu0 0
      %4640 = vmatmul.mubr.bf16.gmra.mrb[0].mxu0 %v4516
      %v4641 = vpop.f32.mrb[0].mxu0
      %v4642 = vadd.f32 0.0, %v4641
      %v4643 = vpop.f32.mrb[0].mxu0
      %v4644 = vpop.f32.mrb[0].mxu0
      %v4645 = vadd.f32 0.0, %v4644
      %v4646 = vpop.f32.mrb[0].mxu0
      %4647 = vmatprep.mubr.bf16.mxu0 0
      %4648 = vmatmul.mubr.bf16.gmra.mrb[0].mxu0 %v4519
      %v4649 = vpop.f32.mrb[0].mxu0
      %v4650 = vadd.f32 0.0, %v4649
      %v4651 = vpop.f32.mrb[0].mxu0
      %v4652 = vpop.f32.mrb[0].mxu0
      %v4653 = vadd.f32 0.0, %v4652
      %v4654 = vpop.f32.mrb[0].mxu0
      %4655 = vmatprep.mubr.bf16.mxu0 0
      %4656 = vmatmul.mubr.bf16.gmra.mrb[0].mxu0 %v4522
      %v4657 = vpop.f32.mrb[0].mxu0
      %v4658 = vadd.f32 0.0, %v4657
      %v4659 = vpop.f32.mrb[0].mxu0
      %v4660 = vpop.f32.mrb[0].mxu0
      %v4661 = vadd.f32 0.0, %v4660
      %v4662 = vpop.f32.mrb[0].mxu0
      %4663 = vmatprep.mubr.bf16.mxu0 0
      %4664 = vmatmul.mubr.bf16.gmra.mrb[0].mxu0 %v4525
      %v4665 = vpop.f32.mrb[0].mxu0
      %v4666 = vadd.f32 0.0, %v4665
      %v4667 = vpop.f32.mrb[0].mxu0
      %v4668 = vpop.f32.mrb[0].mxu0
      %v4669 = vadd.f32 0.0, %v4668
      %v4670 = vpop.f32.mrb[0].mxu0
      %4671 = vmatprep.mubr.bf16.mxu0 0
      %4672 = vmatmul.mubr.bf16.gmra.mrb[0].mxu0 %v4528
      %v4673 = vpop.f32.mrb[0].mxu0
      %v4674 = vadd.f32 0.0, %v4673
      %v4675 = vpop.f32.mrb[0].mxu0
      %v4676 = vpop.f32.mrb[0].mxu0
      %v4677 = vadd.f32 0.0, %v4676
      %v4678 = vpop.f32.mrb[0].mxu0
      %4679 = vmatprep.mubr.bf16.mxu0 0
      %4680 = vmatmul.mubr.bf16.gmra.mrb[0].mxu0 %v4531
      %v4681 = vpop.f32.mrb[0].mxu0
      %v4682 = vadd.f32 0.0, %v4681
      %v4683 = vpop.f32.mrb[0].mxu0
      %v4684 = vpop.f32.mrb[0].mxu0
      %v4685 = vadd.f32 0.0, %v4684
      %v4686 = vpop.f32.mrb[0].mxu0
      %4687 = vmatprep.mubr.bf16.mxu0 0
      %4688 = vmatmul.mubr.bf16.gmra.mrb[0].mxu0 %v4534
      %v4689 = vpop.f32.mrb[0].mxu0
      %v4690 = vadd.f32 0.0, %v4689
      %v4691 = vpop.f32.mrb[0].mxu0
      %v4692 = vpop.f32.mrb[0].mxu0
      %v4693 = vadd.f32 0.0, %v4692
      %v4694 = vpop.f32.mrb[0].mxu0
      %4695 = vmatprep.mubr.bf16.mxu0 0
      %4696 = vmatmul.mubr.bf16.gmra.mrb[0].mxu0 %v4537
      %v4697 = vpop.f32.mrb[0].mxu0
      %v4698 = vadd.f32 0.0, %v4697
      %v4699 = vpop.f32.mrb[0].mxu0
      %v4700 = vpop.f32.mrb[0].mxu0
      %v4701 = vadd.f32 0.0, %v4700
      %v4702 = vpop.f32.mrb[0].mxu0
      %4703 = vmatprep.mubr.bf16.mxu0 0
      %4704 = vmatmul.mubr.bf16.gmra.mrb[0].mxu0 %v4540
      %v4705 = vpop.f32.mrb[0].mxu0
      %v4706 = vadd.f32 0.0, %v4705
      %v4707 = vpop.f32.mrb[0].mxu0
      %v4708 = vpop.f32.mrb[0].mxu0
      %v4709 = vadd.f32 0.0, %v4708
      %v4710 = vpop.f32.mrb[0].mxu0
      %4711 = vmatprep.mubr.bf16.mxu0 0
      %4712 = vmatmul.mubr.bf16.gmra.mrb[0].mxu0 %v4543
      %v4713 = vpop.f32.mrb[0].mxu0
      %v4714 = vadd.f32 0.0, %v4713
      %v4715 = vpop.f32.mrb[0].mxu0
      %v4716 = vpop.f32.mrb[0].mxu0
      %v4717 = vadd.f32 0.0, %v4716
      %v4718 = vpop.f32.mrb[0].mxu0
      %4719 = vmatprep.mubr.bf16.mxu0 0
      %4720 = vmatmul.mubr.bf16.gmra.mrb[0].mxu0 %v4546
      %v4721 = vpop.f32.mrb[0].mxu0
      %v4722 = vadd.f32 0.0, %v4721
      %v4723 = vpop.f32.mrb[0].mxu0
      %v4724 = vpop.f32.mrb[0].mxu0
      %v4725 = vadd.f32 0.0, %v4724
      %v4726 = vpop.f32.mrb[0].mxu0
      %4727 = vdwg.mxu0
      %v4728 = vadd.f32 %v4289, %v4586
      %v4729 = vadd.f32 %v4290, %v4589
      %v4730 = vadd.f32 %v4291, %v4594
      %v4731 = vadd.f32 %v4292, %v4597
      %v4732 = vadd.f32 %v4293, %v4602
      %v4733 = vadd.f32 %v4294, %v4605
      %v4734 = vadd.f32 %v4295, %v4610
      %v4735 = vadd.f32 %v4296, %v4613
      %v4736 = vadd.f32 %v4297, %v4618
      %v4737 = vadd.f32 %v4298, %v4621
      %v4738 = vadd.f32 %v4299, %v4626
      %v4739 = vadd.f32 %v4300, %v4629
      %v4740 = vadd.f32 %v4301, %v4634
      %v4741 = vadd.f32 %v4302, %v4637
      %v4742 = vadd.f32 %v4303, %v4642
      %v4743 = vadd.f32 %v4304, %v4645
      %v4744 = vadd.f32 %v4305, %v4650
      %v4745 = vadd.f32 %v4306, %v4653
      %v4746 = vadd.f32 %v4307, %v4658
      %v4747 = vadd.f32 %v4308, %v4661
      %v4748 = vadd.f32 %v4309, %v4666
      %v4749 = vadd.f32 %v4310, %v4669
      %v4750 = vadd.f32 %v4311, %v4674
      %v4751 = vadd.f32 %v4312, %v4677
      %v4752 = vadd.f32 %v4313, %v4682
      %v4753 = vadd.f32 %v4314, %v4685
      %v4754 = vadd.f32 %v4315, %v4690
      %v4755 = vadd.f32 %v4316, %v4693
      %v4756 = vadd.f32 %v4317, %v4698
      %v4757 = vadd.f32 %v4318, %v4701
      %v4758 = vadd.f32 %v4319, %v4706
      %v4759 = vadd.f32 %v4320, %v4709
      %v4760 = vadd.f32 %v4321, %v4714
      %v4761 = vadd.f32 %v4322, %v4717
      %v4762 = vadd.f32 %v4323, %v4722
      %v4763 = vadd.f32 %v4324, %v4725
      %v4764 = vld [vmem:[#allocation2 + $0x98] sm:$0x3]
      %s4765 = scalar_lea.vmem %s2, 64
      %v4766 = vld [vmem:[%s4765] sm:$0xf]
      %v4767 = vld [vmem:[%s4765 + $0x4] sm:$0xf]
      %v4768 = vld [vmem:[%s4765 + $0x8] sm:$0xf]
      %v4769 = vld [vmem:[%s4765 + $0xc] sm:$0xf]
      %v4771 = vunpack.c.l.b16 %v4764
      %v4772 = vpack.c.b16 %v4771, %v4771
      %vm4773 = vsmask.f32 6400
      %v4775 = vshrl.u32 %v3990, 16
      %v4777 = vrot.slane %v4775, 1
      %v4778 = vshll.u32 %v3990, 16
      %v4780 = vrot.slane %v4778, 2
      %v4781 = vor.u32 %v4777, %v4780
      %v4783 = vshrl.u32 %v3991, 16
      %v4785 = vrot.slane %v4783, 1
      %v4786 = vshll.u32 %v3991, 16
      %v4788 = vrot.slane %v4786, 2
      %v4789 = vor.u32 %v4785, %v4788
      %v4790 = vsel %vm4773, %v4781, %v4789
      %v4792 = vshrl.u32 %v3992, 16
      %v4794 = vrot.slane %v4792, 1
      %v4795 = vshll.u32 %v3992, 16
      %v4797 = vrot.slane %v4795, 2
      %v4798 = vor.u32 %v4794, %v4797
      %v4799 = vsel %vm4773, %v4789, %v4798
      %v4801 = vshrl.u32 %v3993, 16
      %v4803 = vrot.slane %v4801, 1
      %v4804 = vshll.u32 %v3993, 16
      %v4806 = vrot.slane %v4804, 2
      %v4807 = vor.u32 %v4803, %v4806
      %v4808 = vsel %vm4773, %v4798, %v4807
      %v4810 = vshrl.u32 %v3994, 16
      %v4812 = vrot.slane %v4810, 1
      %v4813 = vshll.u32 %v3994, 16
      %v4815 = vrot.slane %v4813, 2
      %v4816 = vor.u32 %v4812, %v4815
      %v4817 = vsel %vm4773, %v4807, %v4816
      %v4819 = vshrl.u32 %v3995, 16
      %v4821 = vrot.slane %v4819, 1
      %v4822 = vshll.u32 %v3995, 16
      %v4824 = vrot.slane %v4822, 2
      %v4825 = vor.u32 %v4821, %v4824
      %v4826 = vsel %vm4773, %v4816, %v4825
      %v4828 = vshrl.u32 %v3996, 16
      %v4830 = vrot.slane %v4828, 1
      %v4831 = vshll.u32 %v3996, 16
      %v4833 = vrot.slane %v4831, 2
      %v4834 = vor.u32 %v4830, %v4833
      %v4835 = vsel %vm4773, %v4825, %v4834
      %v4837 = vshrl.u32 %v3997, 16
      %v4839 = vrot.slane %v4837, 1
      %v4840 = vshll.u32 %v3997, 16
      %v4842 = vrot.slane %v4840, 2
      %v4843 = vor.u32 %v4839, %v4842
      %v4844 = vsel %vm4773, %v4834, %v4843
      %v4846 = vshrl.u32 %v3998, 16
      %v4848 = vrot.slane %v4846, 1
      %v4849 = vshll.u32 %v3998, 16
      %v4851 = vrot.slane %v4849, 2
      %v4852 = vor.u32 %v4848, %v4851
      %v4853 = vsel %vm4773, %v4843, %v4852
      %v4855 = vshrl.u32 %v3999, 16
      %v4857 = vrot.slane %v4855, 1
      %v4858 = vshll.u32 %v3999, 16
      %v4860 = vrot.slane %v4858, 2
      %v4861 = vor.u32 %v4857, %v4860
      %v4862 = vsel %vm4773, %v4852, %v4861
      %v4864 = vshrl.u32 %v4000, 16
      %v4866 = vrot.slane %v4864, 1
      %v4867 = vshll.u32 %v4000, 16
      %v4869 = vrot.slane %v4867, 2
      %v4870 = vor.u32 %v4866, %v4869
      %v4871 = vsel %vm4773, %v4861, %v4870
      %v4873 = vshrl.u32 %v4001, 16
      %v4875 = vrot.slane %v4873, 1
      %v4876 = vshll.u32 %v4001, 16
      %v4878 = vrot.slane %v4876, 2
      %v4879 = vor.u32 %v4875, %v4878
      %v4880 = vsel %vm4773, %v4870, %v4879
      %v4882 = vshrl.u32 %v4002, 16
      %v4884 = vrot.slane %v4882, 1
      %v4885 = vshll.u32 %v4002, 16
      %v4887 = vrot.slane %v4885, 2
      %v4888 = vor.u32 %v4884, %v4887
      %v4889 = vsel %vm4773, %v4879, %v4888
      %v4891 = vshrl.u32 %v4003, 16
      %v4893 = vrot.slane %v4891, 1
      %v4894 = vshll.u32 %v4003, 16
      %v4896 = vrot.slane %v4894, 2
      %v4897 = vor.u32 %v4893, %v4896
      %v4898 = vsel %vm4773, %v4888, %v4897
      %v4900 = vshrl.u32 %v4004, 16
      %v4902 = vrot.slane %v4900, 1
      %v4903 = vshll.u32 %v4004, 16
      %v4905 = vrot.slane %v4903, 2
      %v4906 = vor.u32 %v4902, %v4905
      %v4907 = vsel %vm4773, %v4897, %v4906
      %v4909 = vshrl.u32 %v4005, 16
      %v4911 = vrot.slane %v4909, 1
      %v4912 = vshll.u32 %v4005, 16
      %v4914 = vrot.slane %v4912, 2
      %v4915 = vor.u32 %v4911, %v4914
      %v4916 = vsel %vm4773, %v4906, %v4915
      %v4918 = vshrl.u32 %v4006, 16
      %v4920 = vrot.slane %v4918, 1
      %v4921 = vshll.u32 %v4006, 16
      %v4923 = vrot.slane %v4921, 2
      %v4924 = vor.u32 %v4920, %v4923
      %v4925 = vsel %vm4773, %v4915, %v4924
      %v4927 = vshrl.u32 %v4007, 16
      %v4929 = vrot.slane %v4927, 1
      %v4930 = vshll.u32 %v4007, 16
      %v4932 = vrot.slane %v4930, 2
      %v4933 = vor.u32 %v4929, %v4932
      %v4934 = vsel %vm4773, %v4924, %v4933
      %v4936 = vshrl.u32 %v4772, 16
      %v4938 = vrot.slane %v4936, 1
      %v4939 = vshll.u32 %v4772, 16
      %v4941 = vrot.slane %v4939, 2
      %v4942 = vor.u32 %v4938, %v4941
      %v4943 = vsel %vm4773, %v4933, %v4942
      %v4948 = vunpack.c.l.b16 %v4766
      %v4949 = vunpack.c.l.b16 %v4767
      %v4950 = vunpack.c.l.b16 %v4768
      %v4951 = vunpack.c.l.b16 %v4769
      %v4952 = vpack.c.b16 %v4949, %v4948
      %v4953 = vpack.c.b16 %v4951, %v4950
      %v4957 = vsel %vm1890, %v4790, 0
      %v4960 = vsel %vm1890, %v4799, 0
      %v4963 = vsel %vm1890, %v4808, 0
      %v4966 = vsel %vm1890, %v4817, 0
      %v4969 = vsel %vm1890, %v4826, 0
      %v4972 = vsel %vm1890, %v4835, 0
      %v4975 = vsel %vm1890, %v4844, 0
      %v4978 = vsel %vm1890, %v4853, 0
      %v4981 = vsel %vm1890, %v4862, 0
      %v4984 = vsel %vm1890, %v4871, 0
      %v4987 = vsel %vm1890, %v4880, 0
      %v4990 = vsel %vm1890, %v4889, 0
      %v4993 = vsel %vm1890, %v4898, 0
      %v4996 = vsel %vm1890, %v4907, 0
      %v4999 = vsel %vm1890, %v4916, 0
      %v5002 = vsel %vm1890, %v4925, 0
      %v5005 = vsel %vm1890, %v4934, 0
      %v5008 = vsel %vm1890, %v4943, 0
      %5010 = vmatprep.subr.bf16.mxu0 0
      %5011 = vmatpush1.bf16.msra.mxu0 %v4952
      %5012 = vmatprep.subr.bf16.mxu0 0
      %5013 = vmatpush1.bf16.msra.mxu0 %v4953
      %5014 = vmatprep.subr.bf16.mxu0 0
      %5015 = vmatpush1.bf16.msra.mxu0 0
      %5016 = vmatprep.subr.bf16.mxu0 0
      %5017 = vmatpush1.bf16.msra.mxu0 0
      %5018 = vmatprep.subr.bf16.mxu0 0
      %5019 = vmatpush1.bf16.msra.mxu0 0
      %5020 = vmatprep.subr.bf16.mxu0 0
      %5021 = vmatpush1.bf16.msra.mxu0 0
      %5022 = vmatprep.subr.bf16.mxu0 0
      %5023 = vmatpush1.bf16.msra.mxu0 0
      %5024 = vmatprep.subr.bf16.mxu0 0
      %5025 = vmatpush1.bf16.msra.mxu0 0
      %5026 = vmatprep.subr.bf16.mxu0 0
      %5027 = vmatpush1.bf16.msra.mxu0 0
      %5028 = vmatprep.subr.bf16.mxu0 0
      %5029 = vmatpush1.bf16.msra.mxu0 0
      %5030 = vmatprep.subr.bf16.mxu0 0
      %5031 = vmatpush1.bf16.msra.mxu0 0
      %5032 = vmatprep.subr.bf16.mxu0 0
      %5033 = vmatpush1.bf16.msra.mxu0 0
      %5034 = vmatprep.subr.bf16.mxu0 0
      %5035 = vmatpush1.bf16.msra.mxu0 0
      %5036 = vmatprep.subr.bf16.mxu0 0
      %5037 = vmatpush1.bf16.msra.mxu0 0
      %5038 = vmatprep.subr.bf16.mxu0 0
      %5039 = vmatpush1.bf16.msra.mxu0 0
      %5040 = vmatprep.subr.bf16.mxu0 0
      %5041 = vmatpush1.bf16.msra.mxu0 0
      %5042 = vmatprep.mubr.bf16.mxu0 0
      %5043 = vmatmul.mubr.bf16.gmra.mrb[0].mxu0 %v4957
      %v5044 = vpop.f32.mrb[0].mxu0
      %v5045 = vadd.f32 0.0, %v5044
      %v5046 = vpop.f32.mrb[0].mxu0
      %v5047 = vpop.f32.mrb[0].mxu0
      %v5048 = vadd.f32 0.0, %v5047
      %v5049 = vpop.f32.mrb[0].mxu0
      %5050 = vmatprep.mubr.bf16.mxu0 0
      %5051 = vmatmul.mubr.bf16.gmra.mrb[0].mxu0 %v4960
      %v5052 = vpop.f32.mrb[0].mxu0
      %v5053 = vadd.f32 0.0, %v5052
      %v5054 = vpop.f32.mrb[0].mxu0
      %v5055 = vpop.f32.mrb[0].mxu0
      %v5056 = vadd.f32 0.0, %v5055
      %v5057 = vpop.f32.mrb[0].mxu0
      %5058 = vmatprep.mubr.bf16.mxu0 0
      %5059 = vmatmul.mubr.bf16.gmra.mrb[0].mxu0 %v4963
      %v5060 = vpop.f32.mrb[0].mxu0
      %v5061 = vadd.f32 0.0, %v5060
      %v5062 = vpop.f32.mrb[0].mxu0
      %v5063 = vpop.f32.mrb[0].mxu0
      %v5064 = vadd.f32 0.0, %v5063
      %v5065 = vpop.f32.mrb[0].mxu0
      %5066 = vmatprep.mubr.bf16.mxu0 0
      %5067 = vmatmul.mubr.bf16.gmra.mrb[0].mxu0 %v4966
      %v5068 = vpop.f32.mrb[0].mxu0
      %v5069 = vadd.f32 0.0, %v5068
      %v5070 = vpop.f32.mrb[0].mxu0
      %v5071 = vpop.f32.mrb[0].mxu0
      %v5072 = vadd.f32 0.0, %v5071
      %v5073 = vpop.f32.mrb[0].mxu0
      %5074 = vmatprep.mubr.bf16.mxu0 0
      %5075 = vmatmul.mubr.bf16.gmra.mrb[0].mxu0 %v4969
      %v5076 = vpop.f32.mrb[0].mxu0
      %v5077 = vadd.f32 0.0, %v5076
      %v5078 = vpop.f32.mrb[0].mxu0
      %v5079 = vpop.f32.mrb[0].mxu0
      %v5080 = vadd.f32 0.0, %v5079
      %v5081 = vpop.f32.mrb[0].mxu0
      %5082 = vmatprep.mubr.bf16.mxu0 0
      %5083 = vmatmul.mubr.bf16.gmra.mrb[0].mxu0 %v4972
      %v5084 = vpop.f32.mrb[0].mxu0
      %v5085 = vadd.f32 0.0, %v5084
      %v5086 = vpop.f32.mrb[0].mxu0
      %v5087 = vpop.f32.mrb[0].mxu0
      %v5088 = vadd.f32 0.0, %v5087
      %v5089 = vpop.f32.mrb[0].mxu0
      %5090 = vmatprep.mubr.bf16.mxu0 0
      %5091 = vmatmul.mubr.bf16.gmra.mrb[0].mxu0 %v4975
      %v5092 = vpop.f32.mrb[0].mxu0
      %v5093 = vadd.f32 0.0, %v5092
      %v5094 = vpop.f32.mrb[0].mxu0
      %v5095 = vpop.f32.mrb[0].mxu0
      %v5096 = vadd.f32 0.0, %v5095
      %v5097 = vpop.f32.mrb[0].mxu0
      %5098 = vmatprep.mubr.bf16.mxu0 0
      %5099 = vmatmul.mubr.bf16.gmra.mrb[0].mxu0 %v4978
      %v5100 = vpop.f32.mrb[0].mxu0
      %v5101 = vadd.f32 0.0, %v5100
      %v5102 = vpop.f32.mrb[0].mxu0
      %v5103 = vpop.f32.mrb[0].mxu0
      %v5104 = vadd.f32 0.0, %v5103
      %v5105 = vpop.f32.mrb[0].mxu0
      %5106 = vmatprep.mubr.bf16.mxu0 0
      %5107 = vmatmul.mubr.bf16.gmra.mrb[0].mxu0 %v4981
      %v5108 = vpop.f32.mrb[0].mxu0
      %v5109 = vadd.f32 0.0, %v5108
      %v5110 = vpop.f32.mrb[0].mxu0
      %v5111 = vpop.f32.mrb[0].mxu0
      %v5112 = vadd.f32 0.0, %v5111
      %v5113 = vpop.f32.mrb[0].mxu0
      %5114 = vmatprep.mubr.bf16.mxu0 0
      %5115 = vmatmul.mubr.bf16.gmra.mrb[0].mxu0 %v4984
      %v5116 = vpop.f32.mrb[0].mxu0
      %v5117 = vadd.f32 0.0, %v5116
      %v5118 = vpop.f32.mrb[0].mxu0
      %v5119 = vpop.f32.mrb[0].mxu0
      %v5120 = vadd.f32 0.0, %v5119
      %v5121 = vpop.f32.mrb[0].mxu0
      %5122 = vmatprep.mubr.bf16.mxu0 0
      %5123 = vmatmul.mubr.bf16.gmra.mrb[0].mxu0 %v4987
      %v5124 = vpop.f32.mrb[0].mxu0
      %v5125 = vadd.f32 0.0, %v5124
      %v5126 = vpop.f32.mrb[0].mxu0
      %v5127 = vpop.f32.mrb[0].mxu0
      %v5128 = vadd.f32 0.0, %v5127
      %v5129 = vpop.f32.mrb[0].mxu0
      %5130 = vmatprep.mubr.bf16.mxu0 0
      %5131 = vmatmul.mubr.bf16.gmra.mrb[0].mxu0 %v4990
      %v5132 = vpop.f32.mrb[0].mxu0
      %v5133 = vadd.f32 0.0, %v5132
      %v5134 = vpop.f32.mrb[0].mxu0
      %v5135 = vpop.f32.mrb[0].mxu0
      %v5136 = vadd.f32 0.0, %v5135
      %v5137 = vpop.f32.mrb[0].mxu0
      %5138 = vmatprep.mubr.bf16.mxu0 0
      %5139 = vmatmul.mubr.bf16.gmra.mrb[0].mxu0 %v4993
      %v5140 = vpop.f32.mrb[0].mxu0
      %v5141 = vadd.f32 0.0, %v5140
      %v5142 = vpop.f32.mrb[0].mxu0
      %v5143 = vpop.f32.mrb[0].mxu0
      %v5144 = vadd.f32 0.0, %v5143
      %v5145 = vpop.f32.mrb[0].mxu0
      %5146 = vmatprep.mubr.bf16.mxu0 0
      %5147 = vmatmul.mubr.bf16.gmra.mrb[0].mxu0 %v4996
      %v5148 = vpop.f32.mrb[0].mxu0
      %v5149 = vadd.f32 0.0, %v5148
      %v5150 = vpop.f32.mrb[0].mxu0
      %v5151 = vpop.f32.mrb[0].mxu0
      %v5152 = vadd.f32 0.0, %v5151
      %v5153 = vpop.f32.mrb[0].mxu0
      %5154 = vmatprep.mubr.bf16.mxu0 0
      %5155 = vmatmul.mubr.bf16.gmra.mrb[0].mxu0 %v4999
      %v5156 = vpop.f32.mrb[0].mxu0
      %v5157 = vadd.f32 0.0, %v5156
      %v5158 = vpop.f32.mrb[0].mxu0
      %v5159 = vpop.f32.mrb[0].mxu0
      %v5160 = vadd.f32 0.0, %v5159
      %v5161 = vpop.f32.mrb[0].mxu0
      %5162 = vmatprep.mubr.bf16.mxu0 0
      %5163 = vmatmul.mubr.bf16.gmra.mrb[0].mxu0 %v5002
      %v5164 = vpop.f32.mrb[0].mxu0
      %v5165 = vadd.f32 0.0, %v5164
      %v5166 = vpop.f32.mrb[0].mxu0
      %v5167 = vpop.f32.mrb[0].mxu0
      %v5168 = vadd.f32 0.0, %v5167
      %v5169 = vpop.f32.mrb[0].mxu0
      %5170 = vmatprep.mubr.bf16.mxu0 0
      %5171 = vmatmul.mubr.bf16.gmra.mrb[0].mxu0 %v5005
      %v5172 = vpop.f32.mrb[0].mxu0
      %v5173 = vadd.f32 0.0, %v5172
      %v5174 = vpop.f32.mrb[0].mxu0
      %v5175 = vpop.f32.mrb[0].mxu0
      %v5176 = vadd.f32 0.0, %v5175
      %v5177 = vpop.f32.mrb[0].mxu0
      %5178 = vmatprep.mubr.bf16.mxu0 0
      %5179 = vmatmul.mubr.bf16.gmra.mrb[0].mxu0 %v5008
      %v5180 = vpop.f32.mrb[0].mxu0
      %v5181 = vadd.f32 0.0, %v5180
      %v5182 = vpop.f32.mrb[0].mxu0
      %v5183 = vpop.f32.mrb[0].mxu0
      %v5184 = vadd.f32 0.0, %v5183
      %v5185 = vpop.f32.mrb[0].mxu0
      %5186 = vdwg.mxu0
      %v5187 = vadd.f32 %v4728, %v5045
      %v5188 = vadd.f32 %v4729, %v5048
      %v5189 = vadd.f32 %v4730, %v5053
      %v5190 = vadd.f32 %v4731, %v5056
      %v5191 = vadd.f32 %v4732, %v5061
      %v5192 = vadd.f32 %v4733, %v5064
      %v5193 = vadd.f32 %v4734, %v5069
      %v5194 = vadd.f32 %v4735, %v5072
      %v5195 = vadd.f32 %v4736, %v5077
      %v5196 = vadd.f32 %v4737, %v5080
      %v5197 = vadd.f32 %v4738, %v5085
      %v5198 = vadd.f32 %v4739, %v5088
      %v5199 = vadd.f32 %v4740, %v5093
      %v5200 = vadd.f32 %v4741, %v5096
      %v5201 = vadd.f32 %v4742, %v5101
      %v5202 = vadd.f32 %v4743, %v5104
      %v5203 = vadd.f32 %v4744, %v5109
      %v5204 = vadd.f32 %v4745, %v5112
      %v5205 = vadd.f32 %v4746, %v5117
      %v5206 = vadd.f32 %v4747, %v5120
      %v5207 = vadd.f32 %v4748, %v5125
      %v5208 = vadd.f32 %v4749, %v5128
      %v5209 = vadd.f32 %v4750, %v5133
      %v5210 = vadd.f32 %v4751, %v5136
      %v5211 = vadd.f32 %v4752, %v5141
      %v5212 = vadd.f32 %v4753, %v5144
      %v5213 = vadd.f32 %v4754, %v5149
      %v5214 = vadd.f32 %v4755, %v5152
      %v5215 = vadd.f32 %v4756, %v5157
      %v5216 = vadd.f32 %v4757, %v5160
      %v5217 = vadd.f32 %v4758, %v5165
      %v5218 = vadd.f32 %v4759, %v5168
      %v5219 = vadd.f32 %v4760, %v5173
      %v5220 = vadd.f32 %v4761, %v5176
      %v5221 = vadd.f32 %v4762, %v5181
      %v5222 = vadd.f32 %v4763, %v5184
      %v5223 = vld [vmem:[#allocation3 + $0x98] sm:$0x3]
      %s5224 = scalar_lea.vmem %s3, 8
      %v5225 = vld [vmem:[%s5224] sm:$0x3]
      %v5227 = vunpack.c.l.b16 %v5223
      %v5228 = vpack.c.b16 %v5227, %v5227
      %v5230 = vshrl.u32 %v4438, 16
      %v5232 = vrot.slane %v5230, 1
      %v5233 = vshll.u32 %v4438, 16
      %v5235 = vrot.slane %v5233, 2
      %v5236 = vor.u32 %v5232, %v5235
      %v5238 = vshrl.u32 %v4439, 16
      %v5240 = vrot.slane %v5238, 1
      %v5241 = vshll.u32 %v4439, 16
      %v5243 = vrot.slane %v5241, 2
      %v5244 = vor.u32 %v5240, %v5243
      %v5245 = vsel %vm4773, %v5236, %v5244
      %v5247 = vshrl.u32 %v4440, 16
      %v5249 = vrot.slane %v5247, 1
      %v5250 = vshll.u32 %v4440, 16
      %v5252 = vrot.slane %v5250, 2
      %v5253 = vor.u32 %v5249, %v5252
      %v5254 = vsel %vm4773, %v5244, %v5253
      %v5256 = vshrl.u32 %v4441, 16
      %v5258 = vrot.slane %v5256, 1
      %v5259 = vshll.u32 %v4441, 16
      %v5261 = vrot.slane %v5259, 2
      %v5262 = vor.u32 %v5258, %v5261
      %v5263 = vsel %vm4773, %v5253, %v5262
      %v5265 = vshrl.u32 %v4442, 16
      %v5267 = vrot.slane %v5265, 1
      %v5268 = vshll.u32 %v4442, 16
      %v5270 = vrot.slane %v5268, 2
      %v5271 = vor.u32 %v5267, %v5270
      %v5272 = vsel %vm4773, %v5262, %v5271
      %v5274 = vshrl.u32 %v4443, 16
      %v5276 = vrot.slane %v5274, 1
      %v5277 = vshll.u32 %v4443, 16
      %v5279 = vrot.slane %v5277, 2
      %v5280 = vor.u32 %v5276, %v5279
      %v5281 = vsel %vm4773, %v5271, %v5280
      %v5283 = vshrl.u32 %v4444, 16
      %v5285 = vrot.slane %v5283, 1
      %v5286 = vshll.u32 %v4444, 16
      %v5288 = vrot.slane %v5286, 2
      %v5289 = vor.u32 %v5285, %v5288
      %v5290 = vsel %vm4773, %v5280, %v5289
      %v5292 = vshrl.u32 %v4445, 16
      %v5294 = vrot.slane %v5292, 1
      %v5295 = vshll.u32 %v4445, 16
      %v5297 = vrot.slane %v5295, 2
      %v5298 = vor.u32 %v5294, %v5297
      %v5299 = vsel %vm4773, %v5289, %v5298
      %v5301 = vshrl.u32 %v4446, 16
      %v5303 = vrot.slane %v5301, 1
      %v5304 = vshll.u32 %v4446, 16
      %v5306 = vrot.slane %v5304, 2
      %v5307 = vor.u32 %v5303, %v5306
      %v5308 = vsel %vm4773, %v5298, %v5307
      %v5310 = vshrl.u32 %v4447, 16
      %v5312 = vrot.slane %v5310, 1
      %v5313 = vshll.u32 %v4447, 16
      %v5315 = vrot.slane %v5313, 2
      %v5316 = vor.u32 %v5312, %v5315
      %v5317 = vsel %vm4773, %v5307, %v5316
      %v5319 = vshrl.u32 %v4448, 16
      %v5321 = vrot.slane %v5319, 1
      %v5322 = vshll.u32 %v4448, 16
      %v5324 = vrot.slane %v5322, 2
      %v5325 = vor.u32 %v5321, %v5324
      %v5326 = vsel %vm4773, %v5316, %v5325
      %v5328 = vshrl.u32 %v4449, 16
      %v5330 = vrot.slane %v5328, 1
      %v5331 = vshll.u32 %v4449, 16
      %v5333 = vrot.slane %v5331, 2
      %v5334 = vor.u32 %v5330, %v5333
      %v5335 = vsel %vm4773, %v5325, %v5334
      %v5337 = vshrl.u32 %v4450, 16
      %v5339 = vrot.slane %v5337, 1
      %v5340 = vshll.u32 %v4450, 16
      %v5342 = vrot.slane %v5340, 2
      %v5343 = vor.u32 %v5339, %v5342
      %v5344 = vsel %vm4773, %v5334, %v5343
      %v5346 = vshrl.u32 %v4451, 16
      %v5348 = vrot.slane %v5346, 1
      %v5349 = vshll.u32 %v4451, 16
      %v5351 = vrot.slane %v5349, 2
      %v5352 = vor.u32 %v5348, %v5351
      %v5353 = vsel %vm4773, %v5343, %v5352
      %v5355 = vshrl.u32 %v4452, 16
      %v5357 = vrot.slane %v5355, 1
      %v5358 = vshll.u32 %v4452, 16
      %v5360 = vrot.slane %v5358, 2
      %v5361 = vor.u32 %v5357, %v5360
      %v5362 = vsel %vm4773, %v5352, %v5361
      %v5364 = vshrl.u32 %v4453, 16
      %v5366 = vrot.slane %v5364, 1
      %v5367 = vshll.u32 %v4453, 16
      %v5369 = vrot.slane %v5367, 2
      %v5370 = vor.u32 %v5366, %v5369
      %v5371 = vsel %vm4773, %v5361, %v5370
      %v5373 = vshrl.u32 %v4454, 16
      %v5375 = vrot.slane %v5373, 1
      %v5376 = vshll.u32 %v4454, 16
      %v5378 = vrot.slane %v5376, 2
      %v5379 = vor.u32 %v5375, %v5378
      %v5380 = vsel %vm4773, %v5370, %v5379
      %v5382 = vshrl.u32 %v4455, 16
      %v5384 = vrot.slane %v5382, 1
      %v5385 = vshll.u32 %v4455, 16
      %v5387 = vrot.slane %v5385, 2
      %v5388 = vor.u32 %v5384, %v5387
      %v5389 = vsel %vm4773, %v5379, %v5388
      %v5391 = vshrl.u32 %v5228, 16
      %v5393 = vrot.slane %v5391, 1
      %v5394 = vshll.u32 %v5228, 16
      %v5396 = vrot.slane %v5394, 2
      %v5397 = vor.u32 %v5393, %v5396
      %v5398 = vsel %vm4773, %v5388, %v5397
      %v5400 = vsel %vm1552, %v5245, 0
      %v5403 = vsel %vm1552, %v5254, 0
      %v5406 = vsel %vm1552, %v5263, 0
      %v5409 = vsel %vm1552, %v5272, 0
      %v5412 = vsel %vm1552, %v5281, 0
      %v5415 = vsel %vm1552, %v5290, 0
      %v5418 = vsel %vm1552, %v5299, 0
      %v5421 = vsel %vm1552, %v5308, 0
      %v5424 = vsel %vm1552, %v5317, 0
      %v5427 = vsel %vm1552, %v5326, 0
      %v5430 = vsel %vm1552, %v5335, 0
      %v5433 = vsel %vm1552, %v5344, 0
      %v5436 = vsel %vm1552, %v5353, 0
      %v5439 = vsel %vm1552, %v5362, 0
      %v5442 = vsel %vm1552, %v5371, 0
      %v5445 = vsel %vm1552, %v5380, 0
      %v5448 = vsel %vm1552, %v5389, 0
      %v5451 = vsel %vm1552, %v5398, 0
      %v5454 = vsel %vm1607, %v5225, 0
      %5456 = vmatprep.subr.bf16.mxu0 0
      %5457 = vmatpush1.bf16.msra.mxu0 %v5454
      %5458 = vmatprep.subr.bf16.mxu0 0
      %5459 = vmatpush1.bf16.msra.mxu0 0
      %5460 = vmatprep.subr.bf16.mxu0 0
      %5461 = vmatpush1.bf16.msra.mxu0 0
      %5462 = vmatprep.subr.bf16.mxu0 0
      %5463 = vmatpush1.bf16.msra.mxu0 0
      %5464 = vmatprep.subr.bf16.mxu0 0
      %5465 = vmatpush1.bf16.msra.mxu0 0
      %5466 = vmatprep.subr.bf16.mxu0 0
      %5467 = vmatpush1.bf16.msra.mxu0 0
      %5468 = vmatprep.subr.bf16.mxu0 0
      %5469 = vmatpush1.bf16.msra.mxu0 0
      %5470 = vmatprep.subr.bf16.mxu0 0
      %5471 = vmatpush1.bf16.msra.mxu0 0
      %5472 = vmatprep.subr.bf16.mxu0 0
      %5473 = vmatpush1.bf16.msra.mxu0 0
      %5474 = vmatprep.subr.bf16.mxu0 0
      %5475 = vmatpush1.bf16.msra.mxu0 0
      %5476 = vmatprep.subr.bf16.mxu0 0
      %5477 = vmatpush1.bf16.msra.mxu0 0
      %5478 = vmatprep.subr.bf16.mxu0 0
      %5479 = vmatpush1.bf16.msra.mxu0 0
      %5480 = vmatprep.subr.bf16.mxu0 0
      %5481 = vmatpush1.bf16.msra.mxu0 0
      %5482 = vmatprep.subr.bf16.mxu0 0
      %5483 = vmatpush1.bf16.msra.mxu0 0
      %5484 = vmatprep.subr.bf16.mxu0 0
      %5485 = vmatpush1.bf16.msra.mxu0 0
      %5486 = vmatprep.subr.bf16.mxu0 0
      %5487 = vmatpush1.bf16.msra.mxu0 0
      %5488 = vmatprep.mubr.bf16.mxu0 0
      %5489 = vmatmul.mubr.bf16.gmra.mrb[0].mxu0 %v5400
      %v5490 = vpop.f32.mrb[0].mxu0
      %v5491 = vadd.f32 0.0, %v5490
      %v5492 = vpop.f32.mrb[0].mxu0
      %v5493 = vpop.f32.mrb[0].mxu0
      %v5494 = vadd.f32 0.0, %v5493
      %v5495 = vpop.f32.mrb[0].mxu0
      %5496 = vmatprep.mubr.bf16.mxu0 0
      %5497 = vmatmul.mubr.bf16.gmra.mrb[0].mxu0 %v5403
      %v5498 = vpop.f32.mrb[0].mxu0
      %v5499 = vadd.f32 0.0, %v5498
      %v5500 = vpop.f32.mrb[0].mxu0
      %v5501 = vpop.f32.mrb[0].mxu0
      %v5502 = vadd.f32 0.0, %v5501
      %v5503 = vpop.f32.mrb[0].mxu0
      %5504 = vmatprep.mubr.bf16.mxu0 0
      %5505 = vmatmul.mubr.bf16.gmra.mrb[0].mxu0 %v5406
      %v5506 = vpop.f32.mrb[0].mxu0
      %v5507 = vadd.f32 0.0, %v5506
      %v5508 = vpop.f32.mrb[0].mxu0
      %v5509 = vpop.f32.mrb[0].mxu0
      %v5510 = vadd.f32 0.0, %v5509
      %v5511 = vpop.f32.mrb[0].mxu0
      %5512 = vmatprep.mubr.bf16.mxu0 0
      %5513 = vmatmul.mubr.bf16.gmra.mrb[0].mxu0 %v5409
      %v5514 = vpop.f32.mrb[0].mxu0
      %v5515 = vadd.f32 0.0, %v5514
      %v5516 = vpop.f32.mrb[0].mxu0
      %v5517 = vpop.f32.mrb[0].mxu0
      %v5518 = vadd.f32 0.0, %v5517
      %v5519 = vpop.f32.mrb[0].mxu0
      %5520 = vmatprep.mubr.bf16.mxu0 0
      %5521 = vmatmul.mubr.bf16.gmra.mrb[0].mxu0 %v5412
      %v5522 = vpop.f32.mrb[0].mxu0
      %v5523 = vadd.f32 0.0, %v5522
      %v5524 = vpop.f32.mrb[0].mxu0
      %v5525 = vpop.f32.mrb[0].mxu0
      %v5526 = vadd.f32 0.0, %v5525
      %v5527 = vpop.f32.mrb[0].mxu0
      %5528 = vmatprep.mubr.bf16.mxu0 0
      %5529 = vmatmul.mubr.bf16.gmra.mrb[0].mxu0 %v5415
      %v5530 = vpop.f32.mrb[0].mxu0
      %v5531 = vadd.f32 0.0, %v5530
      %v5532 = vpop.f32.mrb[0].mxu0
      %v5533 = vpop.f32.mrb[0].mxu0
      %v5534 = vadd.f32 0.0, %v5533
      %v5535 = vpop.f32.mrb[0].mxu0
      %5536 = vmatprep.mubr.bf16.mxu0 0
      %5537 = vmatmul.mubr.bf16.gmra.mrb[0].mxu0 %v5418
      %v5538 = vpop.f32.mrb[0].mxu0
      %v5539 = vadd.f32 0.0, %v5538
      %v5540 = vpop.f32.mrb[0].mxu0
      %v5541 = vpop.f32.mrb[0].mxu0
      %v5542 = vadd.f32 0.0, %v5541
      %v5543 = vpop.f32.mrb[0].mxu0
      %5544 = vmatprep.mubr.bf16.mxu0 0
      %5545 = vmatmul.mubr.bf16.gmra.mrb[0].mxu0 %v5421
      %v5546 = vpop.f32.mrb[0].mxu0
      %v5547 = vadd.f32 0.0, %v5546
      %v5548 = vpop.f32.mrb[0].mxu0
      %v5549 = vpop.f32.mrb[0].mxu0
      %v5550 = vadd.f32 0.0, %v5549
      %v5551 = vpop.f32.mrb[0].mxu0
      %5552 = vmatprep.mubr.bf16.mxu0 0
      %5553 = vmatmul.mubr.bf16.gmra.mrb[0].mxu0 %v5424
      %v5554 = vpop.f32.mrb[0].mxu0
      %v5555 = vadd.f32 0.0, %v5554
      %v5556 = vpop.f32.mrb[0].mxu0
      %v5557 = vpop.f32.mrb[0].mxu0
      %v5558 = vadd.f32 0.0, %v5557
      %v5559 = vpop.f32.mrb[0].mxu0
      %5560 = vmatprep.mubr.bf16.mxu0 0
      %5561 = vmatmul.mubr.bf16.gmra.mrb[0].mxu0 %v5427
      %v5562 = vpop.f32.mrb[0].mxu0
      %v5563 = vadd.f32 0.0, %v5562
      %v5564 = vpop.f32.mrb[0].mxu0
      %v5565 = vpop.f32.mrb[0].mxu0
      %v5566 = vadd.f32 0.0, %v5565
      %v5567 = vpop.f32.mrb[0].mxu0
      %5568 = vmatprep.mubr.bf16.mxu0 0
      %5569 = vmatmul.mubr.bf16.gmra.mrb[0].mxu0 %v5430
      %v5570 = vpop.f32.mrb[0].mxu0
      %v5571 = vadd.f32 0.0, %v5570
      %v5572 = vpop.f32.mrb[0].mxu0
      %v5573 = vpop.f32.mrb[0].mxu0
      %v5574 = vadd.f32 0.0, %v5573
      %v5575 = vpop.f32.mrb[0].mxu0
      %5576 = vmatprep.mubr.bf16.mxu0 0
      %5577 = vmatmul.mubr.bf16.gmra.mrb[0].mxu0 %v5433
      %v5578 = vpop.f32.mrb[0].mxu0
      %v5579 = vadd.f32 0.0, %v5578
      %v5580 = vpop.f32.mrb[0].mxu0
      %v5581 = vpop.f32.mrb[0].mxu0
      %v5582 = vadd.f32 0.0, %v5581
      %v5583 = vpop.f32.mrb[0].mxu0
      %5584 = vmatprep.mubr.bf16.mxu0 0
      %5585 = vmatmul.mubr.bf16.gmra.mrb[0].mxu0 %v5436
      %v5586 = vpop.f32.mrb[0].mxu0
      %v5587 = vadd.f32 0.0, %v5586
      %v5588 = vpop.f32.mrb[0].mxu0
      %v5589 = vpop.f32.mrb[0].mxu0
      %v5590 = vadd.f32 0.0, %v5589
      %v5591 = vpop.f32.mrb[0].mxu0
      %5592 = vmatprep.mubr.bf16.mxu0 0
      %5593 = vmatmul.mubr.bf16.gmra.mrb[0].mxu0 %v5439
      %v5594 = vpop.f32.mrb[0].mxu0
      %v5595 = vadd.f32 0.0, %v5594
      %v5596 = vpop.f32.mrb[0].mxu0
      %v5597 = vpop.f32.mrb[0].mxu0
      %v5598 = vadd.f32 0.0, %v5597
      %v5599 = vpop.f32.mrb[0].mxu0
      %5600 = vmatprep.mubr.bf16.mxu0 0
      %5601 = vmatmul.mubr.bf16.gmra.mrb[0].mxu0 %v5442
      %v5602 = vpop.f32.mrb[0].mxu0
      %v5603 = vadd.f32 0.0, %v5602
      %v5604 = vpop.f32.mrb[0].mxu0
      %v5605 = vpop.f32.mrb[0].mxu0
      %v5606 = vadd.f32 0.0, %v5605
      %v5607 = vpop.f32.mrb[0].mxu0
      %5608 = vmatprep.mubr.bf16.mxu0 0
      %5609 = vmatmul.mubr.bf16.gmra.mrb[0].mxu0 %v5445
      %v5610 = vpop.f32.mrb[0].mxu0
      %v5611 = vadd.f32 0.0, %v5610
      %v5612 = vpop.f32.mrb[0].mxu0
      %v5613 = vpop.f32.mrb[0].mxu0
      %v5614 = vadd.f32 0.0, %v5613
      %v5615 = vpop.f32.mrb[0].mxu0
      %5616 = vmatprep.mubr.bf16.mxu0 0
      %5617 = vmatmul.mubr.bf16.gmra.mrb[0].mxu0 %v5448
      %v5618 = vpop.f32.mrb[0].mxu0
      %v5619 = vadd.f32 0.0, %v5618
      %v5620 = vpop.f32.mrb[0].mxu0
      %v5621 = vpop.f32.mrb[0].mxu0
      %v5622 = vadd.f32 0.0, %v5621
      %v5623 = vpop.f32.mrb[0].mxu0
      %5624 = vmatprep.mubr.bf16.mxu0 0
      %5625 = vmatmul.mubr.bf16.gmra.mrb[0].mxu0 %v5451
      %v5626 = vpop.f32.mrb[0].mxu0
      %v5627 = vadd.f32 0.0, %v5626
      %v5628 = vpop.f32.mrb[0].mxu0
      %v5629 = vpop.f32.mrb[0].mxu0
      %v5630 = vadd.f32 0.0, %v5629
      %v5631 = vpop.f32.mrb[0].mxu0
      %5632 = vdwg.mxu0
      %v5633 = vadd.f32 %v5187, %v5491
      %v5634 = vadd.f32 %v5188, %v5494
      %v5635 = vadd.f32 %v5189, %v5499
      %v5636 = vadd.f32 %v5190, %v5502
      %v5637 = vadd.f32 %v5191, %v5507
      %v5638 = vadd.f32 %v5192, %v5510
      %v5639 = vadd.f32 %v5193, %v5515
      %v5640 = vadd.f32 %v5194, %v5518
      %v5641 = vadd.f32 %v5195, %v5523
      %v5642 = vadd.f32 %v5196, %v5526
      %v5643 = vadd.f32 %v5197, %v5531
      %v5644 = vadd.f32 %v5198, %v5534
      %v5645 = vadd.f32 %v5199, %v5539
      %v5646 = vadd.f32 %v5200, %v5542
      %v5647 = vadd.f32 %v5201, %v5547
      %v5648 = vadd.f32 %v5202, %v5550
      %v5649 = vadd.f32 %v5203, %v5555
      %v5650 = vadd.f32 %v5204, %v5558
      %v5651 = vadd.f32 %v5205, %v5563
      %v5652 = vadd.f32 %v5206, %v5566
      %v5653 = vadd.f32 %v5207, %v5571
      %v5654 = vadd.f32 %v5208, %v5574
      %v5655 = vadd.f32 %v5209, %v5579
      %v5656 = vadd.f32 %v5210, %v5582
      %v5657 = vadd.f32 %v5211, %v5587
      %v5658 = vadd.f32 %v5212, %v5590
      %v5659 = vadd.f32 %v5213, %v5595
      %v5660 = vadd.f32 %v5214, %v5598
      %v5661 = vadd.f32 %v5215, %v5603
      %v5662 = vadd.f32 %v5216, %v5606
      %v5663 = vadd.f32 %v5217, %v5611
      %v5664 = vadd.f32 %v5218, %v5614
      %v5665 = vadd.f32 %v5219, %v5619
      %v5666 = vadd.f32 %v5220, %v5622
      %v5667 = vadd.f32 %v5221, %v5627
      %v5668 = vadd.f32 %v5222, %v5630
      %v5669 = vld [vmem:[#allocation2 + $0x8] sm:$0xc]
      %s5670 = scalar_lea.vmem %s2, 80
      %v5671 = vld [vmem:[%s5670] sm:$0xf]
      %v5672 = vld [vmem:[%s5670 + $0x4] sm:$0xf]
      %v5673 = vld [vmem:[%s5670 + $0x8] sm:$0xf]
      %v5674 = vld [vmem:[%s5670 + $0xc] sm:$0xf]
      %v5676 = vunpack.c.l.b16 %v5669
      %v5677 = vpack.c.b16 %v3954, %v5676
      %vm5678 = vcmask 1045504
      %v5679 = vrot.slane %v5677, 2
      %v5680 = vrot.slane %v3991, 2
      %v5681 = vsel %vm5678, %v5679, %v5680
      %v5682 = vrot.slane %v3992, 2
      %v5683 = vsel %vm5678, %v5680, %v5682
      %v5684 = vrot.slane %v3993, 2
      %v5685 = vsel %vm5678, %v5682, %v5684
      %v5686 = vrot.slane %v3994, 2
      %v5687 = vsel %vm5678, %v5684, %v5686
      %v5688 = vrot.slane %v3995, 2
      %v5689 = vsel %vm5678, %v5686, %v5688
      %v5690 = vrot.slane %v3996, 2
      %v5691 = vsel %vm5678, %v5688, %v5690
      %v5692 = vrot.slane %v3997, 2
      %v5693 = vsel %vm5678, %v5690, %v5692
      %v5694 = vrot.slane %v3998, 2
      %v5695 = vsel %vm5678, %v5692, %v5694
      %v5696 = vrot.slane %v3999, 2
      %v5697 = vsel %vm5678, %v5694, %v5696
      %v5698 = vrot.slane %v4000, 2
      %v5699 = vsel %vm5678, %v5696, %v5698
      %v5700 = vrot.slane %v4001, 2
      %v5701 = vsel %vm5678, %v5698, %v5700
      %v5702 = vrot.slane %v4002, 2
      %v5703 = vsel %vm5678, %v5700, %v5702
      %v5704 = vrot.slane %v4003, 2
      %v5705 = vsel %vm5678, %v5702, %v5704
      %v5706 = vrot.slane %v4004, 2
      %v5707 = vsel %vm5678, %v5704, %v5706
      %v5708 = vrot.slane %v4005, 2
      %v5709 = vsel %vm5678, %v5706, %v5708
      %v5710 = vrot.slane %v4006, 2
      %v5711 = vsel %vm5678, %v5708, %v5710
      %v5712 = vrot.slane %v4007, 2
      %v5713 = vsel %vm5678, %v5710, %v5712
      %v5714 = vrot.slane %v4772, 2
      %v5715 = vsel %vm5678, %v5712, %v5714
      %v5720 = vunpack.c.l.b16 %v5671
      %v5721 = vunpack.c.l.b16 %v5672
      %v5722 = vunpack.c.l.b16 %v5673
      %v5723 = vunpack.c.l.b16 %v5674
      %v5724 = vpack.c.b16 %v5721, %v5720
      %v5725 = vpack.c.b16 %v5723, %v5722
      %v5729 = vsel %vm1890, %v5681, 0
      %v5732 = vsel %vm1890, %v5683, 0
      %v5735 = vsel %vm1890, %v5685, 0
      %v5738 = vsel %vm1890, %v5687, 0
      %v5741 = vsel %vm1890, %v5689, 0
      %v5744 = vsel %vm1890, %v5691, 0
      %v5747 = vsel %vm1890, %v5693, 0
      %v5750 = vsel %vm1890, %v5695, 0
      %v5753 = vsel %vm1890, %v5697, 0
      %v5756 = vsel %vm1890, %v5699, 0
      %v5759 = vsel %vm1890, %v5701, 0
      %v5762 = vsel %vm1890, %v5703, 0
      %v5765 = vsel %vm1890, %v5705, 0
      %v5768 = vsel %vm1890, %v5707, 0
      %v5771 = vsel %vm1890, %v5709, 0
      %v5774 = vsel %vm1890, %v5711, 0
      %v5777 = vsel %vm1890, %v5713, 0
      %v5780 = vsel %vm1890, %v5715, 0
      %5782 = vmatprep.subr.bf16.mxu0 0
      %5783 = vmatpush1.bf16.msra.mxu0 %v5724
      %5784 = vmatprep.subr.bf16.mxu0 0
      %5785 = vmatpush1.bf16.msra.mxu0 %v5725
      %5786 = vmatprep.subr.bf16.mxu0 0
      %5787 = vmatpush1.bf16.msra.mxu0 0
      %5788 = vmatprep.subr.bf16.mxu0 0
      %5789 = vmatpush1.bf16.msra.mxu0 0
      %5790 = vmatprep.subr.bf16.mxu0 0
      %5791 = vmatpush1.bf16.msra.mxu0 0
      %5792 = vmatprep.subr.bf16.mxu0 0
      %5793 = vmatpush1.bf16.msra.mxu0 0
      %5794 = vmatprep.subr.bf16.mxu0 0
      %5795 = vmatpush1.bf16.msra.mxu0 0
      %5796 = vmatprep.subr.bf16.mxu0 0
      %5797 = vmatpush1.bf16.msra.mxu0 0
      %5798 = vmatprep.subr.bf16.mxu0 0
      %5799 = vmatpush1.bf16.msra.mxu0 0
      %5800 = vmatprep.subr.bf16.mxu0 0
      %5801 = vmatpush1.bf16.msra.mxu0 0
      %5802 = vmatprep.subr.bf16.mxu0 0
      %5803 = vmatpush1.bf16.msra.mxu0 0
      %5804 = vmatprep.subr.bf16.mxu0 0
      %5805 = vmatpush1.bf16.msra.mxu0 0
      %5806 = vmatprep.subr.bf16.mxu0 0
      %5807 = vmatpush1.bf16.msra.mxu0 0
      %5808 = vmatprep.subr.bf16.mxu0 0
      %5809 = vmatpush1.bf16.msra.mxu0 0
      %5810 = vmatprep.subr.bf16.mxu0 0
      %5811 = vmatpush1.bf16.msra.mxu0 0
      %5812 = vmatprep.subr.bf16.mxu0 0
      %5813 = vmatpush1.bf16.msra.mxu0 0
      %5814 = vmatprep.mubr.bf16.mxu0 0
      %5815 = vmatmul.mubr.bf16.gmra.mrb[0].mxu0 %v5729
      %v5816 = vpop.f32.mrb[0].mxu0
      %v5817 = vadd.f32 0.0, %v5816
      %v5818 = vpop.f32.mrb[0].mxu0
      %v5819 = vpop.f32.mrb[0].mxu0
      %v5820 = vadd.f32 0.0, %v5819
      %v5821 = vpop.f32.mrb[0].mxu0
      %5822 = vmatprep.mubr.bf16.mxu0 0
      %5823 = vmatmul.mubr.bf16.gmra.mrb[0].mxu0 %v5732
      %v5824 = vpop.f32.mrb[0].mxu0
      %v5825 = vadd.f32 0.0, %v5824
      %v5826 = vpop.f32.mrb[0].mxu0
      %v5827 = vpop.f32.mrb[0].mxu0
      %v5828 = vadd.f32 0.0, %v5827
      %v5829 = vpop.f32.mrb[0].mxu0
      %5830 = vmatprep.mubr.bf16.mxu0 0
      %5831 = vmatmul.mubr.bf16.gmra.mrb[0].mxu0 %v5735
      %v5832 = vpop.f32.mrb[0].mxu0
      %v5833 = vadd.f32 0.0, %v5832
      %v5834 = vpop.f32.mrb[0].mxu0
      %v5835 = vpop.f32.mrb[0].mxu0
      %v5836 = vadd.f32 0.0, %v5835
      %v5837 = vpop.f32.mrb[0].mxu0
      %5838 = vmatprep.mubr.bf16.mxu0 0
      %5839 = vmatmul.mubr.bf16.gmra.mrb[0].mxu0 %v5738
      %v5840 = vpop.f32.mrb[0].mxu0
      %v5841 = vadd.f32 0.0, %v5840
      %v5842 = vpop.f32.mrb[0].mxu0
      %v5843 = vpop.f32.mrb[0].mxu0
      %v5844 = vadd.f32 0.0, %v5843
      %v5845 = vpop.f32.mrb[0].mxu0
      %5846 = vmatprep.mubr.bf16.mxu0 0
      %5847 = vmatmul.mubr.bf16.gmra.mrb[0].mxu0 %v5741
      %v5848 = vpop.f32.mrb[0].mxu0
      %v5849 = vadd.f32 0.0, %v5848
      %v5850 = vpop.f32.mrb[0].mxu0
      %v5851 = vpop.f32.mrb[0].mxu0
      %v5852 = vadd.f32 0.0, %v5851
      %v5853 = vpop.f32.mrb[0].mxu0
      %5854 = vmatprep.mubr.bf16.mxu0 0
      %5855 = vmatmul.mubr.bf16.gmra.mrb[0].mxu0 %v5744
      %v5856 = vpop.f32.mrb[0].mxu0
      %v5857 = vadd.f32 0.0, %v5856
      %v5858 = vpop.f32.mrb[0].mxu0
      %v5859 = vpop.f32.mrb[0].mxu0
      %v5860 = vadd.f32 0.0, %v5859
      %v5861 = vpop.f32.mrb[0].mxu0
      %5862 = vmatprep.mubr.bf16.mxu0 0
      %5863 = vmatmul.mubr.bf16.gmra.mrb[0].mxu0 %v5747
      %v5864 = vpop.f32.mrb[0].mxu0
      %v5865 = vadd.f32 0.0, %v5864
      %v5866 = vpop.f32.mrb[0].mxu0
      %v5867 = vpop.f32.mrb[0].mxu0
      %v5868 = vadd.f32 0.0, %v5867
      %v5869 = vpop.f32.mrb[0].mxu0
      %5870 = vmatprep.mubr.bf16.mxu0 0
      %5871 = vmatmul.mubr.bf16.gmra.mrb[0].mxu0 %v5750
      %v5872 = vpop.f32.mrb[0].mxu0
      %v5873 = vadd.f32 0.0, %v5872
      %v5874 = vpop.f32.mrb[0].mxu0
      %v5875 = vpop.f32.mrb[0].mxu0
      %v5876 = vadd.f32 0.0, %v5875
      %v5877 = vpop.f32.mrb[0].mxu0
      %5878 = vmatprep.mubr.bf16.mxu0 0
      %5879 = vmatmul.mubr.bf16.gmra.mrb[0].mxu0 %v5753
      %v5880 = vpop.f32.mrb[0].mxu0
      %v5881 = vadd.f32 0.0, %v5880
      %v5882 = vpop.f32.mrb[0].mxu0
      %v5883 = vpop.f32.mrb[0].mxu0
      %v5884 = vadd.f32 0.0, %v5883
      %v5885 = vpop.f32.mrb[0].mxu0
      %5886 = vmatprep.mubr.bf16.mxu0 0
      %5887 = vmatmul.mubr.bf16.gmra.mrb[0].mxu0 %v5756
      %v5888 = vpop.f32.mrb[0].mxu0
      %v5889 = vadd.f32 0.0, %v5888
      %v5890 = vpop.f32.mrb[0].mxu0
      %v5891 = vpop.f32.mrb[0].mxu0
      %v5892 = vadd.f32 0.0, %v5891
      %v5893 = vpop.f32.mrb[0].mxu0
      %5894 = vmatprep.mubr.bf16.mxu0 0
      %5895 = vmatmul.mubr.bf16.gmra.mrb[0].mxu0 %v5759
      %v5896 = vpop.f32.mrb[0].mxu0
      %v5897 = vadd.f32 0.0, %v5896
      %v5898 = vpop.f32.mrb[0].mxu0
      %v5899 = vpop.f32.mrb[0].mxu0
      %v5900 = vadd.f32 0.0, %v5899
      %v5901 = vpop.f32.mrb[0].mxu0
      %5902 = vmatprep.mubr.bf16.mxu0 0
      %5903 = vmatmul.mubr.bf16.gmra.mrb[0].mxu0 %v5762
      %v5904 = vpop.f32.mrb[0].mxu0
      %v5905 = vadd.f32 0.0, %v5904
      %v5906 = vpop.f32.mrb[0].mxu0
      %v5907 = vpop.f32.mrb[0].mxu0
      %v5908 = vadd.f32 0.0, %v5907
      %v5909 = vpop.f32.mrb[0].mxu0
      %5910 = vmatprep.mubr.bf16.mxu0 0
      %5911 = vmatmul.mubr.bf16.gmra.mrb[0].mxu0 %v5765
      %v5912 = vpop.f32.mrb[0].mxu0
      %v5913 = vadd.f32 0.0, %v5912
      %v5914 = vpop.f32.mrb[0].mxu0
      %v5915 = vpop.f32.mrb[0].mxu0
      %v5916 = vadd.f32 0.0, %v5915
      %v5917 = vpop.f32.mrb[0].mxu0
      %5918 = vmatprep.mubr.bf16.mxu0 0
      %5919 = vmatmul.mubr.bf16.gmra.mrb[0].mxu0 %v5768
      %v5920 = vpop.f32.mrb[0].mxu0
      %v5921 = vadd.f32 0.0, %v5920
      %v5922 = vpop.f32.mrb[0].mxu0
      %v5923 = vpop.f32.mrb[0].mxu0
      %v5924 = vadd.f32 0.0, %v5923
      %v5925 = vpop.f32.mrb[0].mxu0
      %5926 = vmatprep.mubr.bf16.mxu0 0
      %5927 = vmatmul.mubr.bf16.gmra.mrb[0].mxu0 %v5771
      %v5928 = vpop.f32.mrb[0].mxu0
      %v5929 = vadd.f32 0.0, %v5928
      %v5930 = vpop.f32.mrb[0].mxu0
      %v5931 = vpop.f32.mrb[0].mxu0
      %v5932 = vadd.f32 0.0, %v5931
      %v5933 = vpop.f32.mrb[0].mxu0
      %5934 = vmatprep.mubr.bf16.mxu0 0
      %5935 = vmatmul.mubr.bf16.gmra.mrb[0].mxu0 %v5774
      %v5936 = vpop.f32.mrb[0].mxu0
      %v5937 = vadd.f32 0.0, %v5936
      %v5938 = vpop.f32.mrb[0].mxu0
      %v5939 = vpop.f32.mrb[0].mxu0
      %v5940 = vadd.f32 0.0, %v5939
      %v5941 = vpop.f32.mrb[0].mxu0
      %5942 = vmatprep.mubr.bf16.mxu0 0
      %5943 = vmatmul.mubr.bf16.gmra.mrb[0].mxu0 %v5777
      %v5944 = vpop.f32.mrb[0].mxu0
      %v5945 = vadd.f32 0.0, %v5944
      %v5946 = vpop.f32.mrb[0].mxu0
      %v5947 = vpop.f32.mrb[0].mxu0
      %v5948 = vadd.f32 0.0, %v5947
      %v5949 = vpop.f32.mrb[0].mxu0
      %5950 = vmatprep.mubr.bf16.mxu0 0
      %5951 = vmatmul.mubr.bf16.gmra.mrb[0].mxu0 %v5780
      %v5952 = vpop.f32.mrb[0].mxu0
      %v5953 = vadd.f32 0.0, %v5952
      %v5954 = vpop.f32.mrb[0].mxu0
      %v5955 = vpop.f32.mrb[0].mxu0
      %v5956 = vadd.f32 0.0, %v5955
      %v5957 = vpop.f32.mrb[0].mxu0
      %5958 = vdwg.mxu0
      %v5959 = vadd.f32 %v5633, %v5817
      %v5960 = vadd.f32 %v5634, %v5820
      %v5961 = vadd.f32 %v5635, %v5825
      %v5962 = vadd.f32 %v5636, %v5828
      %v5963 = vadd.f32 %v5637, %v5833
      %v5964 = vadd.f32 %v5638, %v5836
      %v5965 = vadd.f32 %v5639, %v5841
      %v5966 = vadd.f32 %v5640, %v5844
      %v5967 = vadd.f32 %v5641, %v5849
      %v5968 = vadd.f32 %v5642, %v5852
      %v5969 = vadd.f32 %v5643, %v5857
      %v5970 = vadd.f32 %v5644, %v5860
      %v5971 = vadd.f32 %v5645, %v5865
      %v5972 = vadd.f32 %v5646, %v5868
      %v5973 = vadd.f32 %v5647, %v5873
      %v5974 = vadd.f32 %v5648, %v5876
      %v5975 = vadd.f32 %v5649, %v5881
      %v5976 = vadd.f32 %v5650, %v5884
      %v5977 = vadd.f32 %v5651, %v5889
      %v5978 = vadd.f32 %v5652, %v5892
      %v5979 = vadd.f32 %v5653, %v5897
      %v5980 = vadd.f32 %v5654, %v5900
      %v5981 = vadd.f32 %v5655, %v5905
      %v5982 = vadd.f32 %v5656, %v5908
      %v5983 = vadd.f32 %v5657, %v5913
      %v5984 = vadd.f32 %v5658, %v5916
      %v5985 = vadd.f32 %v5659, %v5921
      %v5986 = vadd.f32 %v5660, %v5924
      %v5987 = vadd.f32 %v5661, %v5929
      %v5988 = vadd.f32 %v5662, %v5932
      %v5989 = vadd.f32 %v5663, %v5937
      %v5990 = vadd.f32 %v5664, %v5940
      %v5991 = vadd.f32 %v5665, %v5945
      %v5992 = vadd.f32 %v5666, %v5948
      %v5993 = vadd.f32 %v5667, %v5953
      %v5994 = vadd.f32 %v5668, %v5956
      %v5995 = vld [vmem:[#allocation3 + $0x8] sm:$0xc]
      %s5996 = scalar_lea.vmem %s3, 10
      %v5997 = vld [vmem:[%s5996] sm:$0x3]
      %v5999 = vunpack.c.l.b16 %v5995
      %v6000 = vpack.c.b16 %v4402, %v5999
      %v6001 = vrot.slane %v6000, 2
      %v6002 = vrot.slane %v4439, 2
      %v6003 = vsel %vm5678, %v6001, %v6002
      %v6004 = vrot.slane %v4440, 2
      %v6005 = vsel %vm5678, %v6002, %v6004
      %v6006 = vrot.slane %v4441, 2
      %v6007 = vsel %vm5678, %v6004, %v6006
      %v6008 = vrot.slane %v4442, 2
      %v6009 = vsel %vm5678, %v6006, %v6008
      %v6010 = vrot.slane %v4443, 2
      %v6011 = vsel %vm5678, %v6008, %v6010
      %v6012 = vrot.slane %v4444, 2
      %v6013 = vsel %vm5678, %v6010, %v6012
      %v6014 = vrot.slane %v4445, 2
      %v6015 = vsel %vm5678, %v6012, %v6014
      %v6016 = vrot.slane %v4446, 2
      %v6017 = vsel %vm5678, %v6014, %v6016
      %v6018 = vrot.slane %v4447, 2
      %v6019 = vsel %vm5678, %v6016, %v6018
      %v6020 = vrot.slane %v4448, 2
      %v6021 = vsel %vm5678, %v6018, %v6020
      %v6022 = vrot.slane %v4449, 2
      %v6023 = vsel %vm5678, %v6020, %v6022
      %v6024 = vrot.slane %v4450, 2
      %v6025 = vsel %vm5678, %v6022, %v6024
      %v6026 = vrot.slane %v4451, 2
      %v6027 = vsel %vm5678, %v6024, %v6026
      %v6028 = vrot.slane %v4452, 2
      %v6029 = vsel %vm5678, %v6026, %v6028
      %v6030 = vrot.slane %v4453, 2
      %v6031 = vsel %vm5678, %v6028, %v6030
      %v6032 = vrot.slane %v4454, 2
      %v6033 = vsel %vm5678, %v6030, %v6032
      %v6034 = vrot.slane %v4455, 2
      %v6035 = vsel %vm5678, %v6032, %v6034
      %v6036 = vrot.slane %v5228, 2
      %v6037 = vsel %vm5678, %v6034, %v6036
      %v6039 = vsel %vm1552, %v6003, 0
      %v6042 = vsel %vm1552, %v6005, 0
      %v6045 = vsel %vm1552, %v6007, 0
      %v6048 = vsel %vm1552, %v6009, 0
      %v6051 = vsel %vm1552, %v6011, 0
      %v6054 = vsel %vm1552, %v6013, 0
      %v6057 = vsel %vm1552, %v6015, 0
      %v6060 = vsel %vm1552, %v6017, 0
      %v6063 = vsel %vm1552, %v6019, 0
      %v6066 = vsel %vm1552, %v6021, 0
      %v6069 = vsel %vm1552, %v6023, 0
      %v6072 = vsel %vm1552, %v6025, 0
      %v6075 = vsel %vm1552, %v6027, 0
      %v6078 = vsel %vm1552, %v6029, 0
      %v6081 = vsel %vm1552, %v6031, 0
      %v6084 = vsel %vm1552, %v6033, 0
      %v6087 = vsel %vm1552, %v6035, 0
      %v6090 = vsel %vm1552, %v6037, 0
      %v6093 = vsel %vm1607, %v5997, 0
      %6095 = vmatprep.subr.bf16.mxu0 0
      %6096 = vmatpush1.bf16.msra.mxu0 %v6093
      %6097 = vmatprep.subr.bf16.mxu0 0
      %6098 = vmatpush1.bf16.msra.mxu0 0
      %6099 = vmatprep.subr.bf16.mxu0 0
      %6100 = vmatpush1.bf16.msra.mxu0 0
      %6101 = vmatprep.subr.bf16.mxu0 0
      %6102 = vmatpush1.bf16.msra.mxu0 0
      %6103 = vmatprep.subr.bf16.mxu0 0
      %6104 = vmatpush1.bf16.msra.mxu0 0
      %6105 = vmatprep.subr.bf16.mxu0 0
      %6106 = vmatpush1.bf16.msra.mxu0 0
      %6107 = vmatprep.subr.bf16.mxu0 0
      %6108 = vmatpush1.bf16.msra.mxu0 0
      %6109 = vmatprep.subr.bf16.mxu0 0
      %6110 = vmatpush1.bf16.msra.mxu0 0
      %6111 = vmatprep.subr.bf16.mxu0 0
      %6112 = vmatpush1.bf16.msra.mxu0 0
      %6113 = vmatprep.subr.bf16.mxu0 0
      %6114 = vmatpush1.bf16.msra.mxu0 0
      %6115 = vmatprep.subr.bf16.mxu0 0
      %6116 = vmatpush1.bf16.msra.mxu0 0
      %6117 = vmatprep.subr.bf16.mxu0 0
      %6118 = vmatpush1.bf16.msra.mxu0 0
      %6119 = vmatprep.subr.bf16.mxu0 0
      %6120 = vmatpush1.bf16.msra.mxu0 0
      %6121 = vmatprep.subr.bf16.mxu0 0
      %6122 = vmatpush1.bf16.msra.mxu0 0
      %6123 = vmatprep.subr.bf16.mxu0 0
      %6124 = vmatpush1.bf16.msra.mxu0 0
      %6125 = vmatprep.subr.bf16.mxu0 0
      %6126 = vmatpush1.bf16.msra.mxu0 0
      %6127 = vmatprep.mubr.bf16.mxu0 0
      %6128 = vmatmul.mubr.bf16.gmra.mrb[0].mxu0 %v6039
      %v6129 = vpop.f32.mrb[0].mxu0
      %v6130 = vadd.f32 0.0, %v6129
      %v6131 = vpop.f32.mrb[0].mxu0
      %v6132 = vpop.f32.mrb[0].mxu0
      %v6133 = vadd.f32 0.0, %v6132
      %v6134 = vpop.f32.mrb[0].mxu0
      %6135 = vmatprep.mubr.bf16.mxu0 0
      %6136 = vmatmul.mubr.bf16.gmra.mrb[0].mxu0 %v6042
      %v6137 = vpop.f32.mrb[0].mxu0
      %v6138 = vadd.f32 0.0, %v6137
      %v6139 = vpop.f32.mrb[0].mxu0
      %v6140 = vpop.f32.mrb[0].mxu0
      %v6141 = vadd.f32 0.0, %v6140
      %v6142 = vpop.f32.mrb[0].mxu0
      %6143 = vmatprep.mubr.bf16.mxu0 0
      %6144 = vmatmul.mubr.bf16.gmra.mrb[0].mxu0 %v6045
      %v6145 = vpop.f32.mrb[0].mxu0
      %v6146 = vadd.f32 0.0, %v6145
      %v6147 = vpop.f32.mrb[0].mxu0
      %v6148 = vpop.f32.mrb[0].mxu0
      %v6149 = vadd.f32 0.0, %v6148
      %v6150 = vpop.f32.mrb[0].mxu0
      %6151 = vmatprep.mubr.bf16.mxu0 0
      %6152 = vmatmul.mubr.bf16.gmra.mrb[0].mxu0 %v6048
      %v6153 = vpop.f32.mrb[0].mxu0
      %v6154 = vadd.f32 0.0, %v6153
      %v6155 = vpop.f32.mrb[0].mxu0
      %v6156 = vpop.f32.mrb[0].mxu0
      %v6157 = vadd.f32 0.0, %v6156
      %v6158 = vpop.f32.mrb[0].mxu0
      %6159 = vmatprep.mubr.bf16.mxu0 0
      %6160 = vmatmul.mubr.bf16.gmra.mrb[0].mxu0 %v6051
      %v6161 = vpop.f32.mrb[0].mxu0
      %v6162 = vadd.f32 0.0, %v6161
      %v6163 = vpop.f32.mrb[0].mxu0
      %v6164 = vpop.f32.mrb[0].mxu0
      %v6165 = vadd.f32 0.0, %v6164
      %v6166 = vpop.f32.mrb[0].mxu0
      %6167 = vmatprep.mubr.bf16.mxu0 0
      %6168 = vmatmul.mubr.bf16.gmra.mrb[0].mxu0 %v6054
      %v6169 = vpop.f32.mrb[0].mxu0
      %v6170 = vadd.f32 0.0, %v6169
      %v6171 = vpop.f32.mrb[0].mxu0
      %v6172 = vpop.f32.mrb[0].mxu0
      %v6173 = vadd.f32 0.0, %v6172
      %v6174 = vpop.f32.mrb[0].mxu0
      %6175 = vmatprep.mubr.bf16.mxu0 0
      %6176 = vmatmul.mubr.bf16.gmra.mrb[0].mxu0 %v6057
      %v6177 = vpop.f32.mrb[0].mxu0
      %v6178 = vadd.f32 0.0, %v6177
      %v6179 = vpop.f32.mrb[0].mxu0
      %v6180 = vpop.f32.mrb[0].mxu0
      %v6181 = vadd.f32 0.0, %v6180
      %v6182 = vpop.f32.mrb[0].mxu0
      %6183 = vmatprep.mubr.bf16.mxu0 0
      %6184 = vmatmul.mubr.bf16.gmra.mrb[0].mxu0 %v6060
      %v6185 = vpop.f32.mrb[0].mxu0
      %v6186 = vadd.f32 0.0, %v6185
      %v6187 = vpop.f32.mrb[0].mxu0
      %v6188 = vpop.f32.mrb[0].mxu0
      %v6189 = vadd.f32 0.0, %v6188
      %v6190 = vpop.f32.mrb[0].mxu0
      %6191 = vmatprep.mubr.bf16.mxu0 0
      %6192 = vmatmul.mubr.bf16.gmra.mrb[0].mxu0 %v6063
      %v6193 = vpop.f32.mrb[0].mxu0
      %v6194 = vadd.f32 0.0, %v6193
      %v6195 = vpop.f32.mrb[0].mxu0
      %v6196 = vpop.f32.mrb[0].mxu0
      %v6197 = vadd.f32 0.0, %v6196
      %v6198 = vpop.f32.mrb[0].mxu0
      %6199 = vmatprep.mubr.bf16.mxu0 0
      %6200 = vmatmul.mubr.bf16.gmra.mrb[0].mxu0 %v6066
      %v6201 = vpop.f32.mrb[0].mxu0
      %v6202 = vadd.f32 0.0, %v6201
      %v6203 = vpop.f32.mrb[0].mxu0
      %v6204 = vpop.f32.mrb[0].mxu0
      %v6205 = vadd.f32 0.0, %v6204
      %v6206 = vpop.f32.mrb[0].mxu0
      %6207 = vmatprep.mubr.bf16.mxu0 0
      %6208 = vmatmul.mubr.bf16.gmra.mrb[0].mxu0 %v6069
      %v6209 = vpop.f32.mrb[0].mxu0
      %v6210 = vadd.f32 0.0, %v6209
      %v6211 = vpop.f32.mrb[0].mxu0
      %v6212 = vpop.f32.mrb[0].mxu0
      %v6213 = vadd.f32 0.0, %v6212
      %v6214 = vpop.f32.mrb[0].mxu0
      %6215 = vmatprep.mubr.bf16.mxu0 0
      %6216 = vmatmul.mubr.bf16.gmra.mrb[0].mxu0 %v6072
      %v6217 = vpop.f32.mrb[0].mxu0
      %v6218 = vadd.f32 0.0, %v6217
      %v6219 = vpop.f32.mrb[0].mxu0
      %v6220 = vpop.f32.mrb[0].mxu0
      %v6221 = vadd.f32 0.0, %v6220
      %v6222 = vpop.f32.mrb[0].mxu0
      %6223 = vmatprep.mubr.bf16.mxu0 0
      %6224 = vmatmul.mubr.bf16.gmra.mrb[0].mxu0 %v6075
      %v6225 = vpop.f32.mrb[0].mxu0
      %v6226 = vadd.f32 0.0, %v6225
      %v6227 = vpop.f32.mrb[0].mxu0
      %v6228 = vpop.f32.mrb[0].mxu0
      %v6229 = vadd.f32 0.0, %v6228
      %v6230 = vpop.f32.mrb[0].mxu0
      %6231 = vmatprep.mubr.bf16.mxu0 0
      %6232 = vmatmul.mubr.bf16.gmra.mrb[0].mxu0 %v6078
      %v6233 = vpop.f32.mrb[0].mxu0
      %v6234 = vadd.f32 0.0, %v6233
      %v6235 = vpop.f32.mrb[0].mxu0
      %v6236 = vpop.f32.mrb[0].mxu0
      %v6237 = vadd.f32 0.0, %v6236
      %v6238 = vpop.f32.mrb[0].mxu0
      %6239 = vmatprep.mubr.bf16.mxu0 0
      %6240 = vmatmul.mubr.bf16.gmra.mrb[0].mxu0 %v6081
      %v6241 = vpop.f32.mrb[0].mxu0
      %v6242 = vadd.f32 0.0, %v6241
      %v6243 = vpop.f32.mrb[0].mxu0
      %v6244 = vpop.f32.mrb[0].mxu0
      %v6245 = vadd.f32 0.0, %v6244
      %v6246 = vpop.f32.mrb[0].mxu0
      %6247 = vmatprep.mubr.bf16.mxu0 0
      %6248 = vmatmul.mubr.bf16.gmra.mrb[0].mxu0 %v6084
      %v6249 = vpop.f32.mrb[0].mxu0
      %v6250 = vadd.f32 0.0, %v6249
      %v6251 = vpop.f32.mrb[0].mxu0
      %v6252 = vpop.f32.mrb[0].mxu0
      %v6253 = vadd.f32 0.0, %v6252
      %v6254 = vpop.f32.mrb[0].mxu0
      %6255 = vmatprep.mubr.bf16.mxu0 0
      %6256 = vmatmul.mubr.bf16.gmra.mrb[0].mxu0 %v6087
      %v6257 = vpop.f32.mrb[0].mxu0
      %v6258 = vadd.f32 0.0, %v6257
      %v6259 = vpop.f32.mrb[0].mxu0
      %v6260 = vpop.f32.mrb[0].mxu0
      %v6261 = vadd.f32 0.0, %v6260
      %v6262 = vpop.f32.mrb[0].mxu0
      %6263 = vmatprep.mubr.bf16.mxu0 0
      %6264 = vmatmul.mubr.bf16.gmra.mrb[0].mxu0 %v6090
      %v6265 = vpop.f32.mrb[0].mxu0
      %v6266 = vadd.f32 0.0, %v6265
      %v6267 = vpop.f32.mrb[0].mxu0
      %v6268 = vpop.f32.mrb[0].mxu0
      %v6269 = vadd.f32 0.0, %v6268
      %v6270 = vpop.f32.mrb[0].mxu0
      %6271 = vdwg.mxu0
      %v6272 = vadd.f32 %v5959, %v6130
      %v6273 = vadd.f32 %v5960, %v6133
      %v6274 = vadd.f32 %v5961, %v6138
      %v6275 = vadd.f32 %v5962, %v6141
      %v6276 = vadd.f32 %v5963, %v6146
      %v6277 = vadd.f32 %v5964, %v6149
      %v6278 = vadd.f32 %v5965, %v6154
      %v6279 = vadd.f32 %v5966, %v6157
      %v6280 = vadd.f32 %v5967, %v6162
      %v6281 = vadd.f32 %v5968, %v6165
      %v6282 = vadd.f32 %v5969, %v6170
      %v6283 = vadd.f32 %v5970, %v6173
      %v6284 = vadd.f32 %v5971, %v6178
      %v6285 = vadd.f32 %v5972, %v6181
      %v6286 = vadd.f32 %v5973, %v6186
      %v6287 = vadd.f32 %v5974, %v6189
      %v6288 = vadd.f32 %v5975, %v6194
      %v6289 = vadd.f32 %v5976, %v6197
      %v6290 = vadd.f32 %v5977, %v6202
      %v6291 = vadd.f32 %v5978, %v6205
      %v6292 = vadd.f32 %v5979, %v6210
      %v6293 = vadd.f32 %v5980, %v6213
      %v6294 = vadd.f32 %v5981, %v6218
      %v6295 = vadd.f32 %v5982, %v6221
      %v6296 = vadd.f32 %v5983, %v6226
      %v6297 = vadd.f32 %v5984, %v6229
      %v6298 = vadd.f32 %v5985, %v6234
      %v6299 = vadd.f32 %v5986, %v6237
      %v6300 = vadd.f32 %v5987, %v6242
      %v6301 = vadd.f32 %v5988, %v6245
      %v6302 = vadd.f32 %v5989, %v6250
      %v6303 = vadd.f32 %v5990, %v6253
      %v6304 = vadd.f32 %v5991, %v6258
      %v6305 = vadd.f32 %v5992, %v6261
      %v6306 = vadd.f32 %v5993, %v6266
      %v6307 = vadd.f32 %v5994, %v6269
      %v6308 = vld [vmem:[#allocation2 + $0x10] sm:$0xc]
      %v6309 = vld [vmem:[#allocation2 + $0x14] sm:$0xf]
      %v6310 = vld [vmem:[#allocation2 + $0x18] sm:$0xf]
      %v6311 = vld [vmem:[#allocation2 + $0x1c] sm:$0xf]
      %v6312 = vld [vmem:[#allocation2 + $0x20] sm:$0xf]
      %v6313 = vld [vmem:[#allocation2 + $0x24] sm:$0xf]
      %v6314 = vld [vmem:[#allocation2 + $0x28] sm:$0xf]
      %v6315 = vld [vmem:[#allocation2 + $0x2c] sm:$0xf]
      %v6316 = vld [vmem:[#allocation2 + $0x30] sm:$0xf]
      %v6317 = vld [vmem:[#allocation2 + $0x34] sm:$0xf]
      %v6318 = vld [vmem:[#allocation2 + $0x38] sm:$0xf]
      %v6319 = vld [vmem:[#allocation2 + $0x3c] sm:$0xf]
      %v6320 = vld [vmem:[#allocation2 + $0x40] sm:$0xf]
      %v6321 = vld [vmem:[#allocation2 + $0x44] sm:$0xf]
      %v6322 = vld [vmem:[#allocation2 + $0x48] sm:$0xf]
      %v6323 = vld [vmem:[#allocation2 + $0x4c] sm:$0xf]
      %v6324 = vld [vmem:[#allocation2 + $0x50] sm:$0xf]
      %v6325 = vld [vmem:[#allocation2 + $0x54] sm:$0xf]
      %v6326 = vld [vmem:[#allocation2 + $0x58] sm:$0xf]
      %v6327 = vld [vmem:[#allocation2 + $0x5c] sm:$0xf]
      %v6328 = vld [vmem:[#allocation2 + $0x60] sm:$0xf]
      %v6329 = vld [vmem:[#allocation2 + $0x64] sm:$0xf]
      %v6330 = vld [vmem:[#allocation2 + $0x68] sm:$0xf]
      %v6331 = vld [vmem:[#allocation2 + $0x6c] sm:$0xf]
      %v6332 = vld [vmem:[#allocation2 + $0x70] sm:$0xf]
      %v6333 = vld [vmem:[#allocation2 + $0x74] sm:$0xf]
      %v6334 = vld [vmem:[#allocation2 + $0x78] sm:$0xf]
      %v6335 = vld [vmem:[#allocation2 + $0x7c] sm:$0xf]
      %v6336 = vld [vmem:[#allocation2 + $0x80] sm:$0xf]
      %v6337 = vld [vmem:[#allocation2 + $0x84] sm:$0xf]
      %v6338 = vld [vmem:[#allocation2 + $0x88] sm:$0xf]
      %v6339 = vld [vmem:[#allocation2 + $0x8c] sm:$0xf]
      %v6340 = vld [vmem:[#allocation2 + $0x90] sm:$0xf]
      %v6341 = vld [vmem:[#allocation2 + $0x94] sm:$0xf]
      %v6342 = vld [vmem:[#allocation2 + $0x98] sm:$0xf]
      %v6343 = vld [vmem:[#allocation2 + $0x9c] sm:$0xf]
      %v6344 = vld [vmem:[#allocation2 + $0xa0] sm:$0x3]
      %s6345 = scalar_lea.vmem %s2, 96
      %v6346 = vld [vmem:[%s6345] sm:$0xf]
      %v6347 = vld [vmem:[%s6345 + $0x4] sm:$0xf]
      %v6348 = vld [vmem:[%s6345 + $0x8] sm:$0xf]
      %v6349 = vld [vmem:[%s6345 + $0xc] sm:$0xf]
      %v6387 = vunpack.c.l.b16 %v6308
      %v6388 = vunpack.c.l.b16 %v6309
      %v6389 = vunpack.c.l.b16 %v6310
      %v6390 = vunpack.c.l.b16 %v6311
      %v6391 = vunpack.c.l.b16 %v6312
      %v6392 = vunpack.c.l.b16 %v6313
      %v6393 = vunpack.c.l.b16 %v6314
      %v6394 = vunpack.c.l.b16 %v6315
      %v6395 = vunpack.c.l.b16 %v6316
      %v6396 = vunpack.c.l.b16 %v6317
      %v6397 = vunpack.c.l.b16 %v6318
      %v6398 = vunpack.c.l.b16 %v6319
      %v6399 = vunpack.c.l.b16 %v6320
      %v6400 = vunpack.c.l.b16 %v6321
      %v6401 = vunpack.c.l.b16 %v6322
      %v6402 = vunpack.c.l.b16 %v6323
      %v6403 = vunpack.c.l.b16 %v6324
      %v6404 = vunpack.c.l.b16 %v6325
      %v6405 = vunpack.c.l.b16 %v6326
      %v6406 = vunpack.c.l.b16 %v6327
      %v6407 = vunpack.c.l.b16 %v6328
      %v6408 = vunpack.c.l.b16 %v6329
      %v6409 = vunpack.c.l.b16 %v6330
      %v6410 = vunpack.c.l.b16 %v6331
      %v6411 = vunpack.c.l.b16 %v6332
      %v6412 = vunpack.c.l.b16 %v6333
      %v6413 = vunpack.c.l.b16 %v6334
      %v6414 = vunpack.c.l.b16 %v6335
      %v6415 = vunpack.c.l.b16 %v6336
      %v6416 = vunpack.c.l.b16 %v6337
      %v6417 = vunpack.c.l.b16 %v6338
      %v6418 = vunpack.c.l.b16 %v6339
      %v6419 = vunpack.c.l.b16 %v6340
      %v6420 = vunpack.c.l.b16 %v6341
      %v6421 = vunpack.c.l.b16 %v6342
      %v6422 = vunpack.c.l.b16 %v6343
      %v6423 = vunpack.c.l.b16 %v6344
      %v6424 = vpack.c.b16 %v6388, %v6387
      %v6425 = vpack.c.b16 %v6390, %v6389
      %v6426 = vpack.c.b16 %v6392, %v6391
      %v6427 = vpack.c.b16 %v6394, %v6393
      %v6428 = vpack.c.b16 %v6396, %v6395
      %v6429 = vpack.c.b16 %v6398, %v6397
      %v6430 = vpack.c.b16 %v6400, %v6399
      %v6431 = vpack.c.b16 %v6402, %v6401
      %v6432 = vpack.c.b16 %v6404, %v6403
      %v6433 = vpack.c.b16 %v6406, %v6405
      %v6434 = vpack.c.b16 %v6408, %v6407
      %v6435 = vpack.c.b16 %v6410, %v6409
      %v6436 = vpack.c.b16 %v6412, %v6411
      %v6437 = vpack.c.b16 %v6414, %v6413
      %v6438 = vpack.c.b16 %v6416, %v6415
      %v6439 = vpack.c.b16 %v6418, %v6417
      %v6440 = vpack.c.b16 %v6420, %v6419
      %v6441 = vpack.c.b16 %v6422, %v6421
      %v6442 = vpack.c.b16 %v6423, %v6423
      %v6443 = vrot.slane %v6424, 2
      %v6444 = vrot.slane %v6425, 2
      %v6445 = vsel %vm5678, %v6443, %v6444
      %v6446 = vrot.slane %v6426, 2
      %v6447 = vsel %vm5678, %v6444, %v6446
      %v6448 = vrot.slane %v6427, 2
      %v6449 = vsel %vm5678, %v6446, %v6448
      %v6450 = vrot.slane %v6428, 2
      %v6451 = vsel %vm5678, %v6448, %v6450
      %v6452 = vrot.slane %v6429, 2
      %v6453 = vsel %vm5678, %v6450, %v6452
      %v6454 = vrot.slane %v6430, 2
      %v6455 = vsel %vm5678, %v6452, %v6454
      %v6456 = vrot.slane %v6431, 2
      %v6457 = vsel %vm5678, %v6454, %v6456
      %v6458 = vrot.slane %v6432, 2
      %v6459 = vsel %vm5678, %v6456, %v6458
      %v6460 = vrot.slane %v6433, 2
      %v6461 = vsel %vm5678, %v6458, %v6460
      %v6462 = vrot.slane %v6434, 2
      %v6463 = vsel %vm5678, %v6460, %v6462
      %v6464 = vrot.slane %v6435, 2
      %v6465 = vsel %vm5678, %v6462, %v6464
      %v6466 = vrot.slane %v6436, 2
      %v6467 = vsel %vm5678, %v6464, %v6466
      %v6468 = vrot.slane %v6437, 2
      %v6469 = vsel %vm5678, %v6466, %v6468
      %v6470 = vrot.slane %v6438, 2
      %v6471 = vsel %vm5678, %v6468, %v6470
      %v6472 = vrot.slane %v6439, 2
      %v6473 = vsel %vm5678, %v6470, %v6472
      %v6474 = vrot.slane %v6440, 2
      %v6475 = vsel %vm5678, %v6472, %v6474
      %v6476 = vrot.slane %v6441, 2
      %v6477 = vsel %vm5678, %v6474, %v6476
      %v6478 = vrot.slane %v6442, 2
      %v6479 = vsel %vm5678, %v6476, %v6478
      %v6484 = vunpack.c.l.b16 %v6346
      %v6485 = vunpack.c.l.b16 %v6347
      %v6486 = vunpack.c.l.b16 %v6348
      %v6487 = vunpack.c.l.b16 %v6349
      %v6488 = vpack.c.b16 %v6485, %v6484
      %v6489 = vpack.c.b16 %v6487, %v6486
      %v6493 = vsel %vm1890, %v6445, 0
      %v6496 = vsel %vm1890, %v6447, 0
      %v6499 = vsel %vm1890, %v6449, 0
      %v6502 = vsel %vm1890, %v6451, 0
      %v6505 = vsel %vm1890, %v6453, 0
      %v6508 = vsel %vm1890, %v6455, 0
      %v6511 = vsel %vm1890, %v6457, 0
      %v6514 = vsel %vm1890, %v6459, 0
      %v6517 = vsel %vm1890, %v6461, 0
      %v6520 = vsel %vm1890, %v6463, 0
      %v6523 = vsel %vm1890, %v6465, 0
      %v6526 = vsel %vm1890, %v6467, 0
      %v6529 = vsel %vm1890, %v6469, 0
      %v6532 = vsel %vm1890, %v6471, 0
      %v6535 = vsel %vm1890, %v6473, 0
      %v6538 = vsel %vm1890, %v6475, 0
      %v6541 = vsel %vm1890, %v6477, 0
      %v6544 = vsel %vm1890, %v6479, 0
      %6546 = vmatprep.subr.bf16.mxu0 0
      %6547 = vmatpush1.bf16.msra.mxu0 %v6488
      %6548 = vmatprep.subr.bf16.mxu0 0
      %6549 = vmatpush1.bf16.msra.mxu0 %v6489
      %6550 = vmatprep.subr.bf16.mxu0 0
      %6551 = vmatpush1.bf16.msra.mxu0 0
      %6552 = vmatprep.subr.bf16.mxu0 0
      %6553 = vmatpush1.bf16.msra.mxu0 0
      %6554 = vmatprep.subr.bf16.mxu0 0
      %6555 = vmatpush1.bf16.msra.mxu0 0
      %6556 = vmatprep.subr.bf16.mxu0 0
      %6557 = vmatpush1.bf16.msra.mxu0 0
      %6558 = vmatprep.subr.bf16.mxu0 0
      %6559 = vmatpush1.bf16.msra.mxu0 0
      %6560 = vmatprep.subr.bf16.mxu0 0
      %6561 = vmatpush1.bf16.msra.mxu0 0
      %6562 = vmatprep.subr.bf16.mxu0 0
      %6563 = vmatpush1.bf16.msra.mxu0 0
      %6564 = vmatprep.subr.bf16.mxu0 0
      %6565 = vmatpush1.bf16.msra.mxu0 0
      %6566 = vmatprep.subr.bf16.mxu0 0
      %6567 = vmatpush1.bf16.msra.mxu0 0
      %6568 = vmatprep.subr.bf16.mxu0 0
      %6569 = vmatpush1.bf16.msra.mxu0 0
      %6570 = vmatprep.subr.bf16.mxu0 0
      %6571 = vmatpush1.bf16.msra.mxu0 0
      %6572 = vmatprep.subr.bf16.mxu0 0
      %6573 = vmatpush1.bf16.msra.mxu0 0
      %6574 = vmatprep.subr.bf16.mxu0 0
      %6575 = vmatpush1.bf16.msra.mxu0 0
      %6576 = vmatprep.subr.bf16.mxu0 0
      %6577 = vmatpush1.bf16.msra.mxu0 0
      %6578 = vmatprep.mubr.bf16.mxu0 0
      %6579 = vmatmul.mubr.bf16.gmra.mrb[0].mxu0 %v6493
      %v6580 = vpop.f32.mrb[0].mxu0
      %v6581 = vadd.f32 0.0, %v6580
      %v6582 = vpop.f32.mrb[0].mxu0
      %v6583 = vpop.f32.mrb[0].mxu0
      %v6584 = vadd.f32 0.0, %v6583
      %v6585 = vpop.f32.mrb[0].mxu0
      %6586 = vmatprep.mubr.bf16.mxu0 0
      %6587 = vmatmul.mubr.bf16.gmra.mrb[0].mxu0 %v6496
      %v6588 = vpop.f32.mrb[0].mxu0
      %v6589 = vadd.f32 0.0, %v6588
      %v6590 = vpop.f32.mrb[0].mxu0
      %v6591 = vpop.f32.mrb[0].mxu0
      %v6592 = vadd.f32 0.0, %v6591
      %v6593 = vpop.f32.mrb[0].mxu0
      %6594 = vmatprep.mubr.bf16.mxu0 0
      %6595 = vmatmul.mubr.bf16.gmra.mrb[0].mxu0 %v6499
      %v6596 = vpop.f32.mrb[0].mxu0
      %v6597 = vadd.f32 0.0, %v6596
      %v6598 = vpop.f32.mrb[0].mxu0
      %v6599 = vpop.f32.mrb[0].mxu0
      %v6600 = vadd.f32 0.0, %v6599
      %v6601 = vpop.f32.mrb[0].mxu0
      %6602 = vmatprep.mubr.bf16.mxu0 0
      %6603 = vmatmul.mubr.bf16.gmra.mrb[0].mxu0 %v6502
      %v6604 = vpop.f32.mrb[0].mxu0
      %v6605 = vadd.f32 0.0, %v6604
      %v6606 = vpop.f32.mrb[0].mxu0
      %v6607 = vpop.f32.mrb[0].mxu0
      %v6608 = vadd.f32 0.0, %v6607
      %v6609 = vpop.f32.mrb[0].mxu0
      %6610 = vmatprep.mubr.bf16.mxu0 0
      %6611 = vmatmul.mubr.bf16.gmra.mrb[0].mxu0 %v6505
      %v6612 = vpop.f32.mrb[0].mxu0
      %v6613 = vadd.f32 0.0, %v6612
      %v6614 = vpop.f32.mrb[0].mxu0
      %v6615 = vpop.f32.mrb[0].mxu0
      %v6616 = vadd.f32 0.0, %v6615
      %v6617 = vpop.f32.mrb[0].mxu0
      %6618 = vmatprep.mubr.bf16.mxu0 0
      %6619 = vmatmul.mubr.bf16.gmra.mrb[0].mxu0 %v6508
      %v6620 = vpop.f32.mrb[0].mxu0
      %v6621 = vadd.f32 0.0, %v6620
      %v6622 = vpop.f32.mrb[0].mxu0
      %v6623 = vpop.f32.mrb[0].mxu0
      %v6624 = vadd.f32 0.0, %v6623
      %v6625 = vpop.f32.mrb[0].mxu0
      %6626 = vmatprep.mubr.bf16.mxu0 0
      %6627 = vmatmul.mubr.bf16.gmra.mrb[0].mxu0 %v6511
      %v6628 = vpop.f32.mrb[0].mxu0
      %v6629 = vadd.f32 0.0, %v6628
      %v6630 = vpop.f32.mrb[0].mxu0
      %v6631 = vpop.f32.mrb[0].mxu0
      %v6632 = vadd.f32 0.0, %v6631
      %v6633 = vpop.f32.mrb[0].mxu0
      %6634 = vmatprep.mubr.bf16.mxu0 0
      %6635 = vmatmul.mubr.bf16.gmra.mrb[0].mxu0 %v6514
      %v6636 = vpop.f32.mrb[0].mxu0
      %v6637 = vadd.f32 0.0, %v6636
      %v6638 = vpop.f32.mrb[0].mxu0
      %v6639 = vpop.f32.mrb[0].mxu0
      %v6640 = vadd.f32 0.0, %v6639
      %v6641 = vpop.f32.mrb[0].mxu0
      %6642 = vmatprep.mubr.bf16.mxu0 0
      %6643 = vmatmul.mubr.bf16.gmra.mrb[0].mxu0 %v6517
      %v6644 = vpop.f32.mrb[0].mxu0
      %v6645 = vadd.f32 0.0, %v6644
      %v6646 = vpop.f32.mrb[0].mxu0
      %v6647 = vpop.f32.mrb[0].mxu0
      %v6648 = vadd.f32 0.0, %v6647
      %v6649 = vpop.f32.mrb[0].mxu0
      %6650 = vmatprep.mubr.bf16.mxu0 0
      %6651 = vmatmul.mubr.bf16.gmra.mrb[0].mxu0 %v6520
      %v6652 = vpop.f32.mrb[0].mxu0
      %v6653 = vadd.f32 0.0, %v6652
      %v6654 = vpop.f32.mrb[0].mxu0
      %v6655 = vpop.f32.mrb[0].mxu0
      %v6656 = vadd.f32 0.0, %v6655
      %v6657 = vpop.f32.mrb[0].mxu0
      %6658 = vmatprep.mubr.bf16.mxu0 0
      %6659 = vmatmul.mubr.bf16.gmra.mrb[0].mxu0 %v6523
      %v6660 = vpop.f32.mrb[0].mxu0
      %v6661 = vadd.f32 0.0, %v6660
      %v6662 = vpop.f32.mrb[0].mxu0
      %v6663 = vpop.f32.mrb[0].mxu0
      %v6664 = vadd.f32 0.0, %v6663
      %v6665 = vpop.f32.mrb[0].mxu0
      %6666 = vmatprep.mubr.bf16.mxu0 0
      %6667 = vmatmul.mubr.bf16.gmra.mrb[0].mxu0 %v6526
      %v6668 = vpop.f32.mrb[0].mxu0
      %v6669 = vadd.f32 0.0, %v6668
      %v6670 = vpop.f32.mrb[0].mxu0
      %v6671 = vpop.f32.mrb[0].mxu0
      %v6672 = vadd.f32 0.0, %v6671
      %v6673 = vpop.f32.mrb[0].mxu0
      %6674 = vmatprep.mubr.bf16.mxu0 0
      %6675 = vmatmul.mubr.bf16.gmra.mrb[0].mxu0 %v6529
      %v6676 = vpop.f32.mrb[0].mxu0
      %v6677 = vadd.f32 0.0, %v6676
      %v6678 = vpop.f32.mrb[0].mxu0
      %v6679 = vpop.f32.mrb[0].mxu0
      %v6680 = vadd.f32 0.0, %v6679
      %v6681 = vpop.f32.mrb[0].mxu0
      %6682 = vmatprep.mubr.bf16.mxu0 0
      %6683 = vmatmul.mubr.bf16.gmra.mrb[0].mxu0 %v6532
      %v6684 = vpop.f32.mrb[0].mxu0
      %v6685 = vadd.f32 0.0, %v6684
      %v6686 = vpop.f32.mrb[0].mxu0
      %v6687 = vpop.f32.mrb[0].mxu0
      %v6688 = vadd.f32 0.0, %v6687
      %v6689 = vpop.f32.mrb[0].mxu0
      %6690 = vmatprep.mubr.bf16.mxu0 0
      %6691 = vmatmul.mubr.bf16.gmra.mrb[0].mxu0 %v6535
      %v6692 = vpop.f32.mrb[0].mxu0
      %v6693 = vadd.f32 0.0, %v6692
      %v6694 = vpop.f32.mrb[0].mxu0
      %v6695 = vpop.f32.mrb[0].mxu0
      %v6696 = vadd.f32 0.0, %v6695
      %v6697 = vpop.f32.mrb[0].mxu0
      %6698 = vmatprep.mubr.bf16.mxu0 0
      %6699 = vmatmul.mubr.bf16.gmra.mrb[0].mxu0 %v6538
      %v6700 = vpop.f32.mrb[0].mxu0
      %v6701 = vadd.f32 0.0, %v6700
      %v6702 = vpop.f32.mrb[0].mxu0
      %v6703 = vpop.f32.mrb[0].mxu0
      %v6704 = vadd.f32 0.0, %v6703
      %v6705 = vpop.f32.mrb[0].mxu0
      %6706 = vmatprep.mubr.bf16.mxu0 0
      %6707 = vmatmul.mubr.bf16.gmra.mrb[0].mxu0 %v6541
      %v6708 = vpop.f32.mrb[0].mxu0
      %v6709 = vadd.f32 0.0, %v6708
      %v6710 = vpop.f32.mrb[0].mxu0
      %v6711 = vpop.f32.mrb[0].mxu0
      %v6712 = vadd.f32 0.0, %v6711
      %v6713 = vpop.f32.mrb[0].mxu0
      %6714 = vmatprep.mubr.bf16.mxu0 0
      %6715 = vmatmul.mubr.bf16.gmra.mrb[0].mxu0 %v6544
      %v6716 = vpop.f32.mrb[0].mxu0
      %v6717 = vadd.f32 0.0, %v6716
      %v6718 = vpop.f32.mrb[0].mxu0
      %v6719 = vpop.f32.mrb[0].mxu0
      %v6720 = vadd.f32 0.0, %v6719
      %v6721 = vpop.f32.mrb[0].mxu0
      %6722 = vdwg.mxu0
      %v6723 = vadd.f32 %v6272, %v6581
      %v6724 = vadd.f32 %v6273, %v6584
      %v6725 = vadd.f32 %v6274, %v6589
      %v6726 = vadd.f32 %v6275, %v6592
      %v6727 = vadd.f32 %v6276, %v6597
      %v6728 = vadd.f32 %v6277, %v6600
      %v6729 = vadd.f32 %v6278, %v6605
      %v6730 = vadd.f32 %v6279, %v6608
      %v6731 = vadd.f32 %v6280, %v6613
      %v6732 = vadd.f32 %v6281, %v6616
      %v6733 = vadd.f32 %v6282, %v6621
      %v6734 = vadd.f32 %v6283, %v6624
      %v6735 = vadd.f32 %v6284, %v6629
      %v6736 = vadd.f32 %v6285, %v6632
      %v6737 = vadd.f32 %v6286, %v6637
      %v6738 = vadd.f32 %v6287, %v6640
      %v6739 = vadd.f32 %v6288, %v6645
      %v6740 = vadd.f32 %v6289, %v6648
      %v6741 = vadd.f32 %v6290, %v6653
      %v6742 = vadd.f32 %v6291, %v6656
      %v6743 = vadd.f32 %v6292, %v6661
      %v6744 = vadd.f32 %v6293, %v6664
      %v6745 = vadd.f32 %v6294, %v6669
      %v6746 = vadd.f32 %v6295, %v6672
      %v6747 = vadd.f32 %v6296, %v6677
      %v6748 = vadd.f32 %v6297, %v6680
      %v6749 = vadd.f32 %v6298, %v6685
      %v6750 = vadd.f32 %v6299, %v6688
      %v6751 = vadd.f32 %v6300, %v6693
      %v6752 = vadd.f32 %v6301, %v6696
      %v6753 = vadd.f32 %v6302, %v6701
      %v6754 = vadd.f32 %v6303, %v6704
      %v6755 = vadd.f32 %v6304, %v6709
      %v6756 = vadd.f32 %v6305, %v6712
      %v6757 = vadd.f32 %v6306, %v6717
      %v6758 = vadd.f32 %v6307, %v6720
      %v6759 = vld [vmem:[#allocation3 + $0x10] sm:$0xc]
      %v6760 = vld [vmem:[#allocation3 + $0x14] sm:$0xf]
      %v6761 = vld [vmem:[#allocation3 + $0x18] sm:$0xf]
      %v6762 = vld [vmem:[#allocation3 + $0x1c] sm:$0xf]
      %v6763 = vld [vmem:[#allocation3 + $0x20] sm:$0xf]
      %v6764 = vld [vmem:[#allocation3 + $0x24] sm:$0xf]
      %v6765 = vld [vmem:[#allocation3 + $0x28] sm:$0xf]
      %v6766 = vld [vmem:[#allocation3 + $0x2c] sm:$0xf]
      %v6767 = vld [vmem:[#allocation3 + $0x30] sm:$0xf]
      %v6768 = vld [vmem:[#allocation3 + $0x34] sm:$0xf]
      %v6769 = vld [vmem:[#allocation3 + $0x38] sm:$0xf]
      %v6770 = vld [vmem:[#allocation3 + $0x3c] sm:$0xf]
      %v6771 = vld [vmem:[#allocation3 + $0x40] sm:$0xf]
      %v6772 = vld [vmem:[#allocation3 + $0x44] sm:$0xf]
      %v6773 = vld [vmem:[#allocation3 + $0x48] sm:$0xf]
      %v6774 = vld [vmem:[#allocation3 + $0x4c] sm:$0xf]
      %v6775 = vld [vmem:[#allocation3 + $0x50] sm:$0xf]
      %v6776 = vld [vmem:[#allocation3 + $0x54] sm:$0xf]
      %v6777 = vld [vmem:[#allocation3 + $0x58] sm:$0xf]
      %v6778 = vld [vmem:[#allocation3 + $0x5c] sm:$0xf]
      %v6779 = vld [vmem:[#allocation3 + $0x60] sm:$0xf]
      %v6780 = vld [vmem:[#allocation3 + $0x64] sm:$0xf]
      %v6781 = vld [vmem:[#allocation3 + $0x68] sm:$0xf]
      %v6782 = vld [vmem:[#allocation3 + $0x6c] sm:$0xf]
      %v6783 = vld [vmem:[#allocation3 + $0x70] sm:$0xf]
      %v6784 = vld [vmem:[#allocation3 + $0x74] sm:$0xf]
      %v6785 = vld [vmem:[#allocation3 + $0x78] sm:$0xf]
      %v6786 = vld [vmem:[#allocation3 + $0x7c] sm:$0xf]
      %v6787 = vld [vmem:[#allocation3 + $0x80] sm:$0xf]
      %v6788 = vld [vmem:[#allocation3 + $0x84] sm:$0xf]
      %v6789 = vld [vmem:[#allocation3 + $0x88] sm:$0xf]
      %v6790 = vld [vmem:[#allocation3 + $0x8c] sm:$0xf]
      %v6791 = vld [vmem:[#allocation3 + $0x90] sm:$0xf]
      %v6792 = vld [vmem:[#allocation3 + $0x94] sm:$0xf]
      %v6793 = vld [vmem:[#allocation3 + $0x98] sm:$0xf]
      %v6794 = vld [vmem:[#allocation3 + $0x9c] sm:$0xf]
      %v6795 = vld [vmem:[#allocation3 + $0xa0] sm:$0x3]
      %s6796 = scalar_lea.vmem %s3, 12
      %v6797 = vld [vmem:[%s6796] sm:$0x3]
      %v6835 = vunpack.c.l.b16 %v6759
      %v6836 = vunpack.c.l.b16 %v6760
      %v6837 = vunpack.c.l.b16 %v6761
      %v6838 = vunpack.c.l.b16 %v6762
      %v6839 = vunpack.c.l.b16 %v6763
      %v6840 = vunpack.c.l.b16 %v6764
      %v6841 = vunpack.c.l.b16 %v6765
      %v6842 = vunpack.c.l.b16 %v6766
      %v6843 = vunpack.c.l.b16 %v6767
      %v6844 = vunpack.c.l.b16 %v6768
      %v6845 = vunpack.c.l.b16 %v6769
      %v6846 = vunpack.c.l.b16 %v6770
      %v6847 = vunpack.c.l.b16 %v6771
      %v6848 = vunpack.c.l.b16 %v6772
      %v6849 = vunpack.c.l.b16 %v6773
      %v6850 = vunpack.c.l.b16 %v6774
      %v6851 = vunpack.c.l.b16 %v6775
      %v6852 = vunpack.c.l.b16 %v6776
      %v6853 = vunpack.c.l.b16 %v6777
      %v6854 = vunpack.c.l.b16 %v6778
      %v6855 = vunpack.c.l.b16 %v6779
      %v6856 = vunpack.c.l.b16 %v6780
      %v6857 = vunpack.c.l.b16 %v6781
      %v6858 = vunpack.c.l.b16 %v6782
      %v6859 = vunpack.c.l.b16 %v6783
      %v6860 = vunpack.c.l.b16 %v6784
      %v6861 = vunpack.c.l.b16 %v6785
      %v6862 = vunpack.c.l.b16 %v6786
      %v6863 = vunpack.c.l.b16 %v6787
      %v6864 = vunpack.c.l.b16 %v6788
      %v6865 = vunpack.c.l.b16 %v6789
      %v6866 = vunpack.c.l.b16 %v6790
      %v6867 = vunpack.c.l.b16 %v6791
      %v6868 = vunpack.c.l.b16 %v6792
      %v6869 = vunpack.c.l.b16 %v6793
      %v6870 = vunpack.c.l.b16 %v6794
      %v6871 = vunpack.c.l.b16 %v6795
      %v6872 = vpack.c.b16 %v6836, %v6835
      %v6873 = vpack.c.b16 %v6838, %v6837
      %v6874 = vpack.c.b16 %v6840, %v6839
      %v6875 = vpack.c.b16 %v6842, %v6841
      %v6876 = vpack.c.b16 %v6844, %v6843
      %v6877 = vpack.c.b16 %v6846, %v6845
      %v6878 = vpack.c.b16 %v6848, %v6847
      %v6879 = vpack.c.b16 %v6850, %v6849
      %v6880 = vpack.c.b16 %v6852, %v6851
      %v6881 = vpack.c.b16 %v6854, %v6853
      %v6882 = vpack.c.b16 %v6856, %v6855
      %v6883 = vpack.c.b16 %v6858, %v6857
      %v6884 = vpack.c.b16 %v6860, %v6859
      %v6885 = vpack.c.b16 %v6862, %v6861
      %v6886 = vpack.c.b16 %v6864, %v6863
      %v6887 = vpack.c.b16 %v6866, %v6865
      %v6888 = vpack.c.b16 %v6868, %v6867
      %v6889 = vpack.c.b16 %v6870, %v6869
      %v6890 = vpack.c.b16 %v6871, %v6871
      %v6891 = vrot.slane %v6872, 2
      %v6892 = vrot.slane %v6873, 2
      %v6893 = vsel %vm5678, %v6891, %v6892
      %v6894 = vrot.slane %v6874, 2
      %v6895 = vsel %vm5678, %v6892, %v6894
      %v6896 = vrot.slane %v6875, 2
      %v6897 = vsel %vm5678, %v6894, %v6896
      %v6898 = vrot.slane %v6876, 2
      %v6899 = vsel %vm5678, %v6896, %v6898
      %v6900 = vrot.slane %v6877, 2
      %v6901 = vsel %vm5678, %v6898, %v6900
      %v6902 = vrot.slane %v6878, 2
      %v6903 = vsel %vm5678, %v6900, %v6902
      %v6904 = vrot.slane %v6879, 2
      %v6905 = vsel %vm5678, %v6902, %v6904
      %v6906 = vrot.slane %v6880, 2
      %v6907 = vsel %vm5678, %v6904, %v6906
      %v6908 = vrot.slane %v6881, 2
      %v6909 = vsel %vm5678, %v6906, %v6908
      %v6910 = vrot.slane %v6882, 2
      %v6911 = vsel %vm5678, %v6908, %v6910
      %v6912 = vrot.slane %v6883, 2
      %v6913 = vsel %vm5678, %v6910, %v6912
      %v6914 = vrot.slane %v6884, 2
      %v6915 = vsel %vm5678, %v6912, %v6914
      %v6916 = vrot.slane %v6885, 2
      %v6917 = vsel %vm5678, %v6914, %v6916
      %v6918 = vrot.slane %v6886, 2
      %v6919 = vsel %vm5678, %v6916, %v6918
      %v6920 = vrot.slane %v6887, 2
      %v6921 = vsel %vm5678, %v6918, %v6920
      %v6922 = vrot.slane %v6888, 2
      %v6923 = vsel %vm5678, %v6920, %v6922
      %v6924 = vrot.slane %v6889, 2
      %v6925 = vsel %vm5678, %v6922, %v6924
      %v6926 = vrot.slane %v6890, 2
      %v6927 = vsel %vm5678, %v6924, %v6926
      %v6929 = vsel %vm1552, %v6893, 0
      %v6932 = vsel %vm1552, %v6895, 0
      %v6935 = vsel %vm1552, %v6897, 0
      %v6938 = vsel %vm1552, %v6899, 0
      %v6941 = vsel %vm1552, %v6901, 0
      %v6944 = vsel %vm1552, %v6903, 0
      %v6947 = vsel %vm1552, %v6905, 0
      %v6950 = vsel %vm1552, %v6907, 0
      %v6953 = vsel %vm1552, %v6909, 0
      %v6956 = vsel %vm1552, %v6911, 0
      %v6959 = vsel %vm1552, %v6913, 0
      %v6962 = vsel %vm1552, %v6915, 0
      %v6965 = vsel %vm1552, %v6917, 0
      %v6968 = vsel %vm1552, %v6919, 0
      %v6971 = vsel %vm1552, %v6921, 0
      %v6974 = vsel %vm1552, %v6923, 0
      %v6977 = vsel %vm1552, %v6925, 0
      %v6980 = vsel %vm1552, %v6927, 0
      %v6983 = vsel %vm1607, %v6797, 0
      %6985 = vmatprep.subr.bf16.mxu0 0
      %6986 = vmatpush1.bf16.msra.mxu0 %v6983
      %6987 = vmatprep.subr.bf16.mxu0 0
      %6988 = vmatpush1.bf16.msra.mxu0 0
      %6989 = vmatprep.subr.bf16.mxu0 0
      %6990 = vmatpush1.bf16.msra.mxu0 0
      %6991 = vmatprep.subr.bf16.mxu0 0
      %6992 = vmatpush1.bf16.msra.mxu0 0
      %6993 = vmatprep.subr.bf16.mxu0 0
      %6994 = vmatpush1.bf16.msra.mxu0 0
      %6995 = vmatprep.subr.bf16.mxu0 0
      %6996 = vmatpush1.bf16.msra.mxu0 0
      %6997 = vmatprep.subr.bf16.mxu0 0
      %6998 = vmatpush1.bf16.msra.mxu0 0
      %6999 = vmatprep.subr.bf16.mxu0 0
      %7000 = vmatpush1.bf16.msra.mxu0 0
      %7001 = vmatprep.subr.bf16.mxu0 0
      %7002 = vmatpush1.bf16.msra.mxu0 0
      %7003 = vmatprep.subr.bf16.mxu0 0
      %7004 = vmatpush1.bf16.msra.mxu0 0
      %7005 = vmatprep.subr.bf16.mxu0 0
      %7006 = vmatpush1.bf16.msra.mxu0 0
      %7007 = vmatprep.subr.bf16.mxu0 0
      %7008 = vmatpush1.bf16.msra.mxu0 0
      %7009 = vmatprep.subr.bf16.mxu0 0
      %7010 = vmatpush1.bf16.msra.mxu0 0
      %7011 = vmatprep.subr.bf16.mxu0 0
      %7012 = vmatpush1.bf16.msra.mxu0 0
      %7013 = vmatprep.subr.bf16.mxu0 0
      %7014 = vmatpush1.bf16.msra.mxu0 0
      %7015 = vmatprep.subr.bf16.mxu0 0
      %7016 = vmatpush1.bf16.msra.mxu0 0
      %7017 = vmatprep.mubr.bf16.mxu0 0
      %7018 = vmatmul.mubr.bf16.gmra.mrb[0].mxu0 %v6929
      %v7019 = vpop.f32.mrb[0].mxu0
      %v7020 = vadd.f32 0.0, %v7019
      %v7021 = vpop.f32.mrb[0].mxu0
      %v7022 = vpop.f32.mrb[0].mxu0
      %v7023 = vadd.f32 0.0, %v7022
      %v7024 = vpop.f32.mrb[0].mxu0
      %7025 = vmatprep.mubr.bf16.mxu0 0
      %7026 = vmatmul.mubr.bf16.gmra.mrb[0].mxu0 %v6932
      %v7027 = vpop.f32.mrb[0].mxu0
      %v7028 = vadd.f32 0.0, %v7027
      %v7029 = vpop.f32.mrb[0].mxu0
      %v7030 = vpop.f32.mrb[0].mxu0
      %v7031 = vadd.f32 0.0, %v7030
      %v7032 = vpop.f32.mrb[0].mxu0
      %7033 = vmatprep.mubr.bf16.mxu0 0
      %7034 = vmatmul.mubr.bf16.gmra.mrb[0].mxu0 %v6935
      %v7035 = vpop.f32.mrb[0].mxu0
      %v7036 = vadd.f32 0.0, %v7035
      %v7037 = vpop.f32.mrb[0].mxu0
      %v7038 = vpop.f32.mrb[0].mxu0
      %v7039 = vadd.f32 0.0, %v7038
      %v7040 = vpop.f32.mrb[0].mxu0
      %7041 = vmatprep.mubr.bf16.mxu0 0
      %7042 = vmatmul.mubr.bf16.gmra.mrb[0].mxu0 %v6938
      %v7043 = vpop.f32.mrb[0].mxu0
      %v7044 = vadd.f32 0.0, %v7043
      %v7045 = vpop.f32.mrb[0].mxu0
      %v7046 = vpop.f32.mrb[0].mxu0
      %v7047 = vadd.f32 0.0, %v7046
      %v7048 = vpop.f32.mrb[0].mxu0
      %7049 = vmatprep.mubr.bf16.mxu0 0
      %7050 = vmatmul.mubr.bf16.gmra.mrb[0].mxu0 %v6941
      %v7051 = vpop.f32.mrb[0].mxu0
      %v7052 = vadd.f32 0.0, %v7051
      %v7053 = vpop.f32.mrb[0].mxu0
      %v7054 = vpop.f32.mrb[0].mxu0
      %v7055 = vadd.f32 0.0, %v7054
      %v7056 = vpop.f32.mrb[0].mxu0
      %7057 = vmatprep.mubr.bf16.mxu0 0
      %7058 = vmatmul.mubr.bf16.gmra.mrb[0].mxu0 %v6944
      %v7059 = vpop.f32.mrb[0].mxu0
      %v7060 = vadd.f32 0.0, %v7059
      %v7061 = vpop.f32.mrb[0].mxu0
      %v7062 = vpop.f32.mrb[0].mxu0
      %v7063 = vadd.f32 0.0, %v7062
      %v7064 = vpop.f32.mrb[0].mxu0
      %7065 = vmatprep.mubr.bf16.mxu0 0
      %7066 = vmatmul.mubr.bf16.gmra.mrb[0].mxu0 %v6947
      %v7067 = vpop.f32.mrb[0].mxu0
      %v7068 = vadd.f32 0.0, %v7067
      %v7069 = vpop.f32.mrb[0].mxu0
      %v7070 = vpop.f32.mrb[0].mxu0
      %v7071 = vadd.f32 0.0, %v7070
      %v7072 = vpop.f32.mrb[0].mxu0
      %7073 = vmatprep.mubr.bf16.mxu0 0
      %7074 = vmatmul.mubr.bf16.gmra.mrb[0].mxu0 %v6950
      %v7075 = vpop.f32.mrb[0].mxu0
      %v7076 = vadd.f32 0.0, %v7075
      %v7077 = vpop.f32.mrb[0].mxu0
      %v7078 = vpop.f32.mrb[0].mxu0
      %v7079 = vadd.f32 0.0, %v7078
      %v7080 = vpop.f32.mrb[0].mxu0
      %7081 = vmatprep.mubr.bf16.mxu0 0
      %7082 = vmatmul.mubr.bf16.gmra.mrb[0].mxu0 %v6953
      %v7083 = vpop.f32.mrb[0].mxu0
      %v7084 = vadd.f32 0.0, %v7083
      %v7085 = vpop.f32.mrb[0].mxu0
      %v7086 = vpop.f32.mrb[0].mxu0
      %v7087 = vadd.f32 0.0, %v7086
      %v7088 = vpop.f32.mrb[0].mxu0
      %7089 = vmatprep.mubr.bf16.mxu0 0
      %7090 = vmatmul.mubr.bf16.gmra.mrb[0].mxu0 %v6956
      %v7091 = vpop.f32.mrb[0].mxu0
      %v7092 = vadd.f32 0.0, %v7091
      %v7093 = vpop.f32.mrb[0].mxu0
      %v7094 = vpop.f32.mrb[0].mxu0
      %v7095 = vadd.f32 0.0, %v7094
      %v7096 = vpop.f32.mrb[0].mxu0
      %7097 = vmatprep.mubr.bf16.mxu0 0
      %7098 = vmatmul.mubr.bf16.gmra.mrb[0].mxu0 %v6959
      %v7099 = vpop.f32.mrb[0].mxu0
      %v7100 = vadd.f32 0.0, %v7099
      %v7101 = vpop.f32.mrb[0].mxu0
      %v7102 = vpop.f32.mrb[0].mxu0
      %v7103 = vadd.f32 0.0, %v7102
      %v7104 = vpop.f32.mrb[0].mxu0
      %7105 = vmatprep.mubr.bf16.mxu0 0
      %7106 = vmatmul.mubr.bf16.gmra.mrb[0].mxu0 %v6962
      %v7107 = vpop.f32.mrb[0].mxu0
      %v7108 = vadd.f32 0.0, %v7107
      %v7109 = vpop.f32.mrb[0].mxu0
      %v7110 = vpop.f32.mrb[0].mxu0
      %v7111 = vadd.f32 0.0, %v7110
      %v7112 = vpop.f32.mrb[0].mxu0
      %7113 = vmatprep.mubr.bf16.mxu0 0
      %7114 = vmatmul.mubr.bf16.gmra.mrb[0].mxu0 %v6965
      %v7115 = vpop.f32.mrb[0].mxu0
      %v7116 = vadd.f32 0.0, %v7115
      %v7117 = vpop.f32.mrb[0].mxu0
      %v7118 = vpop.f32.mrb[0].mxu0
      %v7119 = vadd.f32 0.0, %v7118
      %v7120 = vpop.f32.mrb[0].mxu0
      %7121 = vmatprep.mubr.bf16.mxu0 0
      %7122 = vmatmul.mubr.bf16.gmra.mrb[0].mxu0 %v6968
      %v7123 = vpop.f32.mrb[0].mxu0
      %v7124 = vadd.f32 0.0, %v7123
      %v7125 = vpop.f32.mrb[0].mxu0
      %v7126 = vpop.f32.mrb[0].mxu0
      %v7127 = vadd.f32 0.0, %v7126
      %v7128 = vpop.f32.mrb[0].mxu0
      %7129 = vmatprep.mubr.bf16.mxu0 0
      %7130 = vmatmul.mubr.bf16.gmra.mrb[0].mxu0 %v6971
      %v7131 = vpop.f32.mrb[0].mxu0
      %v7132 = vadd.f32 0.0, %v7131
      %v7133 = vpop.f32.mrb[0].mxu0
      %v7134 = vpop.f32.mrb[0].mxu0
      %v7135 = vadd.f32 0.0, %v7134
      %v7136 = vpop.f32.mrb[0].mxu0
      %7137 = vmatprep.mubr.bf16.mxu0 0
      %7138 = vmatmul.mubr.bf16.gmra.mrb[0].mxu0 %v6974
      %v7139 = vpop.f32.mrb[0].mxu0
      %v7140 = vadd.f32 0.0, %v7139
      %v7141 = vpop.f32.mrb[0].mxu0
      %v7142 = vpop.f32.mrb[0].mxu0
      %v7143 = vadd.f32 0.0, %v7142
      %v7144 = vpop.f32.mrb[0].mxu0
      %7145 = vmatprep.mubr.bf16.mxu0 0
      %7146 = vmatmul.mubr.bf16.gmra.mrb[0].mxu0 %v6977
      %v7147 = vpop.f32.mrb[0].mxu0
      %v7148 = vadd.f32 0.0, %v7147
      %v7149 = vpop.f32.mrb[0].mxu0
      %v7150 = vpop.f32.mrb[0].mxu0
      %v7151 = vadd.f32 0.0, %v7150
      %v7152 = vpop.f32.mrb[0].mxu0
      %7153 = vmatprep.mubr.bf16.mxu0 0
      %7154 = vmatmul.mubr.bf16.gmra.mrb[0].mxu0 %v6980
      %v7155 = vpop.f32.mrb[0].mxu0
      %v7156 = vadd.f32 0.0, %v7155
      %v7157 = vpop.f32.mrb[0].mxu0
      %v7158 = vpop.f32.mrb[0].mxu0
      %v7159 = vadd.f32 0.0, %v7158
      %v7160 = vpop.f32.mrb[0].mxu0
      %7161 = vdwg.mxu0
      %v7162 = vadd.f32 %v6723, %v7020
      %v7163 = vadd.f32 %v6724, %v7023
      %v7164 = vadd.f32 %v6725, %v7028
      %v7165 = vadd.f32 %v6726, %v7031
      %v7166 = vadd.f32 %v6727, %v7036
      %v7167 = vadd.f32 %v6728, %v7039
      %v7168 = vadd.f32 %v6729, %v7044
      %v7169 = vadd.f32 %v6730, %v7047
      %v7170 = vadd.f32 %v6731, %v7052
      %v7171 = vadd.f32 %v6732, %v7055
      %v7172 = vadd.f32 %v6733, %v7060
      %v7173 = vadd.f32 %v6734, %v7063
      %v7174 = vadd.f32 %v6735, %v7068
      %v7175 = vadd.f32 %v6736, %v7071
      %v7176 = vadd.f32 %v6737, %v7076
      %v7177 = vadd.f32 %v6738, %v7079
      %v7178 = vadd.f32 %v6739, %v7084
      %v7179 = vadd.f32 %v6740, %v7087
      %v7180 = vadd.f32 %v6741, %v7092
      %v7181 = vadd.f32 %v6742, %v7095
      %v7182 = vadd.f32 %v6743, %v7100
      %v7183 = vadd.f32 %v6744, %v7103
      %v7184 = vadd.f32 %v6745, %v7108
      %v7185 = vadd.f32 %v6746, %v7111
      %v7186 = vadd.f32 %v6747, %v7116
      %v7187 = vadd.f32 %v6748, %v7119
      %v7188 = vadd.f32 %v6749, %v7124
      %v7189 = vadd.f32 %v6750, %v7127
      %v7190 = vadd.f32 %v6751, %v7132
      %v7191 = vadd.f32 %v6752, %v7135
      %v7192 = vadd.f32 %v6753, %v7140
      %v7193 = vadd.f32 %v6754, %v7143
      %v7194 = vadd.f32 %v6755, %v7148
      %v7195 = vadd.f32 %v6756, %v7151
      %v7196 = vadd.f32 %v6757, %v7156
      %v7197 = vadd.f32 %v6758, %v7159
      %v7198 = vld [vmem:[#allocation2 + $0xa0] sm:$0x7]
      %s7199 = scalar_lea.vmem %s2, 112
      %v7200 = vld [vmem:[%s7199] sm:$0xf]
      %v7201 = vld [vmem:[%s7199 + $0x4] sm:$0xf]
      %v7202 = vld [vmem:[%s7199 + $0x8] sm:$0xf]
      %v7203 = vld [vmem:[%s7199 + $0xc] sm:$0xf]
      %v7205 = vunpack.c.l.b16 %v7198
      %v7206 = vpack.c.b16 %v7205, %v7205
      %vm7207 = vsmask.f32 5376
      %v7209 = vshrl.u32 %v6424, 16
      %v7211 = vrot.slane %v7209, 2
      %v7212 = vshll.u32 %v6424, 16
      %v7214 = vrot.slane %v7212, 3
      %v7215 = vor.u32 %v7211, %v7214
      %v7217 = vshrl.u32 %v6425, 16
      %v7219 = vrot.slane %v7217, 2
      %v7220 = vshll.u32 %v6425, 16
      %v7222 = vrot.slane %v7220, 3
      %v7223 = vor.u32 %v7219, %v7222
      %v7224 = vsel %vm7207, %v7215, %v7223
      %v7226 = vshrl.u32 %v6426, 16
      %v7228 = vrot.slane %v7226, 2
      %v7229 = vshll.u32 %v6426, 16
      %v7231 = vrot.slane %v7229, 3
      %v7232 = vor.u32 %v7228, %v7231
      %v7233 = vsel %vm7207, %v7223, %v7232
      %v7235 = vshrl.u32 %v6427, 16
      %v7237 = vrot.slane %v7235, 2
      %v7238 = vshll.u32 %v6427, 16
      %v7240 = vrot.slane %v7238, 3
      %v7241 = vor.u32 %v7237, %v7240
      %v7242 = vsel %vm7207, %v7232, %v7241
      %v7244 = vshrl.u32 %v6428, 16
      %v7246 = vrot.slane %v7244, 2
      %v7247 = vshll.u32 %v6428, 16
      %v7249 = vrot.slane %v7247, 3
      %v7250 = vor.u32 %v7246, %v7249
      %v7251 = vsel %vm7207, %v7241, %v7250
      %v7253 = vshrl.u32 %v6429, 16
      %v7255 = vrot.slane %v7253, 2
      %v7256 = vshll.u32 %v6429, 16
      %v7258 = vrot.slane %v7256, 3
      %v7259 = vor.u32 %v7255, %v7258
      %v7260 = vsel %vm7207, %v7250, %v7259
      %v7262 = vshrl.u32 %v6430, 16
      %v7264 = vrot.slane %v7262, 2
      %v7265 = vshll.u32 %v6430, 16
      %v7267 = vrot.slane %v7265, 3
      %v7268 = vor.u32 %v7264, %v7267
      %v7269 = vsel %vm7207, %v7259, %v7268
      %v7271 = vshrl.u32 %v6431, 16
      %v7273 = vrot.slane %v7271, 2
      %v7274 = vshll.u32 %v6431, 16
      %v7276 = vrot.slane %v7274, 3
      %v7277 = vor.u32 %v7273, %v7276
      %v7278 = vsel %vm7207, %v7268, %v7277
      %v7280 = vshrl.u32 %v6432, 16
      %v7282 = vrot.slane %v7280, 2
      %v7283 = vshll.u32 %v6432, 16
      %v7285 = vrot.slane %v7283, 3
      %v7286 = vor.u32 %v7282, %v7285
      %v7287 = vsel %vm7207, %v7277, %v7286
      %v7289 = vshrl.u32 %v6433, 16
      %v7291 = vrot.slane %v7289, 2
      %v7292 = vshll.u32 %v6433, 16
      %v7294 = vrot.slane %v7292, 3
      %v7295 = vor.u32 %v7291, %v7294
      %v7296 = vsel %vm7207, %v7286, %v7295
      %v7298 = vshrl.u32 %v6434, 16
      %v7300 = vrot.slane %v7298, 2
      %v7301 = vshll.u32 %v6434, 16
      %v7303 = vrot.slane %v7301, 3
      %v7304 = vor.u32 %v7300, %v7303
      %v7305 = vsel %vm7207, %v7295, %v7304
      %v7307 = vshrl.u32 %v6435, 16
      %v7309 = vrot.slane %v7307, 2
      %v7310 = vshll.u32 %v6435, 16
      %v7312 = vrot.slane %v7310, 3
      %v7313 = vor.u32 %v7309, %v7312
      %v7314 = vsel %vm7207, %v7304, %v7313
      %v7316 = vshrl.u32 %v6436, 16
      %v7318 = vrot.slane %v7316, 2
      %v7319 = vshll.u32 %v6436, 16
      %v7321 = vrot.slane %v7319, 3
      %v7322 = vor.u32 %v7318, %v7321
      %v7323 = vsel %vm7207, %v7313, %v7322
      %v7325 = vshrl.u32 %v6437, 16
      %v7327 = vrot.slane %v7325, 2
      %v7328 = vshll.u32 %v6437, 16
      %v7330 = vrot.slane %v7328, 3
      %v7331 = vor.u32 %v7327, %v7330
      %v7332 = vsel %vm7207, %v7322, %v7331
      %v7334 = vshrl.u32 %v6438, 16
      %v7336 = vrot.slane %v7334, 2
      %v7337 = vshll.u32 %v6438, 16
      %v7339 = vrot.slane %v7337, 3
      %v7340 = vor.u32 %v7336, %v7339
      %v7341 = vsel %vm7207, %v7331, %v7340
      %v7343 = vshrl.u32 %v6439, 16
      %v7345 = vrot.slane %v7343, 2
      %v7346 = vshll.u32 %v6439, 16
      %v7348 = vrot.slane %v7346, 3
      %v7349 = vor.u32 %v7345, %v7348
      %v7350 = vsel %vm7207, %v7340, %v7349
      %v7352 = vshrl.u32 %v6440, 16
      %v7354 = vrot.slane %v7352, 2
      %v7355 = vshll.u32 %v6440, 16
      %v7357 = vrot.slane %v7355, 3
      %v7358 = vor.u32 %v7354, %v7357
      %v7359 = vsel %vm7207, %v7349, %v7358
      %v7361 = vshrl.u32 %v6441, 16
      %v7363 = vrot.slane %v7361, 2
      %v7364 = vshll.u32 %v6441, 16
      %v7366 = vrot.slane %v7364, 3
      %v7367 = vor.u32 %v7363, %v7366
      %v7368 = vsel %vm7207, %v7358, %v7367
      %v7370 = vshrl.u32 %v7206, 16
      %v7372 = vrot.slane %v7370, 2
      %v7373 = vshll.u32 %v7206, 16
      %v7375 = vrot.slane %v7373, 3
      %v7376 = vor.u32 %v7372, %v7375
      %v7377 = vsel %vm7207, %v7367, %v7376
      %v7382 = vunpack.c.l.b16 %v7200
      %v7383 = vunpack.c.l.b16 %v7201
      %v7384 = vunpack.c.l.b16 %v7202
      %v7385 = vunpack.c.l.b16 %v7203
      %v7386 = vpack.c.b16 %v7383, %v7382
      %v7387 = vpack.c.b16 %v7385, %v7384
      %v7391 = vsel %vm1890, %v7224, 0
      %v7394 = vsel %vm1890, %v7233, 0
      %v7397 = vsel %vm1890, %v7242, 0
      %v7400 = vsel %vm1890, %v7251, 0
      %v7403 = vsel %vm1890, %v7260, 0
      %v7406 = vsel %vm1890, %v7269, 0
      %v7409 = vsel %vm1890, %v7278, 0
      %v7412 = vsel %vm1890, %v7287, 0
      %v7415 = vsel %vm1890, %v7296, 0
      %v7418 = vsel %vm1890, %v7305, 0
      %v7421 = vsel %vm1890, %v7314, 0
      %v7424 = vsel %vm1890, %v7323, 0
      %v7427 = vsel %vm1890, %v7332, 0
      %v7430 = vsel %vm1890, %v7341, 0
      %v7433 = vsel %vm1890, %v7350, 0
      %v7436 = vsel %vm1890, %v7359, 0
      %v7439 = vsel %vm1890, %v7368, 0
      %v7442 = vsel %vm1890, %v7377, 0
      %7444 = vmatprep.subr.bf16.mxu0 0
      %7445 = vmatpush1.bf16.msra.mxu0 %v7386
      %7446 = vmatprep.subr.bf16.mxu0 0
      %7447 = vmatpush1.bf16.msra.mxu0 %v7387
      %7448 = vmatprep.subr.bf16.mxu0 0
      %7449 = vmatpush1.bf16.msra.mxu0 0
      %7450 = vmatprep.subr.bf16.mxu0 0
      %7451 = vmatpush1.bf16.msra.mxu0 0
      %7452 = vmatprep.subr.bf16.mxu0 0
      %7453 = vmatpush1.bf16.msra.mxu0 0
      %7454 = vmatprep.subr.bf16.mxu0 0
      %7455 = vmatpush1.bf16.msra.mxu0 0
      %7456 = vmatprep.subr.bf16.mxu0 0
      %7457 = vmatpush1.bf16.msra.mxu0 0
      %7458 = vmatprep.subr.bf16.mxu0 0
      %7459 = vmatpush1.bf16.msra.mxu0 0
      %7460 = vmatprep.subr.bf16.mxu0 0
      %7461 = vmatpush1.bf16.msra.mxu0 0
      %7462 = vmatprep.subr.bf16.mxu0 0
      %7463 = vmatpush1.bf16.msra.mxu0 0
      %7464 = vmatprep.subr.bf16.mxu0 0
      %7465 = vmatpush1.bf16.msra.mxu0 0
      %7466 = vmatprep.subr.bf16.mxu0 0
      %7467 = vmatpush1.bf16.msra.mxu0 0
      %7468 = vmatprep.subr.bf16.mxu0 0
      %7469 = vmatpush1.bf16.msra.mxu0 0
      %7470 = vmatprep.subr.bf16.mxu0 0
      %7471 = vmatpush1.bf16.msra.mxu0 0
      %7472 = vmatprep.subr.bf16.mxu0 0
      %7473 = vmatpush1.bf16.msra.mxu0 0
      %7474 = vmatprep.subr.bf16.mxu0 0
      %7475 = vmatpush1.bf16.msra.mxu0 0
      %7476 = vmatprep.mubr.bf16.mxu0 0
      %7477 = vmatmul.mubr.bf16.gmra.mrb[0].mxu0 %v7391
      %v7478 = vpop.f32.mrb[0].mxu0
      %v7479 = vadd.f32 0.0, %v7478
      %v7480 = vpop.f32.mrb[0].mxu0
      %v7481 = vpop.f32.mrb[0].mxu0
      %v7482 = vadd.f32 0.0, %v7481
      %v7483 = vpop.f32.mrb[0].mxu0
      %7484 = vmatprep.mubr.bf16.mxu0 0
      %7485 = vmatmul.mubr.bf16.gmra.mrb[0].mxu0 %v7394
      %v7486 = vpop.f32.mrb[0].mxu0
      %v7487 = vadd.f32 0.0, %v7486
      %v7488 = vpop.f32.mrb[0].mxu0
      %v7489 = vpop.f32.mrb[0].mxu0
      %v7490 = vadd.f32 0.0, %v7489
      %v7491 = vpop.f32.mrb[0].mxu0
      %7492 = vmatprep.mubr.bf16.mxu0 0
      %7493 = vmatmul.mubr.bf16.gmra.mrb[0].mxu0 %v7397
      %v7494 = vpop.f32.mrb[0].mxu0
      %v7495 = vadd.f32 0.0, %v7494
      %v7496 = vpop.f32.mrb[0].mxu0
      %v7497 = vpop.f32.mrb[0].mxu0
      %v7498 = vadd.f32 0.0, %v7497
      %v7499 = vpop.f32.mrb[0].mxu0
      %7500 = vmatprep.mubr.bf16.mxu0 0
      %7501 = vmatmul.mubr.bf16.gmra.mrb[0].mxu0 %v7400
      %v7502 = vpop.f32.mrb[0].mxu0
      %v7503 = vadd.f32 0.0, %v7502
      %v7504 = vpop.f32.mrb[0].mxu0
      %v7505 = vpop.f32.mrb[0].mxu0
      %v7506 = vadd.f32 0.0, %v7505
      %v7507 = vpop.f32.mrb[0].mxu0
      %7508 = vmatprep.mubr.bf16.mxu0 0
      %7509 = vmatmul.mubr.bf16.gmra.mrb[0].mxu0 %v7403
      %v7510 = vpop.f32.mrb[0].mxu0
      %v7511 = vadd.f32 0.0, %v7510
      %v7512 = vpop.f32.mrb[0].mxu0
      %v7513 = vpop.f32.mrb[0].mxu0
      %v7514 = vadd.f32 0.0, %v7513
      %v7515 = vpop.f32.mrb[0].mxu0
      %7516 = vmatprep.mubr.bf16.mxu0 0
      %7517 = vmatmul.mubr.bf16.gmra.mrb[0].mxu0 %v7406
      %v7518 = vpop.f32.mrb[0].mxu0
      %v7519 = vadd.f32 0.0, %v7518
      %v7520 = vpop.f32.mrb[0].mxu0
      %v7521 = vpop.f32.mrb[0].mxu0
      %v7522 = vadd.f32 0.0, %v7521
      %v7523 = vpop.f32.mrb[0].mxu0
      %7524 = vmatprep.mubr.bf16.mxu0 0
      %7525 = vmatmul.mubr.bf16.gmra.mrb[0].mxu0 %v7409
      %v7526 = vpop.f32.mrb[0].mxu0
      %v7527 = vadd.f32 0.0, %v7526
      %v7528 = vpop.f32.mrb[0].mxu0
      %v7529 = vpop.f32.mrb[0].mxu0
      %v7530 = vadd.f32 0.0, %v7529
      %v7531 = vpop.f32.mrb[0].mxu0
      %7532 = vmatprep.mubr.bf16.mxu0 0
      %7533 = vmatmul.mubr.bf16.gmra.mrb[0].mxu0 %v7412
      %v7534 = vpop.f32.mrb[0].mxu0
      %v7535 = vadd.f32 0.0, %v7534
      %v7536 = vpop.f32.mrb[0].mxu0
      %v7537 = vpop.f32.mrb[0].mxu0
      %v7538 = vadd.f32 0.0, %v7537
      %v7539 = vpop.f32.mrb[0].mxu0
      %7540 = vmatprep.mubr.bf16.mxu0 0
      %7541 = vmatmul.mubr.bf16.gmra.mrb[0].mxu0 %v7415
      %v7542 = vpop.f32.mrb[0].mxu0
      %v7543 = vadd.f32 0.0, %v7542
      %v7544 = vpop.f32.mrb[0].mxu0
      %v7545 = vpop.f32.mrb[0].mxu0
      %v7546 = vadd.f32 0.0, %v7545
      %v7547 = vpop.f32.mrb[0].mxu0
      %7548 = vmatprep.mubr.bf16.mxu0 0
      %7549 = vmatmul.mubr.bf16.gmra.mrb[0].mxu0 %v7418
      %v7550 = vpop.f32.mrb[0].mxu0
      %v7551 = vadd.f32 0.0, %v7550
      %v7552 = vpop.f32.mrb[0].mxu0
      %v7553 = vpop.f32.mrb[0].mxu0
      %v7554 = vadd.f32 0.0, %v7553
      %v7555 = vpop.f32.mrb[0].mxu0
      %7556 = vmatprep.mubr.bf16.mxu0 0
      %7557 = vmatmul.mubr.bf16.gmra.mrb[0].mxu0 %v7421
      %v7558 = vpop.f32.mrb[0].mxu0
      %v7559 = vadd.f32 0.0, %v7558
      %v7560 = vpop.f32.mrb[0].mxu0
      %v7561 = vpop.f32.mrb[0].mxu0
      %v7562 = vadd.f32 0.0, %v7561
      %v7563 = vpop.f32.mrb[0].mxu0
      %7564 = vmatprep.mubr.bf16.mxu0 0
      %7565 = vmatmul.mubr.bf16.gmra.mrb[0].mxu0 %v7424
      %v7566 = vpop.f32.mrb[0].mxu0
      %v7567 = vadd.f32 0.0, %v7566
      %v7568 = vpop.f32.mrb[0].mxu0
      %v7569 = vpop.f32.mrb[0].mxu0
      %v7570 = vadd.f32 0.0, %v7569
      %v7571 = vpop.f32.mrb[0].mxu0
      %7572 = vmatprep.mubr.bf16.mxu0 0
      %7573 = vmatmul.mubr.bf16.gmra.mrb[0].mxu0 %v7427
      %v7574 = vpop.f32.mrb[0].mxu0
      %v7575 = vadd.f32 0.0, %v7574
      %v7576 = vpop.f32.mrb[0].mxu0
      %v7577 = vpop.f32.mrb[0].mxu0
      %v7578 = vadd.f32 0.0, %v7577
      %v7579 = vpop.f32.mrb[0].mxu0
      %7580 = vmatprep.mubr.bf16.mxu0 0
      %7581 = vmatmul.mubr.bf16.gmra.mrb[0].mxu0 %v7430
      %v7582 = vpop.f32.mrb[0].mxu0
      %v7583 = vadd.f32 0.0, %v7582
      %v7584 = vpop.f32.mrb[0].mxu0
      %v7585 = vpop.f32.mrb[0].mxu0
      %v7586 = vadd.f32 0.0, %v7585
      %v7587 = vpop.f32.mrb[0].mxu0
      %7588 = vmatprep.mubr.bf16.mxu0 0
      %7589 = vmatmul.mubr.bf16.gmra.mrb[0].mxu0 %v7433
      %v7590 = vpop.f32.mrb[0].mxu0
      %v7591 = vadd.f32 0.0, %v7590
      %v7592 = vpop.f32.mrb[0].mxu0
      %v7593 = vpop.f32.mrb[0].mxu0
      %v7594 = vadd.f32 0.0, %v7593
      %v7595 = vpop.f32.mrb[0].mxu0
      %7596 = vmatprep.mubr.bf16.mxu0 0
      %7597 = vmatmul.mubr.bf16.gmra.mrb[0].mxu0 %v7436
      %v7598 = vpop.f32.mrb[0].mxu0
      %v7599 = vadd.f32 0.0, %v7598
      %v7600 = vpop.f32.mrb[0].mxu0
      %v7601 = vpop.f32.mrb[0].mxu0
      %v7602 = vadd.f32 0.0, %v7601
      %v7603 = vpop.f32.mrb[0].mxu0
      %7604 = vmatprep.mubr.bf16.mxu0 0
      %7605 = vmatmul.mubr.bf16.gmra.mrb[0].mxu0 %v7439
      %v7606 = vpop.f32.mrb[0].mxu0
      %v7607 = vadd.f32 0.0, %v7606
      %v7608 = vpop.f32.mrb[0].mxu0
      %v7609 = vpop.f32.mrb[0].mxu0
      %v7610 = vadd.f32 0.0, %v7609
      %v7611 = vpop.f32.mrb[0].mxu0
      %7612 = vmatprep.mubr.bf16.mxu0 0
      %7613 = vmatmul.mubr.bf16.gmra.mrb[0].mxu0 %v7442
      %v7614 = vpop.f32.mrb[0].mxu0
      %v7615 = vadd.f32 0.0, %v7614
      %v7616 = vpop.f32.mrb[0].mxu0
      %v7617 = vpop.f32.mrb[0].mxu0
      %v7618 = vadd.f32 0.0, %v7617
      %v7619 = vpop.f32.mrb[0].mxu0
      %7620 = vdwg.mxu0
      %v7621 = vadd.f32 %v7162, %v7479
      %v7622 = vadd.f32 %v7163, %v7482
      %v7623 = vadd.f32 %v7164, %v7487
      %v7624 = vadd.f32 %v7165, %v7490
      %v7625 = vadd.f32 %v7166, %v7495
      %v7626 = vadd.f32 %v7167, %v7498
      %v7627 = vadd.f32 %v7168, %v7503
      %v7628 = vadd.f32 %v7169, %v7506
      %v7629 = vadd.f32 %v7170, %v7511
      %v7630 = vadd.f32 %v7171, %v7514
      %v7631 = vadd.f32 %v7172, %v7519
      %v7632 = vadd.f32 %v7173, %v7522
      %v7633 = vadd.f32 %v7174, %v7527
      %v7634 = vadd.f32 %v7175, %v7530
      %v7635 = vadd.f32 %v7176, %v7535
      %v7636 = vadd.f32 %v7177, %v7538
      %v7637 = vadd.f32 %v7178, %v7543
      %v7638 = vadd.f32 %v7179, %v7546
      %v7639 = vadd.f32 %v7180, %v7551
      %v7640 = vadd.f32 %v7181, %v7554
      %v7641 = vadd.f32 %v7182, %v7559
      %v7642 = vadd.f32 %v7183, %v7562
      %v7643 = vadd.f32 %v7184, %v7567
      %v7644 = vadd.f32 %v7185, %v7570
      %v7645 = vadd.f32 %v7186, %v7575
      %v7646 = vadd.f32 %v7187, %v7578
      %v7647 = vadd.f32 %v7188, %v7583
      %v7648 = vadd.f32 %v7189, %v7586
      %v7649 = vadd.f32 %v7190, %v7591
      %v7650 = vadd.f32 %v7191, %v7594
      %v7651 = vadd.f32 %v7192, %v7599
      %v7652 = vadd.f32 %v7193, %v7602
      %v7653 = vadd.f32 %v7194, %v7607
      %v7654 = vadd.f32 %v7195, %v7610
      %v7655 = vadd.f32 %v7196, %v7615
      %v7656 = vadd.f32 %v7197, %v7618
      %v7657 = vld [vmem:[#allocation3 + $0xa0] sm:$0x7]
      %s7658 = scalar_lea.vmem %s3, 14
      %v7659 = vld [vmem:[%s7658] sm:$0x3]
      %v7661 = vunpack.c.l.b16 %v7657
      %v7662 = vpack.c.b16 %v7661, %v7661
      %v7664 = vshrl.u32 %v6872, 16
      %v7666 = vrot.slane %v7664, 2
      %v7667 = vshll.u32 %v6872, 16
      %v7669 = vrot.slane %v7667, 3
      %v7670 = vor.u32 %v7666, %v7669
      %v7672 = vshrl.u32 %v6873, 16
      %v7674 = vrot.slane %v7672, 2
      %v7675 = vshll.u32 %v6873, 16
      %v7677 = vrot.slane %v7675, 3
      %v7678 = vor.u32 %v7674, %v7677
      %v7679 = vsel %vm7207, %v7670, %v7678
      %v7681 = vshrl.u32 %v6874, 16
      %v7683 = vrot.slane %v7681, 2
      %v7684 = vshll.u32 %v6874, 16
      %v7686 = vrot.slane %v7684, 3
      %v7687 = vor.u32 %v7683, %v7686
      %v7688 = vsel %vm7207, %v7678, %v7687
      %v7690 = vshrl.u32 %v6875, 16
      %v7692 = vrot.slane %v7690, 2
      %v7693 = vshll.u32 %v6875, 16
      %v7695 = vrot.slane %v7693, 3
      %v7696 = vor.u32 %v7692, %v7695
      %v7697 = vsel %vm7207, %v7687, %v7696
      %v7699 = vshrl.u32 %v6876, 16
      %v7701 = vrot.slane %v7699, 2
      %v7702 = vshll.u32 %v6876, 16
      %v7704 = vrot.slane %v7702, 3
      %v7705 = vor.u32 %v7701, %v7704
      %v7706 = vsel %vm7207, %v7696, %v7705
      %v7708 = vshrl.u32 %v6877, 16
      %v7710 = vrot.slane %v7708, 2
      %v7711 = vshll.u32 %v6877, 16
      %v7713 = vrot.slane %v7711, 3
      %v7714 = vor.u32 %v7710, %v7713
      %v7715 = vsel %vm7207, %v7705, %v7714
      %v7717 = vshrl.u32 %v6878, 16
      %v7719 = vrot.slane %v7717, 2
      %v7720 = vshll.u32 %v6878, 16
      %v7722 = vrot.slane %v7720, 3
      %v7723 = vor.u32 %v7719, %v7722
      %v7724 = vsel %vm7207, %v7714, %v7723
      %v7726 = vshrl.u32 %v6879, 16
      %v7728 = vrot.slane %v7726, 2
      %v7729 = vshll.u32 %v6879, 16
      %v7731 = vrot.slane %v7729, 3
      %v7732 = vor.u32 %v7728, %v7731
      %v7733 = vsel %vm7207, %v7723, %v7732
      %v7735 = vshrl.u32 %v6880, 16
      %v7737 = vrot.slane %v7735, 2
      %v7738 = vshll.u32 %v6880, 16
      %v7740 = vrot.slane %v7738, 3
      %v7741 = vor.u32 %v7737, %v7740
      %v7742 = vsel %vm7207, %v7732, %v7741
      %v7744 = vshrl.u32 %v6881, 16
      %v7746 = vrot.slane %v7744, 2
      %v7747 = vshll.u32 %v6881, 16
      %v7749 = vrot.slane %v7747, 3
      %v7750 = vor.u32 %v7746, %v7749
      %v7751 = vsel %vm7207, %v7741, %v7750
      %v7753 = vshrl.u32 %v6882, 16
      %v7755 = vrot.slane %v7753, 2
      %v7756 = vshll.u32 %v6882, 16
      %v7758 = vrot.slane %v7756, 3
      %v7759 = vor.u32 %v7755, %v7758
      %v7760 = vsel %vm7207, %v7750, %v7759
      %v7762 = vshrl.u32 %v6883, 16
      %v7764 = vrot.slane %v7762, 2
      %v7765 = vshll.u32 %v6883, 16
      %v7767 = vrot.slane %v7765, 3
      %v7768 = vor.u32 %v7764, %v7767
      %v7769 = vsel %vm7207, %v7759, %v7768
      %v7771 = vshrl.u32 %v6884, 16
      %v7773 = vrot.slane %v7771, 2
      %v7774 = vshll.u32 %v6884, 16
      %v7776 = vrot.slane %v7774, 3
      %v7777 = vor.u32 %v7773, %v7776
      %v7778 = vsel %vm7207, %v7768, %v7777
      %v7780 = vshrl.u32 %v6885, 16
      %v7782 = vrot.slane %v7780, 2
      %v7783 = vshll.u32 %v6885, 16
      %v7785 = vrot.slane %v7783, 3
      %v7786 = vor.u32 %v7782, %v7785
      %v7787 = vsel %vm7207, %v7777, %v7786
      %v7789 = vshrl.u32 %v6886, 16
      %v7791 = vrot.slane %v7789, 2
      %v7792 = vshll.u32 %v6886, 16
      %v7794 = vrot.slane %v7792, 3
      %v7795 = vor.u32 %v7791, %v7794
      %v7796 = vsel %vm7207, %v7786, %v7795
      %v7798 = vshrl.u32 %v6887, 16
      %v7800 = vrot.slane %v7798, 2
      %v7801 = vshll.u32 %v6887, 16
      %v7803 = vrot.slane %v7801, 3
      %v7804 = vor.u32 %v7800, %v7803
      %v7805 = vsel %vm7207, %v7795, %v7804
      %v7807 = vshrl.u32 %v6888, 16
      %v7809 = vrot.slane %v7807, 2
      %v7810 = vshll.u32 %v6888, 16
      %v7812 = vrot.slane %v7810, 3
      %v7813 = vor.u32 %v7809, %v7812
      %v7814 = vsel %vm7207, %v7804, %v7813
      %v7816 = vshrl.u32 %v6889, 16
      %v7818 = vrot.slane %v7816, 2
      %v7819 = vshll.u32 %v6889, 16
      %v7821 = vrot.slane %v7819, 3
      %v7822 = vor.u32 %v7818, %v7821
      %v7823 = vsel %vm7207, %v7813, %v7822
      %v7825 = vshrl.u32 %v7662, 16
      %v7827 = vrot.slane %v7825, 2
      %v7828 = vshll.u32 %v7662, 16
      %v7830 = vrot.slane %v7828, 3
      %v7831 = vor.u32 %v7827, %v7830
      %v7832 = vsel %vm7207, %v7822, %v7831
      %v7834 = vsel %vm1552, %v7679, 0
      %v7837 = vsel %vm1552, %v7688, 0
      %v7840 = vsel %vm1552, %v7697, 0
      %v7843 = vsel %vm1552, %v7706, 0
      %v7846 = vsel %vm1552, %v7715, 0
      %v7849 = vsel %vm1552, %v7724, 0
      %v7852 = vsel %vm1552, %v7733, 0
      %v7855 = vsel %vm1552, %v7742, 0
      %v7858 = vsel %vm1552, %v7751, 0
      %v7861 = vsel %vm1552, %v7760, 0
      %v7864 = vsel %vm1552, %v7769, 0
      %v7867 = vsel %vm1552, %v7778, 0
      %v7870 = vsel %vm1552, %v7787, 0
      %v7873 = vsel %vm1552, %v7796, 0
      %v7876 = vsel %vm1552, %v7805, 0
      %v7879 = vsel %vm1552, %v7814, 0
      %v7882 = vsel %vm1552, %v7823, 0
      %v7885 = vsel %vm1552, %v7832, 0
      %v7888 = vsel %vm1607, %v7659, 0
      %7890 = vmatprep.subr.bf16.mxu0 0
      %7891 = vmatpush1.bf16.msra.mxu0 %v7888
      %7892 = vmatprep.subr.bf16.mxu0 0
      %7893 = vmatpush1.bf16.msra.mxu0 0
      %7894 = vmatprep.subr.bf16.mxu0 0
      %7895 = vmatpush1.bf16.msra.mxu0 0
      %7896 = vmatprep.subr.bf16.mxu0 0
      %7897 = vmatpush1.bf16.msra.mxu0 0
      %7898 = vmatprep.subr.bf16.mxu0 0
      %7899 = vmatpush1.bf16.msra.mxu0 0
      %7900 = vmatprep.subr.bf16.mxu0 0
      %7901 = vmatpush1.bf16.msra.mxu0 0
      %7902 = vmatprep.subr.bf16.mxu0 0
      %7903 = vmatpush1.bf16.msra.mxu0 0
      %7904 = vmatprep.subr.bf16.mxu0 0
      %7905 = vmatpush1.bf16.msra.mxu0 0
      %7906 = vmatprep.subr.bf16.mxu0 0
      %7907 = vmatpush1.bf16.msra.mxu0 0
      %7908 = vmatprep.subr.bf16.mxu0 0
      %7909 = vmatpush1.bf16.msra.mxu0 0
      %7910 = vmatprep.subr.bf16.mxu0 0
      %7911 = vmatpush1.bf16.msra.mxu0 0
      %7912 = vmatprep.subr.bf16.mxu0 0
      %7913 = vmatpush1.bf16.msra.mxu0 0
      %7914 = vmatprep.subr.bf16.mxu0 0
      %7915 = vmatpush1.bf16.msra.mxu0 0
      %7916 = vmatprep.subr.bf16.mxu0 0
      %7917 = vmatpush1.bf16.msra.mxu0 0
      %7918 = vmatprep.subr.bf16.mxu0 0
      %7919 = vmatpush1.bf16.msra.mxu0 0
      %7920 = vmatprep.subr.bf16.mxu0 0
      %7921 = vmatpush1.bf16.msra.mxu0 0
      %7922 = vmatprep.mubr.bf16.mxu0 0
      %7923 = vmatmul.mubr.bf16.gmra.mrb[0].mxu0 %v7834
      %v7924 = vpop.f32.mrb[0].mxu0
      %v7925 = vadd.f32 0.0, %v7924
      %v7926 = vpop.f32.mrb[0].mxu0
      %v7927 = vpop.f32.mrb[0].mxu0
      %v7928 = vadd.f32 0.0, %v7927
      %v7929 = vpop.f32.mrb[0].mxu0
      %7930 = vmatprep.mubr.bf16.mxu0 0
      %7931 = vmatmul.mubr.bf16.gmra.mrb[0].mxu0 %v7837
      %v7932 = vpop.f32.mrb[0].mxu0
      %v7933 = vadd.f32 0.0, %v7932
      %v7934 = vpop.f32.mrb[0].mxu0
      %v7935 = vpop.f32.mrb[0].mxu0
      %v7936 = vadd.f32 0.0, %v7935
      %v7937 = vpop.f32.mrb[0].mxu0
      %7938 = vmatprep.mubr.bf16.mxu0 0
      %7939 = vmatmul.mubr.bf16.gmra.mrb[0].mxu0 %v7840
      %v7940 = vpop.f32.mrb[0].mxu0
      %v7941 = vadd.f32 0.0, %v7940
      %v7942 = vpop.f32.mrb[0].mxu0
      %v7943 = vpop.f32.mrb[0].mxu0
      %v7944 = vadd.f32 0.0, %v7943
      %v7945 = vpop.f32.mrb[0].mxu0
      %7946 = vmatprep.mubr.bf16.mxu0 0
      %7947 = vmatmul.mubr.bf16.gmra.mrb[0].mxu0 %v7843
      %v7948 = vpop.f32.mrb[0].mxu0
      %v7949 = vadd.f32 0.0, %v7948
      %v7950 = vpop.f32.mrb[0].mxu0
      %v7951 = vpop.f32.mrb[0].mxu0
      %v7952 = vadd.f32 0.0, %v7951
      %v7953 = vpop.f32.mrb[0].mxu0
      %7954 = vmatprep.mubr.bf16.mxu0 0
      %7955 = vmatmul.mubr.bf16.gmra.mrb[0].mxu0 %v7846
      %v7956 = vpop.f32.mrb[0].mxu0
      %v7957 = vadd.f32 0.0, %v7956
      %v7958 = vpop.f32.mrb[0].mxu0
      %v7959 = vpop.f32.mrb[0].mxu0
      %v7960 = vadd.f32 0.0, %v7959
      %v7961 = vpop.f32.mrb[0].mxu0
      %7962 = vmatprep.mubr.bf16.mxu0 0
      %7963 = vmatmul.mubr.bf16.gmra.mrb[0].mxu0 %v7849
      %v7964 = vpop.f32.mrb[0].mxu0
      %v7965 = vadd.f32 0.0, %v7964
      %v7966 = vpop.f32.mrb[0].mxu0
      %v7967 = vpop.f32.mrb[0].mxu0
      %v7968 = vadd.f32 0.0, %v7967
      %v7969 = vpop.f32.mrb[0].mxu0
      %7970 = vmatprep.mubr.bf16.mxu0 0
      %7971 = vmatmul.mubr.bf16.gmra.mrb[0].mxu0 %v7852
      %v7972 = vpop.f32.mrb[0].mxu0
      %v7973 = vadd.f32 0.0, %v7972
      %v7974 = vpop.f32.mrb[0].mxu0
      %v7975 = vpop.f32.mrb[0].mxu0
      %v7976 = vadd.f32 0.0, %v7975
      %v7977 = vpop.f32.mrb[0].mxu0
      %7978 = vmatprep.mubr.bf16.mxu0 0
      %7979 = vmatmul.mubr.bf16.gmra.mrb[0].mxu0 %v7855
      %v7980 = vpop.f32.mrb[0].mxu0
      %v7981 = vadd.f32 0.0, %v7980
      %v7982 = vpop.f32.mrb[0].mxu0
      %v7983 = vpop.f32.mrb[0].mxu0
      %v7984 = vadd.f32 0.0, %v7983
      %v7985 = vpop.f32.mrb[0].mxu0
      %7986 = vmatprep.mubr.bf16.mxu0 0
      %7987 = vmatmul.mubr.bf16.gmra.mrb[0].mxu0 %v7858
      %v7988 = vpop.f32.mrb[0].mxu0
      %v7989 = vadd.f32 0.0, %v7988
      %v7990 = vpop.f32.mrb[0].mxu0
      %v7991 = vpop.f32.mrb[0].mxu0
      %v7992 = vadd.f32 0.0, %v7991
      %v7993 = vpop.f32.mrb[0].mxu0
      %7994 = vmatprep.mubr.bf16.mxu0 0
      %7995 = vmatmul.mubr.bf16.gmra.mrb[0].mxu0 %v7861
      %v7996 = vpop.f32.mrb[0].mxu0
      %v7997 = vadd.f32 0.0, %v7996
      %v7998 = vpop.f32.mrb[0].mxu0
      %v7999 = vpop.f32.mrb[0].mxu0
      %v8000 = vadd.f32 0.0, %v7999
      %v8001 = vpop.f32.mrb[0].mxu0
      %8002 = vmatprep.mubr.bf16.mxu0 0
      %8003 = vmatmul.mubr.bf16.gmra.mrb[0].mxu0 %v7864
      %v8004 = vpop.f32.mrb[0].mxu0
      %v8005 = vadd.f32 0.0, %v8004
      %v8006 = vpop.f32.mrb[0].mxu0
      %v8007 = vpop.f32.mrb[0].mxu0
      %v8008 = vadd.f32 0.0, %v8007
      %v8009 = vpop.f32.mrb[0].mxu0
      %8010 = vmatprep.mubr.bf16.mxu0 0
      %8011 = vmatmul.mubr.bf16.gmra.mrb[0].mxu0 %v7867
      %v8012 = vpop.f32.mrb[0].mxu0
      %v8013 = vadd.f32 0.0, %v8012
      %v8014 = vpop.f32.mrb[0].mxu0
      %v8015 = vpop.f32.mrb[0].mxu0
      %v8016 = vadd.f32 0.0, %v8015
      %v8017 = vpop.f32.mrb[0].mxu0
      %8018 = vmatprep.mubr.bf16.mxu0 0
      %8019 = vmatmul.mubr.bf16.gmra.mrb[0].mxu0 %v7870
      %v8020 = vpop.f32.mrb[0].mxu0
      %v8021 = vadd.f32 0.0, %v8020
      %v8022 = vpop.f32.mrb[0].mxu0
      %v8023 = vpop.f32.mrb[0].mxu0
      %v8024 = vadd.f32 0.0, %v8023
      %v8025 = vpop.f32.mrb[0].mxu0
      %8026 = vmatprep.mubr.bf16.mxu0 0
      %8027 = vmatmul.mubr.bf16.gmra.mrb[0].mxu0 %v7873
      %v8028 = vpop.f32.mrb[0].mxu0
      %v8029 = vadd.f32 0.0, %v8028
      %v8030 = vpop.f32.mrb[0].mxu0
      %v8031 = vpop.f32.mrb[0].mxu0
      %v8032 = vadd.f32 0.0, %v8031
      %v8033 = vpop.f32.mrb[0].mxu0
      %8034 = vmatprep.mubr.bf16.mxu0 0
      %8035 = vmatmul.mubr.bf16.gmra.mrb[0].mxu0 %v7876
      %v8036 = vpop.f32.mrb[0].mxu0
      %v8037 = vadd.f32 0.0, %v8036
      %v8038 = vpop.f32.mrb[0].mxu0
      %v8039 = vpop.f32.mrb[0].mxu0
      %v8040 = vadd.f32 0.0, %v8039
      %v8041 = vpop.f32.mrb[0].mxu0
      %8042 = vmatprep.mubr.bf16.mxu0 0
      %8043 = vmatmul.mubr.bf16.gmra.mrb[0].mxu0 %v7879
      %v8044 = vpop.f32.mrb[0].mxu0
      %v8045 = vadd.f32 0.0, %v8044
      %v8046 = vpop.f32.mrb[0].mxu0
      %v8047 = vpop.f32.mrb[0].mxu0
      %v8048 = vadd.f32 0.0, %v8047
      %v8049 = vpop.f32.mrb[0].mxu0
      %8050 = vmatprep.mubr.bf16.mxu0 0
      %8051 = vmatmul.mubr.bf16.gmra.mrb[0].mxu0 %v7882
      %v8052 = vpop.f32.mrb[0].mxu0
      %v8053 = vadd.f32 0.0, %v8052
      %v8054 = vpop.f32.mrb[0].mxu0
      %v8055 = vpop.f32.mrb[0].mxu0
      %v8056 = vadd.f32 0.0, %v8055
      %v8057 = vpop.f32.mrb[0].mxu0
      %8058 = vmatprep.mubr.bf16.mxu0 0
      %8059 = vmatmul.mubr.bf16.gmra.mrb[0].mxu0 %v7885
      %v8060 = vpop.f32.mrb[0].mxu0
      %v8061 = vadd.f32 0.0, %v8060
      %v8062 = vpop.f32.mrb[0].mxu0
      %v8063 = vpop.f32.mrb[0].mxu0
      %v8064 = vadd.f32 0.0, %v8063
      %v8065 = vpop.f32.mrb[0].mxu0
      %8066 = vdwg.mxu0
      %v8067 = vadd.f32 %v7621, %v7925
      %v8068 = vadd.f32 %v7622, %v7928
      %v8069 = vadd.f32 %v7623, %v7933
      %v8070 = vadd.f32 %v7624, %v7936
      %v8071 = vadd.f32 %v7625, %v7941
      %v8072 = vadd.f32 %v7626, %v7944
      %v8073 = vadd.f32 %v7627, %v7949
      %v8074 = vadd.f32 %v7628, %v7952
      %v8075 = vadd.f32 %v7629, %v7957
      %v8076 = vadd.f32 %v7630, %v7960
      %v8077 = vadd.f32 %v7631, %v7965
      %v8078 = vadd.f32 %v7632, %v7968
      %v8079 = vadd.f32 %v7633, %v7973
      %v8080 = vadd.f32 %v7634, %v7976
      %v8081 = vadd.f32 %v7635, %v7981
      %v8082 = vadd.f32 %v7636, %v7984
      %v8083 = vadd.f32 %v7637, %v7989
      %v8084 = vadd.f32 %v7638, %v7992
      %v8085 = vadd.f32 %v7639, %v7997
      %v8086 = vadd.f32 %v7640, %v8000
      %v8087 = vadd.f32 %v7641, %v8005
      %v8088 = vadd.f32 %v7642, %v8008
      %v8089 = vadd.f32 %v7643, %v8013
      %v8090 = vadd.f32 %v7644, %v8016
      %v8091 = vadd.f32 %v7645, %v8021
      %v8092 = vadd.f32 %v7646, %v8024
      %v8093 = vadd.f32 %v7647, %v8029
      %v8094 = vadd.f32 %v7648, %v8032
      %v8095 = vadd.f32 %v7649, %v8037
      %v8096 = vadd.f32 %v7650, %v8040
      %v8097 = vadd.f32 %v7651, %v8045
      %v8098 = vadd.f32 %v7652, %v8048
      %v8099 = vadd.f32 %v7653, %v8053
      %v8100 = vadd.f32 %v7654, %v8056
      %v8101 = vadd.f32 %v7655, %v8061
      %v8102 = vadd.f32 %v7656, %v8064
      %v8103 = vld [vmem:[#allocation2 + $0x10] sm:$0x8]
      %s8104 = scalar_lea.vmem %s2, 128
      %v8105 = vld [vmem:[%s8104] sm:$0xf]
      %v8106 = vld [vmem:[%s8104 + $0x4] sm:$0xf]
      %v8107 = vld [vmem:[%s8104 + $0x8] sm:$0xf]
      %v8108 = vld [vmem:[%s8104 + $0xc] sm:$0xf]
      %v8110 = vunpack.c.l.b16 %v8103
      %v8111 = vpack.c.b16 %v6388, %v8110
      %vm8112 = vcmask 1044480
      %v8113 = vrot.slane %v8111, 3
      %v8114 = vrot.slane %v6425, 3
      %v8115 = vsel %vm8112, %v8113, %v8114
      %v8116 = vrot.slane %v6426, 3
      %v8117 = vsel %vm8112, %v8114, %v8116
      %v8118 = vrot.slane %v6427, 3
      %v8119 = vsel %vm8112, %v8116, %v8118
      %v8120 = vrot.slane %v6428, 3
      %v8121 = vsel %vm8112, %v8118, %v8120
      %v8122 = vrot.slane %v6429, 3
      %v8123 = vsel %vm8112, %v8120, %v8122
      %v8124 = vrot.slane %v6430, 3
      %v8125 = vsel %vm8112, %v8122, %v8124
      %v8126 = vrot.slane %v6431, 3
      %v8127 = vsel %vm8112, %v8124, %v8126
      %v8128 = vrot.slane %v6432, 3
      %v8129 = vsel %vm8112, %v8126, %v8128
      %v8130 = vrot.slane %v6433, 3
      %v8131 = vsel %vm8112, %v8128, %v8130
      %v8132 = vrot.slane %v6434, 3
      %v8133 = vsel %vm8112, %v8130, %v8132
      %v8134 = vrot.slane %v6435, 3
      %v8135 = vsel %vm8112, %v8132, %v8134
      %v8136 = vrot.slane %v6436, 3
      %v8137 = vsel %vm8112, %v8134, %v8136
      %v8138 = vrot.slane %v6437, 3
      %v8139 = vsel %vm8112, %v8136, %v8138
      %v8140 = vrot.slane %v6438, 3
      %v8141 = vsel %vm8112, %v8138, %v8140
      %v8142 = vrot.slane %v6439, 3
      %v8143 = vsel %vm8112, %v8140, %v8142
      %v8144 = vrot.slane %v6440, 3
      %v8145 = vsel %vm8112, %v8142, %v8144
      %v8146 = vrot.slane %v6441, 3
      %v8147 = vsel %vm8112, %v8144, %v8146
      %v8148 = vrot.slane %v7206, 3
      %v8149 = vsel %vm8112, %v8146, %v8148
      %v8154 = vunpack.c.l.b16 %v8105
      %v8155 = vunpack.c.l.b16 %v8106
      %v8156 = vunpack.c.l.b16 %v8107
      %v8157 = vunpack.c.l.b16 %v8108
      %v8158 = vpack.c.b16 %v8155, %v8154
      %v8159 = vpack.c.b16 %v8157, %v8156
      %v8163 = vsel %vm1890, %v8115, 0
      %v8166 = vsel %vm1890, %v8117, 0
      %v8169 = vsel %vm1890, %v8119, 0
      %v8172 = vsel %vm1890, %v8121, 0
      %v8175 = vsel %vm1890, %v8123, 0
      %v8178 = vsel %vm1890, %v8125, 0
      %v8181 = vsel %vm1890, %v8127, 0
      %v8184 = vsel %vm1890, %v8129, 0
      %v8187 = vsel %vm1890, %v8131, 0
      %v8190 = vsel %vm1890, %v8133, 0
      %v8193 = vsel %vm1890, %v8135, 0
      %v8196 = vsel %vm1890, %v8137, 0
      %v8199 = vsel %vm1890, %v8139, 0
      %v8202 = vsel %vm1890, %v8141, 0
      %v8205 = vsel %vm1890, %v8143, 0
      %v8208 = vsel %vm1890, %v8145, 0
      %v8211 = vsel %vm1890, %v8147, 0
      %v8214 = vsel %vm1890, %v8149, 0
      %8216 = vmatprep.subr.bf16.mxu0 0
      %8217 = vmatpush1.bf16.msra.mxu0 %v8158
      %8218 = vmatprep.subr.bf16.mxu0 0
      %8219 = vmatpush1.bf16.msra.mxu0 %v8159
      %8220 = vmatprep.subr.bf16.mxu0 0
      %8221 = vmatpush1.bf16.msra.mxu0 0
      %8222 = vmatprep.subr.bf16.mxu0 0
      %8223 = vmatpush1.bf16.msra.mxu0 0
      %8224 = vmatprep.subr.bf16.mxu0 0
      %8225 = vmatpush1.bf16.msra.mxu0 0
      %8226 = vmatprep.subr.bf16.mxu0 0
      %8227 = vmatpush1.bf16.msra.mxu0 0
      %8228 = vmatprep.subr.bf16.mxu0 0
      %8229 = vmatpush1.bf16.msra.mxu0 0
      %8230 = vmatprep.subr.bf16.mxu0 0
      %8231 = vmatpush1.bf16.msra.mxu0 0
      %8232 = vmatprep.subr.bf16.mxu0 0
      %8233 = vmatpush1.bf16.msra.mxu0 0
      %8234 = vmatprep.subr.bf16.mxu0 0
      %8235 = vmatpush1.bf16.msra.mxu0 0
      %8236 = vmatprep.subr.bf16.mxu0 0
      %8237 = vmatpush1.bf16.msra.mxu0 0
      %8238 = vmatprep.subr.bf16.mxu0 0
      %8239 = vmatpush1.bf16.msra.mxu0 0
      %8240 = vmatprep.subr.bf16.mxu0 0
      %8241 = vmatpush1.bf16.msra.mxu0 0
      %8242 = vmatprep.subr.bf16.mxu0 0
      %8243 = vmatpush1.bf16.msra.mxu0 0
      %8244 = vmatprep.subr.bf16.mxu0 0
      %8245 = vmatpush1.bf16.msra.mxu0 0
      %8246 = vmatprep.subr.bf16.mxu0 0
      %8247 = vmatpush1.bf16.msra.mxu0 0
      %8248 = vmatprep.mubr.bf16.mxu0 0
      %8249 = vmatmul.mubr.bf16.gmra.mrb[0].mxu0 %v8163
      %v8250 = vpop.f32.mrb[0].mxu0
      %v8251 = vadd.f32 0.0, %v8250
      %v8252 = vpop.f32.mrb[0].mxu0
      %v8253 = vpop.f32.mrb[0].mxu0
      %v8254 = vadd.f32 0.0, %v8253
      %v8255 = vpop.f32.mrb[0].mxu0
      %8256 = vmatprep.mubr.bf16.mxu0 0
      %8257 = vmatmul.mubr.bf16.gmra.mrb[0].mxu0 %v8166
      %v8258 = vpop.f32.mrb[0].mxu0
      %v8259 = vadd.f32 0.0, %v8258
      %v8260 = vpop.f32.mrb[0].mxu0
      %v8261 = vpop.f32.mrb[0].mxu0
      %v8262 = vadd.f32 0.0, %v8261
      %v8263 = vpop.f32.mrb[0].mxu0
      %8264 = vmatprep.mubr.bf16.mxu0 0
      %8265 = vmatmul.mubr.bf16.gmra.mrb[0].mxu0 %v8169
      %v8266 = vpop.f32.mrb[0].mxu0
      %v8267 = vadd.f32 0.0, %v8266
      %v8268 = vpop.f32.mrb[0].mxu0
      %v8269 = vpop.f32.mrb[0].mxu0
      %v8270 = vadd.f32 0.0, %v8269
      %v8271 = vpop.f32.mrb[0].mxu0
      %8272 = vmatprep.mubr.bf16.mxu0 0
      %8273 = vmatmul.mubr.bf16.gmra.mrb[0].mxu0 %v8172
      %v8274 = vpop.f32.mrb[0].mxu0
      %v8275 = vadd.f32 0.0, %v8274
      %v8276 = vpop.f32.mrb[0].mxu0
      %v8277 = vpop.f32.mrb[0].mxu0
      %v8278 = vadd.f32 0.0, %v8277
      %v8279 = vpop.f32.mrb[0].mxu0
      %8280 = vmatprep.mubr.bf16.mxu0 0
      %8281 = vmatmul.mubr.bf16.gmra.mrb[0].mxu0 %v8175
      %v8282 = vpop.f32.mrb[0].mxu0
      %v8283 = vadd.f32 0.0, %v8282
      %v8284 = vpop.f32.mrb[0].mxu0
      %v8285 = vpop.f32.mrb[0].mxu0
      %v8286 = vadd.f32 0.0, %v8285
      %v8287 = vpop.f32.mrb[0].mxu0
      %8288 = vmatprep.mubr.bf16.mxu0 0
      %8289 = vmatmul.mubr.bf16.gmra.mrb[0].mxu0 %v8178
      %v8290 = vpop.f32.mrb[0].mxu0
      %v8291 = vadd.f32 0.0, %v8290
      %v8292 = vpop.f32.mrb[0].mxu0
      %v8293 = vpop.f32.mrb[0].mxu0
      %v8294 = vadd.f32 0.0, %v8293
      %v8295 = vpop.f32.mrb[0].mxu0
      %8296 = vmatprep.mubr.bf16.mxu0 0
      %8297 = vmatmul.mubr.bf16.gmra.mrb[0].mxu0 %v8181
      %v8298 = vpop.f32.mrb[0].mxu0
      %v8299 = vadd.f32 0.0, %v8298
      %v8300 = vpop.f32.mrb[0].mxu0
      %v8301 = vpop.f32.mrb[0].mxu0
      %v8302 = vadd.f32 0.0, %v8301
      %v8303 = vpop.f32.mrb[0].mxu0
      %8304 = vmatprep.mubr.bf16.mxu0 0
      %8305 = vmatmul.mubr.bf16.gmra.mrb[0].mxu0 %v8184
      %v8306 = vpop.f32.mrb[0].mxu0
      %v8307 = vadd.f32 0.0, %v8306
      %v8308 = vpop.f32.mrb[0].mxu0
      %v8309 = vpop.f32.mrb[0].mxu0
      %v8310 = vadd.f32 0.0, %v8309
      %v8311 = vpop.f32.mrb[0].mxu0
      %8312 = vmatprep.mubr.bf16.mxu0 0
      %8313 = vmatmul.mubr.bf16.gmra.mrb[0].mxu0 %v8187
      %v8314 = vpop.f32.mrb[0].mxu0
      %v8315 = vadd.f32 0.0, %v8314
      %v8316 = vpop.f32.mrb[0].mxu0
      %v8317 = vpop.f32.mrb[0].mxu0
      %v8318 = vadd.f32 0.0, %v8317
      %v8319 = vpop.f32.mrb[0].mxu0
      %8320 = vmatprep.mubr.bf16.mxu0 0
      %8321 = vmatmul.mubr.bf16.gmra.mrb[0].mxu0 %v8190
      %v8322 = vpop.f32.mrb[0].mxu0
      %v8323 = vadd.f32 0.0, %v8322
      %v8324 = vpop.f32.mrb[0].mxu0
      %v8325 = vpop.f32.mrb[0].mxu0
      %v8326 = vadd.f32 0.0, %v8325
      %v8327 = vpop.f32.mrb[0].mxu0
      %8328 = vmatprep.mubr.bf16.mxu0 0
      %8329 = vmatmul.mubr.bf16.gmra.mrb[0].mxu0 %v8193
      %v8330 = vpop.f32.mrb[0].mxu0
      %v8331 = vadd.f32 0.0, %v8330
      %v8332 = vpop.f32.mrb[0].mxu0
      %v8333 = vpop.f32.mrb[0].mxu0
      %v8334 = vadd.f32 0.0, %v8333
      %v8335 = vpop.f32.mrb[0].mxu0
      %8336 = vmatprep.mubr.bf16.mxu0 0
      %8337 = vmatmul.mubr.bf16.gmra.mrb[0].mxu0 %v8196
      %v8338 = vpop.f32.mrb[0].mxu0
      %v8339 = vadd.f32 0.0, %v8338
      %v8340 = vpop.f32.mrb[0].mxu0
      %v8341 = vpop.f32.mrb[0].mxu0
      %v8342 = vadd.f32 0.0, %v8341
      %v8343 = vpop.f32.mrb[0].mxu0
      %8344 = vmatprep.mubr.bf16.mxu0 0
      %8345 = vmatmul.mubr.bf16.gmra.mrb[0].mxu0 %v8199
      %v8346 = vpop.f32.mrb[0].mxu0
      %v8347 = vadd.f32 0.0, %v8346
      %v8348 = vpop.f32.mrb[0].mxu0
      %v8349 = vpop.f32.mrb[0].mxu0
      %v8350 = vadd.f32 0.0, %v8349
      %v8351 = vpop.f32.mrb[0].mxu0
      %8352 = vmatprep.mubr.bf16.mxu0 0
      %8353 = vmatmul.mubr.bf16.gmra.mrb[0].mxu0 %v8202
      %v8354 = vpop.f32.mrb[0].mxu0
      %v8355 = vadd.f32 0.0, %v8354
      %v8356 = vpop.f32.mrb[0].mxu0
      %v8357 = vpop.f32.mrb[0].mxu0
      %v8358 = vadd.f32 0.0, %v8357
      %v8359 = vpop.f32.mrb[0].mxu0
      %8360 = vmatprep.mubr.bf16.mxu0 0
      %8361 = vmatmul.mubr.bf16.gmra.mrb[0].mxu0 %v8205
      %v8362 = vpop.f32.mrb[0].mxu0
      %v8363 = vadd.f32 0.0, %v8362
      %v8364 = vpop.f32.mrb[0].mxu0
      %v8365 = vpop.f32.mrb[0].mxu0
      %v8366 = vadd.f32 0.0, %v8365
      %v8367 = vpop.f32.mrb[0].mxu0
      %8368 = vmatprep.mubr.bf16.mxu0 0
      %8369 = vmatmul.mubr.bf16.gmra.mrb[0].mxu0 %v8208
      %v8370 = vpop.f32.mrb[0].mxu0
      %v8371 = vadd.f32 0.0, %v8370
      %v8372 = vpop.f32.mrb[0].mxu0
      %v8373 = vpop.f32.mrb[0].mxu0
      %v8374 = vadd.f32 0.0, %v8373
      %v8375 = vpop.f32.mrb[0].mxu0
      %8376 = vmatprep.mubr.bf16.mxu0 0
      %8377 = vmatmul.mubr.bf16.gmra.mrb[0].mxu0 %v8211
      %v8378 = vpop.f32.mrb[0].mxu0
      %v8379 = vadd.f32 0.0, %v8378
      %v8380 = vpop.f32.mrb[0].mxu0
      %v8381 = vpop.f32.mrb[0].mxu0
      %v8382 = vadd.f32 0.0, %v8381
      %v8383 = vpop.f32.mrb[0].mxu0
      %8384 = vmatprep.mubr.bf16.mxu0 0
      %8385 = vmatmul.mubr.bf16.gmra.mrb[0].mxu0 %v8214
      %v8386 = vpop.f32.mrb[0].mxu0
      %v8387 = vadd.f32 0.0, %v8386
      %v8388 = vpop.f32.mrb[0].mxu0
      %v8389 = vpop.f32.mrb[0].mxu0
      %v8390 = vadd.f32 0.0, %v8389
      %v8391 = vpop.f32.mrb[0].mxu0
      %8392 = vdwg.mxu0
      %v8393 = vadd.f32 %v8067, %v8251
      %v8394 = vadd.f32 %v8068, %v8254
      %v8395 = vadd.f32 %v8069, %v8259
      %v8396 = vadd.f32 %v8070, %v8262
      %v8397 = vadd.f32 %v8071, %v8267
      %v8398 = vadd.f32 %v8072, %v8270
      %v8399 = vadd.f32 %v8073, %v8275
      %v8400 = vadd.f32 %v8074, %v8278
      %v8401 = vadd.f32 %v8075, %v8283
      %v8402 = vadd.f32 %v8076, %v8286
      %v8403 = vadd.f32 %v8077, %v8291
      %v8404 = vadd.f32 %v8078, %v8294
      %v8405 = vadd.f32 %v8079, %v8299
      %v8406 = vadd.f32 %v8080, %v8302
      %v8407 = vadd.f32 %v8081, %v8307
      %v8408 = vadd.f32 %v8082, %v8310
      %v8409 = vadd.f32 %v8083, %v8315
      %v8410 = vadd.f32 %v8084, %v8318
      %v8411 = vadd.f32 %v8085, %v8323
      %v8412 = vadd.f32 %v8086, %v8326
      %v8413 = vadd.f32 %v8087, %v8331
      %v8414 = vadd.f32 %v8088, %v8334
      %v8415 = vadd.f32 %v8089, %v8339
      %v8416 = vadd.f32 %v8090, %v8342
      %v8417 = vadd.f32 %v8091, %v8347
      %v8418 = vadd.f32 %v8092, %v8350
      %v8419 = vadd.f32 %v8093, %v8355
      %v8420 = vadd.f32 %v8094, %v8358
      %v8421 = vadd.f32 %v8095, %v8363
      %v8422 = vadd.f32 %v8096, %v8366
      %v8423 = vadd.f32 %v8097, %v8371
      %v8424 = vadd.f32 %v8098, %v8374
      %v8425 = vadd.f32 %v8099, %v8379
      %v8426 = vadd.f32 %v8100, %v8382
      %v8427 = vadd.f32 %v8101, %v8387
      %v8428 = vadd.f32 %v8102, %v8390
      %v8429 = vld [vmem:[#allocation3 + $0x10] sm:$0x8]
      %s8430 = scalar_lea.vmem %s3, 16
      %v8431 = vld [vmem:[%s8430] sm:$0x3]
      %v8433 = vunpack.c.l.b16 %v8429
      %v8434 = vpack.c.b16 %v6836, %v8433
      %v8435 = vrot.slane %v8434, 3
      %v8436 = vrot.slane %v6873, 3
      %v8437 = vsel %vm8112, %v8435, %v8436
      %v8438 = vrot.slane %v6874, 3
      %v8439 = vsel %vm8112, %v8436, %v8438
      %v8440 = vrot.slane %v6875, 3
      %v8441 = vsel %vm8112, %v8438, %v8440
      %v8442 = vrot.slane %v6876, 3
      %v8443 = vsel %vm8112, %v8440, %v8442
      %v8444 = vrot.slane %v6877, 3
      %v8445 = vsel %vm8112, %v8442, %v8444
      %v8446 = vrot.slane %v6878, 3
      %v8447 = vsel %vm8112, %v8444, %v8446
      %v8448 = vrot.slane %v6879, 3
      %v8449 = vsel %vm8112, %v8446, %v8448
      %v8450 = vrot.slane %v6880, 3
      %v8451 = vsel %vm8112, %v8448, %v8450
      %v8452 = vrot.slane %v6881, 3
      %v8453 = vsel %vm8112, %v8450, %v8452
      %v8454 = vrot.slane %v6882, 3
      %v8455 = vsel %vm8112, %v8452, %v8454
      %v8456 = vrot.slane %v6883, 3
      %v8457 = vsel %vm8112, %v8454, %v8456
      %v8458 = vrot.slane %v6884, 3
      %v8459 = vsel %vm8112, %v8456, %v8458
      %v8460 = vrot.slane %v6885, 3
      %v8461 = vsel %vm8112, %v8458, %v8460
      %v8462 = vrot.slane %v6886, 3
      %v8463 = vsel %vm8112, %v8460, %v8462
      %v8464 = vrot.slane %v6887, 3
      %v8465 = vsel %vm8112, %v8462, %v8464
      %v8466 = vrot.slane %v6888, 3
      %v8467 = vsel %vm8112, %v8464, %v8466
      %v8468 = vrot.slane %v6889, 3
      %v8469 = vsel %vm8112, %v8466, %v8468
      %v8470 = vrot.slane %v7662, 3
      %v8471 = vsel %vm8112, %v8468, %v8470
      %v8473 = vsel %vm1552, %v8437, 0
      %v8476 = vsel %vm1552, %v8439, 0
      %v8479 = vsel %vm1552, %v8441, 0
      %v8482 = vsel %vm1552, %v8443, 0
      %v8485 = vsel %vm1552, %v8445, 0
      %v8488 = vsel %vm1552, %v8447, 0
      %v8491 = vsel %vm1552, %v8449, 0
      %v8494 = vsel %vm1552, %v8451, 0
      %v8497 = vsel %vm1552, %v8453, 0
      %v8500 = vsel %vm1552, %v8455, 0
      %v8503 = vsel %vm1552, %v8457, 0
      %v8506 = vsel %vm1552, %v8459, 0
      %v8509 = vsel %vm1552, %v8461, 0
      %v8512 = vsel %vm1552, %v8463, 0
      %v8515 = vsel %vm1552, %v8465, 0
      %v8518 = vsel %vm1552, %v8467, 0
      %v8521 = vsel %vm1552, %v8469, 0
      %v8524 = vsel %vm1552, %v8471, 0
      %v8527 = vsel %vm1607, %v8431, 0
      %8529 = vmatprep.subr.bf16.mxu0 0
      %8530 = vmatpush1.bf16.msra.mxu0 %v8527
      %8531 = vmatprep.subr.bf16.mxu0 0
      %8532 = vmatpush1.bf16.msra.mxu0 0
      %8533 = vmatprep.subr.bf16.mxu0 0
      %8534 = vmatpush1.bf16.msra.mxu0 0
      %8535 = vmatprep.subr.bf16.mxu0 0
      %8536 = vmatpush1.bf16.msra.mxu0 0
      %8537 = vmatprep.subr.bf16.mxu0 0
      %8538 = vmatpush1.bf16.msra.mxu0 0
      %8539 = vmatprep.subr.bf16.mxu0 0
      %8540 = vmatpush1.bf16.msra.mxu0 0
      %8541 = vmatprep.subr.bf16.mxu0 0
      %8542 = vmatpush1.bf16.msra.mxu0 0
      %8543 = vmatprep.subr.bf16.mxu0 0
      %8544 = vmatpush1.bf16.msra.mxu0 0
      %8545 = vmatprep.subr.bf16.mxu0 0
      %8546 = vmatpush1.bf16.msra.mxu0 0
      %8547 = vmatprep.subr.bf16.mxu0 0
      %8548 = vmatpush1.bf16.msra.mxu0 0
      %8549 = vmatprep.subr.bf16.mxu0 0
      %8550 = vmatpush1.bf16.msra.mxu0 0
      %8551 = vmatprep.subr.bf16.mxu0 0
      %8552 = vmatpush1.bf16.msra.mxu0 0
      %8553 = vmatprep.subr.bf16.mxu0 0
      %8554 = vmatpush1.bf16.msra.mxu0 0
      %8555 = vmatprep.subr.bf16.mxu0 0
      %8556 = vmatpush1.bf16.msra.mxu0 0
      %8557 = vmatprep.subr.bf16.mxu0 0
      %8558 = vmatpush1.bf16.msra.mxu0 0
      %8559 = vmatprep.subr.bf16.mxu0 0
      %8560 = vmatpush1.bf16.msra.mxu0 0
      %8561 = vmatprep.mubr.bf16.mxu0 0
      %8562 = vmatmul.mubr.bf16.gmra.mrb[0].mxu0 %v8473
      %v8563 = vpop.f32.mrb[0].mxu0
      %v8564 = vadd.f32 0.0, %v8563
      %v8565 = vpop.f32.mrb[0].mxu0
      %v8566 = vpop.f32.mrb[0].mxu0
      %v8567 = vadd.f32 0.0, %v8566
      %v8568 = vpop.f32.mrb[0].mxu0
      %8569 = vmatprep.mubr.bf16.mxu0 0
      %8570 = vmatmul.mubr.bf16.gmra.mrb[0].mxu0 %v8476
      %v8571 = vpop.f32.mrb[0].mxu0
      %v8572 = vadd.f32 0.0, %v8571
      %v8573 = vpop.f32.mrb[0].mxu0
      %v8574 = vpop.f32.mrb[0].mxu0
      %v8575 = vadd.f32 0.0, %v8574
      %v8576 = vpop.f32.mrb[0].mxu0
      %8577 = vmatprep.mubr.bf16.mxu0 0
      %8578 = vmatmul.mubr.bf16.gmra.mrb[0].mxu0 %v8479
      %v8579 = vpop.f32.mrb[0].mxu0
      %v8580 = vadd.f32 0.0, %v8579
      %v8581 = vpop.f32.mrb[0].mxu0
      %v8582 = vpop.f32.mrb[0].mxu0
      %v8583 = vadd.f32 0.0, %v8582
      %v8584 = vpop.f32.mrb[0].mxu0
      %8585 = vmatprep.mubr.bf16.mxu0 0
      %8586 = vmatmul.mubr.bf16.gmra.mrb[0].mxu0 %v8482
      %v8587 = vpop.f32.mrb[0].mxu0
      %v8588 = vadd.f32 0.0, %v8587
      %v8589 = vpop.f32.mrb[0].mxu0
      %v8590 = vpop.f32.mrb[0].mxu0
      %v8591 = vadd.f32 0.0, %v8590
      %v8592 = vpop.f32.mrb[0].mxu0
      %8593 = vmatprep.mubr.bf16.mxu0 0
      %8594 = vmatmul.mubr.bf16.gmra.mrb[0].mxu0 %v8485
      %v8595 = vpop.f32.mrb[0].mxu0
      %v8596 = vadd.f32 0.0, %v8595
      %v8597 = vpop.f32.mrb[0].mxu0
      %v8598 = vpop.f32.mrb[0].mxu0
      %v8599 = vadd.f32 0.0, %v8598
      %v8600 = vpop.f32.mrb[0].mxu0
      %8601 = vmatprep.mubr.bf16.mxu0 0
      %8602 = vmatmul.mubr.bf16.gmra.mrb[0].mxu0 %v8488
      %v8603 = vpop.f32.mrb[0].mxu0
      %v8604 = vadd.f32 0.0, %v8603
      %v8605 = vpop.f32.mrb[0].mxu0
      %v8606 = vpop.f32.mrb[0].mxu0
      %v8607 = vadd.f32 0.0, %v8606
      %v8608 = vpop.f32.mrb[0].mxu0
      %8609 = vmatprep.mubr.bf16.mxu0 0
      %8610 = vmatmul.mubr.bf16.gmra.mrb[0].mxu0 %v8491
      %v8611 = vpop.f32.mrb[0].mxu0
      %v8612 = vadd.f32 0.0, %v8611
      %v8613 = vpop.f32.mrb[0].mxu0
      %v8614 = vpop.f32.mrb[0].mxu0
      %v8615 = vadd.f32 0.0, %v8614
      %v8616 = vpop.f32.mrb[0].mxu0
      %8617 = vmatprep.mubr.bf16.mxu0 0
      %8618 = vmatmul.mubr.bf16.gmra.mrb[0].mxu0 %v8494
      %v8619 = vpop.f32.mrb[0].mxu0
      %v8620 = vadd.f32 0.0, %v8619
      %v8621 = vpop.f32.mrb[0].mxu0
      %v8622 = vpop.f32.mrb[0].mxu0
      %v8623 = vadd.f32 0.0, %v8622
      %v8624 = vpop.f32.mrb[0].mxu0
      %8625 = vmatprep.mubr.bf16.mxu0 0
      %8626 = vmatmul.mubr.bf16.gmra.mrb[0].mxu0 %v8497
      %v8627 = vpop.f32.mrb[0].mxu0
      %v8628 = vadd.f32 0.0, %v8627
      %v8629 = vpop.f32.mrb[0].mxu0
      %v8630 = vpop.f32.mrb[0].mxu0
      %v8631 = vadd.f32 0.0, %v8630
      %v8632 = vpop.f32.mrb[0].mxu0
      %8633 = vmatprep.mubr.bf16.mxu0 0
      %8634 = vmatmul.mubr.bf16.gmra.mrb[0].mxu0 %v8500
      %v8635 = vpop.f32.mrb[0].mxu0
      %v8636 = vadd.f32 0.0, %v8635
      %v8637 = vpop.f32.mrb[0].mxu0
      %v8638 = vpop.f32.mrb[0].mxu0
      %v8639 = vadd.f32 0.0, %v8638
      %v8640 = vpop.f32.mrb[0].mxu0
      %8641 = vmatprep.mubr.bf16.mxu0 0
      %8642 = vmatmul.mubr.bf16.gmra.mrb[0].mxu0 %v8503
      %v8643 = vpop.f32.mrb[0].mxu0
      %v8644 = vadd.f32 0.0, %v8643
      %v8645 = vpop.f32.mrb[0].mxu0
      %v8646 = vpop.f32.mrb[0].mxu0
      %v8647 = vadd.f32 0.0, %v8646
      %v8648 = vpop.f32.mrb[0].mxu0
      %8649 = vmatprep.mubr.bf16.mxu0 0
      %8650 = vmatmul.mubr.bf16.gmra.mrb[0].mxu0 %v8506
      %v8651 = vpop.f32.mrb[0].mxu0
      %v8652 = vadd.f32 0.0, %v8651
      %v8653 = vpop.f32.mrb[0].mxu0
      %v8654 = vpop.f32.mrb[0].mxu0
      %v8655 = vadd.f32 0.0, %v8654
      %v8656 = vpop.f32.mrb[0].mxu0
      %8657 = vmatprep.mubr.bf16.mxu0 0
      %8658 = vmatmul.mubr.bf16.gmra.mrb[0].mxu0 %v8509
      %v8659 = vpop.f32.mrb[0].mxu0
      %v8660 = vadd.f32 0.0, %v8659
      %v8661 = vpop.f32.mrb[0].mxu0
      %v8662 = vpop.f32.mrb[0].mxu0
      %v8663 = vadd.f32 0.0, %v8662
      %v8664 = vpop.f32.mrb[0].mxu0
      %8665 = vmatprep.mubr.bf16.mxu0 0
      %8666 = vmatmul.mubr.bf16.gmra.mrb[0].mxu0 %v8512
      %v8667 = vpop.f32.mrb[0].mxu0
      %v8668 = vadd.f32 0.0, %v8667
      %v8669 = vpop.f32.mrb[0].mxu0
      %v8670 = vpop.f32.mrb[0].mxu0
      %v8671 = vadd.f32 0.0, %v8670
      %v8672 = vpop.f32.mrb[0].mxu0
      %8673 = vmatprep.mubr.bf16.mxu0 0
      %8674 = vmatmul.mubr.bf16.gmra.mrb[0].mxu0 %v8515
      %v8675 = vpop.f32.mrb[0].mxu0
      %v8676 = vadd.f32 0.0, %v8675
      %v8677 = vpop.f32.mrb[0].mxu0
      %v8678 = vpop.f32.mrb[0].mxu0
      %v8679 = vadd.f32 0.0, %v8678
      %v8680 = vpop.f32.mrb[0].mxu0
      %8681 = vmatprep.mubr.bf16.mxu0 0
      %8682 = vmatmul.mubr.bf16.gmra.mrb[0].mxu0 %v8518
      %v8683 = vpop.f32.mrb[0].mxu0
      %v8684 = vadd.f32 0.0, %v8683
      %v8685 = vpop.f32.mrb[0].mxu0
      %v8686 = vpop.f32.mrb[0].mxu0
      %v8687 = vadd.f32 0.0, %v8686
      %v8688 = vpop.f32.mrb[0].mxu0
      %8689 = vmatprep.mubr.bf16.mxu0 0
      %8690 = vmatmul.mubr.bf16.gmra.mrb[0].mxu0 %v8521
      %v8691 = vpop.f32.mrb[0].mxu0
      %v8692 = vadd.f32 0.0, %v8691
      %v8693 = vpop.f32.mrb[0].mxu0
      %v8694 = vpop.f32.mrb[0].mxu0
      %v8695 = vadd.f32 0.0, %v8694
      %v8696 = vpop.f32.mrb[0].mxu0
      %8697 = vmatprep.mubr.bf16.mxu0 0
      %8698 = vmatmul.mubr.bf16.gmra.mrb[0].mxu0 %v8524
      %v8699 = vpop.f32.mrb[0].mxu0
      %v8700 = vadd.f32 0.0, %v8699
      %v8701 = vpop.f32.mrb[0].mxu0
      %v8702 = vpop.f32.mrb[0].mxu0
      %v8703 = vadd.f32 0.0, %v8702
      %v8704 = vpop.f32.mrb[0].mxu0
      %8705 = vdwg.mxu0
      %v8706 = vadd.f32 %v8393, %v8564
      %v8707 = vadd.f32 %v8394, %v8567
      %v8708 = vadd.f32 %v8395, %v8572
      %v8709 = vadd.f32 %v8396, %v8575
      %v8710 = vadd.f32 %v8397, %v8580
      %v8711 = vadd.f32 %v8398, %v8583
      %v8712 = vadd.f32 %v8399, %v8588
      %v8713 = vadd.f32 %v8400, %v8591
      %v8714 = vadd.f32 %v8401, %v8596
      %v8715 = vadd.f32 %v8402, %v8599
      %v8716 = vadd.f32 %v8403, %v8604
      %v8717 = vadd.f32 %v8404, %v8607
      %v8718 = vadd.f32 %v8405, %v8612
      %v8719 = vadd.f32 %v8406, %v8615
      %v8720 = vadd.f32 %v8407, %v8620
      %v8721 = vadd.f32 %v8408, %v8623
      %v8722 = vadd.f32 %v8409, %v8628
      %v8723 = vadd.f32 %v8410, %v8631
      %v8724 = vadd.f32 %v8411, %v8636
      %v8725 = vadd.f32 %v8412, %v8639
      %v8726 = vadd.f32 %v8413, %v8644
      %v8727 = vadd.f32 %v8414, %v8647
      %v8728 = vadd.f32 %v8415, %v8652
      %v8729 = vadd.f32 %v8416, %v8655
      %v8730 = vadd.f32 %v8417, %v8660
      %v8731 = vadd.f32 %v8418, %v8663
      %v8732 = vadd.f32 %v8419, %v8668
      %v8733 = vadd.f32 %v8420, %v8671
      %v8734 = vadd.f32 %v8421, %v8676
      %v8735 = vadd.f32 %v8422, %v8679
      %v8736 = vadd.f32 %v8423, %v8684
      %v8737 = vadd.f32 %v8424, %v8687
      %v8738 = vadd.f32 %v8425, %v8692
      %v8739 = vadd.f32 %v8426, %v8695
      %v8740 = vadd.f32 %v8427, %v8700
      %v8741 = vadd.f32 %v8428, %v8703
      %v8742 = vld [vmem:[%s4] sm:$0x1]
      %v8744 = vlaneseq
      %v8745 = vshrl.u32 %v8744, 7
      %v8746 = vsub.s32 0, %v8745
      %v8747 = vrot.slane %v8742, %v8746
      %v8749 = vmul.f32 %v8706, %v8747
      %v8750 = vmul.f32 %v8707, %v8747
      %v8751 = vmul.f32 %v8708, %v8747
      %v8752 = vmul.f32 %v8709, %v8747
      %v8753 = vmul.f32 %v8710, %v8747
      %v8754 = vmul.f32 %v8711, %v8747
      %v8755 = vmul.f32 %v8712, %v8747
      %v8756 = vmul.f32 %v8713, %v8747
      %v8757 = vmul.f32 %v8714, %v8747
      %v8758 = vmul.f32 %v8715, %v8747
      %v8759 = vmul.f32 %v8716, %v8747
      %v8760 = vmul.f32 %v8717, %v8747
      %v8761 = vmul.f32 %v8718, %v8747
      %v8762 = vmul.f32 %v8719, %v8747
      %v8763 = vmul.f32 %v8720, %v8747
      %v8764 = vmul.f32 %v8721, %v8747
      %v8765 = vmul.f32 %v8722, %v8747
      %v8766 = vmul.f32 %v8723, %v8747
      %v8767 = vmul.f32 %v8724, %v8747
      %v8768 = vmul.f32 %v8725, %v8747
      %v8769 = vmul.f32 %v8726, %v8747
      %v8770 = vmul.f32 %v8727, %v8747
      %v8771 = vmul.f32 %v8728, %v8747
      %v8772 = vmul.f32 %v8729, %v8747
      %v8773 = vmul.f32 %v8730, %v8747
      %v8774 = vmul.f32 %v8731, %v8747
      %v8775 = vmul.f32 %v8732, %v8747
      %v8776 = vmul.f32 %v8733, %v8747
      %v8777 = vmul.f32 %v8734, %v8747
      %v8778 = vmul.f32 %v8735, %v8747
      %v8779 = vmul.f32 %v8736, %v8747
      %v8780 = vmul.f32 %v8737, %v8747
      %v8781 = vmul.f32 %v8738, %v8747
      %v8782 = vmul.f32 %v8739, %v8747
      %v8783 = vmul.f32 %v8740, %v8747
      %v8784 = vmul.f32 %v8741, %v8747
      %v8785 = vld [vmem:[%s5] sm:$0x1]
      %v8787 = vlaneseq
      %v8788 = vshrl.u32 %v8787, 7
      %v8789 = vsub.s32 0, %v8788
      %v8790 = vrot.slane %v8785, %v8789
      %v8792 = vadd.f32 %v8749, %v8790
      %v8793 = vadd.f32 %v8750, %v8790
      %v8794 = vadd.f32 %v8751, %v8790
      %v8795 = vadd.f32 %v8752, %v8790
      %v8796 = vadd.f32 %v8753, %v8790
      %v8797 = vadd.f32 %v8754, %v8790
      %v8798 = vadd.f32 %v8755, %v8790
      %v8799 = vadd.f32 %v8756, %v8790
      %v8800 = vadd.f32 %v8757, %v8790
      %v8801 = vadd.f32 %v8758, %v8790
      %v8802 = vadd.f32 %v8759, %v8790
      %v8803 = vadd.f32 %v8760, %v8790
      %v8804 = vadd.f32 %v8761, %v8790
      %v8805 = vadd.f32 %v8762, %v8790
      %v8806 = vadd.f32 %v8763, %v8790
      %v8807 = vadd.f32 %v8764, %v8790
      %v8808 = vadd.f32 %v8765, %v8790
      %v8809 = vadd.f32 %v8766, %v8790
      %v8810 = vadd.f32 %v8767, %v8790
      %v8811 = vadd.f32 %v8768, %v8790
      %v8812 = vadd.f32 %v8769, %v8790
      %v8813 = vadd.f32 %v8770, %v8790
      %v8814 = vadd.f32 %v8771, %v8790
      %v8815 = vadd.f32 %v8772, %v8790
      %v8816 = vadd.f32 %v8773, %v8790
      %v8817 = vadd.f32 %v8774, %v8790
      %v8818 = vadd.f32 %v8775, %v8790
      %v8819 = vadd.f32 %v8776, %v8790
      %v8820 = vadd.f32 %v8777, %v8790
      %v8821 = vadd.f32 %v8778, %v8790
      %v8822 = vadd.f32 %v8779, %v8790
      %v8823 = vadd.f32 %v8780, %v8790
      %v8824 = vadd.f32 %v8781, %v8790
      %v8825 = vadd.f32 %v8782, %v8790
      %v8826 = vadd.f32 %v8783, %v8790
      %v8827 = vadd.f32 %v8784, %v8790
      %vm8828 = vcmask 64512
      %8829 = vst.msk [vmem:[%s271] sm:$0xff] %vm8828, %v8792
      %8830 = vst.msk [vmem:[%s271 + $0x8] sm:$0xff] %vm8828, %v8793
      %s8831 = scalar_lea.vmem %s271, 16
      %vm8832 = vcmask 64514
      %8833 = vst.msk [vmem:[%s8831 - $0x2] sm:$0xfc] %vm8832, %v8794
      %8834 = vst.msk [vmem:[%s8831 + $0x6] sm:$0xff] %vm8828, %v8795
      %vm8835 = vcmask 58368
      %8836 = vst.msk [vmem:[%s8831 + $0xe] sm:$0x3] %vm8835, %v8796
      %s8837 = scalar_lea.vmem %s271, 32
      %vm8838 = vcmask 64516
      %8839 = vst.msk [vmem:[%s8837 - $0x4] sm:$0xf0] %vm8838, %v8796
      %8840 = vst.msk [vmem:[%s8837 + $0x4] sm:$0xff] %vm8828, %v8797
      %vm8841 = vcmask 60416
      %8842 = vst.msk [vmem:[%s8837 + $0xc] sm:$0xf] %vm8841, %v8798
      %s8843 = scalar_lea.vmem %s271, 48
      %vm8844 = vcmask 64518
      %8845 = vst.msk [vmem:[%s8843 - $0x6] sm:$0xc0] %vm8844, %v8798
      %8846 = vst.msk [vmem:[%s8843 + $0x2] sm:$0xff] %vm8828, %v8799
      %vm8847 = vcmask 62464
      %8848 = vst.msk [vmem:[%s8843 + $0xa] sm:$0x3f] %vm8847, %v8800
      %s8849 = scalar_lea.vmem %s271, 64
      %8850 = vst.msk [vmem:[%s8849] sm:$0xff] %vm8828, %v8801
      %8851 = vst.msk [vmem:[%s8849 + $0x8] sm:$0xff] %vm8828, %v8802
      %s8852 = scalar_lea.vmem %s271, 80
      %8853 = vst.msk [vmem:[%s8852 - $0x2] sm:$0xfc] %vm8832, %v8803
      %8854 = vst.msk [vmem:[%s8852 + $0x6] sm:$0xff] %vm8828, %v8804
      %8855 = vst.msk [vmem:[%s8852 + $0xe] sm:$0x3] %vm8835, %v8805
      %s8856 = scalar_lea.vmem %s271, 96
      %8857 = vst.msk [vmem:[%s8856 - $0x4] sm:$0xf0] %vm8838, %v8805
      %8858 = vst.msk [vmem:[%s8856 + $0x4] sm:$0xff] %vm8828, %v8806
      %8859 = vst.msk [vmem:[%s8856 + $0xc] sm:$0xf] %vm8841, %v8807
      %s8860 = scalar_lea.vmem %s271, 112
      %8861 = vst.msk [vmem:[%s8860 - $0x6] sm:$0xc0] %vm8844, %v8807
      %8862 = vst.msk [vmem:[%s8860 + $0x2] sm:$0xff] %vm8828, %v8808
      %8863 = vst.msk [vmem:[%s8860 + $0xa] sm:$0x3f] %vm8847, %v8809
      %s8864 = scalar_lea.vmem %s271, 128
      %8865 = vst.msk [vmem:[%s8864] sm:$0xff] %vm8828, %v8810
      %8866 = vst.msk [vmem:[%s8864 + $0x8] sm:$0xff] %vm8828, %v8811
      %s8867 = scalar_lea.vmem %s271, 144
      %8868 = vst.msk [vmem:[%s8867 - $0x2] sm:$0xfc] %vm8832, %v8812
      %8869 = vst.msk [vmem:[%s8867 + $0x6] sm:$0xff] %vm8828, %v8813
      %8870 = vst.msk [vmem:[%s8867 + $0xe] sm:$0x3] %vm8835, %v8814
      %s8871 = scalar_lea.vmem %s271, 160
      %8872 = vst.msk [vmem:[%s8871 - $0x4] sm:$0xf0] %vm8838, %v8814
      %8873 = vst.msk [vmem:[%s8871 + $0x4] sm:$0xff] %vm8828, %v8815
      %8874 = vst.msk [vmem:[%s8871 + $0xc] sm:$0xf] %vm8841, %v8816
      %s8875 = scalar_lea.vmem %s271, 176
      %8876 = vst.msk [vmem:[%s8875 - $0x6] sm:$0xc0] %vm8844, %v8816
      %8877 = vst.msk [vmem:[%s8875 + $0x2] sm:$0xff] %vm8828, %v8817
      %8878 = vst.msk [vmem:[%s8875 + $0xa] sm:$0x3f] %vm8847, %v8818
      %s8879 = scalar_lea.vmem %s271, 192
      %8880 = vst.msk [vmem:[%s8879] sm:$0xff] %vm8828, %v8819
      %8881 = vst.msk [vmem:[%s8879 + $0x8] sm:$0xff] %vm8828, %v8820
      %s8882 = scalar_lea.vmem %s271, 208
      %8883 = vst.msk [vmem:[%s8882 - $0x2] sm:$0xfc] %vm8832, %v8821
      %8884 = vst.msk [vmem:[%s8882 + $0x6] sm:$0xff] %vm8828, %v8822
      %8885 = vst.msk [vmem:[%s8882 + $0xe] sm:$0x3] %vm8835, %v8823
      %s8886 = scalar_lea.vmem %s271, 224
      %8887 = vst.msk [vmem:[%s8886 - $0x4] sm:$0xf0] %vm8838, %v8823
      %8888 = vst.msk [vmem:[%s8886 + $0x4] sm:$0xff] %vm8828, %v8824
      %8889 = vst.msk [vmem:[%s8886 + $0xc] sm:$0xf] %vm8841, %v8825
      %s8890 = scalar_lea.vmem %s271, 240
      %8891 = vst.msk [vmem:[%s8890 - $0x6] sm:$0xc0] %vm8844, %v8825
      %8892 = vst.msk [vmem:[%s8890 + $0x2] sm:$0xff] %vm8828, %v8826
      %8893 = vst.msk [vmem:[%s8890 + $0xa] sm:$0x3f] %vm8847, %v8827
      %p8894 = scmp.lt.s32.totalorder %s17, 1
      %s8895 = scalar_select %p8894, %s17, 1
      %s8896 = smul.addr %s8895, 32
      %s8897 = smul.addr %s8896, 8
      %s8898 = scalar_lea.vmem %s6, %s8897
      // Predicated region
      $region45: #{psp_module_forward.3} parent=43 // pred_check
        %p8899 = pneg %p171
      $region46: #{psp_module_forward.3} parent=43 // pred_check_branch
        %8901 = sbr.rel (%p8899) target = $region48
      $region47: #{psp_module_forward.3} parent=43 // pred_region
        _
      $region48: #{psp_module_forward.3} parent=43 // pred_fallthru
        _
    $region44: #{psp_module_forward.3} parent=5 // pred_fallthru
      _
    %p8902 = scmp.le.s32.totalorder 2, %s12
    // Predicated region
    $region49: #{psp_module_forward.3} parent=5 // pred_check
      %p8903 = pneg %p8902
    $region50: #{psp_module_forward.3} parent=5 // pred_check_branch
      %8905 = sbr.rel (%p8903) target = $region52
    $region51: #{psp_module_forward.3} parent=5 // pred_region
      %s8906 = ssub.s32 %s12, 2
      // Predicated region
      $region53: #{psp_module_forward.3} parent=51 // pred_check
        %p8907 = pneg %p177
      $region54: #{psp_module_forward.3} parent=51 // pred_check_branch
        %8909 = sbr.rel (%p8907) target = $region56
      $region55: #{psp_module_forward.3} parent=51 // pred_region
        %p8910 = scmp.lt.s32.totalorder %s18, 1
        %s8911 = scalar_select %p8910, %s18, 1
        %s8912 = smul.addr %s8911, 32
        %s8913 = smul.addr %s8912, 8
        %s8914 = scalar_lea.vmem %s6, %s8913
      $region56: #{psp_module_forward.3} parent=51 // pred_fallthru
        _
    $region52: #{psp_module_forward.3} parent=5 // pred_fallthru
      _
  $region6: #{psp_module_forward.3} parent=0 // loop_footer
    %s16 = sadd.s32 1, %s12
  $region7: #{psp_module_forward.3} parent=0 // loop_footer_branch
    %11 = sbr.rel target = $region3
  $region8: #{psp_module_forward.3} parent=0 // loop_exit
    _

</llo_original>
